<compile_context>
chip_gen: v5e
topology: v5e:2x2
jax: 0.10.0
libtpu: 0.0.40
codegen_flags: <defaults>
</compile_context>

<pallas_src>
import functools

import jax
import jax.numpy as jnp
from jax.experimental import pallas as pl
from jax.experimental.pallas import tpu as pltpu


_LANES = 128
_KH = 5
_KW = 5


def _round_up(a, b):
    return (a + b - 1) // b * b


# ---------------------------------------------------------------------------
# Kernel 1: fused conv(5x5, valid, stride 1) + bias + ReLU + maxpool(2x2, 2)
# ---------------------------------------------------------------------------

def _conv_relu_pool_kernel(x0_ref, x1_ref, w_ref, b_ref, o_ref, *, WP, POH, PR):
    """One batch element per grid step.

    x0_ref/x1_ref: (1, Hp*WP, C8)  even-/odd-column parity views of the padded
                   NHWC input; rows flattened as h*WP + wp.
    w_ref:         (25, C8, 128)   filter taps, indexed (di*5 + dj, cin, cout).
    b_ref:         (1, 128)        bias, zero padded to 128 lanes.
    o_ref:         (1, POH, WP, 128) pooled output.  Junk columns (wp >= POW)
                   and junk lanes (>= Cout) are finite and never consumed
                   downstream (zero-weighted in the next layer).
    """
    CM = 2 * PR * WP              # conv-output rows handled per chunk
    n_chunks = POH // PR
    b = b_ref[...]                # (1, 128)

    def chunk(c, carry):
        row0 = c * CM             # first conv-output row of this chunk
        acc_e = jnp.zeros((CM, _LANES), jnp.float32)   # even output columns
        acc_o = jnp.zeros((CM, _LANES), jnp.float32)   # odd  output columns
        for di in range(_KH):
            for dj in range(_KW):
                wk = w_ref[di * _KW + dj]              # (C8, 128)
                # even output col 2*wp reads source col 2*wp + dj:
                #   parity dj % 2, pair offset dj // 2
                off_e = di * WP + dj // 2
                # odd output col 2*wp + 1 reads source col 2*wp + 1 + dj:
                #   parity (dj + 1) % 2, pair offset (dj + 1) // 2
                off_o = di * WP + (dj + 1) // 2
                src_e = x1_ref if (dj % 2) else x0_ref
                src_o = x0_ref if (dj % 2) else x1_ref
                a_e = src_e[0, pl.ds(row0 + off_e, CM), :]   # (CM, C8)
                a_o = src_o[0, pl.ds(row0 + off_o, CM), :]
                acc_e = acc_e + jnp.dot(a_e, wk,
                                        preferred_element_type=jnp.float32)
                acc_o = acc_o + jnp.dot(a_o, wk,
                                        preferred_element_type=jnp.float32)
        # ReLU(conv + b), then max over the 2x2 window.  W-pair max first
        # (bias add and ReLU commute with max), then the H-pair max as a
        # leading-axis max after an (8,128)-aligned reshape (WP % 8 == 0).
        wmax = jnp.maximum(jnp.maximum(acc_e, acc_o) + b, 0.0)   # (CM, 128)
        wmax = wmax.reshape(PR, 2, WP, _LANES)
        pooled = jnp.maximum(wmax[:, 0], wmax[:, 1])             # (PR, WP, 128)
        o_ref[0, pl.ds(c * PR, PR), :, :] = pooled
        return carry

    if n_chunks == 1:
        chunk(0, 0)
    else:
        jax.lax.fori_loop(0, n_chunks, chunk, 0)


def _conv_relu_pool(x_nhwc, w_tap, b_pad):
    """x_nhwc: (N, H, W, 8) f32, W even.  Returns (N, (H-4)//2, W//2, 128)."""
    N, H, W, C8 = x_nhwc.shape
    OH = H - (_KH - 1)
    POH = OH // 2
    WP = W // 2
    Hp = H + (_KH - 1)            # bottom zero pad keeps wrap-around reads of
    R = Hp * WP                   # the junk columns inside the array bounds

    xpad = jnp.pad(x_nhwc, ((0, 0), (0, Hp - H), (0, 0), (0, 0)))
    xp = xpad.reshape(N, Hp, WP, 2, C8)
    x0 = xp[:, :, :, 0, :].reshape(N, R, C8)    # even source columns
    x1 = xp[:, :, :, 1, :].reshape(N, R, C8)    # odd  source columns

    # Chunk the conv rows so both f32 accumulators stay register resident.
    PR = 1
    for d in range(1, POH + 1):
        if POH % d == 0 and 2 * d * WP <= 128:
            PR = d

    kernel = functools.partial(_conv_relu_pool_kernel, WP=WP, POH=POH, PR=PR)
    return pl.pallas_call(
        kernel,
        out_shape=jax.ShapeDtypeStruct((N, POH, WP, _LANES), jnp.float32),
        grid=(N,),
        in_specs=[
            pl.BlockSpec((1, R, C8), lambda n: (n, 0, 0)),
            pl.BlockSpec((1, R, C8), lambda n: (n, 0, 0)),
            pl.BlockSpec((_KH * _KW, C8, _LANES), lambda n: (0, 0, 0)),
            pl.BlockSpec((1, _LANES), lambda n: (0, 0)),
        ],
        out_specs=pl.BlockSpec((1, POH, WP, _LANES), lambda n: (n, 0, 0, 0)),
        compiler_params=pltpu.CompilerParams(
            dimension_semantics=("parallel",),
            vmem_limit_bytes=32 * 1024 * 1024,
        ),
    )(x0, x1, w_tap, b_pad)


# ---------------------------------------------------------------------------
# Kernel 3: fused fc1 + ReLU + fc2 + ReLU + fc3 (all weights resident in VMEM)
# ---------------------------------------------------------------------------

def _fc_stack_kernel(x_ref, w1_ref, b1_ref, w2_ref, b2_ref, w3_ref, b3_ref, o_ref):
    h = x_ref[...]                                                   # (TM, K)
    h = jnp.maximum(jnp.dot(h, w1_ref[...],
                            preferred_element_type=jnp.float32) + b1_ref[...], 0.0)
    h = jnp.maximum(jnp.dot(h, w2_ref[...],
                            preferred_element_type=jnp.float32) + b2_ref[...], 0.0)
    o_ref[...] = jnp.dot(h, w3_ref[...],
                         preferred_element_type=jnp.float32) + b3_ref[...]


def _fc_stack(xflat, w1, b1, w2, b2, w3, b3):
    N, K = xflat.shape
    Np = _round_up(N, 8)
    if Np > 256:                  # tile M at realistic batch sizes
        TM = 256
        Np = _round_up(Np, TM)
    else:
        TM = Np
    if Np != N:
        xflat = jnp.pad(xflat, ((0, Np - N), (0, 0)))

    out = pl.pallas_call(
        _fc_stack_kernel,
        out_shape=jax.ShapeDtypeStruct((Np, _LANES), jnp.float32),
        grid=(Np // TM,),
        in_specs=[
            pl.BlockSpec((TM, K), lambda i: (i, 0)),
            pl.BlockSpec(w1.shape, lambda i: (0, 0)),
            pl.BlockSpec((1, _LANES), lambda i: (0, 0)),
            pl.BlockSpec((_LANES, _LANES), lambda i: (0, 0)),
            pl.BlockSpec((1, _LANES), lambda i: (0, 0)),
            pl.BlockSpec((_LANES, _LANES), lambda i: (0, 0)),
            pl.BlockSpec((1, _LANES), lambda i: (0, 0)),
        ],
        out_specs=pl.BlockSpec((TM, _LANES), lambda i: (i, 0)),
        compiler_params=pltpu.CompilerParams(
            dimension_semantics=("parallel",),
            vmem_limit_bytes=32 * 1024 * 1024,
        ),
    )(xflat, w1, b1, w2, b2, w3, b3)
    return out[:N]


# ---------------------------------------------------------------------------
# Parameters (PyTorch layouts) + one-time prep into kernel layouts
# ---------------------------------------------------------------------------

def init_params(key):
    ks = jax.random.split(key, 10)

    def u(k, shape, fan_in):
        bound = 1.0 / jnp.sqrt(fan_in)
        return jax.random.uniform(k, shape, jnp.float32, -bound, bound)

    return {
        "conv1_w": u(ks[0], (6, 3, 5, 5), 3 * 5 * 5),
        "conv1_b": u(ks[1], (6,), 3 * 5 * 5),
        "conv2_w": u(ks[2], (16, 6, 5, 5), 6 * 5 * 5),
        "conv2_b": u(ks[3], (16,), 6 * 5 * 5),
        "fc1_w": u(ks[4], (120, 16 * 5 * 5), 16 * 5 * 5),   # (out, in) torch layout
        "fc1_b": u(ks[5], (120,), 16 * 5 * 5),
        "fc2_w": u(ks[6], (84, 120), 120),
        "fc2_b": u(ks[7], (84,), 120),
        "fc3_w": u(ks[8], (10, 84), 84),
        "fc3_b": u(ks[9], (10,), 84),
    }


def prepare_params(p):
    """One-time repack of torch-layout params into lane-dense kernel layouts."""
    f32 = jnp.float32

    def conv_taps(w, b):
        cout, cin, kh, kw = w.shape
        wt = jnp.transpose(w, (2, 3, 1, 0)).reshape(kh * kw, cin, cout)
        wt = jnp.pad(wt, ((0, 0), (0, 8 - cin), (0, _LANES - cout)))
        bp = jnp.pad(b, (0, _LANES - cout)).reshape(1, _LANES)
        return wt.astype(f32), bp.astype(f32)

    c1w, c1b = conv_taps(p["conv1_w"], p["conv1_b"])
    c2w, c2b = conv_taps(p["conv2_w"], p["conv2_b"])

    # fc1: fold torch.flatten(x, 1) (NCHW order) and the conv2 output padding
    # (a (5, 8, 128) slab with junk width columns / lanes) into one lane-dense
    # weight of shape (5*8*128, 128).  Junk positions get zero rows.
    WP2 = 8
    pr = jnp.arange(5)
    P, Q, C = jnp.meshgrid(pr, pr, jnp.arange(16), indexing="ij")
    rows = (P * (WP2 * _LANES) + Q * _LANES + C).reshape(-1)   # slab position
    tcol = (C * 25 + P * 5 + Q).reshape(-1)                    # torch flatten index
    w1t = jnp.transpose(p["fc1_w"])                            # (400, 120) in->out
    w1_big = jnp.zeros((5 * WP2 * _LANES, 120), f32).at[rows].set(w1t[tcol])
    w1_big = jnp.pad(w1_big, ((0, 0), (0, _LANES - 120)))
    b1 = jnp.pad(p["fc1_b"], (0, _LANES - 120)).reshape(1, _LANES)

    w2 = jnp.pad(jnp.transpose(p["fc2_w"]), ((0, _LANES - 120), (0, _LANES - 84)))
    b2 = jnp.pad(p["fc2_b"], (0, _LANES - 84)).reshape(1, _LANES)
    w3 = jnp.pad(jnp.transpose(p["fc3_w"]), ((0, _LANES - 84), (0, _LANES - 10)))
    b3 = jnp.pad(p["fc3_b"], (0, _LANES - 10)).reshape(1, _LANES)

    return {"c1w": c1w, "c1b": c1b, "c2w": c2w, "c2b": c2b,
            "fc1w": w1_big.astype(f32), "fc1b": b1.astype(f32),
            "fc2w": w2.astype(f32), "fc2b": b2.astype(f32),
            "fc3w": w3.astype(f32), "fc3b": b3.astype(f32)}


# ---------------------------------------------------------------------------
# Net_base forward
# ---------------------------------------------------------------------------

@jax.jit
def net_base_forward(prepped, x_nchw):
    N = x_nchw.shape[0]
    # NCHW -> NHWC once; pad channels 3 -> 8 (zero channels hit zero weight rows).
    x = jnp.transpose(x_nchw, (0, 2, 3, 1)).astype(jnp.float32)      # (N,32,32,3)
    x = jnp.pad(x, ((0, 0), (0, 0), (0, 0), (0, 5)))                 # (N,32,32,8)

    # conv1 + ReLU + pool.  Valid region: [:, :14, :14, :6]; lanes 6.. are 0.
    y1 = _conv_relu_pool(x, prepped["c1w"], prepped["c1b"])          # (N,14,16,128)

    # conv2 reads only valid conv1 columns for its valid outputs, so the two
    # junk width columns of y1 can ride along; channels 6,7 are exactly zero.
    x2 = y1[:, :, :, :8]                                             # (N,14,16,8)
    y2 = _conv_relu_pool(x2, prepped["c2w"], prepped["c2b"])         # (N,5,8,128)

    # Flatten the whole padded slab; the permutation + junk masking live in fc1w.
    xf = y2.reshape(N, 5 * 8 * _LANES)                               # (N,5120)
    out = _fc_stack(xf, prepped["fc1w"], prepped["fc1b"],
                    prepped["fc2w"], prepped["fc2b"],
                    prepped["fc3w"], prepped["fc3b"])                # (N,128)
    return out[:, :10]


if __name__ == "__main__":
    key = jax.random.PRNGKey(0)
    pkey, xkey = jax.random.split(key)
    params = init_params(pkey)
    prepped = prepare_params(params)

    # Input consistent with the module's fc1 (16*5*5): NCHW (2, 3, 32, 32).
    x = jax.random.normal(xkey, (2, 3, 32, 32), jnp.float32)

    out = net_base_forward(prepped, x)
    out = jax.block_until_ready(out)
    assert out.shape == (2, 10) and out.dtype == jnp.float32
    print("KERNEL_OK")
</pallas_src>

<mosaic_0001>
module attributes {stable_mosaic.version = 11 : i64} {
  func.func @_conv_relu_pool_kernel(%arg0: i32, %arg1: memref<1x576x8xf32, #tpu.memory_space<vmem>>, %arg2: memref<1x576x8xf32, #tpu.memory_space<vmem>>, %arg3: memref<25x8x128xf32, #tpu.memory_space<vmem>>, %arg4: memref<1x128xf32, #tpu.memory_space<vmem>>, %arg5: memref<1x14x16x128xf32, #tpu.memory_space<vmem>>) attributes {dimension_semantics = [#tpu.dimension_semantics<parallel>], iteration_bounds = array<i64: 2>, scalar_prefetch = 0 : i64, scratch_operands = 0 : i64, tpu.core_type = #tpu.core_type<tc>, window_params = [{transform_indices = @transform_0, window_bounds = array<i64: 1, 576, 8>}, {transform_indices = @transform_1, window_bounds = array<i64: 1, 576, 8>}, {pipeline_mode = #tpu.pipeline_mode<synchronous>, transform_indices = @transform_2, window_bounds = array<i64: 25, 8, 128>}, {pipeline_mode = #tpu.pipeline_mode<synchronous>, transform_indices = @transform_3, window_bounds = array<i64: 1, 128>}, {transform_indices = @transform_4, window_bounds = array<i64: 1, 14, 16, 128>}]} {
    %c0 = arith.constant 0 : index
    %c0_0 = arith.constant 0 : index
    %0 = vector.load %arg4[%c0, %c0_0] : memref<1x128xf32, #tpu.memory_space<vmem>>, vector<1x128xf32>
    %c0_i32 = arith.constant 0 : i32
    %c7_i32 = arith.constant 7 : i32
    %1 = arith.addi %c0_i32, %c7_i32 : i32
    %c1_i32 = arith.constant 1 : i32
    scf.for %arg6 = %c0_i32 to %1 step %c1_i32  : i32 {
      %c64_i32 = arith.constant 64 : i32
      %2 = arith.muli %arg6, %c64_i32 : i32
      %cst = arith.constant 0.000000e+00 : f32
      %3 = vector.broadcast %cst : f32 to vector<64x128xf32>
      %cst_2 = arith.constant 0.000000e+00 : f32
      %4 = vector.broadcast %cst_2 : f32 to vector<64x128xf32>
      %c0_3 = arith.constant 0 : index
      %c0_4 = arith.constant 0 : index
      %c0_5 = arith.constant 0 : index
      %5 = vector.load %arg3[%c0_3, %c0_4, %c0_5] : memref<25x8x128xf32, #tpu.memory_space<vmem>>, vector<1x8x128xf32>
      %6 = vector.shape_cast %5 : vector<1x8x128xf32> to vector<8x128xf32>
      %c0_i32_6 = arith.constant 0 : i32
      %7 = arith.addi %2, %c0_i32_6 : i32
      %c0_7 = arith.constant 0 : index
      %8 = arith.index_cast %7 : i32 to index
      %c0_8 = arith.constant 0 : index
      %9 = vector.load %arg1[%c0_7, %8, %c0_8] : memref<1x576x8xf32, #tpu.memory_space<vmem>>, vector<1x64x8xf32>
      %10 = vector.shape_cast %9 : vector<1x64x8xf32> to vector<64x8xf32>
      %c0_i32_9 = arith.constant 0 : i32
      %11 = arith.addi %2, %c0_i32_9 : i32
      %c0_10 = arith.constant 0 : index
      %12 = arith.index_cast %11 : i32 to index
      %c0_11 = arith.constant 0 : index
      %13 = vector.load %arg2[%c0_10, %12, %c0_11] : memref<1x576x8xf32, #tpu.memory_space<vmem>>, vector<1x64x8xf32>
      %14 = vector.shape_cast %13 : vector<1x64x8xf32> to vector<64x8xf32>
      %cst_12 = arith.constant dense<0.000000e+00> : vector<64x128xf32>
      %15 = tpu.matmul %10, %6, %cst_12 {dimension_numbers = #tpu.dot_dimension_numbers<[1], [0], [0], [1], [0, 0, 1, 1], [], []>} : vector<64x8xf32>, vector<8x128xf32>, vector<64x128xf32> -> vector<64x128xf32>
      %16 = arith.addf %3, %15 : vector<64x128xf32>
      %cst_13 = arith.constant dense<0.000000e+00> : vector<64x128xf32>
      %17 = tpu.matmul %14, %6, %cst_13 {dimension_numbers = #tpu.dot_dimension_numbers<[1], [0], [0], [1], [0, 0, 1, 1], [], []>} : vector<64x8xf32>, vector<8x128xf32>, vector<64x128xf32> -> vector<64x128xf32>
      %18 = arith.addf %4, %17 : vector<64x128xf32>
      %c1 = arith.constant 1 : index
      %c0_14 = arith.constant 0 : index
      %c0_15 = arith.constant 0 : index
      %19 = vector.load %arg3[%c1, %c0_14, %c0_15] : memref<25x8x128xf32, #tpu.memory_space<vmem>>, vector<1x8x128xf32>
      %20 = vector.shape_cast %19 : vector<1x8x128xf32> to vector<8x128xf32>
      %c0_i32_16 = arith.constant 0 : i32
      %21 = arith.addi %2, %c0_i32_16 : i32
      %c0_17 = arith.constant 0 : index
      %22 = arith.index_cast %21 : i32 to index
      %c0_18 = arith.constant 0 : index
      %23 = vector.load %arg2[%c0_17, %22, %c0_18] : memref<1x576x8xf32, #tpu.memory_space<vmem>>, vector<1x64x8xf32>
      %24 = vector.shape_cast %23 : vector<1x64x8xf32> to vector<64x8xf32>
      %c1_i32_19 = arith.constant 1 : i32
      %25 = arith.addi %2, %c1_i32_19 : i32
      %c0_20 = arith.constant 0 : index
      %26 = arith.index_cast %25 : i32 to index
      %c0_21 = arith.constant 0 : index
      %27 = vector.load %arg1[%c0_20, %26, %c0_21] : memref<1x576x8xf32, #tpu.memory_space<vmem>>, vector<1x64x8xf32>
      %28 = vector.shape_cast %27 : vector<1x64x8xf32> to vector<64x8xf32>
      %cst_22 = arith.constant dense<0.000000e+00> : vector<64x128xf32>
      %29 = tpu.matmul %24, %20, %cst_22 {dimension_numbers = #tpu.dot_dimension_numbers<[1], [0], [0], [1], [0, 0, 1, 1], [], []>} : vector<64x8xf32>, vector<8x128xf32>, vector<64x128xf32> -> vector<64x128xf32>
      %30 = arith.addf %16, %29 : vector<64x128xf32>
      %cst_23 = arith.constant dense<0.000000e+00> : vector<64x128xf32>
      %31 = tpu.matmul %28, %20, %cst_23 {dimension_numbers = #tpu.dot_dimension_numbers<[1], [0], [0], [1], [0, 0, 1, 1], [], []>} : vector<64x8xf32>, vector<8x128xf32>, vector<64x128xf32> -> vector<64x128xf32>
      %32 = arith.addf %18, %31 : vector<64x128xf32>
      %c2 = arith.constant 2 : index
      %c0_24 = arith.constant 0 : index
      %c0_25 = arith.constant 0 : index
      %33 = vector.load %arg3[%c2, %c0_24, %c0_25] : memref<25x8x128xf32, #tpu.memory_space<vmem>>, vector<1x8x128xf32>
      %34 = vector.shape_cast %33 : vector<1x8x128xf32> to vector<8x128xf32>
      %c1_i32_26 = arith.constant 1 : i32
      %35 = arith.addi %2, %c1_i32_26 : i32
      %c0_27 = arith.constant 0 : index
      %36 = arith.index_cast %35 : i32 to index
      %c0_28 = arith.constant 0 : index
      %37 = vector.load %arg1[%c0_27, %36, %c0_28] : memref<1x576x8xf32, #tpu.memory_space<vmem>>, vector<1x64x8xf32>
      %38 = vector.shape_cast %37 : vector<1x64x8xf32> to vector<64x8xf32>
      %c1_i32_29 = arith.constant 1 : i32
      %39 = arith.addi %2, %c1_i32_29 : i32
      %c0_30 = arith.constant 0 : index
      %40 = arith.index_cast %39 : i32 to index
      %c0_31 = arith.constant 0 : index
      %41 = vector.load %arg2[%c0_30, %40, %c0_31] : memref<1x576x8xf32, #tpu.memory_space<vmem>>, vector<1x64x8xf32>
      %42 = vector.shape_cast %41 : vector<1x64x8xf32> to vector<64x8xf32>
      %cst_32 = arith.constant dense<0.000000e+00> : vector<64x128xf32>
      %43 = tpu.matmul %38, %34, %cst_32 {dimension_numbers = #tpu.dot_dimension_numbers<[1], [0], [0], [1], [0, 0, 1, 1], [], []>} : vector<64x8xf32>, vector<8x128xf32>, vector<64x128xf32> -> vector<64x128xf32>
      %44 = arith.addf %30, %43 : vector<64x128xf32>
      %cst_33 = arith.constant dense<0.000000e+00> : vector<64x128xf32>
      %45 = tpu.matmul %42, %34, %cst_33 {dimension_numbers = #tpu.dot_dimension_numbers<[1], [0], [0], [1], [0, 0, 1, 1], [], []>} : vector<64x8xf32>, vector<8x128xf32>, vector<64x128xf32> -> vector<64x128xf32>
      %46 = arith.addf %32, %45 : vector<64x128xf32>
      %c3 = arith.constant 3 : index
      %c0_34 = arith.constant 0 : index
      %c0_35 = arith.constant 0 : index
      %47 = vector.load %arg3[%c3, %c0_34, %c0_35] : memref<25x8x128xf32, #tpu.memory_space<vmem>>, vector<1x8x128xf32>
      %48 = vector.shape_cast %47 : vector<1x8x128xf32> to vector<8x128xf32>
      %c1_i32_36 = arith.constant 1 : i32
      %49 = arith.addi %2, %c1_i32_36 : i32
      %c0_37 = arith.constant 0 : index
      %50 = arith.index_cast %49 : i32 to index
      %c0_38 = arith.constant 0 : index
      %51 = vector.load %arg2[%c0_37, %50, %c0_38] : memref<1x576x8xf32, #tpu.memory_space<vmem>>, vector<1x64x8xf32>
      %52 = vector.shape_cast %51 : vector<1x64x8xf32> to vector<64x8xf32>
      %c2_i32 = arith.constant 2 : i32
      %53 = arith.addi %2, %c2_i32 : i32
      %c0_39 = arith.constant 0 : index
      %54 = arith.index_cast %53 : i32 to index
      %c0_40 = arith.constant 0 : index
      %55 = vector.load %arg1[%c0_39, %54, %c0_40] : memref<1x576x8xf32, #tpu.memory_space<vmem>>, vector<1x64x8xf32>
      %56 = vector.shape_cast %55 : vector<1x64x8xf32> to vector<64x8xf32>
      %cst_41 = arith.constant dense<0.000000e+00> : vector<64x128xf32>
      %57 = tpu.matmul %52, %48, %cst_41 {dimension_numbers = #tpu.dot_dimension_numbers<[1], [0], [0], [1], [0, 0, 1, 1], [], []>} : vector<64x8xf32>, vector<8x128xf32>, vector<64x128xf32> -> vector<64x128xf32>
      %58 = arith.addf %44, %57 : vector<64x128xf32>
      %cst_42 = arith.constant dense<0.000000e+00> : vector<64x128xf32>
      %59 = tpu.matmul %56, %48, %cst_42 {dimension_numbers = #tpu.dot_dimension_numbers<[1], [0], [0], [1], [0, 0, 1, 1], [], []>} : vector<64x8xf32>, vector<8x128xf32>, vector<64x128xf32> -> vector<64x128xf32>
      %60 = arith.addf %46, %59 : vector<64x128xf32>
      %c4 = arith.constant 4 : index
      %c0_43 = arith.constant 0 : index
      %c0_44 = arith.constant 0 : index
      %61 = vector.load %arg3[%c4, %c0_43, %c0_44] : memref<25x8x128xf32, #tpu.memory_space<vmem>>, vector<1x8x128xf32>
      %62 = vector.shape_cast %61 : vector<1x8x128xf32> to vector<8x128xf32>
      %c2_i32_45 = arith.constant 2 : i32
      %63 = arith.addi %2, %c2_i32_45 : i32
      %c0_46 = arith.constant 0 : index
      %64 = arith.index_cast %63 : i32 to index
      %c0_47 = arith.constant 0 : index
      %65 = vector.load %arg1[%c0_46, %64, %c0_47] : memref<1x576x8xf32, #tpu.memory_space<vmem>>, vector<1x64x8xf32>
      %66 = vector.shape_cast %65 : vector<1x64x8xf32> to vector<64x8xf32>
      %c2_i32_48 = arith.constant 2 : i32
      %67 = arith.addi %2, %c2_i32_48 : i32
      %c0_49 = arith.constant 0 : index
      %68 = arith.index_cast %67 : i32 to index
      %c0_50 = arith.constant 0 : index
      %69 = vector.load %arg2[%c0_49, %68, %c0_50] : memref<1x576x8xf32, #tpu.memory_space<vmem>>, vector<1x64x8xf32>
      %70 = vector.shape_cast %69 : vector<1x64x8xf32> to vector<64x8xf32>
      %cst_51 = arith.constant dense<0.000000e+00> : vector<64x128xf32>
      %71 = tpu.matmul %66, %62, %cst_51 {dimension_numbers = #tpu.dot_dimension_numbers<[1], [0], [0], [1], [0, 0, 1, 1], [], []>} : vector<64x8xf32>, vector<8x128xf32>, vector<64x128xf32> -> vector<64x128xf32>
      %72 = arith.addf %58, %71 : vector<64x128xf32>
      %cst_52 = arith.constant dense<0.000000e+00> : vector<64x128xf32>
      %73 = tpu.matmul %70, %62, %cst_52 {dimension_numbers = #tpu.dot_dimension_numbers<[1], [0], [0], [1], [0, 0, 1, 1], [], []>} : vector<64x8xf32>, vector<8x128xf32>, vector<64x128xf32> -> vector<64x128xf32>
      %74 = arith.addf %60, %73 : vector<64x128xf32>
      %c5 = arith.constant 5 : index
      %c0_53 = arith.constant 0 : index
      %c0_54 = arith.constant 0 : index
      %75 = vector.load %arg3[%c5, %c0_53, %c0_54] : memref<25x8x128xf32, #tpu.memory_space<vmem>>, vector<1x8x128xf32>
      %76 = vector.shape_cast %75 : vector<1x8x128xf32> to vector<8x128xf32>
      %c16_i32 = arith.constant 16 : i32
      %77 = arith.addi %2, %c16_i32 : i32
      %c0_55 = arith.constant 0 : index
      %78 = arith.index_cast %77 : i32 to index
      %c0_56 = arith.constant 0 : index
      %79 = vector.load %arg1[%c0_55, %78, %c0_56] : memref<1x576x8xf32, #tpu.memory_space<vmem>>, vector<1x64x8xf32>
      %80 = vector.shape_cast %79 : vector<1x64x8xf32> to vector<64x8xf32>
      %c16_i32_57 = arith.constant 16 : i32
      %81 = arith.addi %2, %c16_i32_57 : i32
      %c0_58 = arith.constant 0 : index
      %82 = arith.index_cast %81 : i32 to index
      %c0_59 = arith.constant 0 : index
      %83 = vector.load %arg2[%c0_58, %82, %c0_59] : memref<1x576x8xf32, #tpu.memory_space<vmem>>, vector<1x64x8xf32>
      %84 = vector.shape_cast %83 : vector<1x64x8xf32> to vector<64x8xf32>
      %cst_60 = arith.constant dense<0.000000e+00> : vector<64x128xf32>
      %85 = tpu.matmul %80, %76, %cst_60 {dimension_numbers = #tpu.dot_dimension_numbers<[1], [0], [0], [1], [0, 0, 1, 1], [], []>} : vector<64x8xf32>, vector<8x128xf32>, vector<64x128xf32> -> vector<64x128xf32>
      %86 = arith.addf %72, %85 : vector<64x128xf32>
      %cst_61 = arith.constant dense<0.000000e+00> : vector<64x128xf32>
      %87 = tpu.matmul %84, %76, %cst_61 {dimension_numbers = #tpu.dot_dimension_numbers<[1], [0], [0], [1], [0, 0, 1, 1], [], []>} : vector<64x8xf32>, vector<8x128xf32>, vector<64x128xf32> -> vector<64x128xf32>
      %88 = arith.addf %74, %87 : vector<64x128xf32>
      %c6 = arith.constant 6 : index
      %c0_62 = arith.constant 0 : index
      %c0_63 = arith.constant 0 : index
      %89 = vector.load %arg3[%c6, %c0_62, %c0_63] : memref<25x8x128xf32, #tpu.memory_space<vmem>>, vector<1x8x128xf32>
      %90 = vector.shape_cast %89 : vector<1x8x128xf32> to vector<8x128xf32>
      %c16_i32_64 = arith.constant 16 : i32
      %91 = arith.addi %2, %c16_i32_64 : i32
      %c0_65 = arith.constant 0 : index
      %92 = arith.index_cast %91 : i32 to index
      %c0_66 = arith.constant 0 : index
      %93 = vector.load %arg2[%c0_65, %92, %c0_66] : memref<1x576x8xf32, #tpu.memory_space<vmem>>, vector<1x64x8xf32>
      %94 = vector.shape_cast %93 : vector<1x64x8xf32> to vector<64x8xf32>
      %c17_i32 = arith.constant 17 : i32
      %95 = arith.addi %2, %c17_i32 : i32
      %c0_67 = arith.constant 0 : index
      %96 = arith.index_cast %95 : i32 to index
      %c0_68 = arith.constant 0 : index
      %97 = vector.load %arg1[%c0_67, %96, %c0_68] : memref<1x576x8xf32, #tpu.memory_space<vmem>>, vector<1x64x8xf32>
      %98 = vector.shape_cast %97 : vector<1x64x8xf32> to vector<64x8xf32>
      %cst_69 = arith.constant dense<0.000000e+00> : vector<64x128xf32>
      %99 = tpu.matmul %94, %90, %cst_69 {dimension_numbers = #tpu.dot_dimension_numbers<[1], [0], [0], [1], [0, 0, 1, 1], [], []>} : vector<64x8xf32>, vector<8x128xf32>, vector<64x128xf32> -> vector<64x128xf32>
      %100 = arith.addf %86, %99 : vector<64x128xf32>
      %cst_70 = arith.constant dense<0.000000e+00> : vector<64x128xf32>
      %101 = tpu.matmul %98, %90, %cst_70 {dimension_numbers = #tpu.dot_dimension_numbers<[1], [0], [0], [1], [0, 0, 1, 1], [], []>} : vector<64x8xf32>, vector<8x128xf32>, vector<64x128xf32> -> vector<64x128xf32>
      %102 = arith.addf %88, %101 : vector<64x128xf32>
      %c7 = arith.constant 7 : index
      %c0_71 = arith.constant 0 : index
      %c0_72 = arith.constant 0 : index
      %103 = vector.load %arg3[%c7, %c0_71, %c0_72] : memref<25x8x128xf32, #tpu.memory_space<vmem>>, vector<1x8x128xf32>
      %104 = vector.shape_cast %103 : vector<1x8x128xf32> to vector<8x128xf32>
      %c17_i32_73 = arith.constant 17 : i32
      %105 = arith.addi %2, %c17_i32_73 : i32
      %c0_74 = arith.constant 0 : index
      %106 = arith.index_cast %105 : i32 to index
      %c0_75 = arith.constant 0 : index
      %107 = vector.load %arg1[%c0_74, %106, %c0_75] : memref<1x576x8xf32, #tpu.memory_space<vmem>>, vector<1x64x8xf32>
      %108 = vector.shape_cast %107 : vector<1x64x8xf32> to vector<64x8xf32>
      %c17_i32_76 = arith.constant 17 : i32
      %109 = arith.addi %2, %c17_i32_76 : i32
      %c0_77 = arith.constant 0 : index
      %110 = arith.index_cast %109 : i32 to index
      %c0_78 = arith.constant 0 : index
      %111 = vector.load %arg2[%c0_77, %110, %c0_78] : memref<1x576x8xf32, #tpu.memory_space<vmem>>, vector<1x64x8xf32>
      %112 = vector.shape_cast %111 : vector<1x64x8xf32> to vector<64x8xf32>
      %cst_79 = arith.constant dense<0.000000e+00> : vector<64x128xf32>
      %113 = tpu.matmul %108, %104, %cst_79 {dimension_numbers = #tpu.dot_dimension_numbers<[1], [0], [0], [1], [0, 0, 1, 1], [], []>} : vector<64x8xf32>, vector<8x128xf32>, vector<64x128xf32> -> vector<64x128xf32>
      %114 = arith.addf %100, %113 : vector<64x128xf32>
      %cst_80 = arith.constant dense<0.000000e+00> : vector<64x128xf32>
      %115 = tpu.matmul %112, %104, %cst_80 {dimension_numbers = #tpu.dot_dimension_numbers<[1], [0], [0], [1], [0, 0, 1, 1], [], []>} : vector<64x8xf32>, vector<8x128xf32>, vector<64x128xf32> -> vector<64x128xf32>
      %116 = arith.addf %102, %115 : vector<64x128xf32>
      %c8 = arith.constant 8 : index
      %c0_81 = arith.constant 0 : index
      %c0_82 = arith.constant 0 : index
      %117 = vector.load %arg3[%c8, %c0_81, %c0_82] : memref<25x8x128xf32, #tpu.memory_space<vmem>>, vector<1x8x128xf32>
      %118 = vector.shape_cast %117 : vector<1x8x128xf32> to vector<8x128xf32>
      %c17_i32_83 = arith.constant 17 : i32
      %119 = arith.addi %2, %c17_i32_83 : i32
      %c0_84 = arith.constant 0 : index
      %120 = arith.index_cast %119 : i32 to index
      %c0_85 = arith.constant 0 : index
      %121 = vector.load %arg2[%c0_84, %120, %c0_85] : memref<1x576x8xf32, #tpu.memory_space<vmem>>, vector<1x64x8xf32>
      %122 = vector.shape_cast %121 : vector<1x64x8xf32> to vector<64x8xf32>
      %c18_i32 = arith.constant 18 : i32
      %123 = arith.addi %2, %c18_i32 : i32
      %c0_86 = arith.constant 0 : index
      %124 = arith.index_cast %123 : i32 to index
      %c0_87 = arith.constant 0 : index
      %125 = vector.load %arg1[%c0_86, %124, %c0_87] : memref<1x576x8xf32, #tpu.memory_space<vmem>>, vector<1x64x8xf32>
      %126 = vector.shape_cast %125 : vector<1x64x8xf32> to vector<64x8xf32>
      %cst_88 = arith.constant dense<0.000000e+00> : vector<64x128xf32>
      %127 = tpu.matmul %122, %118, %cst_88 {dimension_numbers = #tpu.dot_dimension_numbers<[1], [0], [0], [1], [0, 0, 1, 1], [], []>} : vector<64x8xf32>, vector<8x128xf32>, vector<64x128xf32> -> vector<64x128xf32>
      %128 = arith.addf %114, %127 : vector<64x128xf32>
      %cst_89 = arith.constant dense<0.000000e+00> : vector<64x128xf32>
      %129 = tpu.matmul %126, %118, %cst_89 {dimension_numbers = #tpu.dot_dimension_numbers<[1], [0], [0], [1], [0, 0, 1, 1], [], []>} : vector<64x8xf32>, vector<8x128xf32>, vector<64x128xf32> -> vector<64x128xf32>
      %130 = arith.addf %116, %129 : vector<64x128xf32>
      %c9 = arith.constant 9 : index
      %c0_90 = arith.constant 0 : index
      %c0_91 = arith.constant 0 : index
      %131 = vector.load %arg3[%c9, %c0_90, %c0_91] : memref<25x8x128xf32, #tpu.memory_space<vmem>>, vector<1x8x128xf32>
      %132 = vector.shape_cast %131 : vector<1x8x128xf32> to vector<8x128xf32>
      %c18_i32_92 = arith.constant 18 : i32
      %133 = arith.addi %2, %c18_i32_92 : i32
      %c0_93 = arith.constant 0 : index
      %134 = arith.index_cast %133 : i32 to index
      %c0_94 = arith.constant 0 : index
      %135 = vector.load %arg1[%c0_93, %134, %c0_94] : memref<1x576x8xf32, #tpu.memory_space<vmem>>, vector<1x64x8xf32>
      %136 = vector.shape_cast %135 : vector<1x64x8xf32> to vector<64x8xf32>
      %c18_i32_95 = arith.constant 18 : i32
      %137 = arith.addi %2, %c18_i32_95 : i32
      %c0_96 = arith.constant 0 : index
      %138 = arith.index_cast %137 : i32 to index
      %c0_97 = arith.constant 0 : index
      %139 = vector.load %arg2[%c0_96, %138, %c0_97] : memref<1x576x8xf32, #tpu.memory_space<vmem>>, vector<1x64x8xf32>
      %140 = vector.shape_cast %139 : vector<1x64x8xf32> to vector<64x8xf32>
      %cst_98 = arith.constant dense<0.000000e+00> : vector<64x128xf32>
      %141 = tpu.matmul %136, %132, %cst_98 {dimension_numbers = #tpu.dot_dimension_numbers<[1], [0], [0], [1], [0, 0, 1, 1], [], []>} : vector<64x8xf32>, vector<8x128xf32>, vector<64x128xf32> -> vector<64x128xf32>
      %142 = arith.addf %128, %141 : vector<64x128xf32>
      %cst_99 = arith.constant dense<0.000000e+00> : vector<64x128xf32>
      %143 = tpu.matmul %140, %132, %cst_99 {dimension_numbers = #tpu.dot_dimension_numbers<[1], [0], [0], [1], [0, 0, 1, 1], [], []>} : vector<64x8xf32>, vector<8x128xf32>, vector<64x128xf32> -> vector<64x128xf32>
      %144 = arith.addf %130, %143 : vector<64x128xf32>
      %c10 = arith.constant 10 : index
      %c0_100 = arith.constant 0 : index
      %c0_101 = arith.constant 0 : index
      %145 = vector.load %arg3[%c10, %c0_100, %c0_101] : memref<25x8x128xf32, #tpu.memory_space<vmem>>, vector<1x8x128xf32>
      %146 = vector.shape_cast %145 : vector<1x8x128xf32> to vector<8x128xf32>
      %c32_i32 = arith.constant 32 : i32
      %147 = arith.addi %2, %c32_i32 : i32
      %c0_102 = arith.constant 0 : index
      %148 = arith.index_cast %147 : i32 to index
      %c0_103 = arith.constant 0 : index
      %149 = vector.load %arg1[%c0_102, %148, %c0_103] : memref<1x576x8xf32, #tpu.memory_space<vmem>>, vector<1x64x8xf32>
      %150 = vector.shape_cast %149 : vector<1x64x8xf32> to vector<64x8xf32>
      %c32_i32_104 = arith.constant 32 : i32
      %151 = arith.addi %2, %c32_i32_104 : i32
      %c0_105 = arith.constant 0 : index
      %152 = arith.index_cast %151 : i32 to index
      %c0_106 = arith.constant 0 : index
      %153 = vector.load %arg2[%c0_105, %152, %c0_106] : memref<1x576x8xf32, #tpu.memory_space<vmem>>, vector<1x64x8xf32>
      %154 = vector.shape_cast %153 : vector<1x64x8xf32> to vector<64x8xf32>
      %cst_107 = arith.constant dense<0.000000e+00> : vector<64x128xf32>
      %155 = tpu.matmul %150, %146, %cst_107 {dimension_numbers = #tpu.dot_dimension_numbers<[1], [0], [0], [1], [0, 0, 1, 1], [], []>} : vector<64x8xf32>, vector<8x128xf32>, vector<64x128xf32> -> vector<64x128xf32>
      %156 = arith.addf %142, %155 : vector<64x128xf32>
      %cst_108 = arith.constant dense<0.000000e+00> : vector<64x128xf32>
      %157 = tpu.matmul %154, %146, %cst_108 {dimension_numbers = #tpu.dot_dimension_numbers<[1], [0], [0], [1], [0, 0, 1, 1], [], []>} : vector<64x8xf32>, vector<8x128xf32>, vector<64x128xf32> -> vector<64x128xf32>
      %158 = arith.addf %144, %157 : vector<64x128xf32>
      %c11 = arith.constant 11 : index
      %c0_109 = arith.constant 0 : index
      %c0_110 = arith.constant 0 : index
      %159 = vector.load %arg3[%c11, %c0_109, %c0_110] : memref<25x8x128xf32, #tpu.memory_space<vmem>>, vector<1x8x128xf32>
      %160 = vector.shape_cast %159 : vector<1x8x128xf32> to vector<8x128xf32>
      %c32_i32_111 = arith.constant 32 : i32
      %161 = arith.addi %2, %c32_i32_111 : i32
      %c0_112 = arith.constant 0 : index
      %162 = arith.index_cast %161 : i32 to index
      %c0_113 = arith.constant 0 : index
      %163 = vector.load %arg2[%c0_112, %162, %c0_113] : memref<1x576x8xf32, #tpu.memory_space<vmem>>, vector<1x64x8xf32>
      %164 = vector.shape_cast %163 : vector<1x64x8xf32> to vector<64x8xf32>
      %c33_i32 = arith.constant 33 : i32
      %165 = arith.addi %2, %c33_i32 : i32
      %c0_114 = arith.constant 0 : index
      %166 = arith.index_cast %165 : i32 to index
      %c0_115 = arith.constant 0 : index
      %167 = vector.load %arg1[%c0_114, %166, %c0_115] : memref<1x576x8xf32, #tpu.memory_space<vmem>>, vector<1x64x8xf32>
      %168 = vector.shape_cast %167 : vector<1x64x8xf32> to vector<64x8xf32>
      %cst_116 = arith.constant dense<0.000000e+00> : vector<64x128xf32>
      %169 = tpu.matmul %164, %160, %cst_116 {dimension_numbers = #tpu.dot_dimension_numbers<[1], [0], [0], [1], [0, 0, 1, 1], [], []>} : vector<64x8xf32>, vector<8x128xf32>, vector<64x128xf32> -> vector<64x128xf32>
      %170 = arith.addf %156, %169 : vector<64x128xf32>
      %cst_117 = arith.constant dense<0.000000e+00> : vector<64x128xf32>
      %171 = tpu.matmul %168, %160, %cst_117 {dimension_numbers = #tpu.dot_dimension_numbers<[1], [0], [0], [1], [0, 0, 1, 1], [], []>} : vector<64x8xf32>, vector<8x128xf32>, vector<64x128xf32> -> vector<64x128xf32>
      %172 = arith.addf %158, %171 : vector<64x128xf32>
      %c12 = arith.constant 12 : index
      %c0_118 = arith.constant 0 : index
      %c0_119 = arith.constant 0 : index
      %173 = vector.load %arg3[%c12, %c0_118, %c0_119] : memref<25x8x128xf32, #tpu.memory_space<vmem>>, vector<1x8x128xf32>
      %174 = vector.shape_cast %173 : vector<1x8x128xf32> to vector<8x128xf32>
      %c33_i32_120 = arith.constant 33 : i32
      %175 = arith.addi %2, %c33_i32_120 : i32
      %c0_121 = arith.constant 0 : index
      %176 = arith.index_cast %175 : i32 to index
      %c0_122 = arith.constant 0 : index
      %177 = vector.load %arg1[%c0_121, %176, %c0_122] : memref<1x576x8xf32, #tpu.memory_space<vmem>>, vector<1x64x8xf32>
      %178 = vector.shape_cast %177 : vector<1x64x8xf32> to vector<64x8xf32>
      %c33_i32_123 = arith.constant 33 : i32
      %179 = arith.addi %2, %c33_i32_123 : i32
      %c0_124 = arith.constant 0 : index
      %180 = arith.index_cast %179 : i32 to index
      %c0_125 = arith.constant 0 : index
      %181 = vector.load %arg2[%c0_124, %180, %c0_125] : memref<1x576x8xf32, #tpu.memory_space<vmem>>, vector<1x64x8xf32>
      %182 = vector.shape_cast %181 : vector<1x64x8xf32> to vector<64x8xf32>
      %cst_126 = arith.constant dense<0.000000e+00> : vector<64x128xf32>
      %183 = tpu.matmul %178, %174, %cst_126 {dimension_numbers = #tpu.dot_dimension_numbers<[1], [0], [0], [1], [0, 0, 1, 1], [], []>} : vector<64x8xf32>, vector<8x128xf32>, vector<64x128xf32> -> vector<64x128xf32>
      %184 = arith.addf %170, %183 : vector<64x128xf32>
      %cst_127 = arith.constant dense<0.000000e+00> : vector<64x128xf32>
      %185 = tpu.matmul %182, %174, %cst_127 {dimension_numbers = #tpu.dot_dimension_numbers<[1], [0], [0], [1], [0, 0, 1, 1], [], []>} : vector<64x8xf32>, vector<8x128xf32>, vector<64x128xf32> -> vector<64x128xf32>
      %186 = arith.addf %172, %185 : vector<64x128xf32>
      %c13 = arith.constant 13 : index
      %c0_128 = arith.constant 0 : index
      %c0_129 = arith.constant 0 : index
      %187 = vector.load %arg3[%c13, %c0_128, %c0_129] : memref<25x8x128xf32, #tpu.memory_space<vmem>>, vector<1x8x128xf32>
      %188 = vector.shape_cast %187 : vector<1x8x128xf32> to vector<8x128xf32>
      %c33_i32_130 = arith.constant 33 : i32
      %189 = arith.addi %2, %c33_i32_130 : i32
      %c0_131 = arith.constant 0 : index
      %190 = arith.index_cast %189 : i32 to index
      %c0_132 = arith.constant 0 : index
      %191 = vector.load %arg2[%c0_131, %190, %c0_132] : memref<1x576x8xf32, #tpu.memory_space<vmem>>, vector<1x64x8xf32>
      %192 = vector.shape_cast %191 : vector<1x64x8xf32> to vector<64x8xf32>
      %c34_i32 = arith.constant 34 : i32
      %193 = arith.addi %2, %c34_i32 : i32
      %c0_133 = arith.constant 0 : index
      %194 = arith.index_cast %193 : i32 to index
      %c0_134 = arith.constant 0 : index
      %195 = vector.load %arg1[%c0_133, %194, %c0_134] : memref<1x576x8xf32, #tpu.memory_space<vmem>>, vector<1x64x8xf32>
      %196 = vector.shape_cast %195 : vector<1x64x8xf32> to vector<64x8xf32>
      %cst_135 = arith.constant dense<0.000000e+00> : vector<64x128xf32>
      %197 = tpu.matmul %192, %188, %cst_135 {dimension_numbers = #tpu.dot_dimension_numbers<[1], [0], [0], [1], [0, 0, 1, 1], [], []>} : vector<64x8xf32>, vector<8x128xf32>, vector<64x128xf32> -> vector<64x128xf32>
      %198 = arith.addf %184, %197 : vector<64x128xf32>
      %cst_136 = arith.constant dense<0.000000e+00> : vector<64x128xf32>
      %199 = tpu.matmul %196, %188, %cst_136 {dimension_numbers = #tpu.dot_dimension_numbers<[1], [0], [0], [1], [0, 0, 1, 1], [], []>} : vector<64x8xf32>, vector<8x128xf32>, vector<64x128xf32> -> vector<64x128xf32>
      %200 = arith.addf %186, %199 : vector<64x128xf32>
      %c14 = arith.constant 14 : index
      %c0_137 = arith.constant 0 : index
      %c0_138 = arith.constant 0 : index
      %201 = vector.load %arg3[%c14, %c0_137, %c0_138] : memref<25x8x128xf32, #tpu.memory_space<vmem>>, vector<1x8x128xf32>
      %202 = vector.shape_cast %201 : vector<1x8x128xf32> to vector<8x128xf32>
      %c34_i32_139 = arith.constant 34 : i32
      %203 = arith.addi %2, %c34_i32_139 : i32
      %c0_140 = arith.constant 0 : index
      %204 = arith.index_cast %203 : i32 to index
      %c0_141 = arith.constant 0 : index
      %205 = vector.load %arg1[%c0_140, %204, %c0_141] : memref<1x576x8xf32, #tpu.memory_space<vmem>>, vector<1x64x8xf32>
      %206 = vector.shape_cast %205 : vector<1x64x8xf32> to vector<64x8xf32>
      %c34_i32_142 = arith.constant 34 : i32
      %207 = arith.addi %2, %c34_i32_142 : i32
      %c0_143 = arith.constant 0 : index
      %208 = arith.index_cast %207 : i32 to index
      %c0_144 = arith.constant 0 : index
      %209 = vector.load %arg2[%c0_143, %208, %c0_144] : memref<1x576x8xf32, #tpu.memory_space<vmem>>, vector<1x64x8xf32>
      %210 = vector.shape_cast %209 : vector<1x64x8xf32> to vector<64x8xf32>
      %cst_145 = arith.constant dense<0.000000e+00> : vector<64x128xf32>
      %211 = tpu.matmul %206, %202, %cst_145 {dimension_numbers = #tpu.dot_dimension_numbers<[1], [0], [0], [1], [0, 0, 1, 1], [], []>} : vector<64x8xf32>, vector<8x128xf32>, vector<64x128xf32> -> vector<64x128xf32>
      %212 = arith.addf %198, %211 : vector<64x128xf32>
      %cst_146 = arith.constant dense<0.000000e+00> : vector<64x128xf32>
      %213 = tpu.matmul %210, %202, %cst_146 {dimension_numbers = #tpu.dot_dimension_numbers<[1], [0], [0], [1], [0, 0, 1, 1], [], []>} : vector<64x8xf32>, vector<8x128xf32>, vector<64x128xf32> -> vector<64x128xf32>
      %214 = arith.addf %200, %213 : vector<64x128xf32>
      %c15 = arith.constant 15 : index
      %c0_147 = arith.constant 0 : index
      %c0_148 = arith.constant 0 : index
      %215 = vector.load %arg3[%c15, %c0_147, %c0_148] : memref<25x8x128xf32, #tpu.memory_space<vmem>>, vector<1x8x128xf32>
      %216 = vector.shape_cast %215 : vector<1x8x128xf32> to vector<8x128xf32>
      %c48_i32 = arith.constant 48 : i32
      %217 = arith.addi %2, %c48_i32 : i32
      %c0_149 = arith.constant 0 : index
      %218 = arith.index_cast %217 : i32 to index
      %c0_150 = arith.constant 0 : index
      %219 = vector.load %arg1[%c0_149, %218, %c0_150] : memref<1x576x8xf32, #tpu.memory_space<vmem>>, vector<1x64x8xf32>
      %220 = vector.shape_cast %219 : vector<1x64x8xf32> to vector<64x8xf32>
      %c48_i32_151 = arith.constant 48 : i32
      %221 = arith.addi %2, %c48_i32_151 : i32
      %c0_152 = arith.constant 0 : index
      %222 = arith.index_cast %221 : i32 to index
      %c0_153 = arith.constant 0 : index
      %223 = vector.load %arg2[%c0_152, %222, %c0_153] : memref<1x576x8xf32, #tpu.memory_space<vmem>>, vector<1x64x8xf32>
      %224 = vector.shape_cast %223 : vector<1x64x8xf32> to vector<64x8xf32>
      %cst_154 = arith.constant dense<0.000000e+00> : vector<64x128xf32>
      %225 = tpu.matmul %220, %216, %cst_154 {dimension_numbers = #tpu.dot_dimension_numbers<[1], [0], [0], [1], [0, 0, 1, 1], [], []>} : vector<64x8xf32>, vector<8x128xf32>, vector<64x128xf32> -> vector<64x128xf32>
      %226 = arith.addf %212, %225 : vector<64x128xf32>
      %cst_155 = arith.constant dense<0.000000e+00> : vector<64x128xf32>
      %227 = tpu.matmul %224, %216, %cst_155 {dimension_numbers = #tpu.dot_dimension_numbers<[1], [0], [0], [1], [0, 0, 1, 1], [], []>} : vector<64x8xf32>, vector<8x128xf32>, vector<64x128xf32> -> vector<64x128xf32>
      %228 = arith.addf %214, %227 : vector<64x128xf32>
      %c16 = arith.constant 16 : index
      %c0_156 = arith.constant 0 : index
      %c0_157 = arith.constant 0 : index
      %229 = vector.load %arg3[%c16, %c0_156, %c0_157] : memref<25x8x128xf32, #tpu.memory_space<vmem>>, vector<1x8x128xf32>
      %230 = vector.shape_cast %229 : vector<1x8x128xf32> to vector<8x128xf32>
      %c48_i32_158 = arith.constant 48 : i32
      %231 = arith.addi %2, %c48_i32_158 : i32
      %c0_159 = arith.constant 0 : index
      %232 = arith.index_cast %231 : i32 to index
      %c0_160 = arith.constant 0 : index
      %233 = vector.load %arg2[%c0_159, %232, %c0_160] : memref<1x576x8xf32, #tpu.memory_space<vmem>>, vector<1x64x8xf32>
      %234 = vector.shape_cast %233 : vector<1x64x8xf32> to vector<64x8xf32>
      %c49_i32 = arith.constant 49 : i32
      %235 = arith.addi %2, %c49_i32 : i32
      %c0_161 = arith.constant 0 : index
      %236 = arith.index_cast %235 : i32 to index
      %c0_162 = arith.constant 0 : index
      %237 = vector.load %arg1[%c0_161, %236, %c0_162] : memref<1x576x8xf32, #tpu.memory_space<vmem>>, vector<1x64x8xf32>
      %238 = vector.shape_cast %237 : vector<1x64x8xf32> to vector<64x8xf32>
      %cst_163 = arith.constant dense<0.000000e+00> : vector<64x128xf32>
      %239 = tpu.matmul %234, %230, %cst_163 {dimension_numbers = #tpu.dot_dimension_numbers<[1], [0], [0], [1], [0, 0, 1, 1], [], []>} : vector<64x8xf32>, vector<8x128xf32>, vector<64x128xf32> -> vector<64x128xf32>
      %240 = arith.addf %226, %239 : vector<64x128xf32>
      %cst_164 = arith.constant dense<0.000000e+00> : vector<64x128xf32>
      %241 = tpu.matmul %238, %230, %cst_164 {dimension_numbers = #tpu.dot_dimension_numbers<[1], [0], [0], [1], [0, 0, 1, 1], [], []>} : vector<64x8xf32>, vector<8x128xf32>, vector<64x128xf32> -> vector<64x128xf32>
      %242 = arith.addf %228, %241 : vector<64x128xf32>
      %c17 = arith.constant 17 : index
      %c0_165 = arith.constant 0 : index
      %c0_166 = arith.constant 0 : index
      %243 = vector.load %arg3[%c17, %c0_165, %c0_166] : memref<25x8x128xf32, #tpu.memory_space<vmem>>, vector<1x8x128xf32>
      %244 = vector.shape_cast %243 : vector<1x8x128xf32> to vector<8x128xf32>
      %c49_i32_167 = arith.constant 49 : i32
      %245 = arith.addi %2, %c49_i32_167 : i32
      %c0_168 = arith.constant 0 : index
      %246 = arith.index_cast %245 : i32 to index
      %c0_169 = arith.constant 0 : index
      %247 = vector.load %arg1[%c0_168, %246, %c0_169] : memref<1x576x8xf32, #tpu.memory_space<vmem>>, vector<1x64x8xf32>
      %248 = vector.shape_cast %247 : vector<1x64x8xf32> to vector<64x8xf32>
      %c49_i32_170 = arith.constant 49 : i32
      %249 = arith.addi %2, %c49_i32_170 : i32
      %c0_171 = arith.constant 0 : index
      %250 = arith.index_cast %249 : i32 to index
      %c0_172 = arith.constant 0 : index
      %251 = vector.load %arg2[%c0_171, %250, %c0_172] : memref<1x576x8xf32, #tpu.memory_space<vmem>>, vector<1x64x8xf32>
      %252 = vector.shape_cast %251 : vector<1x64x8xf32> to vector<64x8xf32>
      %cst_173 = arith.constant dense<0.000000e+00> : vector<64x128xf32>
      %253 = tpu.matmul %248, %244, %cst_173 {dimension_numbers = #tpu.dot_dimension_numbers<[1], [0], [0], [1], [0, 0, 1, 1], [], []>} : vector<64x8xf32>, vector<8x128xf32>, vector<64x128xf32> -> vector<64x128xf32>
      %254 = arith.addf %240, %253 : vector<64x128xf32>
      %cst_174 = arith.constant dense<0.000000e+00> : vector<64x128xf32>
      %255 = tpu.matmul %252, %244, %cst_174 {dimension_numbers = #tpu.dot_dimension_numbers<[1], [0], [0], [1], [0, 0, 1, 1], [], []>} : vector<64x8xf32>, vector<8x128xf32>, vector<64x128xf32> -> vector<64x128xf32>
      %256 = arith.addf %242, %255 : vector<64x128xf32>
      %c18 = arith.constant 18 : index
      %c0_175 = arith.constant 0 : index
      %c0_176 = arith.constant 0 : index
      %257 = vector.load %arg3[%c18, %c0_175, %c0_176] : memref<25x8x128xf32, #tpu.memory_space<vmem>>, vector<1x8x128xf32>
      %258 = vector.shape_cast %257 : vector<1x8x128xf32> to vector<8x128xf32>
      %c49_i32_177 = arith.constant 49 : i32
      %259 = arith.addi %2, %c49_i32_177 : i32
      %c0_178 = arith.constant 0 : index
      %260 = arith.index_cast %259 : i32 to index
      %c0_179 = arith.constant 0 : index
      %261 = vector.load %arg2[%c0_178, %260, %c0_179] : memref<1x576x8xf32, #tpu.memory_space<vmem>>, vector<1x64x8xf32>
      %262 = vector.shape_cast %261 : vector<1x64x8xf32> to vector<64x8xf32>
      %c50_i32 = arith.constant 50 : i32
      %263 = arith.addi %2, %c50_i32 : i32
      %c0_180 = arith.constant 0 : index
      %264 = arith.index_cast %263 : i32 to index
      %c0_181 = arith.constant 0 : index
      %265 = vector.load %arg1[%c0_180, %264, %c0_181] : memref<1x576x8xf32, #tpu.memory_space<vmem>>, vector<1x64x8xf32>
      %266 = vector.shape_cast %265 : vector<1x64x8xf32> to vector<64x8xf32>
      %cst_182 = arith.constant dense<0.000000e+00> : vector<64x128xf32>
      %267 = tpu.matmul %262, %258, %cst_182 {dimension_numbers = #tpu.dot_dimension_numbers<[1], [0], [0], [1], [0, 0, 1, 1], [], []>} : vector<64x8xf32>, vector<8x128xf32>, vector<64x128xf32> -> vector<64x128xf32>
      %268 = arith.addf %254, %267 : vector<64x128xf32>
      %cst_183 = arith.constant dense<0.000000e+00> : vector<64x128xf32>
      %269 = tpu.matmul %266, %258, %cst_183 {dimension_numbers = #tpu.dot_dimension_numbers<[1], [0], [0], [1], [0, 0, 1, 1], [], []>} : vector<64x8xf32>, vector<8x128xf32>, vector<64x128xf32> -> vector<64x128xf32>
      %270 = arith.addf %256, %269 : vector<64x128xf32>
      %c19 = arith.constant 19 : index
      %c0_184 = arith.constant 0 : index
      %c0_185 = arith.constant 0 : index
      %271 = vector.load %arg3[%c19, %c0_184, %c0_185] : memref<25x8x128xf32, #tpu.memory_space<vmem>>, vector<1x8x128xf32>
      %272 = vector.shape_cast %271 : vector<1x8x128xf32> to vector<8x128xf32>
      %c50_i32_186 = arith.constant 50 : i32
      %273 = arith.addi %2, %c50_i32_186 : i32
      %c0_187 = arith.constant 0 : index
      %274 = arith.index_cast %273 : i32 to index
      %c0_188 = arith.constant 0 : index
      %275 = vector.load %arg1[%c0_187, %274, %c0_188] : memref<1x576x8xf32, #tpu.memory_space<vmem>>, vector<1x64x8xf32>
      %276 = vector.shape_cast %275 : vector<1x64x8xf32> to vector<64x8xf32>
      %c50_i32_189 = arith.constant 50 : i32
      %277 = arith.addi %2, %c50_i32_189 : i32
      %c0_190 = arith.constant 0 : index
      %278 = arith.index_cast %277 : i32 to index
      %c0_191 = arith.constant 0 : index
      %279 = vector.load %arg2[%c0_190, %278, %c0_191] : memref<1x576x8xf32, #tpu.memory_space<vmem>>, vector<1x64x8xf32>
      %280 = vector.shape_cast %279 : vector<1x64x8xf32> to vector<64x8xf32>
      %cst_192 = arith.constant dense<0.000000e+00> : vector<64x128xf32>
      %281 = tpu.matmul %276, %272, %cst_192 {dimension_numbers = #tpu.dot_dimension_numbers<[1], [0], [0], [1], [0, 0, 1, 1], [], []>} : vector<64x8xf32>, vector<8x128xf32>, vector<64x128xf32> -> vector<64x128xf32>
      %282 = arith.addf %268, %281 : vector<64x128xf32>
      %cst_193 = arith.constant dense<0.000000e+00> : vector<64x128xf32>
      %283 = tpu.matmul %280, %272, %cst_193 {dimension_numbers = #tpu.dot_dimension_numbers<[1], [0], [0], [1], [0, 0, 1, 1], [], []>} : vector<64x8xf32>, vector<8x128xf32>, vector<64x128xf32> -> vector<64x128xf32>
      %284 = arith.addf %270, %283 : vector<64x128xf32>
      %c20 = arith.constant 20 : index
      %c0_194 = arith.constant 0 : index
      %c0_195 = arith.constant 0 : index
      %285 = vector.load %arg3[%c20, %c0_194, %c0_195] : memref<25x8x128xf32, #tpu.memory_space<vmem>>, vector<1x8x128xf32>
      %286 = vector.shape_cast %285 : vector<1x8x128xf32> to vector<8x128xf32>
      %c64_i32_196 = arith.constant 64 : i32
      %287 = arith.addi %2, %c64_i32_196 : i32
      %c0_197 = arith.constant 0 : index
      %288 = arith.index_cast %287 : i32 to index
      %c0_198 = arith.constant 0 : index
      %289 = vector.load %arg1[%c0_197, %288, %c0_198] : memref<1x576x8xf32, #tpu.memory_space<vmem>>, vector<1x64x8xf32>
      %290 = vector.shape_cast %289 : vector<1x64x8xf32> to vector<64x8xf32>
      %c64_i32_199 = arith.constant 64 : i32
      %291 = arith.addi %2, %c64_i32_199 : i32
      %c0_200 = arith.constant 0 : index
      %292 = arith.index_cast %291 : i32 to index
      %c0_201 = arith.constant 0 : index
      %293 = vector.load %arg2[%c0_200, %292, %c0_201] : memref<1x576x8xf32, #tpu.memory_space<vmem>>, vector<1x64x8xf32>
      %294 = vector.shape_cast %293 : vector<1x64x8xf32> to vector<64x8xf32>
      %cst_202 = arith.constant dense<0.000000e+00> : vector<64x128xf32>
      %295 = tpu.matmul %290, %286, %cst_202 {dimension_numbers = #tpu.dot_dimension_numbers<[1], [0], [0], [1], [0, 0, 1, 1], [], []>} : vector<64x8xf32>, vector<8x128xf32>, vector<64x128xf32> -> vector<64x128xf32>
      %296 = arith.addf %282, %295 : vector<64x128xf32>
      %cst_203 = arith.constant dense<0.000000e+00> : vector<64x128xf32>
      %297 = tpu.matmul %294, %286, %cst_203 {dimension_numbers = #tpu.dot_dimension_numbers<[1], [0], [0], [1], [0, 0, 1, 1], [], []>} : vector<64x8xf32>, vector<8x128xf32>, vector<64x128xf32> -> vector<64x128xf32>
      %298 = arith.addf %284, %297 : vector<64x128xf32>
      %c21 = arith.constant 21 : index
      %c0_204 = arith.constant 0 : index
      %c0_205 = arith.constant 0 : index
      %299 = vector.load %arg3[%c21, %c0_204, %c0_205] : memref<25x8x128xf32, #tpu.memory_space<vmem>>, vector<1x8x128xf32>
      %300 = vector.shape_cast %299 : vector<1x8x128xf32> to vector<8x128xf32>
      %c64_i32_206 = arith.constant 64 : i32
      %301 = arith.addi %2, %c64_i32_206 : i32
      %c0_207 = arith.constant 0 : index
      %302 = arith.index_cast %301 : i32 to index
      %c0_208 = arith.constant 0 : index
      %303 = vector.load %arg2[%c0_207, %302, %c0_208] : memref<1x576x8xf32, #tpu.memory_space<vmem>>, vector<1x64x8xf32>
      %304 = vector.shape_cast %303 : vector<1x64x8xf32> to vector<64x8xf32>
      %c65_i32 = arith.constant 65 : i32
      %305 = arith.addi %2, %c65_i32 : i32
      %c0_209 = arith.constant 0 : index
      %306 = arith.index_cast %305 : i32 to index
      %c0_210 = arith.constant 0 : index
      %307 = vector.load %arg1[%c0_209, %306, %c0_210] : memref<1x576x8xf32, #tpu.memory_space<vmem>>, vector<1x64x8xf32>
      %308 = vector.shape_cast %307 : vector<1x64x8xf32> to vector<64x8xf32>
      %cst_211 = arith.constant dense<0.000000e+00> : vector<64x128xf32>
      %309 = tpu.matmul %304, %300, %cst_211 {dimension_numbers = #tpu.dot_dimension_numbers<[1], [0], [0], [1], [0, 0, 1, 1], [], []>} : vector<64x8xf32>, vector<8x128xf32>, vector<64x128xf32> -> vector<64x128xf32>
      %310 = arith.addf %296, %309 : vector<64x128xf32>
      %cst_212 = arith.constant dense<0.000000e+00> : vector<64x128xf32>
      %311 = tpu.matmul %308, %300, %cst_212 {dimension_numbers = #tpu.dot_dimension_numbers<[1], [0], [0], [1], [0, 0, 1, 1], [], []>} : vector<64x8xf32>, vector<8x128xf32>, vector<64x128xf32> -> vector<64x128xf32>
      %312 = arith.addf %298, %311 : vector<64x128xf32>
      %c22 = arith.constant 22 : index
      %c0_213 = arith.constant 0 : index
      %c0_214 = arith.constant 0 : index
      %313 = vector.load %arg3[%c22, %c0_213, %c0_214] : memref<25x8x128xf32, #tpu.memory_space<vmem>>, vector<1x8x128xf32>
      %314 = vector.shape_cast %313 : vector<1x8x128xf32> to vector<8x128xf32>
      %c65_i32_215 = arith.constant 65 : i32
      %315 = arith.addi %2, %c65_i32_215 : i32
      %c0_216 = arith.constant 0 : index
      %316 = arith.index_cast %315 : i32 to index
      %c0_217 = arith.constant 0 : index
      %317 = vector.load %arg1[%c0_216, %316, %c0_217] : memref<1x576x8xf32, #tpu.memory_space<vmem>>, vector<1x64x8xf32>
      %318 = vector.shape_cast %317 : vector<1x64x8xf32> to vector<64x8xf32>
      %c65_i32_218 = arith.constant 65 : i32
      %319 = arith.addi %2, %c65_i32_218 : i32
      %c0_219 = arith.constant 0 : index
      %320 = arith.index_cast %319 : i32 to index
      %c0_220 = arith.constant 0 : index
      %321 = vector.load %arg2[%c0_219, %320, %c0_220] : memref<1x576x8xf32, #tpu.memory_space<vmem>>, vector<1x64x8xf32>
      %322 = vector.shape_cast %321 : vector<1x64x8xf32> to vector<64x8xf32>
      %cst_221 = arith.constant dense<0.000000e+00> : vector<64x128xf32>
      %323 = tpu.matmul %318, %314, %cst_221 {dimension_numbers = #tpu.dot_dimension_numbers<[1], [0], [0], [1], [0, 0, 1, 1], [], []>} : vector<64x8xf32>, vector<8x128xf32>, vector<64x128xf32> -> vector<64x128xf32>
      %324 = arith.addf %310, %323 : vector<64x128xf32>
      %cst_222 = arith.constant dense<0.000000e+00> : vector<64x128xf32>
      %325 = tpu.matmul %322, %314, %cst_222 {dimension_numbers = #tpu.dot_dimension_numbers<[1], [0], [0], [1], [0, 0, 1, 1], [], []>} : vector<64x8xf32>, vector<8x128xf32>, vector<64x128xf32> -> vector<64x128xf32>
      %326 = arith.addf %312, %325 : vector<64x128xf32>
      %c23 = arith.constant 23 : index
      %c0_223 = arith.constant 0 : index
      %c0_224 = arith.constant 0 : index
      %327 = vector.load %arg3[%c23, %c0_223, %c0_224] : memref<25x8x128xf32, #tpu.memory_space<vmem>>, vector<1x8x128xf32>
      %328 = vector.shape_cast %327 : vector<1x8x128xf32> to vector<8x128xf32>
      %c65_i32_225 = arith.constant 65 : i32
      %329 = arith.addi %2, %c65_i32_225 : i32
      %c0_226 = arith.constant 0 : index
      %330 = arith.index_cast %329 : i32 to index
      %c0_227 = arith.constant 0 : index
      %331 = vector.load %arg2[%c0_226, %330, %c0_227] : memref<1x576x8xf32, #tpu.memory_space<vmem>>, vector<1x64x8xf32>
      %332 = vector.shape_cast %331 : vector<1x64x8xf32> to vector<64x8xf32>
      %c66_i32 = arith.constant 66 : i32
      %333 = arith.addi %2, %c66_i32 : i32
      %c0_228 = arith.constant 0 : index
      %334 = arith.index_cast %333 : i32 to index
      %c0_229 = arith.constant 0 : index
      %335 = vector.load %arg1[%c0_228, %334, %c0_229] : memref<1x576x8xf32, #tpu.memory_space<vmem>>, vector<1x64x8xf32>
      %336 = vector.shape_cast %335 : vector<1x64x8xf32> to vector<64x8xf32>
      %cst_230 = arith.constant dense<0.000000e+00> : vector<64x128xf32>
      %337 = tpu.matmul %332, %328, %cst_230 {dimension_numbers = #tpu.dot_dimension_numbers<[1], [0], [0], [1], [0, 0, 1, 1], [], []>} : vector<64x8xf32>, vector<8x128xf32>, vector<64x128xf32> -> vector<64x128xf32>
      %338 = arith.addf %324, %337 : vector<64x128xf32>
      %cst_231 = arith.constant dense<0.000000e+00> : vector<64x128xf32>
      %339 = tpu.matmul %336, %328, %cst_231 {dimension_numbers = #tpu.dot_dimension_numbers<[1], [0], [0], [1], [0, 0, 1, 1], [], []>} : vector<64x8xf32>, vector<8x128xf32>, vector<64x128xf32> -> vector<64x128xf32>
      %340 = arith.addf %326, %339 : vector<64x128xf32>
      %c24 = arith.constant 24 : index
      %c0_232 = arith.constant 0 : index
      %c0_233 = arith.constant 0 : index
      %341 = vector.load %arg3[%c24, %c0_232, %c0_233] : memref<25x8x128xf32, #tpu.memory_space<vmem>>, vector<1x8x128xf32>
      %342 = vector.shape_cast %341 : vector<1x8x128xf32> to vector<8x128xf32>
      %c66_i32_234 = arith.constant 66 : i32
      %343 = arith.addi %2, %c66_i32_234 : i32
      %c0_235 = arith.constant 0 : index
      %344 = arith.index_cast %343 : i32 to index
      %c0_236 = arith.constant 0 : index
      %345 = vector.load %arg1[%c0_235, %344, %c0_236] : memref<1x576x8xf32, #tpu.memory_space<vmem>>, vector<1x64x8xf32>
      %346 = vector.shape_cast %345 : vector<1x64x8xf32> to vector<64x8xf32>
      %c66_i32_237 = arith.constant 66 : i32
      %347 = arith.addi %2, %c66_i32_237 : i32
      %c0_238 = arith.constant 0 : index
      %348 = arith.index_cast %347 : i32 to index
      %c0_239 = arith.constant 0 : index
      %349 = vector.load %arg2[%c0_238, %348, %c0_239] : memref<1x576x8xf32, #tpu.memory_space<vmem>>, vector<1x64x8xf32>
      %350 = vector.shape_cast %349 : vector<1x64x8xf32> to vector<64x8xf32>
      %cst_240 = arith.constant dense<0.000000e+00> : vector<64x128xf32>
      %351 = tpu.matmul %346, %342, %cst_240 {dimension_numbers = #tpu.dot_dimension_numbers<[1], [0], [0], [1], [0, 0, 1, 1], [], []>} : vector<64x8xf32>, vector<8x128xf32>, vector<64x128xf32> -> vector<64x128xf32>
      %352 = arith.addf %338, %351 : vector<64x128xf32>
      %cst_241 = arith.constant dense<0.000000e+00> : vector<64x128xf32>
      %353 = tpu.matmul %350, %342, %cst_241 {dimension_numbers = #tpu.dot_dimension_numbers<[1], [0], [0], [1], [0, 0, 1, 1], [], []>} : vector<64x8xf32>, vector<8x128xf32>, vector<64x128xf32> -> vector<64x128xf32>
      %354 = arith.addf %340, %353 : vector<64x128xf32>
      %355 = arith.maximumf %352, %354 : vector<64x128xf32>
      %356 = vector.broadcast %0 : vector<1x128xf32> to vector<64x128xf32>
      %357 = arith.addf %355, %356 : vector<64x128xf32>
      %cst_242 = arith.constant 0.000000e+00 : f32
      %358 = vector.broadcast %cst_242 : f32 to vector<64x128xf32>
      %359 = arith.maximumf %357, %358 : vector<64x128xf32>
      %360 = vector.shape_cast %359 : vector<64x128xf32> to vector<2x2x16x128xf32>
      %361 = vector.extract_strided_slice %360 {offsets = [0, 0, 0, 0], sizes = [2, 1, 16, 128], strides = [1, 1, 1, 1]} : vector<2x2x16x128xf32> to vector<2x1x16x128xf32>
      %362 = vector.shape_cast %361 : vector<2x1x16x128xf32> to vector<2x16x128xf32>
      %363 = vector.extract_strided_slice %360 {offsets = [0, 1, 0, 0], sizes = [2, 1, 16, 128], strides = [1, 1, 1, 1]} : vector<2x2x16x128xf32> to vector<2x1x16x128xf32>
      %364 = vector.shape_cast %363 : vector<2x1x16x128xf32> to vector<2x16x128xf32>
      %365 = arith.maximumf %362, %364 : vector<2x16x128xf32>
      %c2_i32_243 = arith.constant 2 : i32
      %366 = arith.muli %arg6, %c2_i32_243 : i32
      %c0_244 = arith.constant 0 : index
      %367 = arith.index_cast %366 : i32 to index
      %c0_245 = arith.constant 0 : index
      %c0_246 = arith.constant 0 : index
      %368 = vector.load %arg5[%c0_244, %367, %c0_245, %c0_246] : memref<1x14x16x128xf32, #tpu.memory_space<vmem>>, vector<1x2x16x128xf32>
      %369 = vector.shape_cast %368 : vector<1x2x16x128xf32> to vector<2x16x128xf32>
      %370 = vector.shape_cast %365 : vector<2x16x128xf32> to vector<1x2x16x128xf32>
      tpu.vector_store %arg5[%c0_244, %367, %c0_245, %c0_246], %370 {strides = array<i32>} : memref<1x14x16x128xf32, #tpu.memory_space<vmem>>, vector<1x2x16x128xf32>,
    }
    %c7_i32_1 = arith.constant 7 : i32
    return
  }
  func.func @transform_0(%arg0: i32) -> (i32, i32, i32) {
    %c0_i32 = arith.constant 0 : i32
    %c0_i32_0 = arith.constant 0 : i32
    %c0_i32_1 = arith.constant 0 : i32
    return %arg0, %c0_i32, %c0_i32_0 : i32, i32, i32
  }
  func.func @transform_1(%arg0: i32) -> (i32, i32, i32) {
    %c0_i32 = arith.constant 0 : i32
    %c0_i32_0 = arith.constant 0 : i32
    %c0_i32_1 = arith.constant 0 : i32
    return %arg0, %c0_i32, %c0_i32_0 : i32, i32, i32
  }
  func.func @transform_2(%arg0: i32) -> (i32, i32, i32) {
    %c0_i32 = arith.constant 0 : i32
    %c0_i32_0 = arith.constant 0 : i32
    %c0_i32_1 = arith.constant 0 : i32
    %c0_i32_2 = arith.constant 0 : i32
    return %c0_i32, %c0_i32_0, %c0_i32_1 : i32, i32, i32
  }
  func.func @transform_3(%arg0: i32) -> (i32, i32) {
    %c0_i32 = arith.constant 0 : i32
    %c0_i32_0 = arith.constant 0 : i32
    %c0_i32_1 = arith.constant 0 : i32
    return %c0_i32, %c0_i32_0 : i32, i32
  }
  func.func @transform_4(%arg0: i32) -> (i32, i32, i32, i32) {
    %c0_i32 = arith.constant 0 : i32
    %c0_i32_0 = arith.constant 0 : i32
    %c0_i32_1 = arith.constant 0 : i32
    %c0_i32_2 = arith.constant 0 : i32
    return %arg0, %c0_i32, %c0_i32_0, %c0_i32_1 : i32, i32, i32, i32
  }
}

module attributes {stable_mosaic.version = 11 : i64} {
  func.func @_fc_stack_kernel(%arg0: i32, %arg1: memref<8x5120xf32, #tpu.memory_space<vmem>>, %arg2: memref<5120x128xf32, #tpu.memory_space<vmem>>, %arg3: memref<1x128xf32, #tpu.memory_space<vmem>>, %arg4: memref<128x128xf32, #tpu.memory_space<vmem>>, %arg5: memref<1x128xf32, #tpu.memory_space<vmem>>, %arg6: memref<128x128xf32, #tpu.memory_space<vmem>>, %arg7: memref<1x128xf32, #tpu.memory_space<vmem>>, %arg8: memref<8x128xf32, #tpu.memory_space<vmem>>) attributes {dimension_semantics = [#tpu.dimension_semantics<parallel>], iteration_bounds = array<i64: 1>, scalar_prefetch = 0 : i64, scratch_operands = 0 : i64, tpu.core_type = #tpu.core_type<tc>, window_params = [{transform_indices = @transform_0, window_bounds = array<i64: 8, 5120>}, {pipeline_mode = #tpu.pipeline_mode<synchronous>, transform_indices = @transform_1, window_bounds = array<i64: 5120, 128>}, {pipeline_mode = #tpu.pipeline_mode<synchronous>, transform_indices = @transform_2, window_bounds = array<i64: 1, 128>}, {pipeline_mode = #tpu.pipeline_mode<synchronous>, transform_indices = @transform_3, window_bounds = array<i64: 128, 128>}, {pipeline_mode = #tpu.pipeline_mode<synchronous>, transform_indices = @transform_4, window_bounds = array<i64: 1, 128>}, {pipeline_mode = #tpu.pipeline_mode<synchronous>, transform_indices = @transform_5, window_bounds = array<i64: 128, 128>}, {pipeline_mode = #tpu.pipeline_mode<synchronous>, transform_indices = @transform_6, window_bounds = array<i64: 1, 128>}, {transform_indices = @transform_7, window_bounds = array<i64: 8, 128>}]} {
    %c0 = arith.constant 0 : index
    %c0_0 = arith.constant 0 : index
    %0 = vector.load %arg1[%c0, %c0_0] : memref<8x5120xf32, #tpu.memory_space<vmem>>, vector<8x5120xf32>
    %c0_1 = arith.constant 0 : index
    %c0_2 = arith.constant 0 : index
    %1 = vector.load %arg2[%c0_1, %c0_2] : memref<5120x128xf32, #tpu.memory_space<vmem>>, vector<5120x128xf32>
    %cst = arith.constant dense<0.000000e+00> : vector<8x128xf32>
    %2 = tpu.matmul %0, %1, %cst {dimension_numbers = #tpu.dot_dimension_numbers<[1], [0], [0], [1], [0, 0, 1, 1], [], []>} : vector<8x5120xf32>, vector<5120x128xf32>, vector<8x128xf32> -> vector<8x128xf32>
    %c0_3 = arith.constant 0 : index
    %c0_4 = arith.constant 0 : index
    %3 = vector.load %arg3[%c0_3, %c0_4] : memref<1x128xf32, #tpu.memory_space<vmem>>, vector<1x128xf32>
    %4 = vector.broadcast %3 : vector<1x128xf32> to vector<8x128xf32>
    %5 = arith.addf %2, %4 : vector<8x128xf32>
    %cst_5 = arith.constant 0.000000e+00 : f32
    %6 = vector.broadcast %cst_5 : f32 to vector<8x128xf32>
    %7 = arith.maximumf %5, %6 : vector<8x128xf32>
    %c0_6 = arith.constant 0 : index
    %c0_7 = arith.constant 0 : index
    %8 = vector.load %arg4[%c0_6, %c0_7] : memref<128x128xf32, #tpu.memory_space<vmem>>, vector<128x128xf32>
    %cst_8 = arith.constant dense<0.000000e+00> : vector<8x128xf32>
    %9 = tpu.matmul %7, %8, %cst_8 {dimension_numbers = #tpu.dot_dimension_numbers<[1], [0], [0], [1], [0, 0, 1, 1], [], []>} : vector<8x128xf32>, vector<128x128xf32>, vector<8x128xf32> -> vector<8x128xf32>
    %c0_9 = arith.constant 0 : index
    %c0_10 = arith.constant 0 : index
    %10 = vector.load %arg5[%c0_9, %c0_10] : memref<1x128xf32, #tpu.memory_space<vmem>>, vector<1x128xf32>
    %11 = vector.broadcast %10 : vector<1x128xf32> to vector<8x128xf32>
    %12 = arith.addf %9, %11 : vector<8x128xf32>
    %cst_11 = arith.constant 0.000000e+00 : f32
    %13 = vector.broadcast %cst_11 : f32 to vector<8x128xf32>
    %14 = arith.maximumf %12, %13 : vector<8x128xf32>
    %c0_12 = arith.constant 0 : index
    %c0_13 = arith.constant 0 : index
    %15 = vector.load %arg6[%c0_12, %c0_13] : memref<128x128xf32, #tpu.memory_space<vmem>>, vector<128x128xf32>
    %cst_14 = arith.constant dense<0.000000e+00> : vector<8x128xf32>
    %16 = tpu.matmul %14, %15, %cst_14 {dimension_numbers = #tpu.dot_dimension_numbers<[1], [0], [0], [1], [0, 0, 1, 1], [], []>} : vector<8x128xf32>, vector<128x128xf32>, vector<8x128xf32> -> vector<8x128xf32>
    %c0_15 = arith.constant 0 : index
    %c0_16 = arith.constant 0 : index
    %17 = vector.load %arg7[%c0_15, %c0_16] : memref<1x128xf32, #tpu.memory_space<vmem>>, vector<1x128xf32>
    %18 = vector.broadcast %17 : vector<1x128xf32> to vector<8x128xf32>
    %19 = arith.addf %16, %18 : vector<8x128xf32>
    %c0_17 = arith.constant 0 : index
    %c0_18 = arith.constant 0 : index
    %20 = vector.load %arg8[%c0_17, %c0_18] : memref<8x128xf32, #tpu.memory_space<vmem>>, vector<8x128xf32>
    tpu.vector_store %arg8[%c0_17, %c0_18], %19 {strides = array<i32>} : memref<8x128xf32, #tpu.memory_space<vmem>>, vector<8x128xf32>,
    return
  }
  func.func @transform_0(%arg0: i32) -> (i32, i32) {
    %c0_i32 = arith.constant 0 : i32
    %c0_i32_0 = arith.constant 0 : i32
    return %arg0, %c0_i32 : i32, i32
  }
  func.func @transform_1(%arg0: i32) -> (i32, i32) {
    %c0_i32 = arith.constant 0 : i32
    %c0_i32_0 = arith.constant 0 : i32
    %c0_i32_1 = arith.constant 0 : i32
    return %c0_i32, %c0_i32_0 : i32, i32
  }
  func.func @transform_2(%arg0: i32) -> (i32, i32) {
    %c0_i32 = arith.constant 0 : i32
    %c0_i32_0 = arith.constant 0 : i32
    %c0_i32_1 = arith.constant 0 : i32
    return %c0_i32, %c0_i32_0 : i32, i32
  }
  func.func @transform_3(%arg0: i32) -> (i32, i32) {
    %c0_i32 = arith.constant 0 : i32
    %c0_i32_0 = arith.constant 0 : i32
    %c0_i32_1 = arith.constant 0 : i32
    return %c0_i32, %c0_i32_0 : i32, i32
  }
  func.func @transform_4(%arg0: i32) -> (i32, i32) {
    %c0_i32 = arith.constant 0 : i32
    %c0_i32_0 = arith.constant 0 : i32
    %c0_i32_1 = arith.constant 0 : i32
    return %c0_i32, %c0_i32_0 : i32, i32
  }
  func.func @transform_5(%arg0: i32) -> (i32, i32) {
    %c0_i32 = arith.constant 0 : i32
    %c0_i32_0 = arith.constant 0 : i32
    %c0_i32_1 = arith.constant 0 : i32
    return %c0_i32, %c0_i32_0 : i32, i32
  }
  func.func @transform_6(%arg0: i32) -> (i32, i32) {
    %c0_i32 = arith.constant 0 : i32
    %c0_i32_0 = arith.constant 0 : i32
    %c0_i32_1 = arith.constant 0 : i32
    return %c0_i32, %c0_i32_0 : i32, i32
  }
  func.func @transform_7(%arg0: i32) -> (i32, i32) {
    %c0_i32 = arith.constant 0 : i32
    %c0_i32_0 = arith.constant 0 : i32
    return %arg0, %c0_i32 : i32, i32
  }
}

module attributes {stable_mosaic.version = 11 : i64} {
  func.func @_conv_relu_pool_kernel(%arg0: i32, %arg1: memref<1x144x8xf32, #tpu.memory_space<vmem>>, %arg2: memref<1x144x8xf32, #tpu.memory_space<vmem>>, %arg3: memref<25x8x128xf32, #tpu.memory_space<vmem>>, %arg4: memref<1x128xf32, #tpu.memory_space<vmem>>, %arg5: memref<1x5x8x128xf32, #tpu.memory_space<vmem>>) attributes {dimension_semantics = [#tpu.dimension_semantics<parallel>], iteration_bounds = array<i64: 2>, scalar_prefetch = 0 : i64, scratch_operands = 0 : i64, tpu.core_type = #tpu.core_type<tc>, window_params = [{transform_indices = @transform_0, window_bounds = array<i64: 1, 144, 8>}, {transform_indices = @transform_1, window_bounds = array<i64: 1, 144, 8>}, {pipeline_mode = #tpu.pipeline_mode<synchronous>, transform_indices = @transform_2, window_bounds = array<i64: 25, 8, 128>}, {pipeline_mode = #tpu.pipeline_mode<synchronous>, transform_indices = @transform_3, window_bounds = array<i64: 1, 128>}, {transform_indices = @transform_4, window_bounds = array<i64: 1, 5, 8, 128>}]} {
    %c0 = arith.constant 0 : index
    %c0_0 = arith.constant 0 : index
    %0 = vector.load %arg4[%c0, %c0_0] : memref<1x128xf32, #tpu.memory_space<vmem>>, vector<1x128xf32>
    %cst = arith.constant 0.000000e+00 : f32
    %1 = vector.broadcast %cst : f32 to vector<80x128xf32>
    %cst_1 = arith.constant 0.000000e+00 : f32
    %2 = vector.broadcast %cst_1 : f32 to vector<80x128xf32>
    %c0_2 = arith.constant 0 : index
    %c0_3 = arith.constant 0 : index
    %c0_4 = arith.constant 0 : index
    %3 = vector.load %arg3[%c0_2, %c0_3, %c0_4] : memref<25x8x128xf32, #tpu.memory_space<vmem>>, vector<1x8x128xf32>
    %4 = vector.shape_cast %3 : vector<1x8x128xf32> to vector<8x128xf32>
    %c0_5 = arith.constant 0 : index
    %c0_6 = arith.constant 0 : index
    %c0_7 = arith.constant 0 : index
    %5 = vector.load %arg1[%c0_5, %c0_6, %c0_7] : memref<1x144x8xf32, #tpu.memory_space<vmem>>, vector<1x80x8xf32>
    %6 = vector.shape_cast %5 : vector<1x80x8xf32> to vector<80x8xf32>
    %c0_8 = arith.constant 0 : index
    %c0_9 = arith.constant 0 : index
    %c0_10 = arith.constant 0 : index
    %7 = vector.load %arg2[%c0_8, %c0_9, %c0_10] : memref<1x144x8xf32, #tpu.memory_space<vmem>>, vector<1x80x8xf32>
    %8 = vector.shape_cast %7 : vector<1x80x8xf32> to vector<80x8xf32>
    %cst_11 = arith.constant dense<0.000000e+00> : vector<80x128xf32>
    %9 = tpu.matmul %6, %4, %cst_11 {dimension_numbers = #tpu.dot_dimension_numbers<[1], [0], [0], [1], [0, 0, 1, 1], [], []>} : vector<80x8xf32>, vector<8x128xf32>, vector<80x128xf32> -> vector<80x128xf32>
    %10 = arith.addf %1, %9 : vector<80x128xf32>
    %cst_12 = arith.constant dense<0.000000e+00> : vector<80x128xf32>
    %11 = tpu.matmul %8, %4, %cst_12 {dimension_numbers = #tpu.dot_dimension_numbers<[1], [0], [0], [1], [0, 0, 1, 1], [], []>} : vector<80x8xf32>, vector<8x128xf32>, vector<80x128xf32> -> vector<80x128xf32>
    %12 = arith.addf %2, %11 : vector<80x128xf32>
    %c1 = arith.constant 1 : index
    %c0_13 = arith.constant 0 : index
    %c0_14 = arith.constant 0 : index
    %13 = vector.load %arg3[%c1, %c0_13, %c0_14] : memref<25x8x128xf32, #tpu.memory_space<vmem>>, vector<1x8x128xf32>
    %14 = vector.shape_cast %13 : vector<1x8x128xf32> to vector<8x128xf32>
    %c0_15 = arith.constant 0 : index
    %c0_16 = arith.constant 0 : index
    %c0_17 = arith.constant 0 : index
    %15 = vector.load %arg2[%c0_15, %c0_16, %c0_17] : memref<1x144x8xf32, #tpu.memory_space<vmem>>, vector<1x80x8xf32>
    %16 = vector.shape_cast %15 : vector<1x80x8xf32> to vector<80x8xf32>
    %c0_18 = arith.constant 0 : index
    %c1_19 = arith.constant 1 : index
    %c0_20 = arith.constant 0 : index
    %17 = vector.load %arg1[%c0_18, %c1_19, %c0_20] : memref<1x144x8xf32, #tpu.memory_space<vmem>>, vector<1x80x8xf32>
    %18 = vector.shape_cast %17 : vector<1x80x8xf32> to vector<80x8xf32>
    %cst_21 = arith.constant dense<0.000000e+00> : vector<80x128xf32>
    %19 = tpu.matmul %16, %14, %cst_21 {dimension_numbers = #tpu.dot_dimension_numbers<[1], [0], [0], [1], [0, 0, 1, 1], [], []>} : vector<80x8xf32>, vector<8x128xf32>, vector<80x128xf32> -> vector<80x128xf32>
    %20 = arith.addf %10, %19 : vector<80x128xf32>
    %cst_22 = arith.constant dense<0.000000e+00> : vector<80x128xf32>
    %21 = tpu.matmul %18, %14, %cst_22 {dimension_numbers = #tpu.dot_dimension_numbers<[1], [0], [0], [1], [0, 0, 1, 1], [], []>} : vector<80x8xf32>, vector<8x128xf32>, vector<80x128xf32> -> vector<80x128xf32>
    %22 = arith.addf %12, %21 : vector<80x128xf32>
    %c2 = arith.constant 2 : index
    %c0_23 = arith.constant 0 : index
    %c0_24 = arith.constant 0 : index
    %23 = vector.load %arg3[%c2, %c0_23, %c0_24] : memref<25x8x128xf32, #tpu.memory_space<vmem>>, vector<1x8x128xf32>
    %24 = vector.shape_cast %23 : vector<1x8x128xf32> to vector<8x128xf32>
    %c0_25 = arith.constant 0 : index
    %c1_26 = arith.constant 1 : index
    %c0_27 = arith.constant 0 : index
    %25 = vector.load %arg1[%c0_25, %c1_26, %c0_27] : memref<1x144x8xf32, #tpu.memory_space<vmem>>, vector<1x80x8xf32>
    %26 = vector.shape_cast %25 : vector<1x80x8xf32> to vector<80x8xf32>
    %c0_28 = arith.constant 0 : index
    %c1_29 = arith.constant 1 : index
    %c0_30 = arith.constant 0 : index
    %27 = vector.load %arg2[%c0_28, %c1_29, %c0_30] : memref<1x144x8xf32, #tpu.memory_space<vmem>>, vector<1x80x8xf32>
    %28 = vector.shape_cast %27 : vector<1x80x8xf32> to vector<80x8xf32>
    %cst_31 = arith.constant dense<0.000000e+00> : vector<80x128xf32>
    %29 = tpu.matmul %26, %24, %cst_31 {dimension_numbers = #tpu.dot_dimension_numbers<[1], [0], [0], [1], [0, 0, 1, 1], [], []>} : vector<80x8xf32>, vector<8x128xf32>, vector<80x128xf32> -> vector<80x128xf32>
    %30 = arith.addf %20, %29 : vector<80x128xf32>
    %cst_32 = arith.constant dense<0.000000e+00> : vector<80x128xf32>
    %31 = tpu.matmul %28, %24, %cst_32 {dimension_numbers = #tpu.dot_dimension_numbers<[1], [0], [0], [1], [0, 0, 1, 1], [], []>} : vector<80x8xf32>, vector<8x128xf32>, vector<80x128xf32> -> vector<80x128xf32>
    %32 = arith.addf %22, %31 : vector<80x128xf32>
    %c3 = arith.constant 3 : index
    %c0_33 = arith.constant 0 : index
    %c0_34 = arith.constant 0 : index
    %33 = vector.load %arg3[%c3, %c0_33, %c0_34] : memref<25x8x128xf32, #tpu.memory_space<vmem>>, vector<1x8x128xf32>
    %34 = vector.shape_cast %33 : vector<1x8x128xf32> to vector<8x128xf32>
    %c0_35 = arith.constant 0 : index
    %c1_36 = arith.constant 1 : index
    %c0_37 = arith.constant 0 : index
    %35 = vector.load %arg2[%c0_35, %c1_36, %c0_37] : memref<1x144x8xf32, #tpu.memory_space<vmem>>, vector<1x80x8xf32>
    %36 = vector.shape_cast %35 : vector<1x80x8xf32> to vector<80x8xf32>
    %c0_38 = arith.constant 0 : index
    %c2_39 = arith.constant 2 : index
    %c0_40 = arith.constant 0 : index
    %37 = vector.load %arg1[%c0_38, %c2_39, %c0_40] : memref<1x144x8xf32, #tpu.memory_space<vmem>>, vector<1x80x8xf32>
    %38 = vector.shape_cast %37 : vector<1x80x8xf32> to vector<80x8xf32>
    %cst_41 = arith.constant dense<0.000000e+00> : vector<80x128xf32>
    %39 = tpu.matmul %36, %34, %cst_41 {dimension_numbers = #tpu.dot_dimension_numbers<[1], [0], [0], [1], [0, 0, 1, 1], [], []>} : vector<80x8xf32>, vector<8x128xf32>, vector<80x128xf32> -> vector<80x128xf32>
    %40 = arith.addf %30, %39 : vector<80x128xf32>
    %cst_42 = arith.constant dense<0.000000e+00> : vector<80x128xf32>
    %41 = tpu.matmul %38, %34, %cst_42 {dimension_numbers = #tpu.dot_dimension_numbers<[1], [0], [0], [1], [0, 0, 1, 1], [], []>} : vector<80x8xf32>, vector<8x128xf32>, vector<80x128xf32> -> vector<80x128xf32>
    %42 = arith.addf %32, %41 : vector<80x128xf32>
    %c4 = arith.constant 4 : index
    %c0_43 = arith.constant 0 : index
    %c0_44 = arith.constant 0 : index
    %43 = vector.load %arg3[%c4, %c0_43, %c0_44] : memref<25x8x128xf32, #tpu.memory_space<vmem>>, vector<1x8x128xf32>
    %44 = vector.shape_cast %43 : vector<1x8x128xf32> to vector<8x128xf32>
    %c0_45 = arith.constant 0 : index
    %c2_46 = arith.constant 2 : index
    %c0_47 = arith.constant 0 : index
    %45 = vector.load %arg1[%c0_45, %c2_46, %c0_47] : memref<1x144x8xf32, #tpu.memory_space<vmem>>, vector<1x80x8xf32>
    %46 = vector.shape_cast %45 : vector<1x80x8xf32> to vector<80x8xf32>
    %c0_48 = arith.constant 0 : index
    %c2_49 = arith.constant 2 : index
    %c0_50 = arith.constant 0 : index
    %47 = vector.load %arg2[%c0_48, %c2_49, %c0_50] : memref<1x144x8xf32, #tpu.memory_space<vmem>>, vector<1x80x8xf32>
    %48 = vector.shape_cast %47 : vector<1x80x8xf32> to vector<80x8xf32>
    %cst_51 = arith.constant dense<0.000000e+00> : vector<80x128xf32>
    %49 = tpu.matmul %46, %44, %cst_51 {dimension_numbers = #tpu.dot_dimension_numbers<[1], [0], [0], [1], [0, 0, 1, 1], [], []>} : vector<80x8xf32>, vector<8x128xf32>, vector<80x128xf32> -> vector<80x128xf32>
    %50 = arith.addf %40, %49 : vector<80x128xf32>
    %cst_52 = arith.constant dense<0.000000e+00> : vector<80x128xf32>
    %51 = tpu.matmul %48, %44, %cst_52 {dimension_numbers = #tpu.dot_dimension_numbers<[1], [0], [0], [1], [0, 0, 1, 1], [], []>} : vector<80x8xf32>, vector<8x128xf32>, vector<80x128xf32> -> vector<80x128xf32>
    %52 = arith.addf %42, %51 : vector<80x128xf32>
    %c5 = arith.constant 5 : index
    %c0_53 = arith.constant 0 : index
    %c0_54 = arith.constant 0 : index
    %53 = vector.load %arg3[%c5, %c0_53, %c0_54] : memref<25x8x128xf32, #tpu.memory_space<vmem>>, vector<1x8x128xf32>
    %54 = vector.shape_cast %53 : vector<1x8x128xf32> to vector<8x128xf32>
    %c0_55 = arith.constant 0 : index
    %c8 = arith.constant 8 : index
    %c0_56 = arith.constant 0 : index
    %55 = vector.load %arg1[%c0_55, %c8, %c0_56] : memref<1x144x8xf32, #tpu.memory_space<vmem>>, vector<1x80x8xf32>
    %56 = vector.shape_cast %55 : vector<1x80x8xf32> to vector<80x8xf32>
    %c0_57 = arith.constant 0 : index
    %c8_58 = arith.constant 8 : index
    %c0_59 = arith.constant 0 : index
    %57 = vector.load %arg2[%c0_57, %c8_58, %c0_59] : memref<1x144x8xf32, #tpu.memory_space<vmem>>, vector<1x80x8xf32>
    %58 = vector.shape_cast %57 : vector<1x80x8xf32> to vector<80x8xf32>
    %cst_60 = arith.constant dense<0.000000e+00> : vector<80x128xf32>
    %59 = tpu.matmul %56, %54, %cst_60 {dimension_numbers = #tpu.dot_dimension_numbers<[1], [0], [0], [1], [0, 0, 1, 1], [], []>} : vector<80x8xf32>, vector<8x128xf32>, vector<80x128xf32> -> vector<80x128xf32>
    %60 = arith.addf %50, %59 : vector<80x128xf32>
    %cst_61 = arith.constant dense<0.000000e+00> : vector<80x128xf32>
    %61 = tpu.matmul %58, %54, %cst_61 {dimension_numbers = #tpu.dot_dimension_numbers<[1], [0], [0], [1], [0, 0, 1, 1], [], []>} : vector<80x8xf32>, vector<8x128xf32>, vector<80x128xf32> -> vector<80x128xf32>
    %62 = arith.addf %52, %61 : vector<80x128xf32>
    %c6 = arith.constant 6 : index
    %c0_62 = arith.constant 0 : index
    %c0_63 = arith.constant 0 : index
    %63 = vector.load %arg3[%c6, %c0_62, %c0_63] : memref<25x8x128xf32, #tpu.memory_space<vmem>>, vector<1x8x128xf32>
    %64 = vector.shape_cast %63 : vector<1x8x128xf32> to vector<8x128xf32>
    %c0_64 = arith.constant 0 : index
    %c8_65 = arith.constant 8 : index
    %c0_66 = arith.constant 0 : index
    %65 = vector.load %arg2[%c0_64, %c8_65, %c0_66] : memref<1x144x8xf32, #tpu.memory_space<vmem>>, vector<1x80x8xf32>
    %66 = vector.shape_cast %65 : vector<1x80x8xf32> to vector<80x8xf32>
    %c0_67 = arith.constant 0 : index
    %c9 = arith.constant 9 : index
    %c0_68 = arith.constant 0 : index
    %67 = vector.load %arg1[%c0_67, %c9, %c0_68] : memref<1x144x8xf32, #tpu.memory_space<vmem>>, vector<1x80x8xf32>
    %68 = vector.shape_cast %67 : vector<1x80x8xf32> to vector<80x8xf32>
    %cst_69 = arith.constant dense<0.000000e+00> : vector<80x128xf32>
    %69 = tpu.matmul %66, %64, %cst_69 {dimension_numbers = #tpu.dot_dimension_numbers<[1], [0], [0], [1], [0, 0, 1, 1], [], []>} : vector<80x8xf32>, vector<8x128xf32>, vector<80x128xf32> -> vector<80x128xf32>
    %70 = arith.addf %60, %69 : vector<80x128xf32>
    %cst_70 = arith.constant dense<0.000000e+00> : vector<80x128xf32>
    %71 = tpu.matmul %68, %64, %cst_70 {dimension_numbers = #tpu.dot_dimension_numbers<[1], [0], [0], [1], [0, 0, 1, 1], [], []>} : vector<80x8xf32>, vector<8x128xf32>, vector<80x128xf32> -> vector<80x128xf32>
    %72 = arith.addf %62, %71 : vector<80x128xf32>
    %c7 = arith.constant 7 : index
    %c0_71 = arith.constant 0 : index
    %c0_72 = arith.constant 0 : index
    %73 = vector.load %arg3[%c7, %c0_71, %c0_72] : memref<25x8x128xf32, #tpu.memory_space<vmem>>, vector<1x8x128xf32>
    %74 = vector.shape_cast %73 : vector<1x8x128xf32> to vector<8x128xf32>
    %c0_73 = arith.constant 0 : index
    %c9_74 = arith.constant 9 : index
    %c0_75 = arith.constant 0 : index
    %75 = vector.load %arg1[%c0_73, %c9_74, %c0_75] : memref<1x144x8xf32, #tpu.memory_space<vmem>>, vector<1x80x8xf32>
    %76 = vector.shape_cast %75 : vector<1x80x8xf32> to vector<80x8xf32>
    %c0_76 = arith.constant 0 : index
    %c9_77 = arith.constant 9 : index
    %c0_78 = arith.constant 0 : index
    %77 = vector.load %arg2[%c0_76, %c9_77, %c0_78] : memref<1x144x8xf32, #tpu.memory_space<vmem>>, vector<1x80x8xf32>
    %78 = vector.shape_cast %77 : vector<1x80x8xf32> to vector<80x8xf32>
    %cst_79 = arith.constant dense<0.000000e+00> : vector<80x128xf32>
    %79 = tpu.matmul %76, %74, %cst_79 {dimension_numbers = #tpu.dot_dimension_numbers<[1], [0], [0], [1], [0, 0, 1, 1], [], []>} : vector<80x8xf32>, vector<8x128xf32>, vector<80x128xf32> -> vector<80x128xf32>
    %80 = arith.addf %70, %79 : vector<80x128xf32>
    %cst_80 = arith.constant dense<0.000000e+00> : vector<80x128xf32>
    %81 = tpu.matmul %78, %74, %cst_80 {dimension_numbers = #tpu.dot_dimension_numbers<[1], [0], [0], [1], [0, 0, 1, 1], [], []>} : vector<80x8xf32>, vector<8x128xf32>, vector<80x128xf32> -> vector<80x128xf32>
    %82 = arith.addf %72, %81 : vector<80x128xf32>
    %c8_81 = arith.constant 8 : index
    %c0_82 = arith.constant 0 : index
    %c0_83 = arith.constant 0 : index
    %83 = vector.load %arg3[%c8_81, %c0_82, %c0_83] : memref<25x8x128xf32, #tpu.memory_space<vmem>>, vector<1x8x128xf32>
    %84 = vector.shape_cast %83 : vector<1x8x128xf32> to vector<8x128xf32>
    %c0_84 = arith.constant 0 : index
    %c9_85 = arith.constant 9 : index
    %c0_86 = arith.constant 0 : index
    %85 = vector.load %arg2[%c0_84, %c9_85, %c0_86] : memref<1x144x8xf32, #tpu.memory_space<vmem>>, vector<1x80x8xf32>
    %86 = vector.shape_cast %85 : vector<1x80x8xf32> to vector<80x8xf32>
    %c0_87 = arith.constant 0 : index
    %c10 = arith.constant 10 : index
    %c0_88 = arith.constant 0 : index
    %87 = vector.load %arg1[%c0_87, %c10, %c0_88] : memref<1x144x8xf32, #tpu.memory_space<vmem>>, vector<1x80x8xf32>
    %88 = vector.shape_cast %87 : vector<1x80x8xf32> to vector<80x8xf32>
    %cst_89 = arith.constant dense<0.000000e+00> : vector<80x128xf32>
    %89 = tpu.matmul %86, %84, %cst_89 {dimension_numbers = #tpu.dot_dimension_numbers<[1], [0], [0], [1], [0, 0, 1, 1], [], []>} : vector<80x8xf32>, vector<8x128xf32>, vector<80x128xf32> -> vector<80x128xf32>
    %90 = arith.addf %80, %89 : vector<80x128xf32>
    %cst_90 = arith.constant dense<0.000000e+00> : vector<80x128xf32>
    %91 = tpu.matmul %88, %84, %cst_90 {dimension_numbers = #tpu.dot_dimension_numbers<[1], [0], [0], [1], [0, 0, 1, 1], [], []>} : vector<80x8xf32>, vector<8x128xf32>, vector<80x128xf32> -> vector<80x128xf32>
    %92 = arith.addf %82, %91 : vector<80x128xf32>
    %c9_91 = arith.constant 9 : index
    %c0_92 = arith.constant 0 : index
    %c0_93 = arith.constant 0 : index
    %93 = vector.load %arg3[%c9_91, %c0_92, %c0_93] : memref<25x8x128xf32, #tpu.memory_space<vmem>>, vector<1x8x128xf32>
    %94 = vector.shape_cast %93 : vector<1x8x128xf32> to vector<8x128xf32>
    %c0_94 = arith.constant 0 : index
    %c10_95 = arith.constant 10 : index
    %c0_96 = arith.constant 0 : index
    %95 = vector.load %arg1[%c0_94, %c10_95, %c0_96] : memref<1x144x8xf32, #tpu.memory_space<vmem>>, vector<1x80x8xf32>
    %96 = vector.shape_cast %95 : vector<1x80x8xf32> to vector<80x8xf32>
    %c0_97 = arith.constant 0 : index
    %c10_98 = arith.constant 10 : index
    %c0_99 = arith.constant 0 : index
    %97 = vector.load %arg2[%c0_97, %c10_98, %c0_99] : memref<1x144x8xf32, #tpu.memory_space<vmem>>, vector<1x80x8xf32>
    %98 = vector.shape_cast %97 : vector<1x80x8xf32> to vector<80x8xf32>
    %cst_100 = arith.constant dense<0.000000e+00> : vector<80x128xf32>
    %99 = tpu.matmul %96, %94, %cst_100 {dimension_numbers = #tpu.dot_dimension_numbers<[1], [0], [0], [1], [0, 0, 1, 1], [], []>} : vector<80x8xf32>, vector<8x128xf32>, vector<80x128xf32> -> vector<80x128xf32>
    %100 = arith.addf %90, %99 : vector<80x128xf32>
    %cst_101 = arith.constant dense<0.000000e+00> : vector<80x128xf32>
    %101 = tpu.matmul %98, %94, %cst_101 {dimension_numbers = #tpu.dot_dimension_numbers<[1], [0], [0], [1], [0, 0, 1, 1], [], []>} : vector<80x8xf32>, vector<8x128xf32>, vector<80x128xf32> -> vector<80x128xf32>
    %102 = arith.addf %92, %101 : vector<80x128xf32>
    %c10_102 = arith.constant 10 : index
    %c0_103 = arith.constant 0 : index
    %c0_104 = arith.constant 0 : index
    %103 = vector.load %arg3[%c10_102, %c0_103, %c0_104] : memref<25x8x128xf32, #tpu.memory_space<vmem>>, vector<1x8x128xf32>
    %104 = vector.shape_cast %103 : vector<1x8x128xf32> to vector<8x128xf32>
    %c0_105 = arith.constant 0 : index
    %c16 = arith.constant 16 : index
    %c0_106 = arith.constant 0 : index
    %105 = vector.load %arg1[%c0_105, %c16, %c0_106] : memref<1x144x8xf32, #tpu.memory_space<vmem>>, vector<1x80x8xf32>
    %106 = vector.shape_cast %105 : vector<1x80x8xf32> to vector<80x8xf32>
    %c0_107 = arith.constant 0 : index
    %c16_108 = arith.constant 16 : index
    %c0_109 = arith.constant 0 : index
    %107 = vector.load %arg2[%c0_107, %c16_108, %c0_109] : memref<1x144x8xf32, #tpu.memory_space<vmem>>, vector<1x80x8xf32>
    %108 = vector.shape_cast %107 : vector<1x80x8xf32> to vector<80x8xf32>
    %cst_110 = arith.constant dense<0.000000e+00> : vector<80x128xf32>
    %109 = tpu.matmul %106, %104, %cst_110 {dimension_numbers = #tpu.dot_dimension_numbers<[1], [0], [0], [1], [0, 0, 1, 1], [], []>} : vector<80x8xf32>, vector<8x128xf32>, vector<80x128xf32> -> vector<80x128xf32>
    %110 = arith.addf %100, %109 : vector<80x128xf32>
    %cst_111 = arith.constant dense<0.000000e+00> : vector<80x128xf32>
    %111 = tpu.matmul %108, %104, %cst_111 {dimension_numbers = #tpu.dot_dimension_numbers<[1], [0], [0], [1], [0, 0, 1, 1], [], []>} : vector<80x8xf32>, vector<8x128xf32>, vector<80x128xf32> -> vector<80x128xf32>
    %112 = arith.addf %102, %111 : vector<80x128xf32>
    %c11 = arith.constant 11 : index
    %c0_112 = arith.constant 0 : index
    %c0_113 = arith.constant 0 : index
    %113 = vector.load %arg3[%c11, %c0_112, %c0_113] : memref<25x8x128xf32, #tpu.memory_space<vmem>>, vector<1x8x128xf32>
    %114 = vector.shape_cast %113 : vector<1x8x128xf32> to vector<8x128xf32>
    %c0_114 = arith.constant 0 : index
    %c16_115 = arith.constant 16 : index
    %c0_116 = arith.constant 0 : index
    %115 = vector.load %arg2[%c0_114, %c16_115, %c0_116] : memref<1x144x8xf32, #tpu.memory_space<vmem>>, vector<1x80x8xf32>
    %116 = vector.shape_cast %115 : vector<1x80x8xf32> to vector<80x8xf32>
    %c0_117 = arith.constant 0 : index
    %c17 = arith.constant 17 : index
    %c0_118 = arith.constant 0 : index
    %117 = vector.load %arg1[%c0_117, %c17, %c0_118] : memref<1x144x8xf32, #tpu.memory_space<vmem>>, vector<1x80x8xf32>
    %118 = vector.shape_cast %117 : vector<1x80x8xf32> to vector<80x8xf32>
    %cst_119 = arith.constant dense<0.000000e+00> : vector<80x128xf32>
    %119 = tpu.matmul %116, %114, %cst_119 {dimension_numbers = #tpu.dot_dimension_numbers<[1], [0], [0], [1], [0, 0, 1, 1], [], []>} : vector<80x8xf32>, vector<8x128xf32>, vector<80x128xf32> -> vector<80x128xf32>
    %120 = arith.addf %110, %119 : vector<80x128xf32>
    %cst_120 = arith.constant dense<0.000000e+00> : vector<80x128xf32>
    %121 = tpu.matmul %118, %114, %cst_120 {dimension_numbers = #tpu.dot_dimension_numbers<[1], [0], [0], [1], [0, 0, 1, 1], [], []>} : vector<80x8xf32>, vector<8x128xf32>, vector<80x128xf32> -> vector<80x128xf32>
    %122 = arith.addf %112, %121 : vector<80x128xf32>
    %c12 = arith.constant 12 : index
    %c0_121 = arith.constant 0 : index
    %c0_122 = arith.constant 0 : index
    %123 = vector.load %arg3[%c12, %c0_121, %c0_122] : memref<25x8x128xf32, #tpu.memory_space<vmem>>, vector<1x8x128xf32>
    %124 = vector.shape_cast %123 : vector<1x8x128xf32> to vector<8x128xf32>
    %c0_123 = arith.constant 0 : index
    %c17_124 = arith.constant 17 : index
    %c0_125 = arith.constant 0 : index
    %125 = vector.load %arg1[%c0_123, %c17_124, %c0_125] : memref<1x144x8xf32, #tpu.memory_space<vmem>>, vector<1x80x8xf32>
    %126 = vector.shape_cast %125 : vector<1x80x8xf32> to vector<80x8xf32>
    %c0_126 = arith.constant 0 : index
    %c17_127 = arith.constant 17 : index
    %c0_128 = arith.constant 0 : index
    %127 = vector.load %arg2[%c0_126, %c17_127, %c0_128] : memref<1x144x8xf32, #tpu.memory_space<vmem>>, vector<1x80x8xf32>
    %128 = vector.shape_cast %127 : vector<1x80x8xf32> to vector<80x8xf32>
    %cst_129 = arith.constant dense<0.000000e+00> : vector<80x128xf32>
    %129 = tpu.matmul %126, %124, %cst_129 {dimension_numbers = #tpu.dot_dimension_numbers<[1], [0], [0], [1], [0, 0, 1, 1], [], []>} : vector<80x8xf32>, vector<8x128xf32>, vector<80x128xf32> -> vector<80x128xf32>
    %130 = arith.addf %120, %129 : vector<80x128xf32>
    %cst_130 = arith.constant dense<0.000000e+00> : vector<80x128xf32>
    %131 = tpu.matmul %128, %124, %cst_130 {dimension_numbers = #tpu.dot_dimension_numbers<[1], [0], [0], [1], [0, 0, 1, 1], [], []>} : vector<80x8xf32>, vector<8x128xf32>, vector<80x128xf32> -> vector<80x128xf32>
    %132 = arith.addf %122, %131 : vector<80x128xf32>
    %c13 = arith.constant 13 : index
    %c0_131 = arith.constant 0 : index
    %c0_132 = arith.constant 0 : index
    %133 = vector.load %arg3[%c13, %c0_131, %c0_132] : memref<25x8x128xf32, #tpu.memory_space<vmem>>, vector<1x8x128xf32>
    %134 = vector.shape_cast %133 : vector<1x8x128xf32> to vector<8x128xf32>
    %c0_133 = arith.constant 0 : index
    %c17_134 = arith.constant 17 : index
    %c0_135 = arith.constant 0 : index
    %135 = vector.load %arg2[%c0_133, %c17_134, %c0_135] : memref<1x144x8xf32, #tpu.memory_space<vmem>>, vector<1x80x8xf32>
    %136 = vector.shape_cast %135 : vector<1x80x8xf32> to vector<80x8xf32>
    %c0_136 = arith.constant 0 : index
    %c18 = arith.constant 18 : index
    %c0_137 = arith.constant 0 : index
    %137 = vector.load %arg1[%c0_136, %c18, %c0_137] : memref<1x144x8xf32, #tpu.memory_space<vmem>>, vector<1x80x8xf32>
    %138 = vector.shape_cast %137 : vector<1x80x8xf32> to vector<80x8xf32>
    %cst_138 = arith.constant dense<0.000000e+00> : vector<80x128xf32>
    %139 = tpu.matmul %136, %134, %cst_138 {dimension_numbers = #tpu.dot_dimension_numbers<[1], [0], [0], [1], [0, 0, 1, 1], [], []>} : vector<80x8xf32>, vector<8x128xf32>, vector<80x128xf32> -> vector<80x128xf32>
    %140 = arith.addf %130, %139 : vector<80x128xf32>
    %cst_139 = arith.constant dense<0.000000e+00> : vector<80x128xf32>
    %141 = tpu.matmul %138, %134, %cst_139 {dimension_numbers = #tpu.dot_dimension_numbers<[1], [0], [0], [1], [0, 0, 1, 1], [], []>} : vector<80x8xf32>, vector<8x128xf32>, vector<80x128xf32> -> vector<80x128xf32>
    %142 = arith.addf %132, %141 : vector<80x128xf32>
    %c14 = arith.constant 14 : index
    %c0_140 = arith.constant 0 : index
    %c0_141 = arith.constant 0 : index
    %143 = vector.load %arg3[%c14, %c0_140, %c0_141] : memref<25x8x128xf32, #tpu.memory_space<vmem>>, vector<1x8x128xf32>
    %144 = vector.shape_cast %143 : vector<1x8x128xf32> to vector<8x128xf32>
    %c0_142 = arith.constant 0 : index
    %c18_143 = arith.constant 18 : index
    %c0_144 = arith.constant 0 : index
    %145 = vector.load %arg1[%c0_142, %c18_143, %c0_144] : memref<1x144x8xf32, #tpu.memory_space<vmem>>, vector<1x80x8xf32>
    %146 = vector.shape_cast %145 : vector<1x80x8xf32> to vector<80x8xf32>
    %c0_145 = arith.constant 0 : index
    %c18_146 = arith.constant 18 : index
    %c0_147 = arith.constant 0 : index
    %147 = vector.load %arg2[%c0_145, %c18_146, %c0_147] : memref<1x144x8xf32, #tpu.memory_space<vmem>>, vector<1x80x8xf32>
    %148 = vector.shape_cast %147 : vector<1x80x8xf32> to vector<80x8xf32>
    %cst_148 = arith.constant dense<0.000000e+00> : vector<80x128xf32>
    %149 = tpu.matmul %146, %144, %cst_148 {dimension_numbers = #tpu.dot_dimension_numbers<[1], [0], [0], [1], [0, 0, 1, 1], [], []>} : vector<80x8xf32>, vector<8x128xf32>, vector<80x128xf32> -> vector<80x128xf32>
    %150 = arith.addf %140, %149 : vector<80x128xf32>
    %cst_149 = arith.constant dense<0.000000e+00> : vector<80x128xf32>
    %151 = tpu.matmul %148, %144, %cst_149 {dimension_numbers = #tpu.dot_dimension_numbers<[1], [0], [0], [1], [0, 0, 1, 1], [], []>} : vector<80x8xf32>, vector<8x128xf32>, vector<80x128xf32> -> vector<80x128xf32>
    %152 = arith.addf %142, %151 : vector<80x128xf32>
    %c15 = arith.constant 15 : index
    %c0_150 = arith.constant 0 : index
    %c0_151 = arith.constant 0 : index
    %153 = vector.load %arg3[%c15, %c0_150, %c0_151] : memref<25x8x128xf32, #tpu.memory_space<vmem>>, vector<1x8x128xf32>
    %154 = vector.shape_cast %153 : vector<1x8x128xf32> to vector<8x128xf32>
    %c0_152 = arith.constant 0 : index
    %c24 = arith.constant 24 : index
    %c0_153 = arith.constant 0 : index
    %155 = vector.load %arg1[%c0_152, %c24, %c0_153] : memref<1x144x8xf32, #tpu.memory_space<vmem>>, vector<1x80x8xf32>
    %156 = vector.shape_cast %155 : vector<1x80x8xf32> to vector<80x8xf32>
    %c0_154 = arith.constant 0 : index
    %c24_155 = arith.constant 24 : index
    %c0_156 = arith.constant 0 : index
    %157 = vector.load %arg2[%c0_154, %c24_155, %c0_156] : memref<1x144x8xf32, #tpu.memory_space<vmem>>, vector<1x80x8xf32>
    %158 = vector.shape_cast %157 : vector<1x80x8xf32> to vector<80x8xf32>
    %cst_157 = arith.constant dense<0.000000e+00> : vector<80x128xf32>
    %159 = tpu.matmul %156, %154, %cst_157 {dimension_numbers = #tpu.dot_dimension_numbers<[1], [0], [0], [1], [0, 0, 1, 1], [], []>} : vector<80x8xf32>, vector<8x128xf32>, vector<80x128xf32> -> vector<80x128xf32>
    %160 = arith.addf %150, %159 : vector<80x128xf32>
    %cst_158 = arith.constant dense<0.000000e+00> : vector<80x128xf32>
    %161 = tpu.matmul %158, %154, %cst_158 {dimension_numbers = #tpu.dot_dimension_numbers<[1], [0], [0], [1], [0, 0, 1, 1], [], []>} : vector<80x8xf32>, vector<8x128xf32>, vector<80x128xf32> -> vector<80x128xf32>
    %162 = arith.addf %152, %161 : vector<80x128xf32>
    %c16_159 = arith.constant 16 : index
    %c0_160 = arith.constant 0 : index
    %c0_161 = arith.constant 0 : index
    %163 = vector.load %arg3[%c16_159, %c0_160, %c0_161] : memref<25x8x128xf32, #tpu.memory_space<vmem>>, vector<1x8x128xf32>
    %164 = vector.shape_cast %163 : vector<1x8x128xf32> to vector<8x128xf32>
    %c0_162 = arith.constant 0 : index
    %c24_163 = arith.constant 24 : index
    %c0_164 = arith.constant 0 : index
    %165 = vector.load %arg2[%c0_162, %c24_163, %c0_164] : memref<1x144x8xf32, #tpu.memory_space<vmem>>, vector<1x80x8xf32>
    %166 = vector.shape_cast %165 : vector<1x80x8xf32> to vector<80x8xf32>
    %c0_165 = arith.constant 0 : index
    %c25 = arith.constant 25 : index
    %c0_166 = arith.constant 0 : index
    %167 = vector.load %arg1[%c0_165, %c25, %c0_166] : memref<1x144x8xf32, #tpu.memory_space<vmem>>, vector<1x80x8xf32>
    %168 = vector.shape_cast %167 : vector<1x80x8xf32> to vector<80x8xf32>
    %cst_167 = arith.constant dense<0.000000e+00> : vector<80x128xf32>
    %169 = tpu.matmul %166, %164, %cst_167 {dimension_numbers = #tpu.dot_dimension_numbers<[1], [0], [0], [1], [0, 0, 1, 1], [], []>} : vector<80x8xf32>, vector<8x128xf32>, vector<80x128xf32> -> vector<80x128xf32>
    %170 = arith.addf %160, %169 : vector<80x128xf32>
    %cst_168 = arith.constant dense<0.000000e+00> : vector<80x128xf32>
    %171 = tpu.matmul %168, %164, %cst_168 {dimension_numbers = #tpu.dot_dimension_numbers<[1], [0], [0], [1], [0, 0, 1, 1], [], []>} : vector<80x8xf32>, vector<8x128xf32>, vector<80x128xf32> -> vector<80x128xf32>
    %172 = arith.addf %162, %171 : vector<80x128xf32>
    %c17_169 = arith.constant 17 : index
    %c0_170 = arith.constant 0 : index
    %c0_171 = arith.constant 0 : index
    %173 = vector.load %arg3[%c17_169, %c0_170, %c0_171] : memref<25x8x128xf32, #tpu.memory_space<vmem>>, vector<1x8x128xf32>
    %174 = vector.shape_cast %173 : vector<1x8x128xf32> to vector<8x128xf32>
    %c0_172 = arith.constant 0 : index
    %c25_173 = arith.constant 25 : index
    %c0_174 = arith.constant 0 : index
    %175 = vector.load %arg1[%c0_172, %c25_173, %c0_174] : memref<1x144x8xf32, #tpu.memory_space<vmem>>, vector<1x80x8xf32>
    %176 = vector.shape_cast %175 : vector<1x80x8xf32> to vector<80x8xf32>
    %c0_175 = arith.constant 0 : index
    %c25_176 = arith.constant 25 : index
    %c0_177 = arith.constant 0 : index
    %177 = vector.load %arg2[%c0_175, %c25_176, %c0_177] : memref<1x144x8xf32, #tpu.memory_space<vmem>>, vector<1x80x8xf32>
    %178 = vector.shape_cast %177 : vector<1x80x8xf32> to vector<80x8xf32>
    %cst_178 = arith.constant dense<0.000000e+00> : vector<80x128xf32>
    %179 = tpu.matmul %176, %174, %cst_178 {dimension_numbers = #tpu.dot_dimension_numbers<[1], [0], [0], [1], [0, 0, 1, 1], [], []>} : vector<80x8xf32>, vector<8x128xf32>, vector<80x128xf32> -> vector<80x128xf32>
    %180 = arith.addf %170, %179 : vector<80x128xf32>
    %cst_179 = arith.constant dense<0.000000e+00> : vector<80x128xf32>
    %181 = tpu.matmul %178, %174, %cst_179 {dimension_numbers = #tpu.dot_dimension_numbers<[1], [0], [0], [1], [0, 0, 1, 1], [], []>} : vector<80x8xf32>, vector<8x128xf32>, vector<80x128xf32> -> vector<80x128xf32>
    %182 = arith.addf %172, %181 : vector<80x128xf32>
    %c18_180 = arith.constant 18 : index
    %c0_181 = arith.constant 0 : index
    %c0_182 = arith.constant 0 : index
    %183 = vector.load %arg3[%c18_180, %c0_181, %c0_182] : memref<25x8x128xf32, #tpu.memory_space<vmem>>, vector<1x8x128xf32>
    %184 = vector.shape_cast %183 : vector<1x8x128xf32> to vector<8x128xf32>
    %c0_183 = arith.constant 0 : index
    %c25_184 = arith.constant 25 : index
    %c0_185 = arith.constant 0 : index
    %185 = vector.load %arg2[%c0_183, %c25_184, %c0_185] : memref<1x144x8xf32, #tpu.memory_space<vmem>>, vector<1x80x8xf32>
    %186 = vector.shape_cast %185 : vector<1x80x8xf32> to vector<80x8xf32>
    %c0_186 = arith.constant 0 : index
    %c26 = arith.constant 26 : index
    %c0_187 = arith.constant 0 : index
    %187 = vector.load %arg1[%c0_186, %c26, %c0_187] : memref<1x144x8xf32, #tpu.memory_space<vmem>>, vector<1x80x8xf32>
    %188 = vector.shape_cast %187 : vector<1x80x8xf32> to vector<80x8xf32>
    %cst_188 = arith.constant dense<0.000000e+00> : vector<80x128xf32>
    %189 = tpu.matmul %186, %184, %cst_188 {dimension_numbers = #tpu.dot_dimension_numbers<[1], [0], [0], [1], [0, 0, 1, 1], [], []>} : vector<80x8xf32>, vector<8x128xf32>, vector<80x128xf32> -> vector<80x128xf32>
    %190 = arith.addf %180, %189 : vector<80x128xf32>
    %cst_189 = arith.constant dense<0.000000e+00> : vector<80x128xf32>
    %191 = tpu.matmul %188, %184, %cst_189 {dimension_numbers = #tpu.dot_dimension_numbers<[1], [0], [0], [1], [0, 0, 1, 1], [], []>} : vector<80x8xf32>, vector<8x128xf32>, vector<80x128xf32> -> vector<80x128xf32>
    %192 = arith.addf %182, %191 : vector<80x128xf32>
    %c19 = arith.constant 19 : index
    %c0_190 = arith.constant 0 : index
    %c0_191 = arith.constant 0 : index
    %193 = vector.load %arg3[%c19, %c0_190, %c0_191] : memref<25x8x128xf32, #tpu.memory_space<vmem>>, vector<1x8x128xf32>
    %194 = vector.shape_cast %193 : vector<1x8x128xf32> to vector<8x128xf32>
    %c0_192 = arith.constant 0 : index
    %c26_193 = arith.constant 26 : index
    %c0_194 = arith.constant 0 : index
    %195 = vector.load %arg1[%c0_192, %c26_193, %c0_194] : memref<1x144x8xf32, #tpu.memory_space<vmem>>, vector<1x80x8xf32>
    %196 = vector.shape_cast %195 : vector<1x80x8xf32> to vector<80x8xf32>
    %c0_195 = arith.constant 0 : index
    %c26_196 = arith.constant 26 : index
    %c0_197 = arith.constant 0 : index
    %197 = vector.load %arg2[%c0_195, %c26_196, %c0_197] : memref<1x144x8xf32, #tpu.memory_space<vmem>>, vector<1x80x8xf32>
    %198 = vector.shape_cast %197 : vector<1x80x8xf32> to vector<80x8xf32>
    %cst_198 = arith.constant dense<0.000000e+00> : vector<80x128xf32>
    %199 = tpu.matmul %196, %194, %cst_198 {dimension_numbers = #tpu.dot_dimension_numbers<[1], [0], [0], [1], [0, 0, 1, 1], [], []>} : vector<80x8xf32>, vector<8x128xf32>, vector<80x128xf32> -> vector<80x128xf32>
    %200 = arith.addf %190, %199 : vector<80x128xf32>
    %cst_199 = arith.constant dense<0.000000e+00> : vector<80x128xf32>
    %201 = tpu.matmul %198, %194, %cst_199 {dimension_numbers = #tpu.dot_dimension_numbers<[1], [0], [0], [1], [0, 0, 1, 1], [], []>} : vector<80x8xf32>, vector<8x128xf32>, vector<80x128xf32> -> vector<80x128xf32>
    %202 = arith.addf %192, %201 : vector<80x128xf32>
    %c20 = arith.constant 20 : index
    %c0_200 = arith.constant 0 : index
    %c0_201 = arith.constant 0 : index
    %203 = vector.load %arg3[%c20, %c0_200, %c0_201] : memref<25x8x128xf32, #tpu.memory_space<vmem>>, vector<1x8x128xf32>
    %204 = vector.shape_cast %203 : vector<1x8x128xf32> to vector<8x128xf32>
    %c0_202 = arith.constant 0 : index
    %c32 = arith.constant 32 : index
    %c0_203 = arith.constant 0 : index
    %205 = vector.load %arg1[%c0_202, %c32, %c0_203] : memref<1x144x8xf32, #tpu.memory_space<vmem>>, vector<1x80x8xf32>
    %206 = vector.shape_cast %205 : vector<1x80x8xf32> to vector<80x8xf32>
    %c0_204 = arith.constant 0 : index
    %c32_205 = arith.constant 32 : index
    %c0_206 = arith.constant 0 : index
    %207 = vector.load %arg2[%c0_204, %c32_205, %c0_206] : memref<1x144x8xf32, #tpu.memory_space<vmem>>, vector<1x80x8xf32>
    %208 = vector.shape_cast %207 : vector<1x80x8xf32> to vector<80x8xf32>
    %cst_207 = arith.constant dense<0.000000e+00> : vector<80x128xf32>
    %209 = tpu.matmul %206, %204, %cst_207 {dimension_numbers = #tpu.dot_dimension_numbers<[1], [0], [0], [1], [0, 0, 1, 1], [], []>} : vector<80x8xf32>, vector<8x128xf32>, vector<80x128xf32> -> vector<80x128xf32>
    %210 = arith.addf %200, %209 : vector<80x128xf32>
    %cst_208 = arith.constant dense<0.000000e+00> : vector<80x128xf32>
    %211 = tpu.matmul %208, %204, %cst_208 {dimension_numbers = #tpu.dot_dimension_numbers<[1], [0], [0], [1], [0, 0, 1, 1], [], []>} : vector<80x8xf32>, vector<8x128xf32>, vector<80x128xf32> -> vector<80x128xf32>
    %212 = arith.addf %202, %211 : vector<80x128xf32>
    %c21 = arith.constant 21 : index
    %c0_209 = arith.constant 0 : index
    %c0_210 = arith.constant 0 : index
    %213 = vector.load %arg3[%c21, %c0_209, %c0_210] : memref<25x8x128xf32, #tpu.memory_space<vmem>>, vector<1x8x128xf32>
    %214 = vector.shape_cast %213 : vector<1x8x128xf32> to vector<8x128xf32>
    %c0_211 = arith.constant 0 : index
    %c32_212 = arith.constant 32 : index
    %c0_213 = arith.constant 0 : index
    %215 = vector.load %arg2[%c0_211, %c32_212, %c0_213] : memref<1x144x8xf32, #tpu.memory_space<vmem>>, vector<1x80x8xf32>
    %216 = vector.shape_cast %215 : vector<1x80x8xf32> to vector<80x8xf32>
    %c0_214 = arith.constant 0 : index
    %c33 = arith.constant 33 : index
    %c0_215 = arith.constant 0 : index
    %217 = vector.load %arg1[%c0_214, %c33, %c0_215] : memref<1x144x8xf32, #tpu.memory_space<vmem>>, vector<1x80x8xf32>
    %218 = vector.shape_cast %217 : vector<1x80x8xf32> to vector<80x8xf32>
    %cst_216 = arith.constant dense<0.000000e+00> : vector<80x128xf32>
    %219 = tpu.matmul %216, %214, %cst_216 {dimension_numbers = #tpu.dot_dimension_numbers<[1], [0], [0], [1], [0, 0, 1, 1], [], []>} : vector<80x8xf32>, vector<8x128xf32>, vector<80x128xf32> -> vector<80x128xf32>
    %220 = arith.addf %210, %219 : vector<80x128xf32>
    %cst_217 = arith.constant dense<0.000000e+00> : vector<80x128xf32>
    %221 = tpu.matmul %218, %214, %cst_217 {dimension_numbers = #tpu.dot_dimension_numbers<[1], [0], [0], [1], [0, 0, 1, 1], [], []>} : vector<80x8xf32>, vector<8x128xf32>, vector<80x128xf32> -> vector<80x128xf32>
    %222 = arith.addf %212, %221 : vector<80x128xf32>
    %c22 = arith.constant 22 : index
    %c0_218 = arith.constant 0 : index
    %c0_219 = arith.constant 0 : index
    %223 = vector.load %arg3[%c22, %c0_218, %c0_219] : memref<25x8x128xf32, #tpu.memory_space<vmem>>, vector<1x8x128xf32>
    %224 = vector.shape_cast %223 : vector<1x8x128xf32> to vector<8x128xf32>
    %c0_220 = arith.constant 0 : index
    %c33_221 = arith.constant 33 : index
    %c0_222 = arith.constant 0 : index
    %225 = vector.load %arg1[%c0_220, %c33_221, %c0_222] : memref<1x144x8xf32, #tpu.memory_space<vmem>>, vector<1x80x8xf32>
    %226 = vector.shape_cast %225 : vector<1x80x8xf32> to vector<80x8xf32>
    %c0_223 = arith.constant 0 : index
    %c33_224 = arith.constant 33 : index
    %c0_225 = arith.constant 0 : index
    %227 = vector.load %arg2[%c0_223, %c33_224, %c0_225] : memref<1x144x8xf32, #tpu.memory_space<vmem>>, vector<1x80x8xf32>
    %228 = vector.shape_cast %227 : vector<1x80x8xf32> to vector<80x8xf32>
    %cst_226 = arith.constant dense<0.000000e+00> : vector<80x128xf32>
    %229 = tpu.matmul %226, %224, %cst_226 {dimension_numbers = #tpu.dot_dimension_numbers<[1], [0], [0], [1], [0, 0, 1, 1], [], []>} : vector<80x8xf32>, vector<8x128xf32>, vector<80x128xf32> -> vector<80x128xf32>
    %230 = arith.addf %220, %229 : vector<80x128xf32>
    %cst_227 = arith.constant dense<0.000000e+00> : vector<80x128xf32>
    %231 = tpu.matmul %228, %224, %cst_227 {dimension_numbers = #tpu.dot_dimension_numbers<[1], [0], [0], [1], [0, 0, 1, 1], [], []>} : vector<80x8xf32>, vector<8x128xf32>, vector<80x128xf32> -> vector<80x128xf32>
    %232 = arith.addf %222, %231 : vector<80x128xf32>
    %c23 = arith.constant 23 : index
    %c0_228 = arith.constant 0 : index
    %c0_229 = arith.constant 0 : index
    %233 = vector.load %arg3[%c23, %c0_228, %c0_229] : memref<25x8x128xf32, #tpu.memory_space<vmem>>, vector<1x8x128xf32>
    %234 = vector.shape_cast %233 : vector<1x8x128xf32> to vector<8x128xf32>
    %c0_230 = arith.constant 0 : index
    %c33_231 = arith.constant 33 : index
    %c0_232 = arith.constant 0 : index
    %235 = vector.load %arg2[%c0_230, %c33_231, %c0_232] : memref<1x144x8xf32, #tpu.memory_space<vmem>>, vector<1x80x8xf32>
    %236 = vector.shape_cast %235 : vector<1x80x8xf32> to vector<80x8xf32>
    %c0_233 = arith.constant 0 : index
    %c34 = arith.constant 34 : index
    %c0_234 = arith.constant 0 : index
    %237 = vector.load %arg1[%c0_233, %c34, %c0_234] : memref<1x144x8xf32, #tpu.memory_space<vmem>>, vector<1x80x8xf32>
    %238 = vector.shape_cast %237 : vector<1x80x8xf32> to vector<80x8xf32>
    %cst_235 = arith.constant dense<0.000000e+00> : vector<80x128xf32>
    %239 = tpu.matmul %236, %234, %cst_235 {dimension_numbers = #tpu.dot_dimension_numbers<[1], [0], [0], [1], [0, 0, 1, 1], [], []>} : vector<80x8xf32>, vector<8x128xf32>, vector<80x128xf32> -> vector<80x128xf32>
    %240 = arith.addf %230, %239 : vector<80x128xf32>
    %cst_236 = arith.constant dense<0.000000e+00> : vector<80x128xf32>
    %241 = tpu.matmul %238, %234, %cst_236 {dimension_numbers = #tpu.dot_dimension_numbers<[1], [0], [0], [1], [0, 0, 1, 1], [], []>} : vector<80x8xf32>, vector<8x128xf32>, vector<80x128xf32> -> vector<80x128xf32>
    %242 = arith.addf %232, %241 : vector<80x128xf32>
    %c24_237 = arith.constant 24 : index
    %c0_238 = arith.constant 0 : index
    %c0_239 = arith.constant 0 : index
    %243 = vector.load %arg3[%c24_237, %c0_238, %c0_239] : memref<25x8x128xf32, #tpu.memory_space<vmem>>, vector<1x8x128xf32>
    %244 = vector.shape_cast %243 : vector<1x8x128xf32> to vector<8x128xf32>
    %c0_240 = arith.constant 0 : index
    %c34_241 = arith.constant 34 : index
    %c0_242 = arith.constant 0 : index
    %245 = vector.load %arg1[%c0_240, %c34_241, %c0_242] : memref<1x144x8xf32, #tpu.memory_space<vmem>>, vector<1x80x8xf32>
    %246 = vector.shape_cast %245 : vector<1x80x8xf32> to vector<80x8xf32>
    %c0_243 = arith.constant 0 : index
    %c34_244 = arith.constant 34 : index
    %c0_245 = arith.constant 0 : index
    %247 = vector.load %arg2[%c0_243, %c34_244, %c0_245] : memref<1x144x8xf32, #tpu.memory_space<vmem>>, vector<1x80x8xf32>
    %248 = vector.shape_cast %247 : vector<1x80x8xf32> to vector<80x8xf32>
    %cst_246 = arith.constant dense<0.000000e+00> : vector<80x128xf32>
    %249 = tpu.matmul %246, %244, %cst_246 {dimension_numbers = #tpu.dot_dimension_numbers<[1], [0], [0], [1], [0, 0, 1, 1], [], []>} : vector<80x8xf32>, vector<8x128xf32>, vector<80x128xf32> -> vector<80x128xf32>
    %250 = arith.addf %240, %249 : vector<80x128xf32>
    %cst_247 = arith.constant dense<0.000000e+00> : vector<80x128xf32>
    %251 = tpu.matmul %248, %244, %cst_247 {dimension_numbers = #tpu.dot_dimension_numbers<[1], [0], [0], [1], [0, 0, 1, 1], [], []>} : vector<80x8xf32>, vector<8x128xf32>, vector<80x128xf32> -> vector<80x128xf32>
    %252 = arith.addf %242, %251 : vector<80x128xf32>
    %253 = arith.maximumf %250, %252 : vector<80x128xf32>
    %254 = vector.broadcast %0 : vector<1x128xf32> to vector<80x128xf32>
    %255 = arith.addf %253, %254 : vector<80x128xf32>
    %cst_248 = arith.constant 0.000000e+00 : f32
    %256 = vector.broadcast %cst_248 : f32 to vector<80x128xf32>
    %257 = arith.maximumf %255, %256 : vector<80x128xf32>
    %258 = vector.shape_cast %257 : vector<80x128xf32> to vector<5x2x8x128xf32>
    %259 = vector.extract_strided_slice %258 {offsets = [0, 0, 0, 0], sizes = [5, 1, 8, 128], strides = [1, 1, 1, 1]} : vector<5x2x8x128xf32> to vector<5x1x8x128xf32>
    %260 = vector.shape_cast %259 : vector<5x1x8x128xf32> to vector<5x8x128xf32>
    %261 = vector.extract_strided_slice %258 {offsets = [0, 1, 0, 0], sizes = [5, 1, 8, 128], strides = [1, 1, 1, 1]} : vector<5x2x8x128xf32> to vector<5x1x8x128xf32>
    %262 = vector.shape_cast %261 : vector<5x1x8x128xf32> to vector<5x8x128xf32>
    %263 = arith.maximumf %260, %262 : vector<5x8x128xf32>
    %c0_249 = arith.constant 0 : index
    %c0_250 = arith.constant 0 : index
    %c0_251 = arith.constant 0 : index
    %c0_252 = arith.constant 0 : index
    %264 = vector.load %arg5[%c0_249, %c0_250, %c0_251, %c0_252] : memref<1x5x8x128xf32, #tpu.memory_space<vmem>>, vector<1x5x8x128xf32>
    %265 = vector.shape_cast %264 : vector<1x5x8x128xf32> to vector<5x8x128xf32>
    %266 = vector.shape_cast %263 : vector<5x8x128xf32> to vector<1x5x8x128xf32>
    tpu.vector_store %arg5[%c0_249, %c0_250, %c0_251, %c0_252], %266 {strides = array<i32>} : memref<1x5x8x128xf32, #tpu.memory_space<vmem>>, vector<1x5x8x128xf32>,
    return
  }
  func.func @transform_0(%arg0: i32) -> (i32, i32, i32) {
    %c0_i32 = arith.constant 0 : i32
    %c0_i32_0 = arith.constant 0 : i32
    %c0_i32_1 = arith.constant 0 : i32
    return %arg0, %c0_i32, %c0_i32_0 : i32, i32, i32
  }
  func.func @transform_1(%arg0: i32) -> (i32, i32, i32) {
    %c0_i32 = arith.constant 0 : i32
    %c0_i32_0 = arith.constant 0 : i32
    %c0_i32_1 = arith.constant 0 : i32
    return %arg0, %c0_i32, %c0_i32_0 : i32, i32, i32
  }
  func.func @transform_2(%arg0: i32) -> (i32, i32, i32) {
    %c0_i32 = arith.constant 0 : i32
    %c0_i32_0 = arith.constant 0 : i32
    %c0_i32_1 = arith.constant 0 : i32
    %c0_i32_2 = arith.constant 0 : i32
    return %c0_i32, %c0_i32_0, %c0_i32_1 : i32, i32, i32
  }
  func.func @transform_3(%arg0: i32) -> (i32, i32) {
    %c0_i32 = arith.constant 0 : i32
    %c0_i32_0 = arith.constant 0 : i32
    %c0_i32_1 = arith.constant 0 : i32
    return %c0_i32, %c0_i32_0 : i32, i32
  }
  func.func @transform_4(%arg0: i32) -> (i32, i32, i32, i32) {
    %c0_i32 = arith.constant 0 : i32
    %c0_i32_0 = arith.constant 0 : i32
    %c0_i32_1 = arith.constant 0 : i32
    %c0_i32_2 = arith.constant 0 : i32
    return %arg0, %c0_i32, %c0_i32_0, %c0_i32_1 : i32, i32, i32, i32
  }
}

</mosaic_0001>

<llo_original>
// kernel: net_base_forward.3
$region0: #{net_base_forward.3}
  #allocation0 [shape = 'u32[]', space=smem, size = 0x4, offset = 0x4, fixed_abs, tag = 'smem constant byte address 0x4 - core index']
  #allocation1 [shape = 'u32[72,128]{1,0:T(1,128)}', space=vmem, size = 0x9000, scoped, tag = 'internal scratch']
  %s0 = inlined_call_operand.vmem [shape: f32[2,576,8], index: 0, kind: input, shape index: {}]
  %s1 = inlined_call_operand.vmem [shape: f32[2,576,8], index: 1, kind: input, shape index: {}]
  %s2 = inlined_call_operand.hbm [shape: f32[25,8,128], index: 2, kind: input, shape index: {}]
  %s3 = inlined_call_operand.hbm [shape: f32[1,128], index: 3, kind: input, shape index: {}]
  %s4 = inlined_call_operand.vmem [shape: f32[2,14,16,128], index: 4, kind: output, shape index: {}]
  %s5 = sld [smem:[#allocation0]]
  $region64: #{net_base_forward.3} parent=0
    _
  %s7 = ssub.s32 1, %s5
  %s8 = scalar_select 0, %s7, %s5
  $region1: #{net_base_forward.3} parent=0
    #allocation2 [shape = 'u8[102400]{0}', space=vmem, size = 0x19000, scoped, tag = 'input window, operand 2, single buffered']
    #allocation3 [shape = 's32[2]{0}', space=sflag, size = 0x8, scoped, tag = 'scoped memory for net_base_forward.3']
    #allocation4 [shape = 'u8[512]{0}', space=vmem, size = 0x400, scoped, tag = 'input window, operand 3, single buffered']
    #allocation5 [shape = 's32[1]{0}', space=sflag, size = 0x4, scoped, tag = 'scoped memory for net_base_forward.3']
    %9 = vsyncpa [#allocation3], 0
    %10 = vsyncpa [#allocation5], 0
    loop: start=0, step=1, limit=4
    $region2: #{net_base_forward.3} parent=1 // loop_pre_header
      _
    $region3: #{net_base_forward.3} parent=1 // loop_header
      %s12 = sphi 0, %s16
      %p13 = scmp.ge.s32.totalorder %s12, 4
      %s22 = sphi 0, %s24
      %s25 = sphi 0, %s22
      %s26 = sphi 0, %s25
      %s42 = sphi 0, %s26
      %s48 = sphi 0, %s50
      %s51 = sphi 0, %s48
      %s52 = sphi 0, %s51
      %s68 = sphi 0, %s52
      %s72 = sphi 0, %s72
      %s74 = sphi 0, %s72
      %s75 = sphi 0, %s74
      %s89 = sphi 0, %s75
      %s93 = sphi 0, %s93
      %s95 = sphi 0, %s93
      %s96 = sphi 0, %s95
      %s110 = sphi 0, %s96
      %s116 = sphi 0, %s118
      %s119 = sphi 0, %s116
      %s120 = sphi 0, %s119
      %s136 = sphi 0, %s120
    $region4: #{net_base_forward.3} parent=1 // loop_header_branch
      %15 = sbr.rel (%p13) target = $region8
    $region5: #{net_base_forward.3} parent=1 // loop_body
      %s17 = ssub.s32 %s12, 1
      %s18 = ssub.s32 %s12, 2
      %s19 = sadd.s32 %s12, 1
      %s20 = ssub.s32 %s12, %s19
      %p21 = scmp.eq.s32.totalorder %s20, 0
      %s23 = sadd.s32 %s22, 1
      %s24 = scalar_select %p21, %s22, %s23
      %p27 = pneg %p21
      %p28 = scmp.eq.s32.totalorder %s12, 1
      %p29 = por %p27, %p28
      %p30 = scmp.ne.s32.totalorder %s22, %s25
      %p31 = scmp.eq.s32.totalorder %s12, 0
      %p32 = por %p30, %p31
      %p33 = scmp.ne.s32.totalorder %s22, %s25
      %p34 = scmp.eq.s32.totalorder %s17, 1
      %p35 = por %p33, %p34
      %p36 = scmp.ne.s32.totalorder %s25, %s26
      %p37 = scmp.eq.s32.totalorder %s17, 0
      %p38 = por %p36, %p37
      %p39 = scmp.ne.s32.totalorder %s25, %s26
      %p40 = scmp.eq.s32.totalorder %s18, 1
      %p41 = por %p39, %p40
      %p43 = scmp.ne.s32.totalorder %s26, %s42
      %p44 = scmp.eq.s32.totalorder %s18, 0
      %p45 = por %p43, %p44
      %s46 = ssub.s32 %s12, %s19
      %p47 = scmp.eq.s32.totalorder %s46, 0
      %s49 = sadd.s32 %s48, 1
      %s50 = scalar_select %p47, %s48, %s49
      %p53 = pneg %p47
      %p54 = scmp.eq.s32.totalorder %s12, 1
      %p55 = por %p53, %p54
      %p56 = scmp.ne.s32.totalorder %s48, %s51
      %p57 = scmp.eq.s32.totalorder %s12, 0
      %p58 = por %p56, %p57
      %p59 = scmp.ne.s32.totalorder %s48, %s51
      %p60 = scmp.eq.s32.totalorder %s17, 1
      %p61 = por %p59, %p60
      %p62 = scmp.ne.s32.totalorder %s51, %s52
      %p63 = scmp.eq.s32.totalorder %s17, 0
      %p64 = por %p62, %p63
      %p65 = scmp.ne.s32.totalorder %s51, %s52
      %p66 = scmp.eq.s32.totalorder %s18, 1
      %p67 = por %p65, %p66
      %p69 = scmp.ne.s32.totalorder %s52, %s68
      %p70 = scmp.eq.s32.totalorder %s18, 0
      %p71 = por %p69, %p70
      %s73 = sadd.s32 %s72, 1
      %p76 = scmp.eq.s32.totalorder %s12, 1
      %p77 = scmp.ne.s32.totalorder %s72, %s74
      %p78 = scmp.eq.s32.totalorder %s12, 0
      %p79 = por %p77, %p78
      %p80 = scmp.ne.s32.totalorder %s72, %s74
      %p81 = scmp.eq.s32.totalorder %s17, 1
      %p82 = por %p80, %p81
      %p83 = scmp.ne.s32.totalorder %s74, %s75
      %p84 = scmp.eq.s32.totalorder %s17, 0
      %p85 = por %p83, %p84
      %p86 = scmp.ne.s32.totalorder %s74, %s75
      %p87 = scmp.eq.s32.totalorder %s18, 1
      %p88 = por %p86, %p87
      %p90 = scmp.ne.s32.totalorder %s75, %s89
      %p91 = scmp.eq.s32.totalorder %s18, 0
      %p92 = por %p90, %p91
      %s94 = sadd.s32 %s93, 1
      %p97 = scmp.eq.s32.totalorder %s12, 1
      %p98 = scmp.ne.s32.totalorder %s93, %s95
      %p99 = scmp.eq.s32.totalorder %s12, 0
      %p100 = por %p98, %p99
      %p101 = scmp.ne.s32.totalorder %s93, %s95
      %p102 = scmp.eq.s32.totalorder %s17, 1
      %p103 = por %p101, %p102
      %p104 = scmp.ne.s32.totalorder %s95, %s96
      %p105 = scmp.eq.s32.totalorder %s17, 0
      %p106 = por %p104, %p105
      %p107 = scmp.ne.s32.totalorder %s95, %s96
      %p108 = scmp.eq.s32.totalorder %s18, 1
      %p109 = por %p107, %p108
      %p111 = scmp.ne.s32.totalorder %s96, %s110
      %p112 = scmp.eq.s32.totalorder %s18, 0
      %p113 = por %p111, %p112
      %s114 = ssub.s32 %s12, %s19
      %p115 = scmp.eq.s32.totalorder %s114, 0
      %s117 = sadd.s32 %s116, 1
      %s118 = scalar_select %p115, %s116, %s117
      %p121 = pneg %p115
      %p122 = scmp.eq.s32.totalorder %s12, 1
      %p123 = por %p121, %p122
      %p124 = scmp.ne.s32.totalorder %s116, %s119
      %p125 = scmp.eq.s32.totalorder %s12, 0
      %p126 = por %p124, %p125
      %p127 = scmp.ne.s32.totalorder %s116, %s119
      %p128 = scmp.eq.s32.totalorder %s17, 1
      %p129 = por %p127, %p128
      %p130 = scmp.ne.s32.totalorder %s119, %s120
      %p131 = scmp.eq.s32.totalorder %s17, 0
      %p132 = por %p130, %p131
      %p133 = scmp.ne.s32.totalorder %s119, %s120
      %p134 = scmp.eq.s32.totalorder %s18, 1
      %p135 = por %p133, %p134
      %p137 = scmp.ne.s32.totalorder %s120, %s136
      %p138 = scmp.eq.s32.totalorder %s18, 0
      %p139 = por %p137, %p138
      %p140 = scmp.le.s32.totalorder 1, %s12
      %p141 = scmp.lt.s32.totalorder %s12, 3
      %p142 = pnand %p140, %p141
      %p143 = pneg %p142
      // Predicated region
      $region9: #{net_base_forward.3} parent=5 // pred_check
        _
      $region10: #{net_base_forward.3} parent=5 // pred_check_branch
        %145 = sbr.rel (%p142) target = $region12
      $region11: #{net_base_forward.3} parent=5 // pred_region
        %s146 = ssub.s32 %s12, 1
        // Predicated region
        $region13: #{net_base_forward.3} parent=11 // pred_check
          %p147 = pneg %p85
        $region14: #{net_base_forward.3} parent=11 // pred_check_branch
          %149 = sbr.rel (%p147) target = $region16
        $region15: #{net_base_forward.3} parent=11 // pred_region
          %151 = vsyncadd [#allocation3], 0
          %s152 = sshll.u32 %s2, 4
          %s153 = int_to_ptr.hbm [resolvable:$true] %s152
          %s154 = sshll.u32 [#allocation2], 4
          %s155 = int_to_ptr.vmem [resolvable:$true] %s154
          %160 = dma.hbm_to_vmem [thread:$0]  %s153, 3200, %s155, [#allocation3], 128, 128, 8
        $region16: #{net_base_forward.3} parent=11 // pred_fallthru
          _
        // Predicated region
        $region17: #{net_base_forward.3} parent=11 // pred_check
          %p161 = pneg %p106
        $region18: #{net_base_forward.3} parent=11 // pred_check_branch
          %163 = sbr.rel (%p161) target = $region20
        $region19: #{net_base_forward.3} parent=11 // pred_region
          %165 = vsyncadd [#allocation5], 0
          %s167 = sshll.u32 %s3, 4
          %s168 = int_to_ptr.hbm [resolvable:$true] %s167
          %s169 = sshll.u32 [#allocation4], 4
          %s170 = int_to_ptr.vmem [resolvable:$true] %s169
          %172 = dma.hbm_to_vmem [thread:$0]  %s168, 16, %s170, [#allocation5]
        $region20: #{net_base_forward.3} parent=11 // pred_fallthru
          _
      $region12: #{net_base_forward.3} parent=5 // pred_fallthru
        _
      %p173 = scmp.lt.s32.totalorder %s12, 2
      // Predicated region
      $region21: #{net_base_forward.3} parent=5 // pred_check
        %p174 = pneg %p173
      $region22: #{net_base_forward.3} parent=5 // pred_check_branch
        %176 = sbr.rel (%p174) target = $region24
      $region23: #{net_base_forward.3} parent=5 // pred_region
        // Predicated region
        $region25: #{net_base_forward.3} parent=23 // pred_check
          %p177 = pneg %p32
        $region26: #{net_base_forward.3} parent=23 // pred_check_branch
          %179 = sbr.rel (%p177) target = $region28
        $region27: #{net_base_forward.3} parent=23 // pred_region
          %p180 = scmp.lt.s32.totalorder %s12, 1
          %s181 = scalar_select %p180, %s12, 1
          %s182 = smul.addr %s181, 72
          %s183 = smul.addr %s182, 8
          %s184 = scalar_lea.vmem %s0, %s183
        $region28: #{net_base_forward.3} parent=23 // pred_fallthru
          _
        // Predicated region
        $region29: #{net_base_forward.3} parent=23 // pred_check
          %p185 = pneg %p58
        $region30: #{net_base_forward.3} parent=23 // pred_check_branch
          %187 = sbr.rel (%p185) target = $region32
        $region31: #{net_base_forward.3} parent=23 // pred_region
          %p188 = scmp.lt.s32.totalorder %s12, 1
          %s189 = scalar_select %p188, %s12, 1
          %s190 = smul.addr %s189, 72
          %s191 = smul.addr %s190, 8
          %s192 = scalar_lea.vmem %s1, %s191
        $region32: #{net_base_forward.3} parent=23 // pred_fallthru
          _
      $region24: #{net_base_forward.3} parent=5 // pred_fallthru
        _
      %p193 = scmp.le.s32.totalorder 1, %s12
      %p194 = scmp.lt.s32.totalorder %s12, 3
      %p195 = pnand %p193, %p194
      %p196 = pneg %p195
      // Predicated region
      $region33: #{net_base_forward.3} parent=5 // pred_check
        _
      $region34: #{net_base_forward.3} parent=5 // pred_check_branch
        %198 = sbr.rel (%p195) target = $region36
      $region35: #{net_base_forward.3} parent=5 // pred_region
        %s199 = ssub.s32 %s12, 1
        // Predicated region
        $region37: #{net_base_forward.3} parent=35 // pred_check
          %p200 = pneg %p85
        $region38: #{net_base_forward.3} parent=35 // pred_check_branch
          %202 = sbr.rel (%p200) target = $region40
        $region39: #{net_base_forward.3} parent=35 // pred_region
          %204 = dma.done [#allocation3], 3200
        $region40: #{net_base_forward.3} parent=35 // pred_fallthru
          _
        // Predicated region
        $region41: #{net_base_forward.3} parent=35 // pred_check
          %p205 = pneg %p106
        $region42: #{net_base_forward.3} parent=35 // pred_check_branch
          %207 = sbr.rel (%p205) target = $region44
        $region43: #{net_base_forward.3} parent=35 // pred_region
          %209 = dma.done [#allocation5], 16
        $region44: #{net_base_forward.3} parent=35 // pred_fallthru
          _
        %p210 = scmp.lt.s32.totalorder %s17, 1
        %s211 = scalar_select %p210, %s17, 1
        %s212 = smul.addr %s211, 72
        %s213 = smul.addr %s212, 8
        %s214 = scalar_lea.vmem %s0, %s213
        %p215 = pneg %p38
        %p216 = pneg %p35
        %p217 = scmp.lt.s32.totalorder %s17, 1
        %s218 = scalar_select %p217, %s17, 1
        %s219 = smul.addr %s218, 72
        %s220 = smul.addr %s219, 8
        %s221 = scalar_lea.vmem %s1, %s220
        %p222 = pneg %p64
        %p223 = pneg %p61
        %p224 = pneg %p85
        %p225 = pneg %p82
        %p226 = pneg %p106
        %p227 = pneg %p103
        %p228 = pneg %p132
        %p229 = pneg %p129
        %p230 = scmp.lt.s32.totalorder %s17, 1
        %s231 = scalar_select %p230, %s17, 1
        %s232 = smul.addr %s231, 28
        %s233 = smul.addr %s232, 8
        %s234 = scalar_lea.vmem %s4, %s233
        %p235 = scmp.lt.s32.totalorder %s17, 1
        %s236 = scalar_select %p235, %s17, 1
        %s237 = smul.addr %s236, 72
        %s238 = smul.addr %s237, 8
        %s239 = scalar_lea.vmem %s0, %s238
        %p240 = scmp.lt.s32.totalorder %s17, 1
        %s241 = scalar_select %p240, %s17, 1
        %s242 = smul.addr %s241, 72
        %s243 = smul.addr %s242, 8
        %s244 = scalar_lea.vmem %s1, %s243
        %p245 = scmp.lt.s32.totalorder %s17, 1
        %s246 = scalar_select %p245, %s17, 1
        %s247 = smul.addr %s246, 28
        %s248 = smul.addr %s247, 8
        %s249 = scalar_lea.vmem %s4, %s248
        %v250 = vld [vmem:[#allocation4] sm:$0x1]
        loop: start=0, step=1, limit=7
        $region45: #{net_base_forward.3} parent=35 // loop_pre_header
          _
        $region46: #{net_base_forward.3} parent=35 // loop_header
          %s252 = sphi 0, %s256
          %p253 = scmp.ge.s32.totalorder %s252, 7
        $region47: #{net_base_forward.3} parent=35 // loop_header_branch
          %255 = sbr.rel (%p253) target = $region51
        $region48: #{net_base_forward.3} parent=35 // loop_body
          %s257 = smul.u32 %s252, 64
          %v258 = vld [vmem:[#allocation2] sm:$0xff]
          %s259 = scalar_lea.vmem %s239, %s257
          %v260 = vld [vmem:[%s259] sm:$0xff]
          %v261 = vld [vmem:[%s259 + $0x8] sm:$0xff]
          %v262 = vld [vmem:[%s259 + $0x10] sm:$0xff]
          %v263 = vld [vmem:[%s259 + $0x18] sm:$0xff]
          %v264 = vld [vmem:[%s259 + $0x20] sm:$0xff]
          %v265 = vld [vmem:[%s259 + $0x28] sm:$0xff]
          %v266 = vld [vmem:[%s259 + $0x30] sm:$0xff]
          %v267 = vld [vmem:[%s259 + $0x38] sm:$0xff]
          %s268 = scalar_lea.vmem %s244, %s257
          %v269 = vld [vmem:[%s268] sm:$0xff]
          %v270 = vld [vmem:[%s268 + $0x8] sm:$0xff]
          %v271 = vld [vmem:[%s268 + $0x10] sm:$0xff]
          %v272 = vld [vmem:[%s268 + $0x18] sm:$0xff]
          %v273 = vld [vmem:[%s268 + $0x20] sm:$0xff]
          %v274 = vld [vmem:[%s268 + $0x28] sm:$0xff]
          %v275 = vld [vmem:[%s268 + $0x30] sm:$0xff]
          %v276 = vld [vmem:[%s268 + $0x38] sm:$0xff]
          %s277 = scalar_lea.vmem [#allocation2], 8
          %v278 = vld [vmem:[%s277] sm:$0xff]
          %s279 = sadd.s32 %s257, 1
          %s280 = scalar_lea.vmem %s239, %s279
          %v281 = vld [vmem:[%s280] sm:$0xff]
          %v282 = vld [vmem:[%s280 + $0x8] sm:$0xff]
          %v283 = vld [vmem:[%s280 + $0x10] sm:$0xff]
          %v284 = vld [vmem:[%s280 + $0x18] sm:$0xff]
          %v285 = vld [vmem:[%s280 + $0x20] sm:$0xff]
          %v286 = vld [vmem:[%s280 + $0x28] sm:$0xff]
          %v287 = vld [vmem:[%s280 + $0x30] sm:$0xff]
          %v288 = vld [vmem:[%s280 + $0x38] sm:$0xff]
          %vm289 = vcmask 64512
          %v291 = vsel %vm289, %v269, 0
          %v294 = vsel %vm289, %v270, 0
          %v297 = vsel %vm289, %v271, 0
          %v300 = vsel %vm289, %v272, 0
          %v303 = vsel %vm289, %v273, 0
          %v306 = vsel %vm289, %v274, 0
          %v309 = vsel %vm289, %v275, 0
          %v312 = vsel %vm289, %v276, 0
          %314 = vmatpush.msra.mxu0 0.0
          %315 = vmatpush.msra.mxu0 0.0
          %316 = vmatpush.msra.mxu0 0.0
          %317 = vmatpush.msra.mxu0 0.0
          %318 = vmatpush.msra.mxu0 0.0
          %319 = vmatpush.msra.mxu0 0.0
          %320 = vmatpush.msra.mxu0 0.0
          %321 = vmatpush.msra.mxu0 0.0
          %322 = vmatpush.msra.mxu0 0.0
          %323 = vmatpush.msra.mxu0 0.0
          %324 = vmatpush.msra.mxu0 0.0
          %325 = vmatpush.msra.mxu0 0.0
          %326 = vmatpush.msra.mxu0 0.0
          %327 = vmatpush.msra.mxu0 0.0
          %328 = vmatpush.msra.mxu0 0.0
          %329 = vmatpush.msra.mxu0 %v278
          %330 = vmatmul.f32.gmra.mxu0 %v291
          %v331 = vpop.f32.mrf.mxu0
          %v332 = vadd.f32 0.0, %v331
          %333 = vmatmul.f32.gmra.mxu0 %v294
          %v334 = vpop.f32.mrf.mxu0
          %v335 = vadd.f32 0.0, %v334
          %336 = vmatmul.f32.gmra.mxu0 %v297
          %v337 = vpop.f32.mrf.mxu0
          %v338 = vadd.f32 0.0, %v337
          %339 = vmatmul.f32.gmra.mxu0 %v300
          %v340 = vpop.f32.mrf.mxu0
          %v341 = vadd.f32 0.0, %v340
          %342 = vmatmul.f32.gmra.mxu0 %v303
          %v343 = vpop.f32.mrf.mxu0
          %v344 = vadd.f32 0.0, %v343
          %345 = vmatmul.f32.gmra.mxu0 %v306
          %v346 = vpop.f32.mrf.mxu0
          %v347 = vadd.f32 0.0, %v346
          %348 = vmatmul.f32.gmra.mxu0 %v309
          %v349 = vpop.f32.mrf.mxu0
          %v350 = vadd.f32 0.0, %v349
          %351 = vmatmul.f32.gmra.mxu0 %v312
          %v352 = vpop.f32.mrf.mxu0
          %v353 = vadd.f32 0.0, %v352
          %354 = vdwg.mxu0
          %v356 = vsel %vm289, %v260, 0
          %v359 = vsel %vm289, %v261, 0
          %v362 = vsel %vm289, %v262, 0
          %v365 = vsel %vm289, %v263, 0
          %v368 = vsel %vm289, %v264, 0
          %v371 = vsel %vm289, %v265, 0
          %v374 = vsel %vm289, %v266, 0
          %v377 = vsel %vm289, %v267, 0
          %379 = vmatpush.msra.mxu0 0.0
          %380 = vmatpush.msra.mxu0 0.0
          %381 = vmatpush.msra.mxu0 0.0
          %382 = vmatpush.msra.mxu0 0.0
          %383 = vmatpush.msra.mxu0 0.0
          %384 = vmatpush.msra.mxu0 0.0
          %385 = vmatpush.msra.mxu0 0.0
          %386 = vmatpush.msra.mxu0 0.0
          %387 = vmatpush.msra.mxu0 0.0
          %388 = vmatpush.msra.mxu0 0.0
          %389 = vmatpush.msra.mxu0 0.0
          %390 = vmatpush.msra.mxu0 0.0
          %391 = vmatpush.msra.mxu0 0.0
          %392 = vmatpush.msra.mxu0 0.0
          %393 = vmatpush.msra.mxu0 0.0
          %394 = vmatpush.msra.mxu0 %v258
          %395 = vmatmul.f32.gmra.mxu0 %v356
          %v396 = vpop.f32.mrf.mxu0
          %v397 = vadd.f32 %v332, %v396
          %398 = vmatmul.f32.gmra.mxu0 %v359
          %v399 = vpop.f32.mrf.mxu0
          %v400 = vadd.f32 %v335, %v399
          %401 = vmatmul.f32.gmra.mxu0 %v362
          %v402 = vpop.f32.mrf.mxu0
          %v403 = vadd.f32 %v338, %v402
          %404 = vmatmul.f32.gmra.mxu0 %v365
          %v405 = vpop.f32.mrf.mxu0
          %v406 = vadd.f32 %v341, %v405
          %407 = vmatmul.f32.gmra.mxu0 %v368
          %v408 = vpop.f32.mrf.mxu0
          %v409 = vadd.f32 %v344, %v408
          %410 = vmatmul.f32.gmra.mxu0 %v371
          %v411 = vpop.f32.mrf.mxu0
          %v412 = vadd.f32 %v347, %v411
          %413 = vmatmul.f32.gmra.mxu0 %v374
          %v414 = vpop.f32.mrf.mxu0
          %v415 = vadd.f32 %v350, %v414
          %416 = vmatmul.f32.gmra.mxu0 %v377
          %v417 = vpop.f32.mrf.mxu0
          %v418 = vadd.f32 %v353, %v417
          %419 = vdwg.mxu0
          %v421 = vsel %vm289, %v281, 0
          %v424 = vsel %vm289, %v282, 0
          %v427 = vsel %vm289, %v283, 0
          %v430 = vsel %vm289, %v284, 0
          %v433 = vsel %vm289, %v285, 0
          %v436 = vsel %vm289, %v286, 0
          %v439 = vsel %vm289, %v287, 0
          %v442 = vsel %vm289, %v288, 0
          %444 = vmatpush.msra.mxu0 0.0
          %445 = vmatpush.msra.mxu0 0.0
          %446 = vmatpush.msra.mxu0 0.0
          %447 = vmatpush.msra.mxu0 0.0
          %448 = vmatpush.msra.mxu0 0.0
          %449 = vmatpush.msra.mxu0 0.0
          %450 = vmatpush.msra.mxu0 0.0
          %451 = vmatpush.msra.mxu0 0.0
          %452 = vmatpush.msra.mxu0 0.0
          %453 = vmatpush.msra.mxu0 0.0
          %454 = vmatpush.msra.mxu0 0.0
          %455 = vmatpush.msra.mxu0 0.0
          %456 = vmatpush.msra.mxu0 0.0
          %457 = vmatpush.msra.mxu0 0.0
          %458 = vmatpush.msra.mxu0 0.0
          %459 = vmatpush.msra.mxu0 %v278
          %460 = vmatmul.f32.gmra.mxu0 %v421
          %v461 = vpop.f32.mrf.mxu0
          %v462 = vadd.f32 0.0, %v461
          %463 = vmatmul.f32.gmra.mxu0 %v424
          %v464 = vpop.f32.mrf.mxu0
          %v465 = vadd.f32 0.0, %v464
          %466 = vmatmul.f32.gmra.mxu0 %v427
          %v467 = vpop.f32.mrf.mxu0
          %v468 = vadd.f32 0.0, %v467
          %469 = vmatmul.f32.gmra.mxu0 %v430
          %v470 = vpop.f32.mrf.mxu0
          %v471 = vadd.f32 0.0, %v470
          %472 = vmatmul.f32.gmra.mxu0 %v433
          %v473 = vpop.f32.mrf.mxu0
          %v474 = vadd.f32 0.0, %v473
          %475 = vmatmul.f32.gmra.mxu0 %v436
          %v476 = vpop.f32.mrf.mxu0
          %v477 = vadd.f32 0.0, %v476
          %478 = vmatmul.f32.gmra.mxu0 %v439
          %v479 = vpop.f32.mrf.mxu0
          %v480 = vadd.f32 0.0, %v479
          %481 = vmatmul.f32.gmra.mxu0 %v442
          %v482 = vpop.f32.mrf.mxu0
          %v483 = vadd.f32 0.0, %v482
          %484 = vdwg.mxu0
          %485 = vmatpush.msra.mxu0 0.0
          %486 = vmatpush.msra.mxu0 0.0
          %487 = vmatpush.msra.mxu0 0.0
          %488 = vmatpush.msra.mxu0 0.0
          %489 = vmatpush.msra.mxu0 0.0
          %490 = vmatpush.msra.mxu0 0.0
          %491 = vmatpush.msra.mxu0 0.0
          %492 = vmatpush.msra.mxu0 0.0
          %493 = vmatpush.msra.mxu0 0.0
          %494 = vmatpush.msra.mxu0 0.0
          %495 = vmatpush.msra.mxu0 0.0
          %496 = vmatpush.msra.mxu0 0.0
          %497 = vmatpush.msra.mxu0 0.0
          %498 = vmatpush.msra.mxu0 0.0
          %499 = vmatpush.msra.mxu0 0.0
          %500 = vmatpush.msra.mxu0 %v258
          %501 = vmatmul.f32.gmra.mxu0 %v291
          %v502 = vpop.f32.mrf.mxu0
          %v503 = vadd.f32 %v462, %v502
          %504 = vmatmul.f32.gmra.mxu0 %v294
          %v505 = vpop.f32.mrf.mxu0
          %v506 = vadd.f32 %v465, %v505
          %507 = vmatmul.f32.gmra.mxu0 %v297
          %v508 = vpop.f32.mrf.mxu0
          %v509 = vadd.f32 %v468, %v508
          %510 = vmatmul.f32.gmra.mxu0 %v300
          %v511 = vpop.f32.mrf.mxu0
          %v512 = vadd.f32 %v471, %v511
          %513 = vmatmul.f32.gmra.mxu0 %v303
          %v514 = vpop.f32.mrf.mxu0
          %v515 = vadd.f32 %v474, %v514
          %516 = vmatmul.f32.gmra.mxu0 %v306
          %v517 = vpop.f32.mrf.mxu0
          %v518 = vadd.f32 %v477, %v517
          %519 = vmatmul.f32.gmra.mxu0 %v309
          %v520 = vpop.f32.mrf.mxu0
          %v521 = vadd.f32 %v480, %v520
          %522 = vmatmul.f32.gmra.mxu0 %v312
          %v523 = vpop.f32.mrf.mxu0
          %v524 = vadd.f32 %v483, %v523
          %525 = vdwg.mxu0
          %s526 = scalar_lea.vmem [#allocation2], 16
          %v527 = vld [vmem:[%s526] sm:$0xff]
          %s528 = scalar_lea.vmem %s244, %s279
          %v529 = vld [vmem:[%s528] sm:$0xff]
          %v530 = vld [vmem:[%s528 + $0x8] sm:$0xff]
          %v531 = vld [vmem:[%s528 + $0x10] sm:$0xff]
          %v532 = vld [vmem:[%s528 + $0x18] sm:$0xff]
          %v533 = vld [vmem:[%s528 + $0x20] sm:$0xff]
          %v534 = vld [vmem:[%s528 + $0x28] sm:$0xff]
          %v535 = vld [vmem:[%s528 + $0x30] sm:$0xff]
          %v536 = vld [vmem:[%s528 + $0x38] sm:$0xff]
          %537 = vmatpush.msra.mxu0 0.0
          %538 = vmatpush.msra.mxu0 0.0
          %539 = vmatpush.msra.mxu0 0.0
          %540 = vmatpush.msra.mxu0 0.0
          %541 = vmatpush.msra.mxu0 0.0
          %542 = vmatpush.msra.mxu0 0.0
          %543 = vmatpush.msra.mxu0 0.0
          %544 = vmatpush.msra.mxu0 0.0
          %545 = vmatpush.msra.mxu0 0.0
          %546 = vmatpush.msra.mxu0 0.0
          %547 = vmatpush.msra.mxu0 0.0
          %548 = vmatpush.msra.mxu0 0.0
          %549 = vmatpush.msra.mxu0 0.0
          %550 = vmatpush.msra.mxu0 0.0
          %551 = vmatpush.msra.mxu0 0.0
          %552 = vmatpush.msra.mxu0 %v527
          %553 = vmatmul.f32.gmra.mxu0 %v421
          %v554 = vpop.f32.mrf.mxu0
          %v555 = vadd.f32 0.0, %v554
          %556 = vmatmul.f32.gmra.mxu0 %v424
          %v557 = vpop.f32.mrf.mxu0
          %v558 = vadd.f32 0.0, %v557
          %559 = vmatmul.f32.gmra.mxu0 %v427
          %v560 = vpop.f32.mrf.mxu0
          %v561 = vadd.f32 0.0, %v560
          %562 = vmatmul.f32.gmra.mxu0 %v430
          %v563 = vpop.f32.mrf.mxu0
          %v564 = vadd.f32 0.0, %v563
          %565 = vmatmul.f32.gmra.mxu0 %v433
          %v566 = vpop.f32.mrf.mxu0
          %v567 = vadd.f32 0.0, %v566
          %568 = vmatmul.f32.gmra.mxu0 %v436
          %v569 = vpop.f32.mrf.mxu0
          %v570 = vadd.f32 0.0, %v569
          %571 = vmatmul.f32.gmra.mxu0 %v439
          %v572 = vpop.f32.mrf.mxu0
          %v573 = vadd.f32 0.0, %v572
          %574 = vmatmul.f32.gmra.mxu0 %v442
          %v575 = vpop.f32.mrf.mxu0
          %v576 = vadd.f32 0.0, %v575
          %577 = vdwg.mxu0
          %v578 = vadd.f32 %v397, %v555
          %v579 = vadd.f32 %v400, %v558
          %v580 = vadd.f32 %v403, %v561
          %v581 = vadd.f32 %v406, %v564
          %v582 = vadd.f32 %v409, %v567
          %v583 = vadd.f32 %v412, %v570
          %v584 = vadd.f32 %v415, %v573
          %v585 = vadd.f32 %v418, %v576
          %v587 = vsel %vm289, %v529, 0
          %v590 = vsel %vm289, %v530, 0
          %v593 = vsel %vm289, %v531, 0
          %v596 = vsel %vm289, %v532, 0
          %v599 = vsel %vm289, %v533, 0
          %v602 = vsel %vm289, %v534, 0
          %v605 = vsel %vm289, %v535, 0
          %v608 = vsel %vm289, %v536, 0
          %610 = vmatpush.msra.mxu0 0.0
          %611 = vmatpush.msra.mxu0 0.0
          %612 = vmatpush.msra.mxu0 0.0
          %613 = vmatpush.msra.mxu0 0.0
          %614 = vmatpush.msra.mxu0 0.0
          %615 = vmatpush.msra.mxu0 0.0
          %616 = vmatpush.msra.mxu0 0.0
          %617 = vmatpush.msra.mxu0 0.0
          %618 = vmatpush.msra.mxu0 0.0
          %619 = vmatpush.msra.mxu0 0.0
          %620 = vmatpush.msra.mxu0 0.0
          %621 = vmatpush.msra.mxu0 0.0
          %622 = vmatpush.msra.mxu0 0.0
          %623 = vmatpush.msra.mxu0 0.0
          %624 = vmatpush.msra.mxu0 0.0
          %625 = vmatpush.msra.mxu0 %v527
          %626 = vmatmul.f32.gmra.mxu0 %v587
          %v627 = vpop.f32.mrf.mxu0
          %v628 = vadd.f32 0.0, %v627
          %629 = vmatmul.f32.gmra.mxu0 %v590
          %v630 = vpop.f32.mrf.mxu0
          %v631 = vadd.f32 0.0, %v630
          %632 = vmatmul.f32.gmra.mxu0 %v593
          %v633 = vpop.f32.mrf.mxu0
          %v634 = vadd.f32 0.0, %v633
          %635 = vmatmul.f32.gmra.mxu0 %v596
          %v636 = vpop.f32.mrf.mxu0
          %v637 = vadd.f32 0.0, %v636
          %638 = vmatmul.f32.gmra.mxu0 %v599
          %v639 = vpop.f32.mrf.mxu0
          %v640 = vadd.f32 0.0, %v639
          %641 = vmatmul.f32.gmra.mxu0 %v602
          %v642 = vpop.f32.mrf.mxu0
          %v643 = vadd.f32 0.0, %v642
          %644 = vmatmul.f32.gmra.mxu0 %v605
          %v645 = vpop.f32.mrf.mxu0
          %v646 = vadd.f32 0.0, %v645
          %647 = vmatmul.f32.gmra.mxu0 %v608
          %v648 = vpop.f32.mrf.mxu0
          %v649 = vadd.f32 0.0, %v648
          %650 = vdwg.mxu0
          %v651 = vadd.f32 %v503, %v628
          %v652 = vadd.f32 %v506, %v631
          %v653 = vadd.f32 %v509, %v634
          %v654 = vadd.f32 %v512, %v637
          %v655 = vadd.f32 %v515, %v640
          %v656 = vadd.f32 %v518, %v643
          %v657 = vadd.f32 %v521, %v646
          %v658 = vadd.f32 %v524, %v649
          %s659 = scalar_lea.vmem [#allocation2], 24
          %v660 = vld [vmem:[%s659] sm:$0xff]
          %s661 = sadd.s32 %s257, 2
          %s662 = scalar_lea.vmem %s239, %s661
          %v663 = vld [vmem:[%s662] sm:$0xff]
          %v664 = vld [vmem:[%s662 + $0x8] sm:$0xff]
          %v665 = vld [vmem:[%s662 + $0x10] sm:$0xff]
          %v666 = vld [vmem:[%s662 + $0x18] sm:$0xff]
          %v667 = vld [vmem:[%s662 + $0x20] sm:$0xff]
          %v668 = vld [vmem:[%s662 + $0x28] sm:$0xff]
          %v669 = vld [vmem:[%s662 + $0x30] sm:$0xff]
          %v670 = vld [vmem:[%s662 + $0x38] sm:$0xff]
          %671 = vmatpush.msra.mxu0 0.0
          %672 = vmatpush.msra.mxu0 0.0
          %673 = vmatpush.msra.mxu0 0.0
          %674 = vmatpush.msra.mxu0 0.0
          %675 = vmatpush.msra.mxu0 0.0
          %676 = vmatpush.msra.mxu0 0.0
          %677 = vmatpush.msra.mxu0 0.0
          %678 = vmatpush.msra.mxu0 0.0
          %679 = vmatpush.msra.mxu0 0.0
          %680 = vmatpush.msra.mxu0 0.0
          %681 = vmatpush.msra.mxu0 0.0
          %682 = vmatpush.msra.mxu0 0.0
          %683 = vmatpush.msra.mxu0 0.0
          %684 = vmatpush.msra.mxu0 0.0
          %685 = vmatpush.msra.mxu0 0.0
          %686 = vmatpush.msra.mxu0 %v660
          %687 = vmatmul.f32.gmra.mxu0 %v587
          %v688 = vpop.f32.mrf.mxu0
          %v689 = vadd.f32 0.0, %v688
          %690 = vmatmul.f32.gmra.mxu0 %v590
          %v691 = vpop.f32.mrf.mxu0
          %v692 = vadd.f32 0.0, %v691
          %693 = vmatmul.f32.gmra.mxu0 %v593
          %v694 = vpop.f32.mrf.mxu0
          %v695 = vadd.f32 0.0, %v694
          %696 = vmatmul.f32.gmra.mxu0 %v596
          %v697 = vpop.f32.mrf.mxu0
          %v698 = vadd.f32 0.0, %v697
          %699 = vmatmul.f32.gmra.mxu0 %v599
          %v700 = vpop.f32.mrf.mxu0
          %v701 = vadd.f32 0.0, %v700
          %702 = vmatmul.f32.gmra.mxu0 %v602
          %v703 = vpop.f32.mrf.mxu0
          %v704 = vadd.f32 0.0, %v703
          %705 = vmatmul.f32.gmra.mxu0 %v605
          %v706 = vpop.f32.mrf.mxu0
          %v707 = vadd.f32 0.0, %v706
          %708 = vmatmul.f32.gmra.mxu0 %v608
          %v709 = vpop.f32.mrf.mxu0
          %v710 = vadd.f32 0.0, %v709
          %711 = vdwg.mxu0
          %v712 = vadd.f32 %v578, %v689
          %v713 = vadd.f32 %v579, %v692
          %v714 = vadd.f32 %v580, %v695
          %v715 = vadd.f32 %v581, %v698
          %v716 = vadd.f32 %v582, %v701
          %v717 = vadd.f32 %v583, %v704
          %v718 = vadd.f32 %v584, %v707
          %v719 = vadd.f32 %v585, %v710
          %v721 = vsel %vm289, %v663, 0
          %v724 = vsel %vm289, %v664, 0
          %v727 = vsel %vm289, %v665, 0
          %v730 = vsel %vm289, %v666, 0
          %v733 = vsel %vm289, %v667, 0
          %v736 = vsel %vm289, %v668, 0
          %v739 = vsel %vm289, %v669, 0
          %v742 = vsel %vm289, %v670, 0
          %744 = vmatpush.msra.mxu0 0.0
          %745 = vmatpush.msra.mxu0 0.0
          %746 = vmatpush.msra.mxu0 0.0
          %747 = vmatpush.msra.mxu0 0.0
          %748 = vmatpush.msra.mxu0 0.0
          %749 = vmatpush.msra.mxu0 0.0
          %750 = vmatpush.msra.mxu0 0.0
          %751 = vmatpush.msra.mxu0 0.0
          %752 = vmatpush.msra.mxu0 0.0
          %753 = vmatpush.msra.mxu0 0.0
          %754 = vmatpush.msra.mxu0 0.0
          %755 = vmatpush.msra.mxu0 0.0
          %756 = vmatpush.msra.mxu0 0.0
          %757 = vmatpush.msra.mxu0 0.0
          %758 = vmatpush.msra.mxu0 0.0
          %759 = vmatpush.msra.mxu0 %v660
          %760 = vmatmul.f32.gmra.mxu0 %v721
          %v761 = vpop.f32.mrf.mxu0
          %v762 = vadd.f32 0.0, %v761
          %763 = vmatmul.f32.gmra.mxu0 %v724
          %v764 = vpop.f32.mrf.mxu0
          %v765 = vadd.f32 0.0, %v764
          %766 = vmatmul.f32.gmra.mxu0 %v727
          %v767 = vpop.f32.mrf.mxu0
          %v768 = vadd.f32 0.0, %v767
          %769 = vmatmul.f32.gmra.mxu0 %v730
          %v770 = vpop.f32.mrf.mxu0
          %v771 = vadd.f32 0.0, %v770
          %772 = vmatmul.f32.gmra.mxu0 %v733
          %v773 = vpop.f32.mrf.mxu0
          %v774 = vadd.f32 0.0, %v773
          %775 = vmatmul.f32.gmra.mxu0 %v736
          %v776 = vpop.f32.mrf.mxu0
          %v777 = vadd.f32 0.0, %v776
          %778 = vmatmul.f32.gmra.mxu0 %v739
          %v779 = vpop.f32.mrf.mxu0
          %v780 = vadd.f32 0.0, %v779
          %781 = vmatmul.f32.gmra.mxu0 %v742
          %v782 = vpop.f32.mrf.mxu0
          %v783 = vadd.f32 0.0, %v782
          %784 = vdwg.mxu0
          %v785 = vadd.f32 %v651, %v762
          %v786 = vadd.f32 %v652, %v765
          %v787 = vadd.f32 %v653, %v768
          %v788 = vadd.f32 %v654, %v771
          %v789 = vadd.f32 %v655, %v774
          %v790 = vadd.f32 %v656, %v777
          %v791 = vadd.f32 %v657, %v780
          %v792 = vadd.f32 %v658, %v783
          %s793 = scalar_lea.vmem [#allocation2], 32
          %v794 = vld [vmem:[%s793] sm:$0xff]
          %s795 = scalar_lea.vmem %s244, %s661
          %v796 = vld [vmem:[%s795] sm:$0xff]
          %v797 = vld [vmem:[%s795 + $0x8] sm:$0xff]
          %v798 = vld [vmem:[%s795 + $0x10] sm:$0xff]
          %v799 = vld [vmem:[%s795 + $0x18] sm:$0xff]
          %v800 = vld [vmem:[%s795 + $0x20] sm:$0xff]
          %v801 = vld [vmem:[%s795 + $0x28] sm:$0xff]
          %v802 = vld [vmem:[%s795 + $0x30] sm:$0xff]
          %v803 = vld [vmem:[%s795 + $0x38] sm:$0xff]
          %804 = vmatpush.msra.mxu0 0.0
          %805 = vmatpush.msra.mxu0 0.0
          %806 = vmatpush.msra.mxu0 0.0
          %807 = vmatpush.msra.mxu0 0.0
          %808 = vmatpush.msra.mxu0 0.0
          %809 = vmatpush.msra.mxu0 0.0
          %810 = vmatpush.msra.mxu0 0.0
          %811 = vmatpush.msra.mxu0 0.0
          %812 = vmatpush.msra.mxu0 0.0
          %813 = vmatpush.msra.mxu0 0.0
          %814 = vmatpush.msra.mxu0 0.0
          %815 = vmatpush.msra.mxu0 0.0
          %816 = vmatpush.msra.mxu0 0.0
          %817 = vmatpush.msra.mxu0 0.0
          %818 = vmatpush.msra.mxu0 0.0
          %819 = vmatpush.msra.mxu0 %v794
          %820 = vmatmul.f32.gmra.mxu0 %v721
          %v821 = vpop.f32.mrf.mxu0
          %v822 = vadd.f32 0.0, %v821
          %823 = vmatmul.f32.gmra.mxu0 %v724
          %v824 = vpop.f32.mrf.mxu0
          %v825 = vadd.f32 0.0, %v824
          %826 = vmatmul.f32.gmra.mxu0 %v727
          %v827 = vpop.f32.mrf.mxu0
          %v828 = vadd.f32 0.0, %v827
          %829 = vmatmul.f32.gmra.mxu0 %v730
          %v830 = vpop.f32.mrf.mxu0
          %v831 = vadd.f32 0.0, %v830
          %832 = vmatmul.f32.gmra.mxu0 %v733
          %v833 = vpop.f32.mrf.mxu0
          %v834 = vadd.f32 0.0, %v833
          %835 = vmatmul.f32.gmra.mxu0 %v736
          %v836 = vpop.f32.mrf.mxu0
          %v837 = vadd.f32 0.0, %v836
          %838 = vmatmul.f32.gmra.mxu0 %v739
          %v839 = vpop.f32.mrf.mxu0
          %v840 = vadd.f32 0.0, %v839
          %841 = vmatmul.f32.gmra.mxu0 %v742
          %v842 = vpop.f32.mrf.mxu0
          %v843 = vadd.f32 0.0, %v842
          %844 = vdwg.mxu0
          %v845 = vadd.f32 %v712, %v822
          %v846 = vadd.f32 %v713, %v825
          %v847 = vadd.f32 %v714, %v828
          %v848 = vadd.f32 %v715, %v831
          %v849 = vadd.f32 %v716, %v834
          %v850 = vadd.f32 %v717, %v837
          %v851 = vadd.f32 %v718, %v840
          %v852 = vadd.f32 %v719, %v843
          %v854 = vsel %vm289, %v796, 0
          %v857 = vsel %vm289, %v797, 0
          %v860 = vsel %vm289, %v798, 0
          %v863 = vsel %vm289, %v799, 0
          %v866 = vsel %vm289, %v800, 0
          %v869 = vsel %vm289, %v801, 0
          %v872 = vsel %vm289, %v802, 0
          %v875 = vsel %vm289, %v803, 0
          %877 = vmatpush.msra.mxu0 0.0
          %878 = vmatpush.msra.mxu0 0.0
          %879 = vmatpush.msra.mxu0 0.0
          %880 = vmatpush.msra.mxu0 0.0
          %881 = vmatpush.msra.mxu0 0.0
          %882 = vmatpush.msra.mxu0 0.0
          %883 = vmatpush.msra.mxu0 0.0
          %884 = vmatpush.msra.mxu0 0.0
          %885 = vmatpush.msra.mxu0 0.0
          %886 = vmatpush.msra.mxu0 0.0
          %887 = vmatpush.msra.mxu0 0.0
          %888 = vmatpush.msra.mxu0 0.0
          %889 = vmatpush.msra.mxu0 0.0
          %890 = vmatpush.msra.mxu0 0.0
          %891 = vmatpush.msra.mxu0 0.0
          %892 = vmatpush.msra.mxu0 %v794
          %893 = vmatmul.f32.gmra.mxu0 %v854
          %v894 = vpop.f32.mrf.mxu0
          %v895 = vadd.f32 0.0, %v894
          %896 = vmatmul.f32.gmra.mxu0 %v857
          %v897 = vpop.f32.mrf.mxu0
          %v898 = vadd.f32 0.0, %v897
          %899 = vmatmul.f32.gmra.mxu0 %v860
          %v900 = vpop.f32.mrf.mxu0
          %v901 = vadd.f32 0.0, %v900
          %902 = vmatmul.f32.gmra.mxu0 %v863
          %v903 = vpop.f32.mrf.mxu0
          %v904 = vadd.f32 0.0, %v903
          %905 = vmatmul.f32.gmra.mxu0 %v866
          %v906 = vpop.f32.mrf.mxu0
          %v907 = vadd.f32 0.0, %v906
          %908 = vmatmul.f32.gmra.mxu0 %v869
          %v909 = vpop.f32.mrf.mxu0
          %v910 = vadd.f32 0.0, %v909
          %911 = vmatmul.f32.gmra.mxu0 %v872
          %v912 = vpop.f32.mrf.mxu0
          %v913 = vadd.f32 0.0, %v912
          %914 = vmatmul.f32.gmra.mxu0 %v875
          %v915 = vpop.f32.mrf.mxu0
          %v916 = vadd.f32 0.0, %v915
          %917 = vdwg.mxu0
          %v918 = vadd.f32 %v785, %v895
          %v919 = vadd.f32 %v786, %v898
          %v920 = vadd.f32 %v787, %v901
          %v921 = vadd.f32 %v788, %v904
          %v922 = vadd.f32 %v789, %v907
          %v923 = vadd.f32 %v790, %v910
          %v924 = vadd.f32 %v791, %v913
          %v925 = vadd.f32 %v792, %v916
          %s926 = scalar_lea.vmem [#allocation2], 40
          %v927 = vld [vmem:[%s926] sm:$0xff]
          %s928 = sadd.s32 %s257, 16
          %s929 = scalar_lea.vmem %s239, %s928
          %v930 = vld [vmem:[%s929] sm:$0xff]
          %v931 = vld [vmem:[%s929 + $0x8] sm:$0xff]
          %v932 = vld [vmem:[%s929 + $0x10] sm:$0xff]
          %v933 = vld [vmem:[%s929 + $0x18] sm:$0xff]
          %v934 = vld [vmem:[%s929 + $0x20] sm:$0xff]
          %v935 = vld [vmem:[%s929 + $0x28] sm:$0xff]
          %v936 = vld [vmem:[%s929 + $0x30] sm:$0xff]
          %v937 = vld [vmem:[%s929 + $0x38] sm:$0xff]
          %s938 = scalar_lea.vmem %s244, %s928
          %v939 = vld [vmem:[%s938] sm:$0xff]
          %v940 = vld [vmem:[%s938 + $0x8] sm:$0xff]
          %v941 = vld [vmem:[%s938 + $0x10] sm:$0xff]
          %v942 = vld [vmem:[%s938 + $0x18] sm:$0xff]
          %v943 = vld [vmem:[%s938 + $0x20] sm:$0xff]
          %v944 = vld [vmem:[%s938 + $0x28] sm:$0xff]
          %v945 = vld [vmem:[%s938 + $0x30] sm:$0xff]
          %v946 = vld [vmem:[%s938 + $0x38] sm:$0xff]
          %v948 = vsel %vm289, %v930, 0
          %v951 = vsel %vm289, %v931, 0
          %v954 = vsel %vm289, %v932, 0
          %v957 = vsel %vm289, %v933, 0
          %v960 = vsel %vm289, %v934, 0
          %v963 = vsel %vm289, %v935, 0
          %v966 = vsel %vm289, %v936, 0
          %v969 = vsel %vm289, %v937, 0
          %971 = vmatpush.msra.mxu0 0.0
          %972 = vmatpush.msra.mxu0 0.0
          %973 = vmatpush.msra.mxu0 0.0
          %974 = vmatpush.msra.mxu0 0.0
          %975 = vmatpush.msra.mxu0 0.0
          %976 = vmatpush.msra.mxu0 0.0
          %977 = vmatpush.msra.mxu0 0.0
          %978 = vmatpush.msra.mxu0 0.0
          %979 = vmatpush.msra.mxu0 0.0
          %980 = vmatpush.msra.mxu0 0.0
          %981 = vmatpush.msra.mxu0 0.0
          %982 = vmatpush.msra.mxu0 0.0
          %983 = vmatpush.msra.mxu0 0.0
          %984 = vmatpush.msra.mxu0 0.0
          %985 = vmatpush.msra.mxu0 0.0
          %986 = vmatpush.msra.mxu0 %v927
          %987 = vmatmul.f32.gmra.mxu0 %v948
          %v988 = vpop.f32.mrf.mxu0
          %v989 = vadd.f32 0.0, %v988
          %990 = vmatmul.f32.gmra.mxu0 %v951
          %v991 = vpop.f32.mrf.mxu0
          %v992 = vadd.f32 0.0, %v991
          %993 = vmatmul.f32.gmra.mxu0 %v954
          %v994 = vpop.f32.mrf.mxu0
          %v995 = vadd.f32 0.0, %v994
          %996 = vmatmul.f32.gmra.mxu0 %v957
          %v997 = vpop.f32.mrf.mxu0
          %v998 = vadd.f32 0.0, %v997
          %999 = vmatmul.f32.gmra.mxu0 %v960
          %v1000 = vpop.f32.mrf.mxu0
          %v1001 = vadd.f32 0.0, %v1000
          %1002 = vmatmul.f32.gmra.mxu0 %v963
          %v1003 = vpop.f32.mrf.mxu0
          %v1004 = vadd.f32 0.0, %v1003
          %1005 = vmatmul.f32.gmra.mxu0 %v966
          %v1006 = vpop.f32.mrf.mxu0
          %v1007 = vadd.f32 0.0, %v1006
          %1008 = vmatmul.f32.gmra.mxu0 %v969
          %v1009 = vpop.f32.mrf.mxu0
          %v1010 = vadd.f32 0.0, %v1009
          %1011 = vdwg.mxu0
          %v1012 = vadd.f32 %v845, %v989
          %v1013 = vadd.f32 %v846, %v992
          %v1014 = vadd.f32 %v847, %v995
          %v1015 = vadd.f32 %v848, %v998
          %v1016 = vadd.f32 %v849, %v1001
          %v1017 = vadd.f32 %v850, %v1004
          %v1018 = vadd.f32 %v851, %v1007
          %v1019 = vadd.f32 %v852, %v1010
          %v1021 = vsel %vm289, %v939, 0
          %v1024 = vsel %vm289, %v940, 0
          %v1027 = vsel %vm289, %v941, 0
          %v1030 = vsel %vm289, %v942, 0
          %v1033 = vsel %vm289, %v943, 0
          %v1036 = vsel %vm289, %v944, 0
          %v1039 = vsel %vm289, %v945, 0
          %v1042 = vsel %vm289, %v946, 0
          %1044 = vmatpush.msra.mxu0 0.0
          %1045 = vmatpush.msra.mxu0 0.0
          %1046 = vmatpush.msra.mxu0 0.0
          %1047 = vmatpush.msra.mxu0 0.0
          %1048 = vmatpush.msra.mxu0 0.0
          %1049 = vmatpush.msra.mxu0 0.0
          %1050 = vmatpush.msra.mxu0 0.0
          %1051 = vmatpush.msra.mxu0 0.0
          %1052 = vmatpush.msra.mxu0 0.0
          %1053 = vmatpush.msra.mxu0 0.0
          %1054 = vmatpush.msra.mxu0 0.0
          %1055 = vmatpush.msra.mxu0 0.0
          %1056 = vmatpush.msra.mxu0 0.0
          %1057 = vmatpush.msra.mxu0 0.0
          %1058 = vmatpush.msra.mxu0 0.0
          %1059 = vmatpush.msra.mxu0 %v927
          %1060 = vmatmul.f32.gmra.mxu0 %v1021
          %v1061 = vpop.f32.mrf.mxu0
          %v1062 = vadd.f32 0.0, %v1061
          %1063 = vmatmul.f32.gmra.mxu0 %v1024
          %v1064 = vpop.f32.mrf.mxu0
          %v1065 = vadd.f32 0.0, %v1064
          %1066 = vmatmul.f32.gmra.mxu0 %v1027
          %v1067 = vpop.f32.mrf.mxu0
          %v1068 = vadd.f32 0.0, %v1067
          %1069 = vmatmul.f32.gmra.mxu0 %v1030
          %v1070 = vpop.f32.mrf.mxu0
          %v1071 = vadd.f32 0.0, %v1070
          %1072 = vmatmul.f32.gmra.mxu0 %v1033
          %v1073 = vpop.f32.mrf.mxu0
          %v1074 = vadd.f32 0.0, %v1073
          %1075 = vmatmul.f32.gmra.mxu0 %v1036
          %v1076 = vpop.f32.mrf.mxu0
          %v1077 = vadd.f32 0.0, %v1076
          %1078 = vmatmul.f32.gmra.mxu0 %v1039
          %v1079 = vpop.f32.mrf.mxu0
          %v1080 = vadd.f32 0.0, %v1079
          %1081 = vmatmul.f32.gmra.mxu0 %v1042
          %v1082 = vpop.f32.mrf.mxu0
          %v1083 = vadd.f32 0.0, %v1082
          %1084 = vdwg.mxu0
          %v1085 = vadd.f32 %v918, %v1062
          %v1086 = vadd.f32 %v919, %v1065
          %v1087 = vadd.f32 %v920, %v1068
          %v1088 = vadd.f32 %v921, %v1071
          %v1089 = vadd.f32 %v922, %v1074
          %v1090 = vadd.f32 %v923, %v1077
          %v1091 = vadd.f32 %v924, %v1080
          %v1092 = vadd.f32 %v925, %v1083
          %s1093 = scalar_lea.vmem [#allocation2], 48
          %v1094 = vld [vmem:[%s1093] sm:$0xff]
          %s1095 = sadd.s32 %s257, 17
          %s1096 = scalar_lea.vmem %s239, %s1095
          %v1097 = vld [vmem:[%s1096] sm:$0xff]
          %v1098 = vld [vmem:[%s1096 + $0x8] sm:$0xff]
          %v1099 = vld [vmem:[%s1096 + $0x10] sm:$0xff]
          %v1100 = vld [vmem:[%s1096 + $0x18] sm:$0xff]
          %v1101 = vld [vmem:[%s1096 + $0x20] sm:$0xff]
          %v1102 = vld [vmem:[%s1096 + $0x28] sm:$0xff]
          %v1103 = vld [vmem:[%s1096 + $0x30] sm:$0xff]
          %v1104 = vld [vmem:[%s1096 + $0x38] sm:$0xff]
          %1105 = vmatpush.msra.mxu0 0.0
          %1106 = vmatpush.msra.mxu0 0.0
          %1107 = vmatpush.msra.mxu0 0.0
          %1108 = vmatpush.msra.mxu0 0.0
          %1109 = vmatpush.msra.mxu0 0.0
          %1110 = vmatpush.msra.mxu0 0.0
          %1111 = vmatpush.msra.mxu0 0.0
          %1112 = vmatpush.msra.mxu0 0.0
          %1113 = vmatpush.msra.mxu0 0.0
          %1114 = vmatpush.msra.mxu0 0.0
          %1115 = vmatpush.msra.mxu0 0.0
          %1116 = vmatpush.msra.mxu0 0.0
          %1117 = vmatpush.msra.mxu0 0.0
          %1118 = vmatpush.msra.mxu0 0.0
          %1119 = vmatpush.msra.mxu0 0.0
          %1120 = vmatpush.msra.mxu0 %v1094
          %1121 = vmatmul.f32.gmra.mxu0 %v1021
          %v1122 = vpop.f32.mrf.mxu0
          %v1123 = vadd.f32 0.0, %v1122
          %1124 = vmatmul.f32.gmra.mxu0 %v1024
          %v1125 = vpop.f32.mrf.mxu0
          %v1126 = vadd.f32 0.0, %v1125
          %1127 = vmatmul.f32.gmra.mxu0 %v1027
          %v1128 = vpop.f32.mrf.mxu0
          %v1129 = vadd.f32 0.0, %v1128
          %1130 = vmatmul.f32.gmra.mxu0 %v1030
          %v1131 = vpop.f32.mrf.mxu0
          %v1132 = vadd.f32 0.0, %v1131
          %1133 = vmatmul.f32.gmra.mxu0 %v1033
          %v1134 = vpop.f32.mrf.mxu0
          %v1135 = vadd.f32 0.0, %v1134
          %1136 = vmatmul.f32.gmra.mxu0 %v1036
          %v1137 = vpop.f32.mrf.mxu0
          %v1138 = vadd.f32 0.0, %v1137
          %1139 = vmatmul.f32.gmra.mxu0 %v1039
          %v1140 = vpop.f32.mrf.mxu0
          %v1141 = vadd.f32 0.0, %v1140
          %1142 = vmatmul.f32.gmra.mxu0 %v1042
          %v1143 = vpop.f32.mrf.mxu0
          %v1144 = vadd.f32 0.0, %v1143
          %1145 = vdwg.mxu0
          %v1146 = vadd.f32 %v1012, %v1123
          %v1147 = vadd.f32 %v1013, %v1126
          %v1148 = vadd.f32 %v1014, %v1129
          %v1149 = vadd.f32 %v1015, %v1132
          %v1150 = vadd.f32 %v1016, %v1135
          %v1151 = vadd.f32 %v1017, %v1138
          %v1152 = vadd.f32 %v1018, %v1141
          %v1153 = vadd.f32 %v1019, %v1144
          %v1155 = vsel %vm289, %v1097, 0
          %v1158 = vsel %vm289, %v1098, 0
          %v1161 = vsel %vm289, %v1099, 0
          %v1164 = vsel %vm289, %v1100, 0
          %v1167 = vsel %vm289, %v1101, 0
          %v1170 = vsel %vm289, %v1102, 0
          %v1173 = vsel %vm289, %v1103, 0
          %v1176 = vsel %vm289, %v1104, 0
          %1178 = vmatpush.msra.mxu0 0.0
          %1179 = vmatpush.msra.mxu0 0.0
          %1180 = vmatpush.msra.mxu0 0.0
          %1181 = vmatpush.msra.mxu0 0.0
          %1182 = vmatpush.msra.mxu0 0.0
          %1183 = vmatpush.msra.mxu0 0.0
          %1184 = vmatpush.msra.mxu0 0.0
          %1185 = vmatpush.msra.mxu0 0.0
          %1186 = vmatpush.msra.mxu0 0.0
          %1187 = vmatpush.msra.mxu0 0.0
          %1188 = vmatpush.msra.mxu0 0.0
          %1189 = vmatpush.msra.mxu0 0.0
          %1190 = vmatpush.msra.mxu0 0.0
          %1191 = vmatpush.msra.mxu0 0.0
          %1192 = vmatpush.msra.mxu0 0.0
          %1193 = vmatpush.msra.mxu0 %v1094
          %1194 = vmatmul.f32.gmra.mxu0 %v1155
          %v1195 = vpop.f32.mrf.mxu0
          %v1196 = vadd.f32 0.0, %v1195
          %1197 = vmatmul.f32.gmra.mxu0 %v1158
          %v1198 = vpop.f32.mrf.mxu0
          %v1199 = vadd.f32 0.0, %v1198
          %1200 = vmatmul.f32.gmra.mxu0 %v1161
          %v1201 = vpop.f32.mrf.mxu0
          %v1202 = vadd.f32 0.0, %v1201
          %1203 = vmatmul.f32.gmra.mxu0 %v1164
          %v1204 = vpop.f32.mrf.mxu0
          %v1205 = vadd.f32 0.0, %v1204
          %1206 = vmatmul.f32.gmra.mxu0 %v1167
          %v1207 = vpop.f32.mrf.mxu0
          %v1208 = vadd.f32 0.0, %v1207
          %1209 = vmatmul.f32.gmra.mxu0 %v1170
          %v1210 = vpop.f32.mrf.mxu0
          %v1211 = vadd.f32 0.0, %v1210
          %1212 = vmatmul.f32.gmra.mxu0 %v1173
          %v1213 = vpop.f32.mrf.mxu0
          %v1214 = vadd.f32 0.0, %v1213
          %1215 = vmatmul.f32.gmra.mxu0 %v1176
          %v1216 = vpop.f32.mrf.mxu0
          %v1217 = vadd.f32 0.0, %v1216
          %1218 = vdwg.mxu0
          %v1219 = vadd.f32 %v1085, %v1196
          %v1220 = vadd.f32 %v1086, %v1199
          %v1221 = vadd.f32 %v1087, %v1202
          %v1222 = vadd.f32 %v1088, %v1205
          %v1223 = vadd.f32 %v1089, %v1208
          %v1224 = vadd.f32 %v1090, %v1211
          %v1225 = vadd.f32 %v1091, %v1214
          %v1226 = vadd.f32 %v1092, %v1217
          %s1227 = scalar_lea.vmem [#allocation2], 56
          %v1228 = vld [vmem:[%s1227] sm:$0xff]
          %s1229 = scalar_lea.vmem %s244, %s1095
          %v1230 = vld [vmem:[%s1229] sm:$0xff]
          %v1231 = vld [vmem:[%s1229 + $0x8] sm:$0xff]
          %v1232 = vld [vmem:[%s1229 + $0x10] sm:$0xff]
          %v1233 = vld [vmem:[%s1229 + $0x18] sm:$0xff]
          %v1234 = vld [vmem:[%s1229 + $0x20] sm:$0xff]
          %v1235 = vld [vmem:[%s1229 + $0x28] sm:$0xff]
          %v1236 = vld [vmem:[%s1229 + $0x30] sm:$0xff]
          %v1237 = vld [vmem:[%s1229 + $0x38] sm:$0xff]
          %1238 = vmatpush.msra.mxu0 0.0
          %1239 = vmatpush.msra.mxu0 0.0
          %1240 = vmatpush.msra.mxu0 0.0
          %1241 = vmatpush.msra.mxu0 0.0
          %1242 = vmatpush.msra.mxu0 0.0
          %1243 = vmatpush.msra.mxu0 0.0
          %1244 = vmatpush.msra.mxu0 0.0
          %1245 = vmatpush.msra.mxu0 0.0
          %1246 = vmatpush.msra.mxu0 0.0
          %1247 = vmatpush.msra.mxu0 0.0
          %1248 = vmatpush.msra.mxu0 0.0
          %1249 = vmatpush.msra.mxu0 0.0
          %1250 = vmatpush.msra.mxu0 0.0
          %1251 = vmatpush.msra.mxu0 0.0
          %1252 = vmatpush.msra.mxu0 0.0
          %1253 = vmatpush.msra.mxu0 %v1228
          %1254 = vmatmul.f32.gmra.mxu0 %v1155
          %v1255 = vpop.f32.mrf.mxu0
          %v1256 = vadd.f32 0.0, %v1255
          %1257 = vmatmul.f32.gmra.mxu0 %v1158
          %v1258 = vpop.f32.mrf.mxu0
          %v1259 = vadd.f32 0.0, %v1258
          %1260 = vmatmul.f32.gmra.mxu0 %v1161
          %v1261 = vpop.f32.mrf.mxu0
          %v1262 = vadd.f32 0.0, %v1261
          %1263 = vmatmul.f32.gmra.mxu0 %v1164
          %v1264 = vpop.f32.mrf.mxu0
          %v1265 = vadd.f32 0.0, %v1264
          %1266 = vmatmul.f32.gmra.mxu0 %v1167
          %v1267 = vpop.f32.mrf.mxu0
          %v1268 = vadd.f32 0.0, %v1267
          %1269 = vmatmul.f32.gmra.mxu0 %v1170
          %v1270 = vpop.f32.mrf.mxu0
          %v1271 = vadd.f32 0.0, %v1270
          %1272 = vmatmul.f32.gmra.mxu0 %v1173
          %v1273 = vpop.f32.mrf.mxu0
          %v1274 = vadd.f32 0.0, %v1273
          %1275 = vmatmul.f32.gmra.mxu0 %v1176
          %v1276 = vpop.f32.mrf.mxu0
          %v1277 = vadd.f32 0.0, %v1276
          %1278 = vdwg.mxu0
          %v1279 = vadd.f32 %v1146, %v1256
          %v1280 = vadd.f32 %v1147, %v1259
          %v1281 = vadd.f32 %v1148, %v1262
          %v1282 = vadd.f32 %v1149, %v1265
          %v1283 = vadd.f32 %v1150, %v1268
          %v1284 = vadd.f32 %v1151, %v1271
          %v1285 = vadd.f32 %v1152, %v1274
          %v1286 = vadd.f32 %v1153, %v1277
          %v1288 = vsel %vm289, %v1230, 0
          %v1291 = vsel %vm289, %v1231, 0
          %v1294 = vsel %vm289, %v1232, 0
          %v1297 = vsel %vm289, %v1233, 0
          %v1300 = vsel %vm289, %v1234, 0
          %v1303 = vsel %vm289, %v1235, 0
          %v1306 = vsel %vm289, %v1236, 0
          %v1309 = vsel %vm289, %v1237, 0
          %1311 = vmatpush.msra.mxu0 0.0
          %1312 = vmatpush.msra.mxu0 0.0
          %1313 = vmatpush.msra.mxu0 0.0
          %1314 = vmatpush.msra.mxu0 0.0
          %1315 = vmatpush.msra.mxu0 0.0
          %1316 = vmatpush.msra.mxu0 0.0
          %1317 = vmatpush.msra.mxu0 0.0
          %1318 = vmatpush.msra.mxu0 0.0
          %1319 = vmatpush.msra.mxu0 0.0
          %1320 = vmatpush.msra.mxu0 0.0
          %1321 = vmatpush.msra.mxu0 0.0
          %1322 = vmatpush.msra.mxu0 0.0
          %1323 = vmatpush.msra.mxu0 0.0
          %1324 = vmatpush.msra.mxu0 0.0
          %1325 = vmatpush.msra.mxu0 0.0
          %1326 = vmatpush.msra.mxu0 %v1228
          %1327 = vmatmul.f32.gmra.mxu0 %v1288
          %v1328 = vpop.f32.mrf.mxu0
          %v1329 = vadd.f32 0.0, %v1328
          %1330 = vmatmul.f32.gmra.mxu0 %v1291
          %v1331 = vpop.f32.mrf.mxu0
          %v1332 = vadd.f32 0.0, %v1331
          %1333 = vmatmul.f32.gmra.mxu0 %v1294
          %v1334 = vpop.f32.mrf.mxu0
          %v1335 = vadd.f32 0.0, %v1334
          %1336 = vmatmul.f32.gmra.mxu0 %v1297
          %v1337 = vpop.f32.mrf.mxu0
          %v1338 = vadd.f32 0.0, %v1337
          %1339 = vmatmul.f32.gmra.mxu0 %v1300
          %v1340 = vpop.f32.mrf.mxu0
          %v1341 = vadd.f32 0.0, %v1340
          %1342 = vmatmul.f32.gmra.mxu0 %v1303
          %v1343 = vpop.f32.mrf.mxu0
          %v1344 = vadd.f32 0.0, %v1343
          %1345 = vmatmul.f32.gmra.mxu0 %v1306
          %v1346 = vpop.f32.mrf.mxu0
          %v1347 = vadd.f32 0.0, %v1346
          %1348 = vmatmul.f32.gmra.mxu0 %v1309
          %v1349 = vpop.f32.mrf.mxu0
          %v1350 = vadd.f32 0.0, %v1349
          %1351 = vdwg.mxu0
          %v1352 = vadd.f32 %v1219, %v1329
          %v1353 = vadd.f32 %v1220, %v1332
          %v1354 = vadd.f32 %v1221, %v1335
          %v1355 = vadd.f32 %v1222, %v1338
          %v1356 = vadd.f32 %v1223, %v1341
          %v1357 = vadd.f32 %v1224, %v1344
          %v1358 = vadd.f32 %v1225, %v1347
          %v1359 = vadd.f32 %v1226, %v1350
          %s1360 = scalar_lea.vmem [#allocation2], 64
          %v1361 = vld [vmem:[%s1360] sm:$0xff]
          %s1362 = sadd.s32 %s257, 18
          %s1363 = scalar_lea.vmem %s239, %s1362
          %v1364 = vld [vmem:[%s1363] sm:$0xff]
          %v1365 = vld [vmem:[%s1363 + $0x8] sm:$0xff]
          %v1366 = vld [vmem:[%s1363 + $0x10] sm:$0xff]
          %v1367 = vld [vmem:[%s1363 + $0x18] sm:$0xff]
          %v1368 = vld [vmem:[%s1363 + $0x20] sm:$0xff]
          %v1369 = vld [vmem:[%s1363 + $0x28] sm:$0xff]
          %v1370 = vld [vmem:[%s1363 + $0x30] sm:$0xff]
          %v1371 = vld [vmem:[%s1363 + $0x38] sm:$0xff]
          %1372 = vmatpush.msra.mxu0 0.0
          %1373 = vmatpush.msra.mxu0 0.0
          %1374 = vmatpush.msra.mxu0 0.0
          %1375 = vmatpush.msra.mxu0 0.0
          %1376 = vmatpush.msra.mxu0 0.0
          %1377 = vmatpush.msra.mxu0 0.0
          %1378 = vmatpush.msra.mxu0 0.0
          %1379 = vmatpush.msra.mxu0 0.0
          %1380 = vmatpush.msra.mxu0 0.0
          %1381 = vmatpush.msra.mxu0 0.0
          %1382 = vmatpush.msra.mxu0 0.0
          %1383 = vmatpush.msra.mxu0 0.0
          %1384 = vmatpush.msra.mxu0 0.0
          %1385 = vmatpush.msra.mxu0 0.0
          %1386 = vmatpush.msra.mxu0 0.0
          %1387 = vmatpush.msra.mxu0 %v1361
          %1388 = vmatmul.f32.gmra.mxu0 %v1288
          %v1389 = vpop.f32.mrf.mxu0
          %v1390 = vadd.f32 0.0, %v1389
          %1391 = vmatmul.f32.gmra.mxu0 %v1291
          %v1392 = vpop.f32.mrf.mxu0
          %v1393 = vadd.f32 0.0, %v1392
          %1394 = vmatmul.f32.gmra.mxu0 %v1294
          %v1395 = vpop.f32.mrf.mxu0
          %v1396 = vadd.f32 0.0, %v1395
          %1397 = vmatmul.f32.gmra.mxu0 %v1297
          %v1398 = vpop.f32.mrf.mxu0
          %v1399 = vadd.f32 0.0, %v1398
          %1400 = vmatmul.f32.gmra.mxu0 %v1300
          %v1401 = vpop.f32.mrf.mxu0
          %v1402 = vadd.f32 0.0, %v1401
          %1403 = vmatmul.f32.gmra.mxu0 %v1303
          %v1404 = vpop.f32.mrf.mxu0
          %v1405 = vadd.f32 0.0, %v1404
          %1406 = vmatmul.f32.gmra.mxu0 %v1306
          %v1407 = vpop.f32.mrf.mxu0
          %v1408 = vadd.f32 0.0, %v1407
          %1409 = vmatmul.f32.gmra.mxu0 %v1309
          %v1410 = vpop.f32.mrf.mxu0
          %v1411 = vadd.f32 0.0, %v1410
          %1412 = vdwg.mxu0
          %v1413 = vadd.f32 %v1279, %v1390
          %v1414 = vadd.f32 %v1280, %v1393
          %v1415 = vadd.f32 %v1281, %v1396
          %v1416 = vadd.f32 %v1282, %v1399
          %v1417 = vadd.f32 %v1283, %v1402
          %v1418 = vadd.f32 %v1284, %v1405
          %v1419 = vadd.f32 %v1285, %v1408
          %v1420 = vadd.f32 %v1286, %v1411
          %v1422 = vsel %vm289, %v1364, 0
          %v1425 = vsel %vm289, %v1365, 0
          %v1428 = vsel %vm289, %v1366, 0
          %v1431 = vsel %vm289, %v1367, 0
          %v1434 = vsel %vm289, %v1368, 0
          %v1437 = vsel %vm289, %v1369, 0
          %v1440 = vsel %vm289, %v1370, 0
          %v1443 = vsel %vm289, %v1371, 0
          %1445 = vmatpush.msra.mxu0 0.0
          %1446 = vmatpush.msra.mxu0 0.0
          %1447 = vmatpush.msra.mxu0 0.0
          %1448 = vmatpush.msra.mxu0 0.0
          %1449 = vmatpush.msra.mxu0 0.0
          %1450 = vmatpush.msra.mxu0 0.0
          %1451 = vmatpush.msra.mxu0 0.0
          %1452 = vmatpush.msra.mxu0 0.0
          %1453 = vmatpush.msra.mxu0 0.0
          %1454 = vmatpush.msra.mxu0 0.0
          %1455 = vmatpush.msra.mxu0 0.0
          %1456 = vmatpush.msra.mxu0 0.0
          %1457 = vmatpush.msra.mxu0 0.0
          %1458 = vmatpush.msra.mxu0 0.0
          %1459 = vmatpush.msra.mxu0 0.0
          %1460 = vmatpush.msra.mxu0 %v1361
          %1461 = vmatmul.f32.gmra.mxu0 %v1422
          %v1462 = vpop.f32.mrf.mxu0
          %v1463 = vadd.f32 0.0, %v1462
          %1464 = vmatmul.f32.gmra.mxu0 %v1425
          %v1465 = vpop.f32.mrf.mxu0
          %v1466 = vadd.f32 0.0, %v1465
          %1467 = vmatmul.f32.gmra.mxu0 %v1428
          %v1468 = vpop.f32.mrf.mxu0
          %v1469 = vadd.f32 0.0, %v1468
          %1470 = vmatmul.f32.gmra.mxu0 %v1431
          %v1471 = vpop.f32.mrf.mxu0
          %v1472 = vadd.f32 0.0, %v1471
          %1473 = vmatmul.f32.gmra.mxu0 %v1434
          %v1474 = vpop.f32.mrf.mxu0
          %v1475 = vadd.f32 0.0, %v1474
          %1476 = vmatmul.f32.gmra.mxu0 %v1437
          %v1477 = vpop.f32.mrf.mxu0
          %v1478 = vadd.f32 0.0, %v1477
          %1479 = vmatmul.f32.gmra.mxu0 %v1440
          %v1480 = vpop.f32.mrf.mxu0
          %v1481 = vadd.f32 0.0, %v1480
          %1482 = vmatmul.f32.gmra.mxu0 %v1443
          %v1483 = vpop.f32.mrf.mxu0
          %v1484 = vadd.f32 0.0, %v1483
          %1485 = vdwg.mxu0
          %v1486 = vadd.f32 %v1352, %v1463
          %v1487 = vadd.f32 %v1353, %v1466
          %v1488 = vadd.f32 %v1354, %v1469
          %v1489 = vadd.f32 %v1355, %v1472
          %v1490 = vadd.f32 %v1356, %v1475
          %v1491 = vadd.f32 %v1357, %v1478
          %v1492 = vadd.f32 %v1358, %v1481
          %v1493 = vadd.f32 %v1359, %v1484
          %s1494 = scalar_lea.vmem [#allocation2], 72
          %v1495 = vld [vmem:[%s1494] sm:$0xff]
          %s1496 = scalar_lea.vmem %s244, %s1362
          %v1497 = vld [vmem:[%s1496] sm:$0xff]
          %v1498 = vld [vmem:[%s1496 + $0x8] sm:$0xff]
          %v1499 = vld [vmem:[%s1496 + $0x10] sm:$0xff]
          %v1500 = vld [vmem:[%s1496 + $0x18] sm:$0xff]
          %v1501 = vld [vmem:[%s1496 + $0x20] sm:$0xff]
          %v1502 = vld [vmem:[%s1496 + $0x28] sm:$0xff]
          %v1503 = vld [vmem:[%s1496 + $0x30] sm:$0xff]
          %v1504 = vld [vmem:[%s1496 + $0x38] sm:$0xff]
          %1505 = vmatpush.msra.mxu0 0.0
          %1506 = vmatpush.msra.mxu0 0.0
          %1507 = vmatpush.msra.mxu0 0.0
          %1508 = vmatpush.msra.mxu0 0.0
          %1509 = vmatpush.msra.mxu0 0.0
          %1510 = vmatpush.msra.mxu0 0.0
          %1511 = vmatpush.msra.mxu0 0.0
          %1512 = vmatpush.msra.mxu0 0.0
          %1513 = vmatpush.msra.mxu0 0.0
          %1514 = vmatpush.msra.mxu0 0.0
          %1515 = vmatpush.msra.mxu0 0.0
          %1516 = vmatpush.msra.mxu0 0.0
          %1517 = vmatpush.msra.mxu0 0.0
          %1518 = vmatpush.msra.mxu0 0.0
          %1519 = vmatpush.msra.mxu0 0.0
          %1520 = vmatpush.msra.mxu0 %v1495
          %1521 = vmatmul.f32.gmra.mxu0 %v1422
          %v1522 = vpop.f32.mrf.mxu0
          %v1523 = vadd.f32 0.0, %v1522
          %1524 = vmatmul.f32.gmra.mxu0 %v1425
          %v1525 = vpop.f32.mrf.mxu0
          %v1526 = vadd.f32 0.0, %v1525
          %1527 = vmatmul.f32.gmra.mxu0 %v1428
          %v1528 = vpop.f32.mrf.mxu0
          %v1529 = vadd.f32 0.0, %v1528
          %1530 = vmatmul.f32.gmra.mxu0 %v1431
          %v1531 = vpop.f32.mrf.mxu0
          %v1532 = vadd.f32 0.0, %v1531
          %1533 = vmatmul.f32.gmra.mxu0 %v1434
          %v1534 = vpop.f32.mrf.mxu0
          %v1535 = vadd.f32 0.0, %v1534
          %1536 = vmatmul.f32.gmra.mxu0 %v1437
          %v1537 = vpop.f32.mrf.mxu0
          %v1538 = vadd.f32 0.0, %v1537
          %1539 = vmatmul.f32.gmra.mxu0 %v1440
          %v1540 = vpop.f32.mrf.mxu0
          %v1541 = vadd.f32 0.0, %v1540
          %1542 = vmatmul.f32.gmra.mxu0 %v1443
          %v1543 = vpop.f32.mrf.mxu0
          %v1544 = vadd.f32 0.0, %v1543
          %1545 = vdwg.mxu0
          %v1546 = vadd.f32 %v1413, %v1523
          %v1547 = vadd.f32 %v1414, %v1526
          %v1548 = vadd.f32 %v1415, %v1529
          %v1549 = vadd.f32 %v1416, %v1532
          %v1550 = vadd.f32 %v1417, %v1535
          %v1551 = vadd.f32 %v1418, %v1538
          %v1552 = vadd.f32 %v1419, %v1541
          %v1553 = vadd.f32 %v1420, %v1544
          %v1555 = vsel %vm289, %v1497, 0
          %v1558 = vsel %vm289, %v1498, 0
          %v1561 = vsel %vm289, %v1499, 0
          %v1564 = vsel %vm289, %v1500, 0
          %v1567 = vsel %vm289, %v1501, 0
          %v1570 = vsel %vm289, %v1502, 0
          %v1573 = vsel %vm289, %v1503, 0
          %v1576 = vsel %vm289, %v1504, 0
          %1578 = vmatpush.msra.mxu0 0.0
          %1579 = vmatpush.msra.mxu0 0.0
          %1580 = vmatpush.msra.mxu0 0.0
          %1581 = vmatpush.msra.mxu0 0.0
          %1582 = vmatpush.msra.mxu0 0.0
          %1583 = vmatpush.msra.mxu0 0.0
          %1584 = vmatpush.msra.mxu0 0.0
          %1585 = vmatpush.msra.mxu0 0.0
          %1586 = vmatpush.msra.mxu0 0.0
          %1587 = vmatpush.msra.mxu0 0.0
          %1588 = vmatpush.msra.mxu0 0.0
          %1589 = vmatpush.msra.mxu0 0.0
          %1590 = vmatpush.msra.mxu0 0.0
          %1591 = vmatpush.msra.mxu0 0.0
          %1592 = vmatpush.msra.mxu0 0.0
          %1593 = vmatpush.msra.mxu0 %v1495
          %1594 = vmatmul.f32.gmra.mxu0 %v1555
          %v1595 = vpop.f32.mrf.mxu0
          %v1596 = vadd.f32 0.0, %v1595
          %1597 = vmatmul.f32.gmra.mxu0 %v1558
          %v1598 = vpop.f32.mrf.mxu0
          %v1599 = vadd.f32 0.0, %v1598
          %1600 = vmatmul.f32.gmra.mxu0 %v1561
          %v1601 = vpop.f32.mrf.mxu0
          %v1602 = vadd.f32 0.0, %v1601
          %1603 = vmatmul.f32.gmra.mxu0 %v1564
          %v1604 = vpop.f32.mrf.mxu0
          %v1605 = vadd.f32 0.0, %v1604
          %1606 = vmatmul.f32.gmra.mxu0 %v1567
          %v1607 = vpop.f32.mrf.mxu0
          %v1608 = vadd.f32 0.0, %v1607
          %1609 = vmatmul.f32.gmra.mxu0 %v1570
          %v1610 = vpop.f32.mrf.mxu0
          %v1611 = vadd.f32 0.0, %v1610
          %1612 = vmatmul.f32.gmra.mxu0 %v1573
          %v1613 = vpop.f32.mrf.mxu0
          %v1614 = vadd.f32 0.0, %v1613
          %1615 = vmatmul.f32.gmra.mxu0 %v1576
          %v1616 = vpop.f32.mrf.mxu0
          %v1617 = vadd.f32 0.0, %v1616
          %1618 = vdwg.mxu0
          %v1619 = vadd.f32 %v1486, %v1596
          %v1620 = vadd.f32 %v1487, %v1599
          %v1621 = vadd.f32 %v1488, %v1602
          %v1622 = vadd.f32 %v1489, %v1605
          %v1623 = vadd.f32 %v1490, %v1608
          %v1624 = vadd.f32 %v1491, %v1611
          %v1625 = vadd.f32 %v1492, %v1614
          %v1626 = vadd.f32 %v1493, %v1617
          %s1627 = scalar_lea.vmem [#allocation2], 80
          %v1628 = vld [vmem:[%s1627] sm:$0xff]
          %s1629 = sadd.s32 %s257, 32
          %s1630 = scalar_lea.vmem %s239, %s1629
          %v1631 = vld [vmem:[%s1630] sm:$0xff]
          %v1632 = vld [vmem:[%s1630 + $0x8] sm:$0xff]
          %v1633 = vld [vmem:[%s1630 + $0x10] sm:$0xff]
          %v1634 = vld [vmem:[%s1630 + $0x18] sm:$0xff]
          %v1635 = vld [vmem:[%s1630 + $0x20] sm:$0xff]
          %v1636 = vld [vmem:[%s1630 + $0x28] sm:$0xff]
          %v1637 = vld [vmem:[%s1630 + $0x30] sm:$0xff]
          %v1638 = vld [vmem:[%s1630 + $0x38] sm:$0xff]
          %s1639 = scalar_lea.vmem %s244, %s1629
          %v1640 = vld [vmem:[%s1639] sm:$0xff]
          %v1641 = vld [vmem:[%s1639 + $0x8] sm:$0xff]
          %v1642 = vld [vmem:[%s1639 + $0x10] sm:$0xff]
          %v1643 = vld [vmem:[%s1639 + $0x18] sm:$0xff]
          %v1644 = vld [vmem:[%s1639 + $0x20] sm:$0xff]
          %v1645 = vld [vmem:[%s1639 + $0x28] sm:$0xff]
          %v1646 = vld [vmem:[%s1639 + $0x30] sm:$0xff]
          %v1647 = vld [vmem:[%s1639 + $0x38] sm:$0xff]
          %v1649 = vsel %vm289, %v1631, 0
          %v1652 = vsel %vm289, %v1632, 0
          %v1655 = vsel %vm289, %v1633, 0
          %v1658 = vsel %vm289, %v1634, 0
          %v1661 = vsel %vm289, %v1635, 0
          %v1664 = vsel %vm289, %v1636, 0
          %v1667 = vsel %vm289, %v1637, 0
          %v1670 = vsel %vm289, %v1638, 0
          %1672 = vmatpush.msra.mxu0 0.0
          %1673 = vmatpush.msra.mxu0 0.0
          %1674 = vmatpush.msra.mxu0 0.0
          %1675 = vmatpush.msra.mxu0 0.0
          %1676 = vmatpush.msra.mxu0 0.0
          %1677 = vmatpush.msra.mxu0 0.0
          %1678 = vmatpush.msra.mxu0 0.0
          %1679 = vmatpush.msra.mxu0 0.0
          %1680 = vmatpush.msra.mxu0 0.0
          %1681 = vmatpush.msra.mxu0 0.0
          %1682 = vmatpush.msra.mxu0 0.0
          %1683 = vmatpush.msra.mxu0 0.0
          %1684 = vmatpush.msra.mxu0 0.0
          %1685 = vmatpush.msra.mxu0 0.0
          %1686 = vmatpush.msra.mxu0 0.0
          %1687 = vmatpush.msra.mxu0 %v1628
          %1688 = vmatmul.f32.gmra.mxu0 %v1649
          %v1689 = vpop.f32.mrf.mxu0
          %v1690 = vadd.f32 0.0, %v1689
          %1691 = vmatmul.f32.gmra.mxu0 %v1652
          %v1692 = vpop.f32.mrf.mxu0
          %v1693 = vadd.f32 0.0, %v1692
          %1694 = vmatmul.f32.gmra.mxu0 %v1655
          %v1695 = vpop.f32.mrf.mxu0
          %v1696 = vadd.f32 0.0, %v1695
          %1697 = vmatmul.f32.gmra.mxu0 %v1658
          %v1698 = vpop.f32.mrf.mxu0
          %v1699 = vadd.f32 0.0, %v1698
          %1700 = vmatmul.f32.gmra.mxu0 %v1661
          %v1701 = vpop.f32.mrf.mxu0
          %v1702 = vadd.f32 0.0, %v1701
          %1703 = vmatmul.f32.gmra.mxu0 %v1664
          %v1704 = vpop.f32.mrf.mxu0
          %v1705 = vadd.f32 0.0, %v1704
          %1706 = vmatmul.f32.gmra.mxu0 %v1667
          %v1707 = vpop.f32.mrf.mxu0
          %v1708 = vadd.f32 0.0, %v1707
          %1709 = vmatmul.f32.gmra.mxu0 %v1670
          %v1710 = vpop.f32.mrf.mxu0
          %v1711 = vadd.f32 0.0, %v1710
          %1712 = vdwg.mxu0
          %v1713 = vadd.f32 %v1546, %v1690
          %v1714 = vadd.f32 %v1547, %v1693
          %v1715 = vadd.f32 %v1548, %v1696
          %v1716 = vadd.f32 %v1549, %v1699
          %v1717 = vadd.f32 %v1550, %v1702
          %v1718 = vadd.f32 %v1551, %v1705
          %v1719 = vadd.f32 %v1552, %v1708
          %v1720 = vadd.f32 %v1553, %v1711
          %v1722 = vsel %vm289, %v1640, 0
          %v1725 = vsel %vm289, %v1641, 0
          %v1728 = vsel %vm289, %v1642, 0
          %v1731 = vsel %vm289, %v1643, 0
          %v1734 = vsel %vm289, %v1644, 0
          %v1737 = vsel %vm289, %v1645, 0
          %v1740 = vsel %vm289, %v1646, 0
          %v1743 = vsel %vm289, %v1647, 0
          %1745 = vmatpush.msra.mxu0 0.0
          %1746 = vmatpush.msra.mxu0 0.0
          %1747 = vmatpush.msra.mxu0 0.0
          %1748 = vmatpush.msra.mxu0 0.0
          %1749 = vmatpush.msra.mxu0 0.0
          %1750 = vmatpush.msra.mxu0 0.0
          %1751 = vmatpush.msra.mxu0 0.0
          %1752 = vmatpush.msra.mxu0 0.0
          %1753 = vmatpush.msra.mxu0 0.0
          %1754 = vmatpush.msra.mxu0 0.0
          %1755 = vmatpush.msra.mxu0 0.0
          %1756 = vmatpush.msra.mxu0 0.0
          %1757 = vmatpush.msra.mxu0 0.0
          %1758 = vmatpush.msra.mxu0 0.0
          %1759 = vmatpush.msra.mxu0 0.0
          %1760 = vmatpush.msra.mxu0 %v1628
          %1761 = vmatmul.f32.gmra.mxu0 %v1722
          %v1762 = vpop.f32.mrf.mxu0
          %v1763 = vadd.f32 0.0, %v1762
          %1764 = vmatmul.f32.gmra.mxu0 %v1725
          %v1765 = vpop.f32.mrf.mxu0
          %v1766 = vadd.f32 0.0, %v1765
          %1767 = vmatmul.f32.gmra.mxu0 %v1728
          %v1768 = vpop.f32.mrf.mxu0
          %v1769 = vadd.f32 0.0, %v1768
          %1770 = vmatmul.f32.gmra.mxu0 %v1731
          %v1771 = vpop.f32.mrf.mxu0
          %v1772 = vadd.f32 0.0, %v1771
          %1773 = vmatmul.f32.gmra.mxu0 %v1734
          %v1774 = vpop.f32.mrf.mxu0
          %v1775 = vadd.f32 0.0, %v1774
          %1776 = vmatmul.f32.gmra.mxu0 %v1737
          %v1777 = vpop.f32.mrf.mxu0
          %v1778 = vadd.f32 0.0, %v1777
          %1779 = vmatmul.f32.gmra.mxu0 %v1740
          %v1780 = vpop.f32.mrf.mxu0
          %v1781 = vadd.f32 0.0, %v1780
          %1782 = vmatmul.f32.gmra.mxu0 %v1743
          %v1783 = vpop.f32.mrf.mxu0
          %v1784 = vadd.f32 0.0, %v1783
          %1785 = vdwg.mxu0
          %v1786 = vadd.f32 %v1619, %v1763
          %v1787 = vadd.f32 %v1620, %v1766
          %v1788 = vadd.f32 %v1621, %v1769
          %v1789 = vadd.f32 %v1622, %v1772
          %v1790 = vadd.f32 %v1623, %v1775
          %v1791 = vadd.f32 %v1624, %v1778
          %v1792 = vadd.f32 %v1625, %v1781
          %v1793 = vadd.f32 %v1626, %v1784
          %s1794 = scalar_lea.vmem [#allocation2], 88
          %v1795 = vld [vmem:[%s1794] sm:$0xff]
          %s1796 = sadd.s32 %s257, 33
          %s1797 = scalar_lea.vmem %s239, %s1796
          %v1798 = vld [vmem:[%s1797] sm:$0xff]
          %v1799 = vld [vmem:[%s1797 + $0x8] sm:$0xff]
          %v1800 = vld [vmem:[%s1797 + $0x10] sm:$0xff]
          %v1801 = vld [vmem:[%s1797 + $0x18] sm:$0xff]
          %v1802 = vld [vmem:[%s1797 + $0x20] sm:$0xff]
          %v1803 = vld [vmem:[%s1797 + $0x28] sm:$0xff]
          %v1804 = vld [vmem:[%s1797 + $0x30] sm:$0xff]
          %v1805 = vld [vmem:[%s1797 + $0x38] sm:$0xff]
          %1806 = vmatpush.msra.mxu0 0.0
          %1807 = vmatpush.msra.mxu0 0.0
          %1808 = vmatpush.msra.mxu0 0.0
          %1809 = vmatpush.msra.mxu0 0.0
          %1810 = vmatpush.msra.mxu0 0.0
          %1811 = vmatpush.msra.mxu0 0.0
          %1812 = vmatpush.msra.mxu0 0.0
          %1813 = vmatpush.msra.mxu0 0.0
          %1814 = vmatpush.msra.mxu0 0.0
          %1815 = vmatpush.msra.mxu0 0.0
          %1816 = vmatpush.msra.mxu0 0.0
          %1817 = vmatpush.msra.mxu0 0.0
          %1818 = vmatpush.msra.mxu0 0.0
          %1819 = vmatpush.msra.mxu0 0.0
          %1820 = vmatpush.msra.mxu0 0.0
          %1821 = vmatpush.msra.mxu0 %v1795
          %1822 = vmatmul.f32.gmra.mxu0 %v1722
          %v1823 = vpop.f32.mrf.mxu0
          %v1824 = vadd.f32 0.0, %v1823
          %1825 = vmatmul.f32.gmra.mxu0 %v1725
          %v1826 = vpop.f32.mrf.mxu0
          %v1827 = vadd.f32 0.0, %v1826
          %1828 = vmatmul.f32.gmra.mxu0 %v1728
          %v1829 = vpop.f32.mrf.mxu0
          %v1830 = vadd.f32 0.0, %v1829
          %1831 = vmatmul.f32.gmra.mxu0 %v1731
          %v1832 = vpop.f32.mrf.mxu0
          %v1833 = vadd.f32 0.0, %v1832
          %1834 = vmatmul.f32.gmra.mxu0 %v1734
          %v1835 = vpop.f32.mrf.mxu0
          %v1836 = vadd.f32 0.0, %v1835
          %1837 = vmatmul.f32.gmra.mxu0 %v1737
          %v1838 = vpop.f32.mrf.mxu0
          %v1839 = vadd.f32 0.0, %v1838
          %1840 = vmatmul.f32.gmra.mxu0 %v1740
          %v1841 = vpop.f32.mrf.mxu0
          %v1842 = vadd.f32 0.0, %v1841
          %1843 = vmatmul.f32.gmra.mxu0 %v1743
          %v1844 = vpop.f32.mrf.mxu0
          %v1845 = vadd.f32 0.0, %v1844
          %1846 = vdwg.mxu0
          %v1847 = vadd.f32 %v1713, %v1824
          %v1848 = vadd.f32 %v1714, %v1827
          %v1849 = vadd.f32 %v1715, %v1830
          %v1850 = vadd.f32 %v1716, %v1833
          %v1851 = vadd.f32 %v1717, %v1836
          %v1852 = vadd.f32 %v1718, %v1839
          %v1853 = vadd.f32 %v1719, %v1842
          %v1854 = vadd.f32 %v1720, %v1845
          %v1856 = vsel %vm289, %v1798, 0
          %v1859 = vsel %vm289, %v1799, 0
          %v1862 = vsel %vm289, %v1800, 0
          %v1865 = vsel %vm289, %v1801, 0
          %v1868 = vsel %vm289, %v1802, 0
          %v1871 = vsel %vm289, %v1803, 0
          %v1874 = vsel %vm289, %v1804, 0
          %v1877 = vsel %vm289, %v1805, 0
          %1879 = vmatpush.msra.mxu0 0.0
          %1880 = vmatpush.msra.mxu0 0.0
          %1881 = vmatpush.msra.mxu0 0.0
          %1882 = vmatpush.msra.mxu0 0.0
          %1883 = vmatpush.msra.mxu0 0.0
          %1884 = vmatpush.msra.mxu0 0.0
          %1885 = vmatpush.msra.mxu0 0.0
          %1886 = vmatpush.msra.mxu0 0.0
          %1887 = vmatpush.msra.mxu0 0.0
          %1888 = vmatpush.msra.mxu0 0.0
          %1889 = vmatpush.msra.mxu0 0.0
          %1890 = vmatpush.msra.mxu0 0.0
          %1891 = vmatpush.msra.mxu0 0.0
          %1892 = vmatpush.msra.mxu0 0.0
          %1893 = vmatpush.msra.mxu0 0.0
          %1894 = vmatpush.msra.mxu0 %v1795
          %1895 = vmatmul.f32.gmra.mxu0 %v1856
          %v1896 = vpop.f32.mrf.mxu0
          %v1897 = vadd.f32 0.0, %v1896
          %1898 = vmatmul.f32.gmra.mxu0 %v1859
          %v1899 = vpop.f32.mrf.mxu0
          %v1900 = vadd.f32 0.0, %v1899
          %1901 = vmatmul.f32.gmra.mxu0 %v1862
          %v1902 = vpop.f32.mrf.mxu0
          %v1903 = vadd.f32 0.0, %v1902
          %1904 = vmatmul.f32.gmra.mxu0 %v1865
          %v1905 = vpop.f32.mrf.mxu0
          %v1906 = vadd.f32 0.0, %v1905
          %1907 = vmatmul.f32.gmra.mxu0 %v1868
          %v1908 = vpop.f32.mrf.mxu0
          %v1909 = vadd.f32 0.0, %v1908
          %1910 = vmatmul.f32.gmra.mxu0 %v1871
          %v1911 = vpop.f32.mrf.mxu0
          %v1912 = vadd.f32 0.0, %v1911
          %1913 = vmatmul.f32.gmra.mxu0 %v1874
          %v1914 = vpop.f32.mrf.mxu0
          %v1915 = vadd.f32 0.0, %v1914
          %1916 = vmatmul.f32.gmra.mxu0 %v1877
          %v1917 = vpop.f32.mrf.mxu0
          %v1918 = vadd.f32 0.0, %v1917
          %1919 = vdwg.mxu0
          %v1920 = vadd.f32 %v1786, %v1897
          %v1921 = vadd.f32 %v1787, %v1900
          %v1922 = vadd.f32 %v1788, %v1903
          %v1923 = vadd.f32 %v1789, %v1906
          %v1924 = vadd.f32 %v1790, %v1909
          %v1925 = vadd.f32 %v1791, %v1912
          %v1926 = vadd.f32 %v1792, %v1915
          %v1927 = vadd.f32 %v1793, %v1918
          %s1928 = scalar_lea.vmem [#allocation2], 96
          %v1929 = vld [vmem:[%s1928] sm:$0xff]
          %s1930 = scalar_lea.vmem %s244, %s1796
          %v1931 = vld [vmem:[%s1930] sm:$0xff]
          %v1932 = vld [vmem:[%s1930 + $0x8] sm:$0xff]
          %v1933 = vld [vmem:[%s1930 + $0x10] sm:$0xff]
          %v1934 = vld [vmem:[%s1930 + $0x18] sm:$0xff]
          %v1935 = vld [vmem:[%s1930 + $0x20] sm:$0xff]
          %v1936 = vld [vmem:[%s1930 + $0x28] sm:$0xff]
          %v1937 = vld [vmem:[%s1930 + $0x30] sm:$0xff]
          %v1938 = vld [vmem:[%s1930 + $0x38] sm:$0xff]
          %1939 = vmatpush.msra.mxu0 0.0
          %1940 = vmatpush.msra.mxu0 0.0
          %1941 = vmatpush.msra.mxu0 0.0
          %1942 = vmatpush.msra.mxu0 0.0
          %1943 = vmatpush.msra.mxu0 0.0
          %1944 = vmatpush.msra.mxu0 0.0
          %1945 = vmatpush.msra.mxu0 0.0
          %1946 = vmatpush.msra.mxu0 0.0
          %1947 = vmatpush.msra.mxu0 0.0
          %1948 = vmatpush.msra.mxu0 0.0
          %1949 = vmatpush.msra.mxu0 0.0
          %1950 = vmatpush.msra.mxu0 0.0
          %1951 = vmatpush.msra.mxu0 0.0
          %1952 = vmatpush.msra.mxu0 0.0
          %1953 = vmatpush.msra.mxu0 0.0
          %1954 = vmatpush.msra.mxu0 %v1929
          %1955 = vmatmul.f32.gmra.mxu0 %v1856
          %v1956 = vpop.f32.mrf.mxu0
          %v1957 = vadd.f32 0.0, %v1956
          %1958 = vmatmul.f32.gmra.mxu0 %v1859
          %v1959 = vpop.f32.mrf.mxu0
          %v1960 = vadd.f32 0.0, %v1959
          %1961 = vmatmul.f32.gmra.mxu0 %v1862
          %v1962 = vpop.f32.mrf.mxu0
          %v1963 = vadd.f32 0.0, %v1962
          %1964 = vmatmul.f32.gmra.mxu0 %v1865
          %v1965 = vpop.f32.mrf.mxu0
          %v1966 = vadd.f32 0.0, %v1965
          %1967 = vmatmul.f32.gmra.mxu0 %v1868
          %v1968 = vpop.f32.mrf.mxu0
          %v1969 = vadd.f32 0.0, %v1968
          %1970 = vmatmul.f32.gmra.mxu0 %v1871
          %v1971 = vpop.f32.mrf.mxu0
          %v1972 = vadd.f32 0.0, %v1971
          %1973 = vmatmul.f32.gmra.mxu0 %v1874
          %v1974 = vpop.f32.mrf.mxu0
          %v1975 = vadd.f32 0.0, %v1974
          %1976 = vmatmul.f32.gmra.mxu0 %v1877
          %v1977 = vpop.f32.mrf.mxu0
          %v1978 = vadd.f32 0.0, %v1977
          %1979 = vdwg.mxu0
          %v1980 = vadd.f32 %v1847, %v1957
          %v1981 = vadd.f32 %v1848, %v1960
          %v1982 = vadd.f32 %v1849, %v1963
          %v1983 = vadd.f32 %v1850, %v1966
          %v1984 = vadd.f32 %v1851, %v1969
          %v1985 = vadd.f32 %v1852, %v1972
          %v1986 = vadd.f32 %v1853, %v1975
          %v1987 = vadd.f32 %v1854, %v1978
          %v1989 = vsel %vm289, %v1931, 0
          %v1992 = vsel %vm289, %v1932, 0
          %v1995 = vsel %vm289, %v1933, 0
          %v1998 = vsel %vm289, %v1934, 0
          %v2001 = vsel %vm289, %v1935, 0
          %v2004 = vsel %vm289, %v1936, 0
          %v2007 = vsel %vm289, %v1937, 0
          %v2010 = vsel %vm289, %v1938, 0
          %2012 = vmatpush.msra.mxu0 0.0
          %2013 = vmatpush.msra.mxu0 0.0
          %2014 = vmatpush.msra.mxu0 0.0
          %2015 = vmatpush.msra.mxu0 0.0
          %2016 = vmatpush.msra.mxu0 0.0
          %2017 = vmatpush.msra.mxu0 0.0
          %2018 = vmatpush.msra.mxu0 0.0
          %2019 = vmatpush.msra.mxu0 0.0
          %2020 = vmatpush.msra.mxu0 0.0
          %2021 = vmatpush.msra.mxu0 0.0
          %2022 = vmatpush.msra.mxu0 0.0
          %2023 = vmatpush.msra.mxu0 0.0
          %2024 = vmatpush.msra.mxu0 0.0
          %2025 = vmatpush.msra.mxu0 0.0
          %2026 = vmatpush.msra.mxu0 0.0
          %2027 = vmatpush.msra.mxu0 %v1929
          %2028 = vmatmul.f32.gmra.mxu0 %v1989
          %v2029 = vpop.f32.mrf.mxu0
          %v2030 = vadd.f32 0.0, %v2029
          %2031 = vmatmul.f32.gmra.mxu0 %v1992
          %v2032 = vpop.f32.mrf.mxu0
          %v2033 = vadd.f32 0.0, %v2032
          %2034 = vmatmul.f32.gmra.mxu0 %v1995
          %v2035 = vpop.f32.mrf.mxu0
          %v2036 = vadd.f32 0.0, %v2035
          %2037 = vmatmul.f32.gmra.mxu0 %v1998
          %v2038 = vpop.f32.mrf.mxu0
          %v2039 = vadd.f32 0.0, %v2038
          %2040 = vmatmul.f32.gmra.mxu0 %v2001
          %v2041 = vpop.f32.mrf.mxu0
          %v2042 = vadd.f32 0.0, %v2041
          %2043 = vmatmul.f32.gmra.mxu0 %v2004
          %v2044 = vpop.f32.mrf.mxu0
          %v2045 = vadd.f32 0.0, %v2044
          %2046 = vmatmul.f32.gmra.mxu0 %v2007
          %v2047 = vpop.f32.mrf.mxu0
          %v2048 = vadd.f32 0.0, %v2047
          %2049 = vmatmul.f32.gmra.mxu0 %v2010
          %v2050 = vpop.f32.mrf.mxu0
          %v2051 = vadd.f32 0.0, %v2050
          %2052 = vdwg.mxu0
          %v2053 = vadd.f32 %v1920, %v2030
          %v2054 = vadd.f32 %v1921, %v2033
          %v2055 = vadd.f32 %v1922, %v2036
          %v2056 = vadd.f32 %v1923, %v2039
          %v2057 = vadd.f32 %v1924, %v2042
          %v2058 = vadd.f32 %v1925, %v2045
          %v2059 = vadd.f32 %v1926, %v2048
          %v2060 = vadd.f32 %v1927, %v2051
          %s2061 = scalar_lea.vmem [#allocation2], 104
          %v2062 = vld [vmem:[%s2061] sm:$0xff]
          %s2063 = sadd.s32 %s257, 34
          %s2064 = scalar_lea.vmem %s239, %s2063
          %v2065 = vld [vmem:[%s2064] sm:$0xff]
          %v2066 = vld [vmem:[%s2064 + $0x8] sm:$0xff]
          %v2067 = vld [vmem:[%s2064 + $0x10] sm:$0xff]
          %v2068 = vld [vmem:[%s2064 + $0x18] sm:$0xff]
          %v2069 = vld [vmem:[%s2064 + $0x20] sm:$0xff]
          %v2070 = vld [vmem:[%s2064 + $0x28] sm:$0xff]
          %v2071 = vld [vmem:[%s2064 + $0x30] sm:$0xff]
          %v2072 = vld [vmem:[%s2064 + $0x38] sm:$0xff]
          %2073 = vmatpush.msra.mxu0 0.0
          %2074 = vmatpush.msra.mxu0 0.0
          %2075 = vmatpush.msra.mxu0 0.0
          %2076 = vmatpush.msra.mxu0 0.0
          %2077 = vmatpush.msra.mxu0 0.0
          %2078 = vmatpush.msra.mxu0 0.0
          %2079 = vmatpush.msra.mxu0 0.0
          %2080 = vmatpush.msra.mxu0 0.0
          %2081 = vmatpush.msra.mxu0 0.0
          %2082 = vmatpush.msra.mxu0 0.0
          %2083 = vmatpush.msra.mxu0 0.0
          %2084 = vmatpush.msra.mxu0 0.0
          %2085 = vmatpush.msra.mxu0 0.0
          %2086 = vmatpush.msra.mxu0 0.0
          %2087 = vmatpush.msra.mxu0 0.0
          %2088 = vmatpush.msra.mxu0 %v2062
          %2089 = vmatmul.f32.gmra.mxu0 %v1989
          %v2090 = vpop.f32.mrf.mxu0
          %v2091 = vadd.f32 0.0, %v2090
          %2092 = vmatmul.f32.gmra.mxu0 %v1992
          %v2093 = vpop.f32.mrf.mxu0
          %v2094 = vadd.f32 0.0, %v2093
          %2095 = vmatmul.f32.gmra.mxu0 %v1995
          %v2096 = vpop.f32.mrf.mxu0
          %v2097 = vadd.f32 0.0, %v2096
          %2098 = vmatmul.f32.gmra.mxu0 %v1998
          %v2099 = vpop.f32.mrf.mxu0
          %v2100 = vadd.f32 0.0, %v2099
          %2101 = vmatmul.f32.gmra.mxu0 %v2001
          %v2102 = vpop.f32.mrf.mxu0
          %v2103 = vadd.f32 0.0, %v2102
          %2104 = vmatmul.f32.gmra.mxu0 %v2004
          %v2105 = vpop.f32.mrf.mxu0
          %v2106 = vadd.f32 0.0, %v2105
          %2107 = vmatmul.f32.gmra.mxu0 %v2007
          %v2108 = vpop.f32.mrf.mxu0
          %v2109 = vadd.f32 0.0, %v2108
          %2110 = vmatmul.f32.gmra.mxu0 %v2010
          %v2111 = vpop.f32.mrf.mxu0
          %v2112 = vadd.f32 0.0, %v2111
          %2113 = vdwg.mxu0
          %v2114 = vadd.f32 %v1980, %v2091
          %v2115 = vadd.f32 %v1981, %v2094
          %v2116 = vadd.f32 %v1982, %v2097
          %v2117 = vadd.f32 %v1983, %v2100
          %v2118 = vadd.f32 %v1984, %v2103
          %v2119 = vadd.f32 %v1985, %v2106
          %v2120 = vadd.f32 %v1986, %v2109
          %v2121 = vadd.f32 %v1987, %v2112
          %v2123 = vsel %vm289, %v2065, 0
          %v2126 = vsel %vm289, %v2066, 0
          %v2129 = vsel %vm289, %v2067, 0
          %v2132 = vsel %vm289, %v2068, 0
          %v2135 = vsel %vm289, %v2069, 0
          %v2138 = vsel %vm289, %v2070, 0
          %v2141 = vsel %vm289, %v2071, 0
          %v2144 = vsel %vm289, %v2072, 0
          %2146 = vmatpush.msra.mxu0 0.0
          %2147 = vmatpush.msra.mxu0 0.0
          %2148 = vmatpush.msra.mxu0 0.0
          %2149 = vmatpush.msra.mxu0 0.0
          %2150 = vmatpush.msra.mxu0 0.0
          %2151 = vmatpush.msra.mxu0 0.0
          %2152 = vmatpush.msra.mxu0 0.0
          %2153 = vmatpush.msra.mxu0 0.0
          %2154 = vmatpush.msra.mxu0 0.0
          %2155 = vmatpush.msra.mxu0 0.0
          %2156 = vmatpush.msra.mxu0 0.0
          %2157 = vmatpush.msra.mxu0 0.0
          %2158 = vmatpush.msra.mxu0 0.0
          %2159 = vmatpush.msra.mxu0 0.0
          %2160 = vmatpush.msra.mxu0 0.0
          %2161 = vmatpush.msra.mxu0 %v2062
          %2162 = vmatmul.f32.gmra.mxu0 %v2123
          %v2163 = vpop.f32.mrf.mxu0
          %v2164 = vadd.f32 0.0, %v2163
          %2165 = vmatmul.f32.gmra.mxu0 %v2126
          %v2166 = vpop.f32.mrf.mxu0
          %v2167 = vadd.f32 0.0, %v2166
          %2168 = vmatmul.f32.gmra.mxu0 %v2129
          %v2169 = vpop.f32.mrf.mxu0
          %v2170 = vadd.f32 0.0, %v2169
          %2171 = vmatmul.f32.gmra.mxu0 %v2132
          %v2172 = vpop.f32.mrf.mxu0
          %v2173 = vadd.f32 0.0, %v2172
          %2174 = vmatmul.f32.gmra.mxu0 %v2135
          %v2175 = vpop.f32.mrf.mxu0
          %v2176 = vadd.f32 0.0, %v2175
          %2177 = vmatmul.f32.gmra.mxu0 %v2138
          %v2178 = vpop.f32.mrf.mxu0
          %v2179 = vadd.f32 0.0, %v2178
          %2180 = vmatmul.f32.gmra.mxu0 %v2141
          %v2181 = vpop.f32.mrf.mxu0
          %v2182 = vadd.f32 0.0, %v2181
          %2183 = vmatmul.f32.gmra.mxu0 %v2144
          %v2184 = vpop.f32.mrf.mxu0
          %v2185 = vadd.f32 0.0, %v2184
          %2186 = vdwg.mxu0
          %v2187 = vadd.f32 %v2053, %v2164
          %v2188 = vadd.f32 %v2054, %v2167
          %v2189 = vadd.f32 %v2055, %v2170
          %v2190 = vadd.f32 %v2056, %v2173
          %v2191 = vadd.f32 %v2057, %v2176
          %v2192 = vadd.f32 %v2058, %v2179
          %v2193 = vadd.f32 %v2059, %v2182
          %v2194 = vadd.f32 %v2060, %v2185
          %s2195 = scalar_lea.vmem [#allocation2], 112
          %v2196 = vld [vmem:[%s2195] sm:$0xff]
          %s2197 = scalar_lea.vmem %s244, %s2063
          %v2198 = vld [vmem:[%s2197] sm:$0xff]
          %v2199 = vld [vmem:[%s2197 + $0x8] sm:$0xff]
          %v2200 = vld [vmem:[%s2197 + $0x10] sm:$0xff]
          %v2201 = vld [vmem:[%s2197 + $0x18] sm:$0xff]
          %v2202 = vld [vmem:[%s2197 + $0x20] sm:$0xff]
          %v2203 = vld [vmem:[%s2197 + $0x28] sm:$0xff]
          %v2204 = vld [vmem:[%s2197 + $0x30] sm:$0xff]
          %v2205 = vld [vmem:[%s2197 + $0x38] sm:$0xff]
          %2206 = vmatpush.msra.mxu0 0.0
          %2207 = vmatpush.msra.mxu0 0.0
          %2208 = vmatpush.msra.mxu0 0.0
          %2209 = vmatpush.msra.mxu0 0.0
          %2210 = vmatpush.msra.mxu0 0.0
          %2211 = vmatpush.msra.mxu0 0.0
          %2212 = vmatpush.msra.mxu0 0.0
          %2213 = vmatpush.msra.mxu0 0.0
          %2214 = vmatpush.msra.mxu0 0.0
          %2215 = vmatpush.msra.mxu0 0.0
          %2216 = vmatpush.msra.mxu0 0.0
          %2217 = vmatpush.msra.mxu0 0.0
          %2218 = vmatpush.msra.mxu0 0.0
          %2219 = vmatpush.msra.mxu0 0.0
          %2220 = vmatpush.msra.mxu0 0.0
          %2221 = vmatpush.msra.mxu0 %v2196
          %2222 = vmatmul.f32.gmra.mxu0 %v2123
          %v2223 = vpop.f32.mrf.mxu0
          %v2224 = vadd.f32 0.0, %v2223
          %2225 = vmatmul.f32.gmra.mxu0 %v2126
          %v2226 = vpop.f32.mrf.mxu0
          %v2227 = vadd.f32 0.0, %v2226
          %2228 = vmatmul.f32.gmra.mxu0 %v2129
          %v2229 = vpop.f32.mrf.mxu0
          %v2230 = vadd.f32 0.0, %v2229
          %2231 = vmatmul.f32.gmra.mxu0 %v2132
          %v2232 = vpop.f32.mrf.mxu0
          %v2233 = vadd.f32 0.0, %v2232
          %2234 = vmatmul.f32.gmra.mxu0 %v2135
          %v2235 = vpop.f32.mrf.mxu0
          %v2236 = vadd.f32 0.0, %v2235
          %2237 = vmatmul.f32.gmra.mxu0 %v2138
          %v2238 = vpop.f32.mrf.mxu0
          %v2239 = vadd.f32 0.0, %v2238
          %2240 = vmatmul.f32.gmra.mxu0 %v2141
          %v2241 = vpop.f32.mrf.mxu0
          %v2242 = vadd.f32 0.0, %v2241
          %2243 = vmatmul.f32.gmra.mxu0 %v2144
          %v2244 = vpop.f32.mrf.mxu0
          %v2245 = vadd.f32 0.0, %v2244
          %2246 = vdwg.mxu0
          %v2247 = vadd.f32 %v2114, %v2224
          %v2248 = vadd.f32 %v2115, %v2227
          %v2249 = vadd.f32 %v2116, %v2230
          %v2250 = vadd.f32 %v2117, %v2233
          %v2251 = vadd.f32 %v2118, %v2236
          %v2252 = vadd.f32 %v2119, %v2239
          %v2253 = vadd.f32 %v2120, %v2242
          %v2254 = vadd.f32 %v2121, %v2245
          %v2256 = vsel %vm289, %v2198, 0
          %v2259 = vsel %vm289, %v2199, 0
          %v2262 = vsel %vm289, %v2200, 0
          %v2265 = vsel %vm289, %v2201, 0
          %v2268 = vsel %vm289, %v2202, 0
          %v2271 = vsel %vm289, %v2203, 0
          %v2274 = vsel %vm289, %v2204, 0
          %v2277 = vsel %vm289, %v2205, 0
          %2279 = vmatpush.msra.mxu0 0.0
          %2280 = vmatpush.msra.mxu0 0.0
          %2281 = vmatpush.msra.mxu0 0.0
          %2282 = vmatpush.msra.mxu0 0.0
          %2283 = vmatpush.msra.mxu0 0.0
          %2284 = vmatpush.msra.mxu0 0.0
          %2285 = vmatpush.msra.mxu0 0.0
          %2286 = vmatpush.msra.mxu0 0.0
          %2287 = vmatpush.msra.mxu0 0.0
          %2288 = vmatpush.msra.mxu0 0.0
          %2289 = vmatpush.msra.mxu0 0.0
          %2290 = vmatpush.msra.mxu0 0.0
          %2291 = vmatpush.msra.mxu0 0.0
          %2292 = vmatpush.msra.mxu0 0.0
          %2293 = vmatpush.msra.mxu0 0.0
          %2294 = vmatpush.msra.mxu0 %v2196
          %2295 = vmatmul.f32.gmra.mxu0 %v2256
          %v2296 = vpop.f32.mrf.mxu0
          %v2297 = vadd.f32 0.0, %v2296
          %2298 = vmatmul.f32.gmra.mxu0 %v2259
          %v2299 = vpop.f32.mrf.mxu0
          %v2300 = vadd.f32 0.0, %v2299
          %2301 = vmatmul.f32.gmra.mxu0 %v2262
          %v2302 = vpop.f32.mrf.mxu0
          %v2303 = vadd.f32 0.0, %v2302
          %2304 = vmatmul.f32.gmra.mxu0 %v2265
          %v2305 = vpop.f32.mrf.mxu0
          %v2306 = vadd.f32 0.0, %v2305
          %2307 = vmatmul.f32.gmra.mxu0 %v2268
          %v2308 = vpop.f32.mrf.mxu0
          %v2309 = vadd.f32 0.0, %v2308
          %2310 = vmatmul.f32.gmra.mxu0 %v2271
          %v2311 = vpop.f32.mrf.mxu0
          %v2312 = vadd.f32 0.0, %v2311
          %2313 = vmatmul.f32.gmra.mxu0 %v2274
          %v2314 = vpop.f32.mrf.mxu0
          %v2315 = vadd.f32 0.0, %v2314
          %2316 = vmatmul.f32.gmra.mxu0 %v2277
          %v2317 = vpop.f32.mrf.mxu0
          %v2318 = vadd.f32 0.0, %v2317
          %2319 = vdwg.mxu0
          %v2320 = vadd.f32 %v2187, %v2297
          %v2321 = vadd.f32 %v2188, %v2300
          %v2322 = vadd.f32 %v2189, %v2303
          %v2323 = vadd.f32 %v2190, %v2306
          %v2324 = vadd.f32 %v2191, %v2309
          %v2325 = vadd.f32 %v2192, %v2312
          %v2326 = vadd.f32 %v2193, %v2315
          %v2327 = vadd.f32 %v2194, %v2318
          %s2328 = scalar_lea.vmem [#allocation2], 120
          %v2329 = vld [vmem:[%s2328] sm:$0xff]
          %s2330 = sadd.s32 %s257, 48
          %s2331 = scalar_lea.vmem %s239, %s2330
          %v2332 = vld [vmem:[%s2331] sm:$0xff]
          %v2333 = vld [vmem:[%s2331 + $0x8] sm:$0xff]
          %v2334 = vld [vmem:[%s2331 + $0x10] sm:$0xff]
          %v2335 = vld [vmem:[%s2331 + $0x18] sm:$0xff]
          %v2336 = vld [vmem:[%s2331 + $0x20] sm:$0xff]
          %v2337 = vld [vmem:[%s2331 + $0x28] sm:$0xff]
          %v2338 = vld [vmem:[%s2331 + $0x30] sm:$0xff]
          %v2339 = vld [vmem:[%s2331 + $0x38] sm:$0xff]
          %s2340 = scalar_lea.vmem %s244, %s2330
          %v2341 = vld [vmem:[%s2340] sm:$0xff]
          %v2342 = vld [vmem:[%s2340 + $0x8] sm:$0xff]
          %v2343 = vld [vmem:[%s2340 + $0x10] sm:$0xff]
          %v2344 = vld [vmem:[%s2340 + $0x18] sm:$0xff]
          %v2345 = vld [vmem:[%s2340 + $0x20] sm:$0xff]
          %v2346 = vld [vmem:[%s2340 + $0x28] sm:$0xff]
          %v2347 = vld [vmem:[%s2340 + $0x30] sm:$0xff]
          %v2348 = vld [vmem:[%s2340 + $0x38] sm:$0xff]
          %v2350 = vsel %vm289, %v2332, 0
          %v2353 = vsel %vm289, %v2333, 0
          %v2356 = vsel %vm289, %v2334, 0
          %v2359 = vsel %vm289, %v2335, 0
          %v2362 = vsel %vm289, %v2336, 0
          %v2365 = vsel %vm289, %v2337, 0
          %v2368 = vsel %vm289, %v2338, 0
          %v2371 = vsel %vm289, %v2339, 0
          %2373 = vmatpush.msra.mxu0 0.0
          %2374 = vmatpush.msra.mxu0 0.0
          %2375 = vmatpush.msra.mxu0 0.0
          %2376 = vmatpush.msra.mxu0 0.0
          %2377 = vmatpush.msra.mxu0 0.0
          %2378 = vmatpush.msra.mxu0 0.0
          %2379 = vmatpush.msra.mxu0 0.0
          %2380 = vmatpush.msra.mxu0 0.0
          %2381 = vmatpush.msra.mxu0 0.0
          %2382 = vmatpush.msra.mxu0 0.0
          %2383 = vmatpush.msra.mxu0 0.0
          %2384 = vmatpush.msra.mxu0 0.0
          %2385 = vmatpush.msra.mxu0 0.0
          %2386 = vmatpush.msra.mxu0 0.0
          %2387 = vmatpush.msra.mxu0 0.0
          %2388 = vmatpush.msra.mxu0 %v2329
          %2389 = vmatmul.f32.gmra.mxu0 %v2350
          %v2390 = vpop.f32.mrf.mxu0
          %v2391 = vadd.f32 0.0, %v2390
          %2392 = vmatmul.f32.gmra.mxu0 %v2353
          %v2393 = vpop.f32.mrf.mxu0
          %v2394 = vadd.f32 0.0, %v2393
          %2395 = vmatmul.f32.gmra.mxu0 %v2356
          %v2396 = vpop.f32.mrf.mxu0
          %v2397 = vadd.f32 0.0, %v2396
          %2398 = vmatmul.f32.gmra.mxu0 %v2359
          %v2399 = vpop.f32.mrf.mxu0
          %v2400 = vadd.f32 0.0, %v2399
          %2401 = vmatmul.f32.gmra.mxu0 %v2362
          %v2402 = vpop.f32.mrf.mxu0
          %v2403 = vadd.f32 0.0, %v2402
          %2404 = vmatmul.f32.gmra.mxu0 %v2365
          %v2405 = vpop.f32.mrf.mxu0
          %v2406 = vadd.f32 0.0, %v2405
          %2407 = vmatmul.f32.gmra.mxu0 %v2368
          %v2408 = vpop.f32.mrf.mxu0
          %v2409 = vadd.f32 0.0, %v2408
          %2410 = vmatmul.f32.gmra.mxu0 %v2371
          %v2411 = vpop.f32.mrf.mxu0
          %v2412 = vadd.f32 0.0, %v2411
          %2413 = vdwg.mxu0
          %v2414 = vadd.f32 %v2247, %v2391
          %v2415 = vadd.f32 %v2248, %v2394
          %v2416 = vadd.f32 %v2249, %v2397
          %v2417 = vadd.f32 %v2250, %v2400
          %v2418 = vadd.f32 %v2251, %v2403
          %v2419 = vadd.f32 %v2252, %v2406
          %v2420 = vadd.f32 %v2253, %v2409
          %v2421 = vadd.f32 %v2254, %v2412
          %v2423 = vsel %vm289, %v2341, 0
          %v2426 = vsel %vm289, %v2342, 0
          %v2429 = vsel %vm289, %v2343, 0
          %v2432 = vsel %vm289, %v2344, 0
          %v2435 = vsel %vm289, %v2345, 0
          %v2438 = vsel %vm289, %v2346, 0
          %v2441 = vsel %vm289, %v2347, 0
          %v2444 = vsel %vm289, %v2348, 0
          %2446 = vmatpush.msra.mxu0 0.0
          %2447 = vmatpush.msra.mxu0 0.0
          %2448 = vmatpush.msra.mxu0 0.0
          %2449 = vmatpush.msra.mxu0 0.0
          %2450 = vmatpush.msra.mxu0 0.0
          %2451 = vmatpush.msra.mxu0 0.0
          %2452 = vmatpush.msra.mxu0 0.0
          %2453 = vmatpush.msra.mxu0 0.0
          %2454 = vmatpush.msra.mxu0 0.0
          %2455 = vmatpush.msra.mxu0 0.0
          %2456 = vmatpush.msra.mxu0 0.0
          %2457 = vmatpush.msra.mxu0 0.0
          %2458 = vmatpush.msra.mxu0 0.0
          %2459 = vmatpush.msra.mxu0 0.0
          %2460 = vmatpush.msra.mxu0 0.0
          %2461 = vmatpush.msra.mxu0 %v2329
          %2462 = vmatmul.f32.gmra.mxu0 %v2423
          %v2463 = vpop.f32.mrf.mxu0
          %v2464 = vadd.f32 0.0, %v2463
          %2465 = vmatmul.f32.gmra.mxu0 %v2426
          %v2466 = vpop.f32.mrf.mxu0
          %v2467 = vadd.f32 0.0, %v2466
          %2468 = vmatmul.f32.gmra.mxu0 %v2429
          %v2469 = vpop.f32.mrf.mxu0
          %v2470 = vadd.f32 0.0, %v2469
          %2471 = vmatmul.f32.gmra.mxu0 %v2432
          %v2472 = vpop.f32.mrf.mxu0
          %v2473 = vadd.f32 0.0, %v2472
          %2474 = vmatmul.f32.gmra.mxu0 %v2435
          %v2475 = vpop.f32.mrf.mxu0
          %v2476 = vadd.f32 0.0, %v2475
          %2477 = vmatmul.f32.gmra.mxu0 %v2438
          %v2478 = vpop.f32.mrf.mxu0
          %v2479 = vadd.f32 0.0, %v2478
          %2480 = vmatmul.f32.gmra.mxu0 %v2441
          %v2481 = vpop.f32.mrf.mxu0
          %v2482 = vadd.f32 0.0, %v2481
          %2483 = vmatmul.f32.gmra.mxu0 %v2444
          %v2484 = vpop.f32.mrf.mxu0
          %v2485 = vadd.f32 0.0, %v2484
          %2486 = vdwg.mxu0
          %v2487 = vadd.f32 %v2320, %v2464
          %v2488 = vadd.f32 %v2321, %v2467
          %v2489 = vadd.f32 %v2322, %v2470
          %v2490 = vadd.f32 %v2323, %v2473
          %v2491 = vadd.f32 %v2324, %v2476
          %v2492 = vadd.f32 %v2325, %v2479
          %v2493 = vadd.f32 %v2326, %v2482
          %v2494 = vadd.f32 %v2327, %v2485
          %s2495 = scalar_lea.vmem [#allocation2], 128
          %v2496 = vld [vmem:[%s2495] sm:$0xff]
          %s2497 = sadd.s32 %s257, 49
          %s2498 = scalar_lea.vmem %s239, %s2497
          %v2499 = vld [vmem:[%s2498] sm:$0xff]
          %v2500 = vld [vmem:[%s2498 + $0x8] sm:$0xff]
          %v2501 = vld [vmem:[%s2498 + $0x10] sm:$0xff]
          %v2502 = vld [vmem:[%s2498 + $0x18] sm:$0xff]
          %v2503 = vld [vmem:[%s2498 + $0x20] sm:$0xff]
          %v2504 = vld [vmem:[%s2498 + $0x28] sm:$0xff]
          %v2505 = vld [vmem:[%s2498 + $0x30] sm:$0xff]
          %v2506 = vld [vmem:[%s2498 + $0x38] sm:$0xff]
          %2507 = vmatpush.msra.mxu0 0.0
          %2508 = vmatpush.msra.mxu0 0.0
          %2509 = vmatpush.msra.mxu0 0.0
          %2510 = vmatpush.msra.mxu0 0.0
          %2511 = vmatpush.msra.mxu0 0.0
          %2512 = vmatpush.msra.mxu0 0.0
          %2513 = vmatpush.msra.mxu0 0.0
          %2514 = vmatpush.msra.mxu0 0.0
          %2515 = vmatpush.msra.mxu0 0.0
          %2516 = vmatpush.msra.mxu0 0.0
          %2517 = vmatpush.msra.mxu0 0.0
          %2518 = vmatpush.msra.mxu0 0.0
          %2519 = vmatpush.msra.mxu0 0.0
          %2520 = vmatpush.msra.mxu0 0.0
          %2521 = vmatpush.msra.mxu0 0.0
          %2522 = vmatpush.msra.mxu0 %v2496
          %2523 = vmatmul.f32.gmra.mxu0 %v2423
          %v2524 = vpop.f32.mrf.mxu0
          %v2525 = vadd.f32 0.0, %v2524
          %2526 = vmatmul.f32.gmra.mxu0 %v2426
          %v2527 = vpop.f32.mrf.mxu0
          %v2528 = vadd.f32 0.0, %v2527
          %2529 = vmatmul.f32.gmra.mxu0 %v2429
          %v2530 = vpop.f32.mrf.mxu0
          %v2531 = vadd.f32 0.0, %v2530
          %2532 = vmatmul.f32.gmra.mxu0 %v2432
          %v2533 = vpop.f32.mrf.mxu0
          %v2534 = vadd.f32 0.0, %v2533
          %2535 = vmatmul.f32.gmra.mxu0 %v2435
          %v2536 = vpop.f32.mrf.mxu0
          %v2537 = vadd.f32 0.0, %v2536
          %2538 = vmatmul.f32.gmra.mxu0 %v2438
          %v2539 = vpop.f32.mrf.mxu0
          %v2540 = vadd.f32 0.0, %v2539
          %2541 = vmatmul.f32.gmra.mxu0 %v2441
          %v2542 = vpop.f32.mrf.mxu0
          %v2543 = vadd.f32 0.0, %v2542
          %2544 = vmatmul.f32.gmra.mxu0 %v2444
          %v2545 = vpop.f32.mrf.mxu0
          %v2546 = vadd.f32 0.0, %v2545
          %2547 = vdwg.mxu0
          %v2548 = vadd.f32 %v2414, %v2525
          %v2549 = vadd.f32 %v2415, %v2528
          %v2550 = vadd.f32 %v2416, %v2531
          %v2551 = vadd.f32 %v2417, %v2534
          %v2552 = vadd.f32 %v2418, %v2537
          %v2553 = vadd.f32 %v2419, %v2540
          %v2554 = vadd.f32 %v2420, %v2543
          %v2555 = vadd.f32 %v2421, %v2546
          %v2557 = vsel %vm289, %v2499, 0
          %v2560 = vsel %vm289, %v2500, 0
          %v2563 = vsel %vm289, %v2501, 0
          %v2566 = vsel %vm289, %v2502, 0
          %v2569 = vsel %vm289, %v2503, 0
          %v2572 = vsel %vm289, %v2504, 0
          %v2575 = vsel %vm289, %v2505, 0
          %v2578 = vsel %vm289, %v2506, 0
          %2580 = vmatpush.msra.mxu0 0.0
          %2581 = vmatpush.msra.mxu0 0.0
          %2582 = vmatpush.msra.mxu0 0.0
          %2583 = vmatpush.msra.mxu0 0.0
          %2584 = vmatpush.msra.mxu0 0.0
          %2585 = vmatpush.msra.mxu0 0.0
          %2586 = vmatpush.msra.mxu0 0.0
          %2587 = vmatpush.msra.mxu0 0.0
          %2588 = vmatpush.msra.mxu0 0.0
          %2589 = vmatpush.msra.mxu0 0.0
          %2590 = vmatpush.msra.mxu0 0.0
          %2591 = vmatpush.msra.mxu0 0.0
          %2592 = vmatpush.msra.mxu0 0.0
          %2593 = vmatpush.msra.mxu0 0.0
          %2594 = vmatpush.msra.mxu0 0.0
          %2595 = vmatpush.msra.mxu0 %v2496
          %2596 = vmatmul.f32.gmra.mxu0 %v2557
          %v2597 = vpop.f32.mrf.mxu0
          %v2598 = vadd.f32 0.0, %v2597
          %2599 = vmatmul.f32.gmra.mxu0 %v2560
          %v2600 = vpop.f32.mrf.mxu0
          %v2601 = vadd.f32 0.0, %v2600
          %2602 = vmatmul.f32.gmra.mxu0 %v2563
          %v2603 = vpop.f32.mrf.mxu0
          %v2604 = vadd.f32 0.0, %v2603
          %2605 = vmatmul.f32.gmra.mxu0 %v2566
          %v2606 = vpop.f32.mrf.mxu0
          %v2607 = vadd.f32 0.0, %v2606
          %2608 = vmatmul.f32.gmra.mxu0 %v2569
          %v2609 = vpop.f32.mrf.mxu0
          %v2610 = vadd.f32 0.0, %v2609
          %2611 = vmatmul.f32.gmra.mxu0 %v2572
          %v2612 = vpop.f32.mrf.mxu0
          %v2613 = vadd.f32 0.0, %v2612
          %2614 = vmatmul.f32.gmra.mxu0 %v2575
          %v2615 = vpop.f32.mrf.mxu0
          %v2616 = vadd.f32 0.0, %v2615
          %2617 = vmatmul.f32.gmra.mxu0 %v2578
          %v2618 = vpop.f32.mrf.mxu0
          %v2619 = vadd.f32 0.0, %v2618
          %2620 = vdwg.mxu0
          %v2621 = vadd.f32 %v2487, %v2598
          %v2622 = vadd.f32 %v2488, %v2601
          %v2623 = vadd.f32 %v2489, %v2604
          %v2624 = vadd.f32 %v2490, %v2607
          %v2625 = vadd.f32 %v2491, %v2610
          %v2626 = vadd.f32 %v2492, %v2613
          %v2627 = vadd.f32 %v2493, %v2616
          %v2628 = vadd.f32 %v2494, %v2619
          %s2629 = scalar_lea.vmem [#allocation2], 136
          %v2630 = vld [vmem:[%s2629] sm:$0xff]
          %s2631 = scalar_lea.vmem %s244, %s2497
          %v2632 = vld [vmem:[%s2631] sm:$0xff]
          %v2633 = vld [vmem:[%s2631 + $0x8] sm:$0xff]
          %v2634 = vld [vmem:[%s2631 + $0x10] sm:$0xff]
          %v2635 = vld [vmem:[%s2631 + $0x18] sm:$0xff]
          %v2636 = vld [vmem:[%s2631 + $0x20] sm:$0xff]
          %v2637 = vld [vmem:[%s2631 + $0x28] sm:$0xff]
          %v2638 = vld [vmem:[%s2631 + $0x30] sm:$0xff]
          %v2639 = vld [vmem:[%s2631 + $0x38] sm:$0xff]
          %2640 = vmatpush.msra.mxu0 0.0
          %2641 = vmatpush.msra.mxu0 0.0
          %2642 = vmatpush.msra.mxu0 0.0
          %2643 = vmatpush.msra.mxu0 0.0
          %2644 = vmatpush.msra.mxu0 0.0
          %2645 = vmatpush.msra.mxu0 0.0
          %2646 = vmatpush.msra.mxu0 0.0
          %2647 = vmatpush.msra.mxu0 0.0
          %2648 = vmatpush.msra.mxu0 0.0
          %2649 = vmatpush.msra.mxu0 0.0
          %2650 = vmatpush.msra.mxu0 0.0
          %2651 = vmatpush.msra.mxu0 0.0
          %2652 = vmatpush.msra.mxu0 0.0
          %2653 = vmatpush.msra.mxu0 0.0
          %2654 = vmatpush.msra.mxu0 0.0
          %2655 = vmatpush.msra.mxu0 %v2630
          %2656 = vmatmul.f32.gmra.mxu0 %v2557
          %v2657 = vpop.f32.mrf.mxu0
          %v2658 = vadd.f32 0.0, %v2657
          %2659 = vmatmul.f32.gmra.mxu0 %v2560
          %v2660 = vpop.f32.mrf.mxu0
          %v2661 = vadd.f32 0.0, %v2660
          %2662 = vmatmul.f32.gmra.mxu0 %v2563
          %v2663 = vpop.f32.mrf.mxu0
          %v2664 = vadd.f32 0.0, %v2663
          %2665 = vmatmul.f32.gmra.mxu0 %v2566
          %v2666 = vpop.f32.mrf.mxu0
          %v2667 = vadd.f32 0.0, %v2666
          %2668 = vmatmul.f32.gmra.mxu0 %v2569
          %v2669 = vpop.f32.mrf.mxu0
          %v2670 = vadd.f32 0.0, %v2669
          %2671 = vmatmul.f32.gmra.mxu0 %v2572
          %v2672 = vpop.f32.mrf.mxu0
          %v2673 = vadd.f32 0.0, %v2672
          %2674 = vmatmul.f32.gmra.mxu0 %v2575
          %v2675 = vpop.f32.mrf.mxu0
          %v2676 = vadd.f32 0.0, %v2675
          %2677 = vmatmul.f32.gmra.mxu0 %v2578
          %v2678 = vpop.f32.mrf.mxu0
          %v2679 = vadd.f32 0.0, %v2678
          %2680 = vdwg.mxu0
          %v2681 = vadd.f32 %v2548, %v2658
          %v2682 = vadd.f32 %v2549, %v2661
          %v2683 = vadd.f32 %v2550, %v2664
          %v2684 = vadd.f32 %v2551, %v2667
          %v2685 = vadd.f32 %v2552, %v2670
          %v2686 = vadd.f32 %v2553, %v2673
          %v2687 = vadd.f32 %v2554, %v2676
          %v2688 = vadd.f32 %v2555, %v2679
          %v2690 = vsel %vm289, %v2632, 0
          %v2693 = vsel %vm289, %v2633, 0
          %v2696 = vsel %vm289, %v2634, 0
          %v2699 = vsel %vm289, %v2635, 0
          %v2702 = vsel %vm289, %v2636, 0
          %v2705 = vsel %vm289, %v2637, 0
          %v2708 = vsel %vm289, %v2638, 0
          %v2711 = vsel %vm289, %v2639, 0
          %2713 = vmatpush.msra.mxu0 0.0
          %2714 = vmatpush.msra.mxu0 0.0
          %2715 = vmatpush.msra.mxu0 0.0
          %2716 = vmatpush.msra.mxu0 0.0
          %2717 = vmatpush.msra.mxu0 0.0
          %2718 = vmatpush.msra.mxu0 0.0
          %2719 = vmatpush.msra.mxu0 0.0
          %2720 = vmatpush.msra.mxu0 0.0
          %2721 = vmatpush.msra.mxu0 0.0
          %2722 = vmatpush.msra.mxu0 0.0
          %2723 = vmatpush.msra.mxu0 0.0
          %2724 = vmatpush.msra.mxu0 0.0
          %2725 = vmatpush.msra.mxu0 0.0
          %2726 = vmatpush.msra.mxu0 0.0
          %2727 = vmatpush.msra.mxu0 0.0
          %2728 = vmatpush.msra.mxu0 %v2630
          %2729 = vmatmul.f32.gmra.mxu0 %v2690
          %v2730 = vpop.f32.mrf.mxu0
          %v2731 = vadd.f32 0.0, %v2730
          %2732 = vmatmul.f32.gmra.mxu0 %v2693
          %v2733 = vpop.f32.mrf.mxu0
          %v2734 = vadd.f32 0.0, %v2733
          %2735 = vmatmul.f32.gmra.mxu0 %v2696
          %v2736 = vpop.f32.mrf.mxu0
          %v2737 = vadd.f32 0.0, %v2736
          %2738 = vmatmul.f32.gmra.mxu0 %v2699
          %v2739 = vpop.f32.mrf.mxu0
          %v2740 = vadd.f32 0.0, %v2739
          %2741 = vmatmul.f32.gmra.mxu0 %v2702
          %v2742 = vpop.f32.mrf.mxu0
          %v2743 = vadd.f32 0.0, %v2742
          %2744 = vmatmul.f32.gmra.mxu0 %v2705
          %v2745 = vpop.f32.mrf.mxu0
          %v2746 = vadd.f32 0.0, %v2745
          %2747 = vmatmul.f32.gmra.mxu0 %v2708
          %v2748 = vpop.f32.mrf.mxu0
          %v2749 = vadd.f32 0.0, %v2748
          %2750 = vmatmul.f32.gmra.mxu0 %v2711
          %v2751 = vpop.f32.mrf.mxu0
          %v2752 = vadd.f32 0.0, %v2751
          %2753 = vdwg.mxu0
          %v2754 = vadd.f32 %v2621, %v2731
          %v2755 = vadd.f32 %v2622, %v2734
          %v2756 = vadd.f32 %v2623, %v2737
          %v2757 = vadd.f32 %v2624, %v2740
          %v2758 = vadd.f32 %v2625, %v2743
          %v2759 = vadd.f32 %v2626, %v2746
          %v2760 = vadd.f32 %v2627, %v2749
          %v2761 = vadd.f32 %v2628, %v2752
          %s2762 = scalar_lea.vmem [#allocation2], 144
          %v2763 = vld [vmem:[%s2762] sm:$0xff]
          %s2764 = sadd.s32 %s257, 50
          %s2765 = scalar_lea.vmem %s239, %s2764
          %v2766 = vld [vmem:[%s2765] sm:$0xff]
          %v2767 = vld [vmem:[%s2765 + $0x8] sm:$0xff]
          %v2768 = vld [vmem:[%s2765 + $0x10] sm:$0xff]
          %v2769 = vld [vmem:[%s2765 + $0x18] sm:$0xff]
          %v2770 = vld [vmem:[%s2765 + $0x20] sm:$0xff]
          %v2771 = vld [vmem:[%s2765 + $0x28] sm:$0xff]
          %v2772 = vld [vmem:[%s2765 + $0x30] sm:$0xff]
          %v2773 = vld [vmem:[%s2765 + $0x38] sm:$0xff]
          %2774 = vmatpush.msra.mxu0 0.0
          %2775 = vmatpush.msra.mxu0 0.0
          %2776 = vmatpush.msra.mxu0 0.0
          %2777 = vmatpush.msra.mxu0 0.0
          %2778 = vmatpush.msra.mxu0 0.0
          %2779 = vmatpush.msra.mxu0 0.0
          %2780 = vmatpush.msra.mxu0 0.0
          %2781 = vmatpush.msra.mxu0 0.0
          %2782 = vmatpush.msra.mxu0 0.0
          %2783 = vmatpush.msra.mxu0 0.0
          %2784 = vmatpush.msra.mxu0 0.0
          %2785 = vmatpush.msra.mxu0 0.0
          %2786 = vmatpush.msra.mxu0 0.0
          %2787 = vmatpush.msra.mxu0 0.0
          %2788 = vmatpush.msra.mxu0 0.0
          %2789 = vmatpush.msra.mxu0 %v2763
          %2790 = vmatmul.f32.gmra.mxu0 %v2690
          %v2791 = vpop.f32.mrf.mxu0
          %v2792 = vadd.f32 0.0, %v2791
          %2793 = vmatmul.f32.gmra.mxu0 %v2693
          %v2794 = vpop.f32.mrf.mxu0
          %v2795 = vadd.f32 0.0, %v2794
          %2796 = vmatmul.f32.gmra.mxu0 %v2696
          %v2797 = vpop.f32.mrf.mxu0
          %v2798 = vadd.f32 0.0, %v2797
          %2799 = vmatmul.f32.gmra.mxu0 %v2699
          %v2800 = vpop.f32.mrf.mxu0
          %v2801 = vadd.f32 0.0, %v2800
          %2802 = vmatmul.f32.gmra.mxu0 %v2702
          %v2803 = vpop.f32.mrf.mxu0
          %v2804 = vadd.f32 0.0, %v2803
          %2805 = vmatmul.f32.gmra.mxu0 %v2705
          %v2806 = vpop.f32.mrf.mxu0
          %v2807 = vadd.f32 0.0, %v2806
          %2808 = vmatmul.f32.gmra.mxu0 %v2708
          %v2809 = vpop.f32.mrf.mxu0
          %v2810 = vadd.f32 0.0, %v2809
          %2811 = vmatmul.f32.gmra.mxu0 %v2711
          %v2812 = vpop.f32.mrf.mxu0
          %v2813 = vadd.f32 0.0, %v2812
          %2814 = vdwg.mxu0
          %v2815 = vadd.f32 %v2681, %v2792
          %v2816 = vadd.f32 %v2682, %v2795
          %v2817 = vadd.f32 %v2683, %v2798
          %v2818 = vadd.f32 %v2684, %v2801
          %v2819 = vadd.f32 %v2685, %v2804
          %v2820 = vadd.f32 %v2686, %v2807
          %v2821 = vadd.f32 %v2687, %v2810
          %v2822 = vadd.f32 %v2688, %v2813
          %v2824 = vsel %vm289, %v2766, 0
          %v2827 = vsel %vm289, %v2767, 0
          %v2830 = vsel %vm289, %v2768, 0
          %v2833 = vsel %vm289, %v2769, 0
          %v2836 = vsel %vm289, %v2770, 0
          %v2839 = vsel %vm289, %v2771, 0
          %v2842 = vsel %vm289, %v2772, 0
          %v2845 = vsel %vm289, %v2773, 0
          %2847 = vmatpush.msra.mxu0 0.0
          %2848 = vmatpush.msra.mxu0 0.0
          %2849 = vmatpush.msra.mxu0 0.0
          %2850 = vmatpush.msra.mxu0 0.0
          %2851 = vmatpush.msra.mxu0 0.0
          %2852 = vmatpush.msra.mxu0 0.0
          %2853 = vmatpush.msra.mxu0 0.0
          %2854 = vmatpush.msra.mxu0 0.0
          %2855 = vmatpush.msra.mxu0 0.0
          %2856 = vmatpush.msra.mxu0 0.0
          %2857 = vmatpush.msra.mxu0 0.0
          %2858 = vmatpush.msra.mxu0 0.0
          %2859 = vmatpush.msra.mxu0 0.0
          %2860 = vmatpush.msra.mxu0 0.0
          %2861 = vmatpush.msra.mxu0 0.0
          %2862 = vmatpush.msra.mxu0 %v2763
          %2863 = vmatmul.f32.gmra.mxu0 %v2824
          %v2864 = vpop.f32.mrf.mxu0
          %v2865 = vadd.f32 0.0, %v2864
          %2866 = vmatmul.f32.gmra.mxu0 %v2827
          %v2867 = vpop.f32.mrf.mxu0
          %v2868 = vadd.f32 0.0, %v2867
          %2869 = vmatmul.f32.gmra.mxu0 %v2830
          %v2870 = vpop.f32.mrf.mxu0
          %v2871 = vadd.f32 0.0, %v2870
          %2872 = vmatmul.f32.gmra.mxu0 %v2833
          %v2873 = vpop.f32.mrf.mxu0
          %v2874 = vadd.f32 0.0, %v2873
          %2875 = vmatmul.f32.gmra.mxu0 %v2836
          %v2876 = vpop.f32.mrf.mxu0
          %v2877 = vadd.f32 0.0, %v2876
          %2878 = vmatmul.f32.gmra.mxu0 %v2839
          %v2879 = vpop.f32.mrf.mxu0
          %v2880 = vadd.f32 0.0, %v2879
          %2881 = vmatmul.f32.gmra.mxu0 %v2842
          %v2882 = vpop.f32.mrf.mxu0
          %v2883 = vadd.f32 0.0, %v2882
          %2884 = vmatmul.f32.gmra.mxu0 %v2845
          %v2885 = vpop.f32.mrf.mxu0
          %v2886 = vadd.f32 0.0, %v2885
          %2887 = vdwg.mxu0
          %v2888 = vadd.f32 %v2754, %v2865
          %v2889 = vadd.f32 %v2755, %v2868
          %v2890 = vadd.f32 %v2756, %v2871
          %v2891 = vadd.f32 %v2757, %v2874
          %v2892 = vadd.f32 %v2758, %v2877
          %v2893 = vadd.f32 %v2759, %v2880
          %v2894 = vadd.f32 %v2760, %v2883
          %v2895 = vadd.f32 %v2761, %v2886
          %s2896 = scalar_lea.vmem [#allocation2], 152
          %v2897 = vld [vmem:[%s2896] sm:$0xff]
          %s2898 = scalar_lea.vmem %s244, %s2764
          %v2899 = vld [vmem:[%s2898] sm:$0xff]
          %v2900 = vld [vmem:[%s2898 + $0x8] sm:$0xff]
          %v2901 = vld [vmem:[%s2898 + $0x10] sm:$0xff]
          %v2902 = vld [vmem:[%s2898 + $0x18] sm:$0xff]
          %v2903 = vld [vmem:[%s2898 + $0x20] sm:$0xff]
          %v2904 = vld [vmem:[%s2898 + $0x28] sm:$0xff]
          %v2905 = vld [vmem:[%s2898 + $0x30] sm:$0xff]
          %v2906 = vld [vmem:[%s2898 + $0x38] sm:$0xff]
          %2907 = vmatpush.msra.mxu0 0.0
          %2908 = vmatpush.msra.mxu0 0.0
          %2909 = vmatpush.msra.mxu0 0.0
          %2910 = vmatpush.msra.mxu0 0.0
          %2911 = vmatpush.msra.mxu0 0.0
          %2912 = vmatpush.msra.mxu0 0.0
          %2913 = vmatpush.msra.mxu0 0.0
          %2914 = vmatpush.msra.mxu0 0.0
          %2915 = vmatpush.msra.mxu0 0.0
          %2916 = vmatpush.msra.mxu0 0.0
          %2917 = vmatpush.msra.mxu0 0.0
          %2918 = vmatpush.msra.mxu0 0.0
          %2919 = vmatpush.msra.mxu0 0.0
          %2920 = vmatpush.msra.mxu0 0.0
          %2921 = vmatpush.msra.mxu0 0.0
          %2922 = vmatpush.msra.mxu0 %v2897
          %2923 = vmatmul.f32.gmra.mxu0 %v2824
          %v2924 = vpop.f32.mrf.mxu0
          %v2925 = vadd.f32 0.0, %v2924
          %2926 = vmatmul.f32.gmra.mxu0 %v2827
          %v2927 = vpop.f32.mrf.mxu0
          %v2928 = vadd.f32 0.0, %v2927
          %2929 = vmatmul.f32.gmra.mxu0 %v2830
          %v2930 = vpop.f32.mrf.mxu0
          %v2931 = vadd.f32 0.0, %v2930
          %2932 = vmatmul.f32.gmra.mxu0 %v2833
          %v2933 = vpop.f32.mrf.mxu0
          %v2934 = vadd.f32 0.0, %v2933
          %2935 = vmatmul.f32.gmra.mxu0 %v2836
          %v2936 = vpop.f32.mrf.mxu0
          %v2937 = vadd.f32 0.0, %v2936
          %2938 = vmatmul.f32.gmra.mxu0 %v2839
          %v2939 = vpop.f32.mrf.mxu0
          %v2940 = vadd.f32 0.0, %v2939
          %2941 = vmatmul.f32.gmra.mxu0 %v2842
          %v2942 = vpop.f32.mrf.mxu0
          %v2943 = vadd.f32 0.0, %v2942
          %2944 = vmatmul.f32.gmra.mxu0 %v2845
          %v2945 = vpop.f32.mrf.mxu0
          %v2946 = vadd.f32 0.0, %v2945
          %2947 = vdwg.mxu0
          %v2948 = vadd.f32 %v2815, %v2925
          %v2949 = vadd.f32 %v2816, %v2928
          %v2950 = vadd.f32 %v2817, %v2931
          %v2951 = vadd.f32 %v2818, %v2934
          %v2952 = vadd.f32 %v2819, %v2937
          %v2953 = vadd.f32 %v2820, %v2940
          %v2954 = vadd.f32 %v2821, %v2943
          %v2955 = vadd.f32 %v2822, %v2946
          %v2957 = vsel %vm289, %v2899, 0
          %v2960 = vsel %vm289, %v2900, 0
          %v2963 = vsel %vm289, %v2901, 0
          %v2966 = vsel %vm289, %v2902, 0
          %v2969 = vsel %vm289, %v2903, 0
          %v2972 = vsel %vm289, %v2904, 0
          %v2975 = vsel %vm289, %v2905, 0
          %v2978 = vsel %vm289, %v2906, 0
          %2980 = vmatpush.msra.mxu0 0.0
          %2981 = vmatpush.msra.mxu0 0.0
          %2982 = vmatpush.msra.mxu0 0.0
          %2983 = vmatpush.msra.mxu0 0.0
          %2984 = vmatpush.msra.mxu0 0.0
          %2985 = vmatpush.msra.mxu0 0.0
          %2986 = vmatpush.msra.mxu0 0.0
          %2987 = vmatpush.msra.mxu0 0.0
          %2988 = vmatpush.msra.mxu0 0.0
          %2989 = vmatpush.msra.mxu0 0.0
          %2990 = vmatpush.msra.mxu0 0.0
          %2991 = vmatpush.msra.mxu0 0.0
          %2992 = vmatpush.msra.mxu0 0.0
          %2993 = vmatpush.msra.mxu0 0.0
          %2994 = vmatpush.msra.mxu0 0.0
          %2995 = vmatpush.msra.mxu0 %v2897
          %2996 = vmatmul.f32.gmra.mxu0 %v2957
          %v2997 = vpop.f32.mrf.mxu0
          %v2998 = vadd.f32 0.0, %v2997
          %2999 = vmatmul.f32.gmra.mxu0 %v2960
          %v3000 = vpop.f32.mrf.mxu0
          %v3001 = vadd.f32 0.0, %v3000
          %3002 = vmatmul.f32.gmra.mxu0 %v2963
          %v3003 = vpop.f32.mrf.mxu0
          %v3004 = vadd.f32 0.0, %v3003
          %3005 = vmatmul.f32.gmra.mxu0 %v2966
          %v3006 = vpop.f32.mrf.mxu0
          %v3007 = vadd.f32 0.0, %v3006
          %3008 = vmatmul.f32.gmra.mxu0 %v2969
          %v3009 = vpop.f32.mrf.mxu0
          %v3010 = vadd.f32 0.0, %v3009
          %3011 = vmatmul.f32.gmra.mxu0 %v2972
          %v3012 = vpop.f32.mrf.mxu0
          %v3013 = vadd.f32 0.0, %v3012
          %3014 = vmatmul.f32.gmra.mxu0 %v2975
          %v3015 = vpop.f32.mrf.mxu0
          %v3016 = vadd.f32 0.0, %v3015
          %3017 = vmatmul.f32.gmra.mxu0 %v2978
          %v3018 = vpop.f32.mrf.mxu0
          %v3019 = vadd.f32 0.0, %v3018
          %3020 = vdwg.mxu0
          %v3021 = vadd.f32 %v2888, %v2998
          %v3022 = vadd.f32 %v2889, %v3001
          %v3023 = vadd.f32 %v2890, %v3004
          %v3024 = vadd.f32 %v2891, %v3007
          %v3025 = vadd.f32 %v2892, %v3010
          %v3026 = vadd.f32 %v2893, %v3013
          %v3027 = vadd.f32 %v2894, %v3016
          %v3028 = vadd.f32 %v2895, %v3019
          %s3029 = scalar_lea.vmem [#allocation2], 160
          %v3030 = vld [vmem:[%s3029] sm:$0xff]
          %s3031 = sadd.s32 %s257, 64
          %s3032 = scalar_lea.vmem %s239, %s3031
          %v3033 = vld [vmem:[%s3032] sm:$0xff]
          %v3034 = vld [vmem:[%s3032 + $0x8] sm:$0xff]
          %v3035 = vld [vmem:[%s3032 + $0x10] sm:$0xff]
          %v3036 = vld [vmem:[%s3032 + $0x18] sm:$0xff]
          %v3037 = vld [vmem:[%s3032 + $0x20] sm:$0xff]
          %v3038 = vld [vmem:[%s3032 + $0x28] sm:$0xff]
          %v3039 = vld [vmem:[%s3032 + $0x30] sm:$0xff]
          %v3040 = vld [vmem:[%s3032 + $0x38] sm:$0xff]
          %s3041 = scalar_lea.vmem %s244, %s3031
          %v3042 = vld [vmem:[%s3041] sm:$0xff]
          %v3043 = vld [vmem:[%s3041 + $0x8] sm:$0xff]
          %v3044 = vld [vmem:[%s3041 + $0x10] sm:$0xff]
          %v3045 = vld [vmem:[%s3041 + $0x18] sm:$0xff]
          %v3046 = vld [vmem:[%s3041 + $0x20] sm:$0xff]
          %v3047 = vld [vmem:[%s3041 + $0x28] sm:$0xff]
          %v3048 = vld [vmem:[%s3041 + $0x30] sm:$0xff]
          %v3049 = vld [vmem:[%s3041 + $0x38] sm:$0xff]
          %v3051 = vsel %vm289, %v3033, 0
          %v3054 = vsel %vm289, %v3034, 0
          %v3057 = vsel %vm289, %v3035, 0
          %v3060 = vsel %vm289, %v3036, 0
          %v3063 = vsel %vm289, %v3037, 0
          %v3066 = vsel %vm289, %v3038, 0
          %v3069 = vsel %vm289, %v3039, 0
          %v3072 = vsel %vm289, %v3040, 0
          %3074 = vmatpush.msra.mxu0 0.0
          %3075 = vmatpush.msra.mxu0 0.0
          %3076 = vmatpush.msra.mxu0 0.0
          %3077 = vmatpush.msra.mxu0 0.0
          %3078 = vmatpush.msra.mxu0 0.0
          %3079 = vmatpush.msra.mxu0 0.0
          %3080 = vmatpush.msra.mxu0 0.0
          %3081 = vmatpush.msra.mxu0 0.0
          %3082 = vmatpush.msra.mxu0 0.0
          %3083 = vmatpush.msra.mxu0 0.0
          %3084 = vmatpush.msra.mxu0 0.0
          %3085 = vmatpush.msra.mxu0 0.0
          %3086 = vmatpush.msra.mxu0 0.0
          %3087 = vmatpush.msra.mxu0 0.0
          %3088 = vmatpush.msra.mxu0 0.0
          %3089 = vmatpush.msra.mxu0 %v3030
          %3090 = vmatmul.f32.gmra.mxu0 %v3051
          %v3091 = vpop.f32.mrf.mxu0
          %v3092 = vadd.f32 0.0, %v3091
          %3093 = vmatmul.f32.gmra.mxu0 %v3054
          %v3094 = vpop.f32.mrf.mxu0
          %v3095 = vadd.f32 0.0, %v3094
          %3096 = vmatmul.f32.gmra.mxu0 %v3057
          %v3097 = vpop.f32.mrf.mxu0
          %v3098 = vadd.f32 0.0, %v3097
          %3099 = vmatmul.f32.gmra.mxu0 %v3060
          %v3100 = vpop.f32.mrf.mxu0
          %v3101 = vadd.f32 0.0, %v3100
          %3102 = vmatmul.f32.gmra.mxu0 %v3063
          %v3103 = vpop.f32.mrf.mxu0
          %v3104 = vadd.f32 0.0, %v3103
          %3105 = vmatmul.f32.gmra.mxu0 %v3066
          %v3106 = vpop.f32.mrf.mxu0
          %v3107 = vadd.f32 0.0, %v3106
          %3108 = vmatmul.f32.gmra.mxu0 %v3069
          %v3109 = vpop.f32.mrf.mxu0
          %v3110 = vadd.f32 0.0, %v3109
          %3111 = vmatmul.f32.gmra.mxu0 %v3072
          %v3112 = vpop.f32.mrf.mxu0
          %v3113 = vadd.f32 0.0, %v3112
          %3114 = vdwg.mxu0
          %v3115 = vadd.f32 %v2948, %v3092
          %v3116 = vadd.f32 %v2949, %v3095
          %v3117 = vadd.f32 %v2950, %v3098
          %v3118 = vadd.f32 %v2951, %v3101
          %v3119 = vadd.f32 %v2952, %v3104
          %v3120 = vadd.f32 %v2953, %v3107
          %v3121 = vadd.f32 %v2954, %v3110
          %v3122 = vadd.f32 %v2955, %v3113
          %v3124 = vsel %vm289, %v3042, 0
          %v3127 = vsel %vm289, %v3043, 0
          %v3130 = vsel %vm289, %v3044, 0
          %v3133 = vsel %vm289, %v3045, 0
          %v3136 = vsel %vm289, %v3046, 0
          %v3139 = vsel %vm289, %v3047, 0
          %v3142 = vsel %vm289, %v3048, 0
          %v3145 = vsel %vm289, %v3049, 0
          %3147 = vmatpush.msra.mxu0 0.0
          %3148 = vmatpush.msra.mxu0 0.0
          %3149 = vmatpush.msra.mxu0 0.0
          %3150 = vmatpush.msra.mxu0 0.0
          %3151 = vmatpush.msra.mxu0 0.0
          %3152 = vmatpush.msra.mxu0 0.0
          %3153 = vmatpush.msra.mxu0 0.0
          %3154 = vmatpush.msra.mxu0 0.0
          %3155 = vmatpush.msra.mxu0 0.0
          %3156 = vmatpush.msra.mxu0 0.0
          %3157 = vmatpush.msra.mxu0 0.0
          %3158 = vmatpush.msra.mxu0 0.0
          %3159 = vmatpush.msra.mxu0 0.0
          %3160 = vmatpush.msra.mxu0 0.0
          %3161 = vmatpush.msra.mxu0 0.0
          %3162 = vmatpush.msra.mxu0 %v3030
          %3163 = vmatmul.f32.gmra.mxu0 %v3124
          %v3164 = vpop.f32.mrf.mxu0
          %v3165 = vadd.f32 0.0, %v3164
          %3166 = vmatmul.f32.gmra.mxu0 %v3127
          %v3167 = vpop.f32.mrf.mxu0
          %v3168 = vadd.f32 0.0, %v3167
          %3169 = vmatmul.f32.gmra.mxu0 %v3130
          %v3170 = vpop.f32.mrf.mxu0
          %v3171 = vadd.f32 0.0, %v3170
          %3172 = vmatmul.f32.gmra.mxu0 %v3133
          %v3173 = vpop.f32.mrf.mxu0
          %v3174 = vadd.f32 0.0, %v3173
          %3175 = vmatmul.f32.gmra.mxu0 %v3136
          %v3176 = vpop.f32.mrf.mxu0
          %v3177 = vadd.f32 0.0, %v3176
          %3178 = vmatmul.f32.gmra.mxu0 %v3139
          %v3179 = vpop.f32.mrf.mxu0
          %v3180 = vadd.f32 0.0, %v3179
          %3181 = vmatmul.f32.gmra.mxu0 %v3142
          %v3182 = vpop.f32.mrf.mxu0
          %v3183 = vadd.f32 0.0, %v3182
          %3184 = vmatmul.f32.gmra.mxu0 %v3145
          %v3185 = vpop.f32.mrf.mxu0
          %v3186 = vadd.f32 0.0, %v3185
          %3187 = vdwg.mxu0
          %v3188 = vadd.f32 %v3021, %v3165
          %v3189 = vadd.f32 %v3022, %v3168
          %v3190 = vadd.f32 %v3023, %v3171
          %v3191 = vadd.f32 %v3024, %v3174
          %v3192 = vadd.f32 %v3025, %v3177
          %v3193 = vadd.f32 %v3026, %v3180
          %v3194 = vadd.f32 %v3027, %v3183
          %v3195 = vadd.f32 %v3028, %v3186
          %s3196 = scalar_lea.vmem [#allocation2], 168
          %v3197 = vld [vmem:[%s3196] sm:$0xff]
          %s3198 = sadd.s32 %s257, 65
          %s3199 = scalar_lea.vmem %s239, %s3198
          %v3200 = vld [vmem:[%s3199] sm:$0xff]
          %v3201 = vld [vmem:[%s3199 + $0x8] sm:$0xff]
          %v3202 = vld [vmem:[%s3199 + $0x10] sm:$0xff]
          %v3203 = vld [vmem:[%s3199 + $0x18] sm:$0xff]
          %v3204 = vld [vmem:[%s3199 + $0x20] sm:$0xff]
          %v3205 = vld [vmem:[%s3199 + $0x28] sm:$0xff]
          %v3206 = vld [vmem:[%s3199 + $0x30] sm:$0xff]
          %v3207 = vld [vmem:[%s3199 + $0x38] sm:$0xff]
          %3208 = vmatpush.msra.mxu0 0.0
          %3209 = vmatpush.msra.mxu0 0.0
          %3210 = vmatpush.msra.mxu0 0.0
          %3211 = vmatpush.msra.mxu0 0.0
          %3212 = vmatpush.msra.mxu0 0.0
          %3213 = vmatpush.msra.mxu0 0.0
          %3214 = vmatpush.msra.mxu0 0.0
          %3215 = vmatpush.msra.mxu0 0.0
          %3216 = vmatpush.msra.mxu0 0.0
          %3217 = vmatpush.msra.mxu0 0.0
          %3218 = vmatpush.msra.mxu0 0.0
          %3219 = vmatpush.msra.mxu0 0.0
          %3220 = vmatpush.msra.mxu0 0.0
          %3221 = vmatpush.msra.mxu0 0.0
          %3222 = vmatpush.msra.mxu0 0.0
          %3223 = vmatpush.msra.mxu0 %v3197
          %3224 = vmatmul.f32.gmra.mxu0 %v3124
          %v3225 = vpop.f32.mrf.mxu0
          %v3226 = vadd.f32 0.0, %v3225
          %3227 = vmatmul.f32.gmra.mxu0 %v3127
          %v3228 = vpop.f32.mrf.mxu0
          %v3229 = vadd.f32 0.0, %v3228
          %3230 = vmatmul.f32.gmra.mxu0 %v3130
          %v3231 = vpop.f32.mrf.mxu0
          %v3232 = vadd.f32 0.0, %v3231
          %3233 = vmatmul.f32.gmra.mxu0 %v3133
          %v3234 = vpop.f32.mrf.mxu0
          %v3235 = vadd.f32 0.0, %v3234
          %3236 = vmatmul.f32.gmra.mxu0 %v3136
          %v3237 = vpop.f32.mrf.mxu0
          %v3238 = vadd.f32 0.0, %v3237
          %3239 = vmatmul.f32.gmra.mxu0 %v3139
          %v3240 = vpop.f32.mrf.mxu0
          %v3241 = vadd.f32 0.0, %v3240
          %3242 = vmatmul.f32.gmra.mxu0 %v3142
          %v3243 = vpop.f32.mrf.mxu0
          %v3244 = vadd.f32 0.0, %v3243
          %3245 = vmatmul.f32.gmra.mxu0 %v3145
          %v3246 = vpop.f32.mrf.mxu0
          %v3247 = vadd.f32 0.0, %v3246
          %3248 = vdwg.mxu0
          %v3249 = vadd.f32 %v3115, %v3226
          %v3250 = vadd.f32 %v3116, %v3229
          %v3251 = vadd.f32 %v3117, %v3232
          %v3252 = vadd.f32 %v3118, %v3235
          %v3253 = vadd.f32 %v3119, %v3238
          %v3254 = vadd.f32 %v3120, %v3241
          %v3255 = vadd.f32 %v3121, %v3244
          %v3256 = vadd.f32 %v3122, %v3247
          %v3258 = vsel %vm289, %v3200, 0
          %v3261 = vsel %vm289, %v3201, 0
          %v3264 = vsel %vm289, %v3202, 0
          %v3267 = vsel %vm289, %v3203, 0
          %v3270 = vsel %vm289, %v3204, 0
          %v3273 = vsel %vm289, %v3205, 0
          %v3276 = vsel %vm289, %v3206, 0
          %v3279 = vsel %vm289, %v3207, 0
          %3281 = vmatpush.msra.mxu0 0.0
          %3282 = vmatpush.msra.mxu0 0.0
          %3283 = vmatpush.msra.mxu0 0.0
          %3284 = vmatpush.msra.mxu0 0.0
          %3285 = vmatpush.msra.mxu0 0.0
          %3286 = vmatpush.msra.mxu0 0.0
          %3287 = vmatpush.msra.mxu0 0.0
          %3288 = vmatpush.msra.mxu0 0.0
          %3289 = vmatpush.msra.mxu0 0.0
          %3290 = vmatpush.msra.mxu0 0.0
          %3291 = vmatpush.msra.mxu0 0.0
          %3292 = vmatpush.msra.mxu0 0.0
          %3293 = vmatpush.msra.mxu0 0.0
          %3294 = vmatpush.msra.mxu0 0.0
          %3295 = vmatpush.msra.mxu0 0.0
          %3296 = vmatpush.msra.mxu0 %v3197
          %3297 = vmatmul.f32.gmra.mxu0 %v3258
          %v3298 = vpop.f32.mrf.mxu0
          %v3299 = vadd.f32 0.0, %v3298
          %3300 = vmatmul.f32.gmra.mxu0 %v3261
          %v3301 = vpop.f32.mrf.mxu0
          %v3302 = vadd.f32 0.0, %v3301
          %3303 = vmatmul.f32.gmra.mxu0 %v3264
          %v3304 = vpop.f32.mrf.mxu0
          %v3305 = vadd.f32 0.0, %v3304
          %3306 = vmatmul.f32.gmra.mxu0 %v3267
          %v3307 = vpop.f32.mrf.mxu0
          %v3308 = vadd.f32 0.0, %v3307
          %3309 = vmatmul.f32.gmra.mxu0 %v3270
          %v3310 = vpop.f32.mrf.mxu0
          %v3311 = vadd.f32 0.0, %v3310
          %3312 = vmatmul.f32.gmra.mxu0 %v3273
          %v3313 = vpop.f32.mrf.mxu0
          %v3314 = vadd.f32 0.0, %v3313
          %3315 = vmatmul.f32.gmra.mxu0 %v3276
          %v3316 = vpop.f32.mrf.mxu0
          %v3317 = vadd.f32 0.0, %v3316
          %3318 = vmatmul.f32.gmra.mxu0 %v3279
          %v3319 = vpop.f32.mrf.mxu0
          %v3320 = vadd.f32 0.0, %v3319
          %3321 = vdwg.mxu0
          %v3322 = vadd.f32 %v3188, %v3299
          %v3323 = vadd.f32 %v3189, %v3302
          %v3324 = vadd.f32 %v3190, %v3305
          %v3325 = vadd.f32 %v3191, %v3308
          %v3326 = vadd.f32 %v3192, %v3311
          %v3327 = vadd.f32 %v3193, %v3314
          %v3328 = vadd.f32 %v3194, %v3317
          %v3329 = vadd.f32 %v3195, %v3320
          %s3330 = scalar_lea.vmem [#allocation2], 176
          %v3331 = vld [vmem:[%s3330] sm:$0xff]
          %s3332 = scalar_lea.vmem %s244, %s3198
          %v3333 = vld [vmem:[%s3332] sm:$0xff]
          %v3334 = vld [vmem:[%s3332 + $0x8] sm:$0xff]
          %v3335 = vld [vmem:[%s3332 + $0x10] sm:$0xff]
          %v3336 = vld [vmem:[%s3332 + $0x18] sm:$0xff]
          %v3337 = vld [vmem:[%s3332 + $0x20] sm:$0xff]
          %v3338 = vld [vmem:[%s3332 + $0x28] sm:$0xff]
          %v3339 = vld [vmem:[%s3332 + $0x30] sm:$0xff]
          %v3340 = vld [vmem:[%s3332 + $0x38] sm:$0xff]
          %3341 = vmatpush.msra.mxu0 0.0
          %3342 = vmatpush.msra.mxu0 0.0
          %3343 = vmatpush.msra.mxu0 0.0
          %3344 = vmatpush.msra.mxu0 0.0
          %3345 = vmatpush.msra.mxu0 0.0
          %3346 = vmatpush.msra.mxu0 0.0
          %3347 = vmatpush.msra.mxu0 0.0
          %3348 = vmatpush.msra.mxu0 0.0
          %3349 = vmatpush.msra.mxu0 0.0
          %3350 = vmatpush.msra.mxu0 0.0
          %3351 = vmatpush.msra.mxu0 0.0
          %3352 = vmatpush.msra.mxu0 0.0
          %3353 = vmatpush.msra.mxu0 0.0
          %3354 = vmatpush.msra.mxu0 0.0
          %3355 = vmatpush.msra.mxu0 0.0
          %3356 = vmatpush.msra.mxu0 %v3331
          %3357 = vmatmul.f32.gmra.mxu0 %v3258
          %v3358 = vpop.f32.mrf.mxu0
          %v3359 = vadd.f32 0.0, %v3358
          %3360 = vmatmul.f32.gmra.mxu0 %v3261
          %v3361 = vpop.f32.mrf.mxu0
          %v3362 = vadd.f32 0.0, %v3361
          %3363 = vmatmul.f32.gmra.mxu0 %v3264
          %v3364 = vpop.f32.mrf.mxu0
          %v3365 = vadd.f32 0.0, %v3364
          %3366 = vmatmul.f32.gmra.mxu0 %v3267
          %v3367 = vpop.f32.mrf.mxu0
          %v3368 = vadd.f32 0.0, %v3367
          %3369 = vmatmul.f32.gmra.mxu0 %v3270
          %v3370 = vpop.f32.mrf.mxu0
          %v3371 = vadd.f32 0.0, %v3370
          %3372 = vmatmul.f32.gmra.mxu0 %v3273
          %v3373 = vpop.f32.mrf.mxu0
          %v3374 = vadd.f32 0.0, %v3373
          %3375 = vmatmul.f32.gmra.mxu0 %v3276
          %v3376 = vpop.f32.mrf.mxu0
          %v3377 = vadd.f32 0.0, %v3376
          %3378 = vmatmul.f32.gmra.mxu0 %v3279
          %v3379 = vpop.f32.mrf.mxu0
          %v3380 = vadd.f32 0.0, %v3379
          %3381 = vdwg.mxu0
          %v3382 = vadd.f32 %v3249, %v3359
          %v3383 = vadd.f32 %v3250, %v3362
          %v3384 = vadd.f32 %v3251, %v3365
          %v3385 = vadd.f32 %v3252, %v3368
          %v3386 = vadd.f32 %v3253, %v3371
          %v3387 = vadd.f32 %v3254, %v3374
          %v3388 = vadd.f32 %v3255, %v3377
          %v3389 = vadd.f32 %v3256, %v3380
          %v3391 = vsel %vm289, %v3333, 0
          %v3394 = vsel %vm289, %v3334, 0
          %v3397 = vsel %vm289, %v3335, 0
          %v3400 = vsel %vm289, %v3336, 0
          %v3403 = vsel %vm289, %v3337, 0
          %v3406 = vsel %vm289, %v3338, 0
          %v3409 = vsel %vm289, %v3339, 0
          %v3412 = vsel %vm289, %v3340, 0
          %3414 = vmatpush.msra.mxu0 0.0
          %3415 = vmatpush.msra.mxu0 0.0
          %3416 = vmatpush.msra.mxu0 0.0
          %3417 = vmatpush.msra.mxu0 0.0
          %3418 = vmatpush.msra.mxu0 0.0
          %3419 = vmatpush.msra.mxu0 0.0
          %3420 = vmatpush.msra.mxu0 0.0
          %3421 = vmatpush.msra.mxu0 0.0
          %3422 = vmatpush.msra.mxu0 0.0
          %3423 = vmatpush.msra.mxu0 0.0
          %3424 = vmatpush.msra.mxu0 0.0
          %3425 = vmatpush.msra.mxu0 0.0
          %3426 = vmatpush.msra.mxu0 0.0
          %3427 = vmatpush.msra.mxu0 0.0
          %3428 = vmatpush.msra.mxu0 0.0
          %3429 = vmatpush.msra.mxu0 %v3331
          %3430 = vmatmul.f32.gmra.mxu0 %v3391
          %v3431 = vpop.f32.mrf.mxu0
          %v3432 = vadd.f32 0.0, %v3431
          %3433 = vmatmul.f32.gmra.mxu0 %v3394
          %v3434 = vpop.f32.mrf.mxu0
          %v3435 = vadd.f32 0.0, %v3434
          %3436 = vmatmul.f32.gmra.mxu0 %v3397
          %v3437 = vpop.f32.mrf.mxu0
          %v3438 = vadd.f32 0.0, %v3437
          %3439 = vmatmul.f32.gmra.mxu0 %v3400
          %v3440 = vpop.f32.mrf.mxu0
          %v3441 = vadd.f32 0.0, %v3440
          %3442 = vmatmul.f32.gmra.mxu0 %v3403
          %v3443 = vpop.f32.mrf.mxu0
          %v3444 = vadd.f32 0.0, %v3443
          %3445 = vmatmul.f32.gmra.mxu0 %v3406
          %v3446 = vpop.f32.mrf.mxu0
          %v3447 = vadd.f32 0.0, %v3446
          %3448 = vmatmul.f32.gmra.mxu0 %v3409
          %v3449 = vpop.f32.mrf.mxu0
          %v3450 = vadd.f32 0.0, %v3449
          %3451 = vmatmul.f32.gmra.mxu0 %v3412
          %v3452 = vpop.f32.mrf.mxu0
          %v3453 = vadd.f32 0.0, %v3452
          %3454 = vdwg.mxu0
          %v3455 = vadd.f32 %v3322, %v3432
          %v3456 = vadd.f32 %v3323, %v3435
          %v3457 = vadd.f32 %v3324, %v3438
          %v3458 = vadd.f32 %v3325, %v3441
          %v3459 = vadd.f32 %v3326, %v3444
          %v3460 = vadd.f32 %v3327, %v3447
          %v3461 = vadd.f32 %v3328, %v3450
          %v3462 = vadd.f32 %v3329, %v3453
          %s3463 = scalar_lea.vmem [#allocation2], 184
          %v3464 = vld [vmem:[%s3463] sm:$0xff]
          %s3465 = sadd.s32 %s257, 66
          %s3466 = scalar_lea.vmem %s239, %s3465
          %v3467 = vld [vmem:[%s3466] sm:$0xff]
          %v3468 = vld [vmem:[%s3466 + $0x8] sm:$0xff]
          %v3469 = vld [vmem:[%s3466 + $0x10] sm:$0xff]
          %v3470 = vld [vmem:[%s3466 + $0x18] sm:$0xff]
          %v3471 = vld [vmem:[%s3466 + $0x20] sm:$0xff]
          %v3472 = vld [vmem:[%s3466 + $0x28] sm:$0xff]
          %v3473 = vld [vmem:[%s3466 + $0x30] sm:$0xff]
          %v3474 = vld [vmem:[%s3466 + $0x38] sm:$0xff]
          %3475 = vmatpush.msra.mxu0 0.0
          %3476 = vmatpush.msra.mxu0 0.0
          %3477 = vmatpush.msra.mxu0 0.0
          %3478 = vmatpush.msra.mxu0 0.0
          %3479 = vmatpush.msra.mxu0 0.0
          %3480 = vmatpush.msra.mxu0 0.0
          %3481 = vmatpush.msra.mxu0 0.0
          %3482 = vmatpush.msra.mxu0 0.0
          %3483 = vmatpush.msra.mxu0 0.0
          %3484 = vmatpush.msra.mxu0 0.0
          %3485 = vmatpush.msra.mxu0 0.0
          %3486 = vmatpush.msra.mxu0 0.0
          %3487 = vmatpush.msra.mxu0 0.0
          %3488 = vmatpush.msra.mxu0 0.0
          %3489 = vmatpush.msra.mxu0 0.0
          %3490 = vmatpush.msra.mxu0 %v3464
          %3491 = vmatmul.f32.gmra.mxu0 %v3391
          %v3492 = vpop.f32.mrf.mxu0
          %v3493 = vadd.f32 0.0, %v3492
          %3494 = vmatmul.f32.gmra.mxu0 %v3394
          %v3495 = vpop.f32.mrf.mxu0
          %v3496 = vadd.f32 0.0, %v3495
          %3497 = vmatmul.f32.gmra.mxu0 %v3397
          %v3498 = vpop.f32.mrf.mxu0
          %v3499 = vadd.f32 0.0, %v3498
          %3500 = vmatmul.f32.gmra.mxu0 %v3400
          %v3501 = vpop.f32.mrf.mxu0
          %v3502 = vadd.f32 0.0, %v3501
          %3503 = vmatmul.f32.gmra.mxu0 %v3403
          %v3504 = vpop.f32.mrf.mxu0
          %v3505 = vadd.f32 0.0, %v3504
          %3506 = vmatmul.f32.gmra.mxu0 %v3406
          %v3507 = vpop.f32.mrf.mxu0
          %v3508 = vadd.f32 0.0, %v3507
          %3509 = vmatmul.f32.gmra.mxu0 %v3409
          %v3510 = vpop.f32.mrf.mxu0
          %v3511 = vadd.f32 0.0, %v3510
          %3512 = vmatmul.f32.gmra.mxu0 %v3412
          %v3513 = vpop.f32.mrf.mxu0
          %v3514 = vadd.f32 0.0, %v3513
          %3515 = vdwg.mxu0
          %v3516 = vadd.f32 %v3382, %v3493
          %v3517 = vadd.f32 %v3383, %v3496
          %v3518 = vadd.f32 %v3384, %v3499
          %v3519 = vadd.f32 %v3385, %v3502
          %v3520 = vadd.f32 %v3386, %v3505
          %v3521 = vadd.f32 %v3387, %v3508
          %v3522 = vadd.f32 %v3388, %v3511
          %v3523 = vadd.f32 %v3389, %v3514
          %v3525 = vsel %vm289, %v3467, 0
          %v3528 = vsel %vm289, %v3468, 0
          %v3531 = vsel %vm289, %v3469, 0
          %v3534 = vsel %vm289, %v3470, 0
          %v3537 = vsel %vm289, %v3471, 0
          %v3540 = vsel %vm289, %v3472, 0
          %v3543 = vsel %vm289, %v3473, 0
          %v3546 = vsel %vm289, %v3474, 0
          %3548 = vmatpush.msra.mxu0 0.0
          %3549 = vmatpush.msra.mxu0 0.0
          %3550 = vmatpush.msra.mxu0 0.0
          %3551 = vmatpush.msra.mxu0 0.0
          %3552 = vmatpush.msra.mxu0 0.0
          %3553 = vmatpush.msra.mxu0 0.0
          %3554 = vmatpush.msra.mxu0 0.0
          %3555 = vmatpush.msra.mxu0 0.0
          %3556 = vmatpush.msra.mxu0 0.0
          %3557 = vmatpush.msra.mxu0 0.0
          %3558 = vmatpush.msra.mxu0 0.0
          %3559 = vmatpush.msra.mxu0 0.0
          %3560 = vmatpush.msra.mxu0 0.0
          %3561 = vmatpush.msra.mxu0 0.0
          %3562 = vmatpush.msra.mxu0 0.0
          %3563 = vmatpush.msra.mxu0 %v3464
          %3564 = vmatmul.f32.gmra.mxu0 %v3525
          %v3565 = vpop.f32.mrf.mxu0
          %v3566 = vadd.f32 0.0, %v3565
          %3567 = vmatmul.f32.gmra.mxu0 %v3528
          %v3568 = vpop.f32.mrf.mxu0
          %v3569 = vadd.f32 0.0, %v3568
          %3570 = vmatmul.f32.gmra.mxu0 %v3531
          %v3571 = vpop.f32.mrf.mxu0
          %v3572 = vadd.f32 0.0, %v3571
          %3573 = vmatmul.f32.gmra.mxu0 %v3534
          %v3574 = vpop.f32.mrf.mxu0
          %v3575 = vadd.f32 0.0, %v3574
          %3576 = vmatmul.f32.gmra.mxu0 %v3537
          %v3577 = vpop.f32.mrf.mxu0
          %v3578 = vadd.f32 0.0, %v3577
          %3579 = vmatmul.f32.gmra.mxu0 %v3540
          %v3580 = vpop.f32.mrf.mxu0
          %v3581 = vadd.f32 0.0, %v3580
          %3582 = vmatmul.f32.gmra.mxu0 %v3543
          %v3583 = vpop.f32.mrf.mxu0
          %v3584 = vadd.f32 0.0, %v3583
          %3585 = vmatmul.f32.gmra.mxu0 %v3546
          %v3586 = vpop.f32.mrf.mxu0
          %v3587 = vadd.f32 0.0, %v3586
          %3588 = vdwg.mxu0
          %v3589 = vadd.f32 %v3455, %v3566
          %v3590 = vadd.f32 %v3456, %v3569
          %v3591 = vadd.f32 %v3457, %v3572
          %v3592 = vadd.f32 %v3458, %v3575
          %v3593 = vadd.f32 %v3459, %v3578
          %v3594 = vadd.f32 %v3460, %v3581
          %v3595 = vadd.f32 %v3461, %v3584
          %v3596 = vadd.f32 %v3462, %v3587
          %s3597 = scalar_lea.vmem [#allocation2], 192
          %v3598 = vld [vmem:[%s3597] sm:$0xff]
          %s3599 = scalar_lea.vmem %s244, %s3465
          %v3600 = vld [vmem:[%s3599] sm:$0xff]
          %v3601 = vld [vmem:[%s3599 + $0x8] sm:$0xff]
          %v3602 = vld [vmem:[%s3599 + $0x10] sm:$0xff]
          %v3603 = vld [vmem:[%s3599 + $0x18] sm:$0xff]
          %v3604 = vld [vmem:[%s3599 + $0x20] sm:$0xff]
          %v3605 = vld [vmem:[%s3599 + $0x28] sm:$0xff]
          %v3606 = vld [vmem:[%s3599 + $0x30] sm:$0xff]
          %v3607 = vld [vmem:[%s3599 + $0x38] sm:$0xff]
          %3608 = vmatpush.msra.mxu0 0.0
          %3609 = vmatpush.msra.mxu0 0.0
          %3610 = vmatpush.msra.mxu0 0.0
          %3611 = vmatpush.msra.mxu0 0.0
          %3612 = vmatpush.msra.mxu0 0.0
          %3613 = vmatpush.msra.mxu0 0.0
          %3614 = vmatpush.msra.mxu0 0.0
          %3615 = vmatpush.msra.mxu0 0.0
          %3616 = vmatpush.msra.mxu0 0.0
          %3617 = vmatpush.msra.mxu0 0.0
          %3618 = vmatpush.msra.mxu0 0.0
          %3619 = vmatpush.msra.mxu0 0.0
          %3620 = vmatpush.msra.mxu0 0.0
          %3621 = vmatpush.msra.mxu0 0.0
          %3622 = vmatpush.msra.mxu0 0.0
          %3623 = vmatpush.msra.mxu0 %v3598
          %3624 = vmatmul.f32.gmra.mxu0 %v3525
          %v3625 = vpop.f32.mrf.mxu0
          %v3626 = vadd.f32 0.0, %v3625
          %3627 = vmatmul.f32.gmra.mxu0 %v3528
          %v3628 = vpop.f32.mrf.mxu0
          %v3629 = vadd.f32 0.0, %v3628
          %3630 = vmatmul.f32.gmra.mxu0 %v3531
          %v3631 = vpop.f32.mrf.mxu0
          %v3632 = vadd.f32 0.0, %v3631
          %3633 = vmatmul.f32.gmra.mxu0 %v3534
          %v3634 = vpop.f32.mrf.mxu0
          %v3635 = vadd.f32 0.0, %v3634
          %3636 = vmatmul.f32.gmra.mxu0 %v3537
          %v3637 = vpop.f32.mrf.mxu0
          %v3638 = vadd.f32 0.0, %v3637
          %3639 = vmatmul.f32.gmra.mxu0 %v3540
          %v3640 = vpop.f32.mrf.mxu0
          %v3641 = vadd.f32 0.0, %v3640
          %3642 = vmatmul.f32.gmra.mxu0 %v3543
          %v3643 = vpop.f32.mrf.mxu0
          %v3644 = vadd.f32 0.0, %v3643
          %3645 = vmatmul.f32.gmra.mxu0 %v3546
          %v3646 = vpop.f32.mrf.mxu0
          %v3647 = vadd.f32 0.0, %v3646
          %3648 = vdwg.mxu0
          %v3649 = vadd.f32 %v3516, %v3626
          %v3650 = vadd.f32 %v3517, %v3629
          %v3651 = vadd.f32 %v3518, %v3632
          %v3652 = vadd.f32 %v3519, %v3635
          %v3653 = vadd.f32 %v3520, %v3638
          %v3654 = vadd.f32 %v3521, %v3641
          %v3655 = vadd.f32 %v3522, %v3644
          %v3656 = vadd.f32 %v3523, %v3647
          %v3658 = vsel %vm289, %v3600, 0
          %v3661 = vsel %vm289, %v3601, 0
          %v3664 = vsel %vm289, %v3602, 0
          %v3667 = vsel %vm289, %v3603, 0
          %v3670 = vsel %vm289, %v3604, 0
          %v3673 = vsel %vm289, %v3605, 0
          %v3676 = vsel %vm289, %v3606, 0
          %v3679 = vsel %vm289, %v3607, 0
          %3681 = vmatpush.msra.mxu0 0.0
          %3682 = vmatpush.msra.mxu0 0.0
          %3683 = vmatpush.msra.mxu0 0.0
          %3684 = vmatpush.msra.mxu0 0.0
          %3685 = vmatpush.msra.mxu0 0.0
          %3686 = vmatpush.msra.mxu0 0.0
          %3687 = vmatpush.msra.mxu0 0.0
          %3688 = vmatpush.msra.mxu0 0.0
          %3689 = vmatpush.msra.mxu0 0.0
          %3690 = vmatpush.msra.mxu0 0.0
          %3691 = vmatpush.msra.mxu0 0.0
          %3692 = vmatpush.msra.mxu0 0.0
          %3693 = vmatpush.msra.mxu0 0.0
          %3694 = vmatpush.msra.mxu0 0.0
          %3695 = vmatpush.msra.mxu0 0.0
          %3696 = vmatpush.msra.mxu0 %v3598
          %3697 = vmatmul.f32.gmra.mxu0 %v3658
          %v3698 = vpop.f32.mrf.mxu0
          %v3699 = vadd.f32 0.0, %v3698
          %3700 = vmatmul.f32.gmra.mxu0 %v3661
          %v3701 = vpop.f32.mrf.mxu0
          %v3702 = vadd.f32 0.0, %v3701
          %3703 = vmatmul.f32.gmra.mxu0 %v3664
          %v3704 = vpop.f32.mrf.mxu0
          %v3705 = vadd.f32 0.0, %v3704
          %3706 = vmatmul.f32.gmra.mxu0 %v3667
          %v3707 = vpop.f32.mrf.mxu0
          %v3708 = vadd.f32 0.0, %v3707
          %3709 = vmatmul.f32.gmra.mxu0 %v3670
          %v3710 = vpop.f32.mrf.mxu0
          %v3711 = vadd.f32 0.0, %v3710
          %3712 = vmatmul.f32.gmra.mxu0 %v3673
          %v3713 = vpop.f32.mrf.mxu0
          %v3714 = vadd.f32 0.0, %v3713
          %3715 = vmatmul.f32.gmra.mxu0 %v3676
          %v3716 = vpop.f32.mrf.mxu0
          %v3717 = vadd.f32 0.0, %v3716
          %3718 = vmatmul.f32.gmra.mxu0 %v3679
          %v3719 = vpop.f32.mrf.mxu0
          %v3720 = vadd.f32 0.0, %v3719
          %3721 = vdwg.mxu0
          %v3722 = vadd.f32 %v3589, %v3699
          %v3723 = vadd.f32 %v3590, %v3702
          %v3724 = vadd.f32 %v3591, %v3705
          %v3725 = vadd.f32 %v3592, %v3708
          %v3726 = vadd.f32 %v3593, %v3711
          %v3727 = vadd.f32 %v3594, %v3714
          %v3728 = vadd.f32 %v3595, %v3717
          %v3729 = vadd.f32 %v3596, %v3720
          %v3730 = vmax.f32 %v3649, %v3722
          %v3731 = vmax.f32 %v3650, %v3723
          %v3732 = vmax.f32 %v3651, %v3724
          %v3733 = vmax.f32 %v3652, %v3725
          %v3734 = vmax.f32 %v3653, %v3726
          %v3735 = vmax.f32 %v3654, %v3727
          %v3736 = vmax.f32 %v3655, %v3728
          %v3737 = vmax.f32 %v3656, %v3729
          %v3739 = vperm.slane %v250, 0
          %v3741 = vadd.f32 %v3730, %v3739
          %v3742 = vadd.f32 %v3731, %v3739
          %v3743 = vadd.f32 %v3732, %v3739
          %v3744 = vadd.f32 %v3733, %v3739
          %v3745 = vadd.f32 %v3734, %v3739
          %v3746 = vadd.f32 %v3735, %v3739
          %v3747 = vadd.f32 %v3736, %v3739
          %v3748 = vadd.f32 %v3737, %v3739
          %v3749 = vmax.f32 %v3741, 0.0
          %v3750 = vmax.f32 %v3742, 0.0
          %v3751 = vmax.f32 %v3743, 0.0
          %v3752 = vmax.f32 %v3744, 0.0
          %v3753 = vmax.f32 %v3745, 0.0
          %v3754 = vmax.f32 %v3746, 0.0
          %v3755 = vmax.f32 %v3747, 0.0
          %v3756 = vmax.f32 %v3748, 0.0
          %v3757 = vmax.f32 %v3749, %v3751
          %v3758 = vmax.f32 %v3750, %v3752
          %v3759 = vmax.f32 %v3753, %v3755
          %v3760 = vmax.f32 %v3754, %v3756
          %s3761 = smul.u32 %s252, 2
          %s3762 = smul.u32 %s3761, 16
          %s3763 = scalar_lea.vmem %s249, %s3762
          %3764 = vst [vmem:[%s3763] sm:$0xff] %v3757
          %3765 = vst [vmem:[%s3763 + $0x8] sm:$0xff] %v3758
          %3766 = vst [vmem:[%s3763 + $0x10] sm:$0xff] %v3759
          %3767 = vst [vmem:[%s3763 + $0x18] sm:$0xff] %v3760
        $region49: #{net_base_forward.3} parent=35 // loop_footer
          %s256 = sadd.s32 1, %s252
        $region50: #{net_base_forward.3} parent=35 // loop_footer_branch
          %251 = sbr.rel target = $region46
        $region51: #{net_base_forward.3} parent=35 // loop_exit
          _
        %p3768 = scmp.lt.s32.totalorder %s17, 1
        %s3769 = scalar_select %p3768, %s17, 1
        %s3770 = smul.addr %s3769, 28
        %s3771 = smul.addr %s3770, 8
        %s3772 = scalar_lea.vmem %s4, %s3771
        // Predicated region
        $region52: #{net_base_forward.3} parent=35 // pred_check
          %p3773 = pneg %p129
        $region53: #{net_base_forward.3} parent=35 // pred_check_branch
          %3775 = sbr.rel (%p3773) target = $region55
        $region54: #{net_base_forward.3} parent=35 // pred_region
          _
        $region55: #{net_base_forward.3} parent=35 // pred_fallthru
          _
      $region36: #{net_base_forward.3} parent=5 // pred_fallthru
        _
      %p3776 = scmp.le.s32.totalorder 2, %s12
      // Predicated region
      $region56: #{net_base_forward.3} parent=5 // pred_check
        %p3777 = pneg %p3776
      $region57: #{net_base_forward.3} parent=5 // pred_check_branch
        %3779 = sbr.rel (%p3777) target = $region59
      $region58: #{net_base_forward.3} parent=5 // pred_region
        %s3780 = ssub.s32 %s12, 2
        // Predicated region
        $region60: #{net_base_forward.3} parent=58 // pred_check
          %p3781 = pneg %p135
        $region61: #{net_base_forward.3} parent=58 // pred_check_branch
          %3783 = sbr.rel (%p3781) target = $region63
        $region62: #{net_base_forward.3} parent=58 // pred_region
          %p3784 = scmp.lt.s32.totalorder %s18, 1
          %s3785 = scalar_select %p3784, %s18, 1
          %s3786 = smul.addr %s3785, 28
          %s3787 = smul.addr %s3786, 8
          %s3788 = scalar_lea.vmem %s4, %s3787
        $region63: #{net_base_forward.3} parent=58 // pred_fallthru
          _
      $region59: #{net_base_forward.3} parent=5 // pred_fallthru
        _
    $region6: #{net_base_forward.3} parent=1 // loop_footer
      %s16 = sadd.s32 1, %s12
    $region7: #{net_base_forward.3} parent=1 // loop_footer_branch
      %11 = sbr.rel target = $region3
    $region8: #{net_base_forward.3} parent=1 // loop_exit
      _
    %3789 = vsyncpa [#allocation3], 1
    %s3790 = scalar_lea.sflag [#allocation3], 1
    %3791 = vsyncpa %s3790, 1
    %3792 = vsyncpa [#allocation5], 1

// kernel: net_base_forward.5
$region0: #{net_base_forward.5}
  #allocation0 [shape = 'u32[]', space=smem, size = 0x4, offset = 0x4, fixed_abs, tag = 'smem constant byte address 0x4 - core index']
  #allocation1 [shape = 'u32[72,128]{1,0:T(1,128)}', space=vmem, size = 0x9000, scoped, tag = 'internal scratch']
  %s0 = inlined_call_operand.vmem [shape: f32[8,5120], index: 0, kind: input, shape index: {}]
  %s1 = inlined_call_operand.vmem [shape: f32[5120,128], index: 1, kind: input, shape index: {}]
  %s2 = inlined_call_operand.vmem [shape: f32[1,128], index: 2, kind: input, shape index: {}]
  %s3 = inlined_call_operand.vmem [shape: f32[128,128], index: 3, kind: input, shape index: {}]
  %s4 = inlined_call_operand.vmem [shape: f32[1,128], index: 4, kind: input, shape index: {}]
  %s5 = inlined_call_operand.vmem [shape: f32[128,128], index: 5, kind: input, shape index: {}]
  %s6 = inlined_call_operand.vmem [shape: f32[1,128], index: 6, kind: input, shape index: {}]
  %s7 = inlined_call_operand.vmem [shape: f32[8,128], index: 7, kind: output, shape index: {}]
  %s8 = sld [smem:[#allocation0]]
  $region38: #{net_base_forward.5} parent=0
    _
  %s10 = ssub.s32 1, %s8
  %s11 = scalar_select 0, %s10, %s8
  // Predicated region
  $region2: #{net_base_forward.5} parent=0 // pred_check
    _
  $region3: #{net_base_forward.5} parent=0 // pred_check_branch
    %13 = sbr.rel (0) target = $region5
  $region4: #{net_base_forward.5} parent=0 // pred_region
    _
  $region5: #{net_base_forward.5} parent=0 // pred_fallthru
    _
  // Predicated region
  $region6: #{net_base_forward.5} parent=0 // pred_check
    _
  $region7: #{net_base_forward.5} parent=0 // pred_check_branch
    %15 = sbr.rel (0) target = $region9
  $region8: #{net_base_forward.5} parent=0 // pred_region
    _
  $region9: #{net_base_forward.5} parent=0 // pred_fallthru
    _
  // Predicated region
  $region10: #{net_base_forward.5} parent=0 // pred_check
    _
  $region11: #{net_base_forward.5} parent=0 // pred_check_branch
    %17 = sbr.rel (0) target = $region13
  $region12: #{net_base_forward.5} parent=0 // pred_region
    _
  $region13: #{net_base_forward.5} parent=0 // pred_fallthru
    _
  // Predicated region
  $region14: #{net_base_forward.5} parent=0 // pred_check
    _
  $region15: #{net_base_forward.5} parent=0 // pred_check_branch
    %19 = sbr.rel (0) target = $region17
  $region16: #{net_base_forward.5} parent=0 // pred_region
    _
  $region17: #{net_base_forward.5} parent=0 // pred_fallthru
    _
  // Predicated region
  $region18: #{net_base_forward.5} parent=0 // pred_check
    _
  $region19: #{net_base_forward.5} parent=0 // pred_check_branch
    %21 = sbr.rel (0) target = $region21
  $region20: #{net_base_forward.5} parent=0 // pred_region
    _
  $region21: #{net_base_forward.5} parent=0 // pred_fallthru
    _
  // Predicated region
  $region22: #{net_base_forward.5} parent=0 // pred_check
    _
  $region23: #{net_base_forward.5} parent=0 // pred_check_branch
    %23 = sbr.rel (0) target = $region25
  $region24: #{net_base_forward.5} parent=0 // pred_region
    _
  $region25: #{net_base_forward.5} parent=0 // pred_fallthru
    _
  // Predicated region
  $region26: #{net_base_forward.5} parent=0 // pred_check
    _
  $region27: #{net_base_forward.5} parent=0 // pred_check_branch
    %25 = sbr.rel (0) target = $region29
  $region28: #{net_base_forward.5} parent=0 // pred_region
    _
  $region29: #{net_base_forward.5} parent=0 // pred_fallthru
    _
  %v26 = vld [vmem:[%s0] sm:$0xff]
  %v27 = vld [vmem:[%s0 + $0x8] sm:$0xff]
  %v28 = vld [vmem:[%s0 + $0x10] sm:$0xff]
  %v29 = vld [vmem:[%s0 + $0x18] sm:$0xff]
  %v30 = vld [vmem:[%s0 + $0x20] sm:$0xff]
  %v31 = vld [vmem:[%s0 + $0x28] sm:$0xff]
  %v32 = vld [vmem:[%s0 + $0x30] sm:$0xff]
  %v33 = vld [vmem:[%s0 + $0x38] sm:$0xff]
  %v34 = vld [vmem:[%s0 + $0x40] sm:$0xff]
  %v35 = vld [vmem:[%s0 + $0x48] sm:$0xff]
  %v36 = vld [vmem:[%s0 + $0x50] sm:$0xff]
  %v37 = vld [vmem:[%s0 + $0x58] sm:$0xff]
  %v38 = vld [vmem:[%s0 + $0x60] sm:$0xff]
  %v39 = vld [vmem:[%s0 + $0x68] sm:$0xff]
  %v40 = vld [vmem:[%s0 + $0x70] sm:$0xff]
  %v41 = vld [vmem:[%s0 + $0x78] sm:$0xff]
  %v42 = vld [vmem:[%s0 + $0x80] sm:$0xff]
  %v43 = vld [vmem:[%s0 + $0x88] sm:$0xff]
  %v44 = vld [vmem:[%s0 + $0x90] sm:$0xff]
  %v45 = vld [vmem:[%s0 + $0x98] sm:$0xff]
  %v46 = vld [vmem:[%s0 + $0xa0] sm:$0xff]
  %v47 = vld [vmem:[%s0 + $0xa8] sm:$0xff]
  %v48 = vld [vmem:[%s0 + $0xb0] sm:$0xff]
  %v49 = vld [vmem:[%s0 + $0xb8] sm:$0xff]
  %v50 = vld [vmem:[%s0 + $0xc0] sm:$0xff]
  %v51 = vld [vmem:[%s0 + $0xc8] sm:$0xff]
  %v52 = vld [vmem:[%s0 + $0xd0] sm:$0xff]
  %v53 = vld [vmem:[%s0 + $0xd8] sm:$0xff]
  %v54 = vld [vmem:[%s0 + $0xe0] sm:$0xff]
  %v55 = vld [vmem:[%s0 + $0xe8] sm:$0xff]
  %v56 = vld [vmem:[%s0 + $0xf0] sm:$0xff]
  %v57 = vld [vmem:[%s0 + $0xf8] sm:$0xff]
  %v58 = vld [vmem:[%s0 + $0x100] sm:$0xff]
  %v59 = vld [vmem:[%s0 + $0x108] sm:$0xff]
  %v60 = vld [vmem:[%s0 + $0x110] sm:$0xff]
  %v61 = vld [vmem:[%s0 + $0x118] sm:$0xff]
  %v62 = vld [vmem:[%s0 + $0x120] sm:$0xff]
  %v63 = vld [vmem:[%s0 + $0x128] sm:$0xff]
  %v64 = vld [vmem:[%s0 + $0x130] sm:$0xff]
  %v65 = vld [vmem:[%s0 + $0x138] sm:$0xff]
  %v66 = vld [vmem:[%s1] sm:$0xff]
  %v67 = vld [vmem:[%s1 + $0x8] sm:$0xff]
  %v68 = vld [vmem:[%s1 + $0x10] sm:$0xff]
  %v69 = vld [vmem:[%s1 + $0x18] sm:$0xff]
  %v70 = vld [vmem:[%s1 + $0x20] sm:$0xff]
  %v71 = vld [vmem:[%s1 + $0x28] sm:$0xff]
  %v72 = vld [vmem:[%s1 + $0x30] sm:$0xff]
  %v73 = vld [vmem:[%s1 + $0x38] sm:$0xff]
  %v74 = vld [vmem:[%s1 + $0x40] sm:$0xff]
  %v75 = vld [vmem:[%s1 + $0x48] sm:$0xff]
  %v76 = vld [vmem:[%s1 + $0x50] sm:$0xff]
  %v77 = vld [vmem:[%s1 + $0x58] sm:$0xff]
  %v78 = vld [vmem:[%s1 + $0x60] sm:$0xff]
  %v79 = vld [vmem:[%s1 + $0x68] sm:$0xff]
  %v80 = vld [vmem:[%s1 + $0x70] sm:$0xff]
  %v81 = vld [vmem:[%s1 + $0x78] sm:$0xff]
  %v82 = vld [vmem:[%s1 + $0x80] sm:$0xff]
  %v83 = vld [vmem:[%s1 + $0x88] sm:$0xff]
  %v84 = vld [vmem:[%s1 + $0x90] sm:$0xff]
  %v85 = vld [vmem:[%s1 + $0x98] sm:$0xff]
  %v86 = vld [vmem:[%s1 + $0xa0] sm:$0xff]
  %v87 = vld [vmem:[%s1 + $0xa8] sm:$0xff]
  %v88 = vld [vmem:[%s1 + $0xb0] sm:$0xff]
  %v89 = vld [vmem:[%s1 + $0xb8] sm:$0xff]
  %v90 = vld [vmem:[%s1 + $0xc0] sm:$0xff]
  %v91 = vld [vmem:[%s1 + $0xc8] sm:$0xff]
  %v92 = vld [vmem:[%s1 + $0xd0] sm:$0xff]
  %v93 = vld [vmem:[%s1 + $0xd8] sm:$0xff]
  %v94 = vld [vmem:[%s1 + $0xe0] sm:$0xff]
  %v95 = vld [vmem:[%s1 + $0xe8] sm:$0xff]
  %v96 = vld [vmem:[%s1 + $0xf0] sm:$0xff]
  %v97 = vld [vmem:[%s1 + $0xf8] sm:$0xff]
  %v98 = vld [vmem:[%s1 + $0x100] sm:$0xff]
  %v99 = vld [vmem:[%s1 + $0x108] sm:$0xff]
  %v100 = vld [vmem:[%s1 + $0x110] sm:$0xff]
  %v101 = vld [vmem:[%s1 + $0x118] sm:$0xff]
  %v102 = vld [vmem:[%s1 + $0x120] sm:$0xff]
  %v103 = vld [vmem:[%s1 + $0x128] sm:$0xff]
  %v104 = vld [vmem:[%s1 + $0x130] sm:$0xff]
  %v105 = vld [vmem:[%s1 + $0x138] sm:$0xff]
  %v106 = vld [vmem:[%s1 + $0x140] sm:$0xff]
  %v107 = vld [vmem:[%s1 + $0x148] sm:$0xff]
  %v108 = vld [vmem:[%s1 + $0x150] sm:$0xff]
  %v109 = vld [vmem:[%s1 + $0x158] sm:$0xff]
  %v110 = vld [vmem:[%s1 + $0x160] sm:$0xff]
  %v111 = vld [vmem:[%s1 + $0x168] sm:$0xff]
  %v112 = vld [vmem:[%s1 + $0x170] sm:$0xff]
  %v113 = vld [vmem:[%s1 + $0x178] sm:$0xff]
  %v114 = vld [vmem:[%s1 + $0x180] sm:$0xff]
  %v115 = vld [vmem:[%s1 + $0x188] sm:$0xff]
  %v116 = vld [vmem:[%s1 + $0x190] sm:$0xff]
  %v117 = vld [vmem:[%s1 + $0x198] sm:$0xff]
  %v118 = vld [vmem:[%s1 + $0x1a0] sm:$0xff]
  %v119 = vld [vmem:[%s1 + $0x1a8] sm:$0xff]
  %v120 = vld [vmem:[%s1 + $0x1b0] sm:$0xff]
  %v121 = vld [vmem:[%s1 + $0x1b8] sm:$0xff]
  %v122 = vld [vmem:[%s1 + $0x1c0] sm:$0xff]
  %v123 = vld [vmem:[%s1 + $0x1c8] sm:$0xff]
  %v124 = vld [vmem:[%s1 + $0x1d0] sm:$0xff]
  %v125 = vld [vmem:[%s1 + $0x1d8] sm:$0xff]
  %v126 = vld [vmem:[%s1 + $0x1e0] sm:$0xff]
  %v127 = vld [vmem:[%s1 + $0x1e8] sm:$0xff]
  %v128 = vld [vmem:[%s1 + $0x1f0] sm:$0xff]
  %v129 = vld [vmem:[%s1 + $0x1f8] sm:$0xff]
  %v130 = vld [vmem:[%s1 + $0x200] sm:$0xff]
  %v131 = vld [vmem:[%s1 + $0x208] sm:$0xff]
  %v132 = vld [vmem:[%s1 + $0x210] sm:$0xff]
  %v133 = vld [vmem:[%s1 + $0x218] sm:$0xff]
  %v134 = vld [vmem:[%s1 + $0x220] sm:$0xff]
  %v135 = vld [vmem:[%s1 + $0x228] sm:$0xff]
  %v136 = vld [vmem:[%s1 + $0x230] sm:$0xff]
  %v137 = vld [vmem:[%s1 + $0x238] sm:$0xff]
  %v138 = vld [vmem:[%s1 + $0x240] sm:$0xff]
  %v139 = vld [vmem:[%s1 + $0x248] sm:$0xff]
  %v140 = vld [vmem:[%s1 + $0x250] sm:$0xff]
  %v141 = vld [vmem:[%s1 + $0x258] sm:$0xff]
  %v142 = vld [vmem:[%s1 + $0x260] sm:$0xff]
  %v143 = vld [vmem:[%s1 + $0x268] sm:$0xff]
  %v144 = vld [vmem:[%s1 + $0x270] sm:$0xff]
  %v145 = vld [vmem:[%s1 + $0x278] sm:$0xff]
  %v146 = vld [vmem:[%s1 + $0x280] sm:$0xff]
  %v147 = vld [vmem:[%s1 + $0x288] sm:$0xff]
  %v148 = vld [vmem:[%s1 + $0x290] sm:$0xff]
  %v149 = vld [vmem:[%s1 + $0x298] sm:$0xff]
  %v150 = vld [vmem:[%s1 + $0x2a0] sm:$0xff]
  %v151 = vld [vmem:[%s1 + $0x2a8] sm:$0xff]
  %v152 = vld [vmem:[%s1 + $0x2b0] sm:$0xff]
  %v153 = vld [vmem:[%s1 + $0x2b8] sm:$0xff]
  %v154 = vld [vmem:[%s1 + $0x2c0] sm:$0xff]
  %v155 = vld [vmem:[%s1 + $0x2c8] sm:$0xff]
  %v156 = vld [vmem:[%s1 + $0x2d0] sm:$0xff]
  %v157 = vld [vmem:[%s1 + $0x2d8] sm:$0xff]
  %v158 = vld [vmem:[%s1 + $0x2e0] sm:$0xff]
  %v159 = vld [vmem:[%s1 + $0x2e8] sm:$0xff]
  %v160 = vld [vmem:[%s1 + $0x2f0] sm:$0xff]
  %v161 = vld [vmem:[%s1 + $0x2f8] sm:$0xff]
  %v162 = vld [vmem:[%s1 + $0x300] sm:$0xff]
  %v163 = vld [vmem:[%s1 + $0x308] sm:$0xff]
  %v164 = vld [vmem:[%s1 + $0x310] sm:$0xff]
  %v165 = vld [vmem:[%s1 + $0x318] sm:$0xff]
  %v166 = vld [vmem:[%s1 + $0x320] sm:$0xff]
  %v167 = vld [vmem:[%s1 + $0x328] sm:$0xff]
  %v168 = vld [vmem:[%s1 + $0x330] sm:$0xff]
  %v169 = vld [vmem:[%s1 + $0x338] sm:$0xff]
  %v170 = vld [vmem:[%s1 + $0x340] sm:$0xff]
  %v171 = vld [vmem:[%s1 + $0x348] sm:$0xff]
  %v172 = vld [vmem:[%s1 + $0x350] sm:$0xff]
  %v173 = vld [vmem:[%s1 + $0x358] sm:$0xff]
  %v174 = vld [vmem:[%s1 + $0x360] sm:$0xff]
  %v175 = vld [vmem:[%s1 + $0x368] sm:$0xff]
  %v176 = vld [vmem:[%s1 + $0x370] sm:$0xff]
  %v177 = vld [vmem:[%s1 + $0x378] sm:$0xff]
  %v178 = vld [vmem:[%s1 + $0x380] sm:$0xff]
  %v179 = vld [vmem:[%s1 + $0x388] sm:$0xff]
  %v180 = vld [vmem:[%s1 + $0x390] sm:$0xff]
  %v181 = vld [vmem:[%s1 + $0x398] sm:$0xff]
  %v182 = vld [vmem:[%s1 + $0x3a0] sm:$0xff]
  %v183 = vld [vmem:[%s1 + $0x3a8] sm:$0xff]
  %v184 = vld [vmem:[%s1 + $0x3b0] sm:$0xff]
  %v185 = vld [vmem:[%s1 + $0x3b8] sm:$0xff]
  %v186 = vld [vmem:[%s1 + $0x3c0] sm:$0xff]
  %v187 = vld [vmem:[%s1 + $0x3c8] sm:$0xff]
  %v188 = vld [vmem:[%s1 + $0x3d0] sm:$0xff]
  %v189 = vld [vmem:[%s1 + $0x3d8] sm:$0xff]
  %v190 = vld [vmem:[%s1 + $0x3e0] sm:$0xff]
  %v191 = vld [vmem:[%s1 + $0x3e8] sm:$0xff]
  %v192 = vld [vmem:[%s1 + $0x3f0] sm:$0xff]
  %v193 = vld [vmem:[%s1 + $0x3f8] sm:$0xff]
  %v194 = vld [vmem:[%s1 + $0x400] sm:$0xff]
  %v195 = vld [vmem:[%s1 + $0x408] sm:$0xff]
  %v196 = vld [vmem:[%s1 + $0x410] sm:$0xff]
  %v197 = vld [vmem:[%s1 + $0x418] sm:$0xff]
  %v198 = vld [vmem:[%s1 + $0x420] sm:$0xff]
  %v199 = vld [vmem:[%s1 + $0x428] sm:$0xff]
  %v200 = vld [vmem:[%s1 + $0x430] sm:$0xff]
  %v201 = vld [vmem:[%s1 + $0x438] sm:$0xff]
  %v202 = vld [vmem:[%s1 + $0x440] sm:$0xff]
  %v203 = vld [vmem:[%s1 + $0x448] sm:$0xff]
  %v204 = vld [vmem:[%s1 + $0x450] sm:$0xff]
  %v205 = vld [vmem:[%s1 + $0x458] sm:$0xff]
  %v206 = vld [vmem:[%s1 + $0x460] sm:$0xff]
  %v207 = vld [vmem:[%s1 + $0x468] sm:$0xff]
  %v208 = vld [vmem:[%s1 + $0x470] sm:$0xff]
  %v209 = vld [vmem:[%s1 + $0x478] sm:$0xff]
  %v210 = vld [vmem:[%s1 + $0x480] sm:$0xff]
  %v211 = vld [vmem:[%s1 + $0x488] sm:$0xff]
  %v212 = vld [vmem:[%s1 + $0x490] sm:$0xff]
  %v213 = vld [vmem:[%s1 + $0x498] sm:$0xff]
  %v214 = vld [vmem:[%s1 + $0x4a0] sm:$0xff]
  %v215 = vld [vmem:[%s1 + $0x4a8] sm:$0xff]
  %v216 = vld [vmem:[%s1 + $0x4b0] sm:$0xff]
  %v217 = vld [vmem:[%s1 + $0x4b8] sm:$0xff]
  %v218 = vld [vmem:[%s1 + $0x4c0] sm:$0xff]
  %v219 = vld [vmem:[%s1 + $0x4c8] sm:$0xff]
  %v220 = vld [vmem:[%s1 + $0x4d0] sm:$0xff]
  %v221 = vld [vmem:[%s1 + $0x4d8] sm:$0xff]
  %v222 = vld [vmem:[%s1 + $0x4e0] sm:$0xff]
  %v223 = vld [vmem:[%s1 + $0x4e8] sm:$0xff]
  %v224 = vld [vmem:[%s1 + $0x4f0] sm:$0xff]
  %v225 = vld [vmem:[%s1 + $0x4f8] sm:$0xff]
  %v226 = vld [vmem:[%s1 + $0x500] sm:$0xff]
  %v227 = vld [vmem:[%s1 + $0x508] sm:$0xff]
  %v228 = vld [vmem:[%s1 + $0x510] sm:$0xff]
  %v229 = vld [vmem:[%s1 + $0x518] sm:$0xff]
  %v230 = vld [vmem:[%s1 + $0x520] sm:$0xff]
  %v231 = vld [vmem:[%s1 + $0x528] sm:$0xff]
  %v232 = vld [vmem:[%s1 + $0x530] sm:$0xff]
  %v233 = vld [vmem:[%s1 + $0x538] sm:$0xff]
  %v234 = vld [vmem:[%s1 + $0x540] sm:$0xff]
  %v235 = vld [vmem:[%s1 + $0x548] sm:$0xff]
  %v236 = vld [vmem:[%s1 + $0x550] sm:$0xff]
  %v237 = vld [vmem:[%s1 + $0x558] sm:$0xff]
  %v238 = vld [vmem:[%s1 + $0x560] sm:$0xff]
  %v239 = vld [vmem:[%s1 + $0x568] sm:$0xff]
  %v240 = vld [vmem:[%s1 + $0x570] sm:$0xff]
  %v241 = vld [vmem:[%s1 + $0x578] sm:$0xff]
  %v242 = vld [vmem:[%s1 + $0x580] sm:$0xff]
  %v243 = vld [vmem:[%s1 + $0x588] sm:$0xff]
  %v244 = vld [vmem:[%s1 + $0x590] sm:$0xff]
  %v245 = vld [vmem:[%s1 + $0x598] sm:$0xff]
  %v246 = vld [vmem:[%s1 + $0x5a0] sm:$0xff]
  %v247 = vld [vmem:[%s1 + $0x5a8] sm:$0xff]
  %v248 = vld [vmem:[%s1 + $0x5b0] sm:$0xff]
  %v249 = vld [vmem:[%s1 + $0x5b8] sm:$0xff]
  %v250 = vld [vmem:[%s1 + $0x5c0] sm:$0xff]
  %v251 = vld [vmem:[%s1 + $0x5c8] sm:$0xff]
  %v252 = vld [vmem:[%s1 + $0x5d0] sm:$0xff]
  %v253 = vld [vmem:[%s1 + $0x5d8] sm:$0xff]
  %v254 = vld [vmem:[%s1 + $0x5e0] sm:$0xff]
  %v255 = vld [vmem:[%s1 + $0x5e8] sm:$0xff]
  %v256 = vld [vmem:[%s1 + $0x5f0] sm:$0xff]
  %v257 = vld [vmem:[%s1 + $0x5f8] sm:$0xff]
  %v258 = vld [vmem:[%s1 + $0x600] sm:$0xff]
  %v259 = vld [vmem:[%s1 + $0x608] sm:$0xff]
  %v260 = vld [vmem:[%s1 + $0x610] sm:$0xff]
  %v261 = vld [vmem:[%s1 + $0x618] sm:$0xff]
  %v262 = vld [vmem:[%s1 + $0x620] sm:$0xff]
  %v263 = vld [vmem:[%s1 + $0x628] sm:$0xff]
  %v264 = vld [vmem:[%s1 + $0x630] sm:$0xff]
  %v265 = vld [vmem:[%s1 + $0x638] sm:$0xff]
  %v266 = vld [vmem:[%s1 + $0x640] sm:$0xff]
  %v267 = vld [vmem:[%s1 + $0x648] sm:$0xff]
  %v268 = vld [vmem:[%s1 + $0x650] sm:$0xff]
  %v269 = vld [vmem:[%s1 + $0x658] sm:$0xff]
  %v270 = vld [vmem:[%s1 + $0x660] sm:$0xff]
  %v271 = vld [vmem:[%s1 + $0x668] sm:$0xff]
  %v272 = vld [vmem:[%s1 + $0x670] sm:$0xff]
  %v273 = vld [vmem:[%s1 + $0x678] sm:$0xff]
  %v274 = vld [vmem:[%s1 + $0x680] sm:$0xff]
  %v275 = vld [vmem:[%s1 + $0x688] sm:$0xff]
  %v276 = vld [vmem:[%s1 + $0x690] sm:$0xff]
  %v277 = vld [vmem:[%s1 + $0x698] sm:$0xff]
  %v278 = vld [vmem:[%s1 + $0x6a0] sm:$0xff]
  %v279 = vld [vmem:[%s1 + $0x6a8] sm:$0xff]
  %v280 = vld [vmem:[%s1 + $0x6b0] sm:$0xff]
  %v281 = vld [vmem:[%s1 + $0x6b8] sm:$0xff]
  %v282 = vld [vmem:[%s1 + $0x6c0] sm:$0xff]
  %v283 = vld [vmem:[%s1 + $0x6c8] sm:$0xff]
  %v284 = vld [vmem:[%s1 + $0x6d0] sm:$0xff]
  %v285 = vld [vmem:[%s1 + $0x6d8] sm:$0xff]
  %v286 = vld [vmem:[%s1 + $0x6e0] sm:$0xff]
  %v287 = vld [vmem:[%s1 + $0x6e8] sm:$0xff]
  %v288 = vld [vmem:[%s1 + $0x6f0] sm:$0xff]
  %v289 = vld [vmem:[%s1 + $0x6f8] sm:$0xff]
  %v290 = vld [vmem:[%s1 + $0x700] sm:$0xff]
  %v291 = vld [vmem:[%s1 + $0x708] sm:$0xff]
  %v292 = vld [vmem:[%s1 + $0x710] sm:$0xff]
  %v293 = vld [vmem:[%s1 + $0x718] sm:$0xff]
  %v294 = vld [vmem:[%s1 + $0x720] sm:$0xff]
  %v295 = vld [vmem:[%s1 + $0x728] sm:$0xff]
  %v296 = vld [vmem:[%s1 + $0x730] sm:$0xff]
  %v297 = vld [vmem:[%s1 + $0x738] sm:$0xff]
  %v298 = vld [vmem:[%s1 + $0x740] sm:$0xff]
  %v299 = vld [vmem:[%s1 + $0x748] sm:$0xff]
  %v300 = vld [vmem:[%s1 + $0x750] sm:$0xff]
  %v301 = vld [vmem:[%s1 + $0x758] sm:$0xff]
  %v302 = vld [vmem:[%s1 + $0x760] sm:$0xff]
  %v303 = vld [vmem:[%s1 + $0x768] sm:$0xff]
  %v304 = vld [vmem:[%s1 + $0x770] sm:$0xff]
  %v305 = vld [vmem:[%s1 + $0x778] sm:$0xff]
  %v306 = vld [vmem:[%s1 + $0x780] sm:$0xff]
  %v307 = vld [vmem:[%s1 + $0x788] sm:$0xff]
  %v308 = vld [vmem:[%s1 + $0x790] sm:$0xff]
  %v309 = vld [vmem:[%s1 + $0x798] sm:$0xff]
  %v310 = vld [vmem:[%s1 + $0x7a0] sm:$0xff]
  %v311 = vld [vmem:[%s1 + $0x7a8] sm:$0xff]
  %v312 = vld [vmem:[%s1 + $0x7b0] sm:$0xff]
  %v313 = vld [vmem:[%s1 + $0x7b8] sm:$0xff]
  %v314 = vld [vmem:[%s1 + $0x7c0] sm:$0xff]
  %v315 = vld [vmem:[%s1 + $0x7c8] sm:$0xff]
  %v316 = vld [vmem:[%s1 + $0x7d0] sm:$0xff]
  %v317 = vld [vmem:[%s1 + $0x7d8] sm:$0xff]
  %v318 = vld [vmem:[%s1 + $0x7e0] sm:$0xff]
  %v319 = vld [vmem:[%s1 + $0x7e8] sm:$0xff]
  %v320 = vld [vmem:[%s1 + $0x7f0] sm:$0xff]
  %v321 = vld [vmem:[%s1 + $0x7f8] sm:$0xff]
  %v322 = vld [vmem:[%s1 + $0x800] sm:$0xff]
  %v323 = vld [vmem:[%s1 + $0x808] sm:$0xff]
  %v324 = vld [vmem:[%s1 + $0x810] sm:$0xff]
  %v325 = vld [vmem:[%s1 + $0x818] sm:$0xff]
  %v326 = vld [vmem:[%s1 + $0x820] sm:$0xff]
  %v327 = vld [vmem:[%s1 + $0x828] sm:$0xff]
  %v328 = vld [vmem:[%s1 + $0x830] sm:$0xff]
  %v329 = vld [vmem:[%s1 + $0x838] sm:$0xff]
  %v330 = vld [vmem:[%s1 + $0x840] sm:$0xff]
  %v331 = vld [vmem:[%s1 + $0x848] sm:$0xff]
  %v332 = vld [vmem:[%s1 + $0x850] sm:$0xff]
  %v333 = vld [vmem:[%s1 + $0x858] sm:$0xff]
  %v334 = vld [vmem:[%s1 + $0x860] sm:$0xff]
  %v335 = vld [vmem:[%s1 + $0x868] sm:$0xff]
  %v336 = vld [vmem:[%s1 + $0x870] sm:$0xff]
  %v337 = vld [vmem:[%s1 + $0x878] sm:$0xff]
  %v338 = vld [vmem:[%s1 + $0x880] sm:$0xff]
  %v339 = vld [vmem:[%s1 + $0x888] sm:$0xff]
  %v340 = vld [vmem:[%s1 + $0x890] sm:$0xff]
  %v341 = vld [vmem:[%s1 + $0x898] sm:$0xff]
  %v342 = vld [vmem:[%s1 + $0x8a0] sm:$0xff]
  %v343 = vld [vmem:[%s1 + $0x8a8] sm:$0xff]
  %v344 = vld [vmem:[%s1 + $0x8b0] sm:$0xff]
  %v345 = vld [vmem:[%s1 + $0x8b8] sm:$0xff]
  %v346 = vld [vmem:[%s1 + $0x8c0] sm:$0xff]
  %v347 = vld [vmem:[%s1 + $0x8c8] sm:$0xff]
  %v348 = vld [vmem:[%s1 + $0x8d0] sm:$0xff]
  %v349 = vld [vmem:[%s1 + $0x8d8] sm:$0xff]
  %v350 = vld [vmem:[%s1 + $0x8e0] sm:$0xff]
  %v351 = vld [vmem:[%s1 + $0x8e8] sm:$0xff]
  %v352 = vld [vmem:[%s1 + $0x8f0] sm:$0xff]
  %v353 = vld [vmem:[%s1 + $0x8f8] sm:$0xff]
  %v354 = vld [vmem:[%s1 + $0x900] sm:$0xff]
  %v355 = vld [vmem:[%s1 + $0x908] sm:$0xff]
  %v356 = vld [vmem:[%s1 + $0x910] sm:$0xff]
  %v357 = vld [vmem:[%s1 + $0x918] sm:$0xff]
  %v358 = vld [vmem:[%s1 + $0x920] sm:$0xff]
  %v359 = vld [vmem:[%s1 + $0x928] sm:$0xff]
  %v360 = vld [vmem:[%s1 + $0x930] sm:$0xff]
  %v361 = vld [vmem:[%s1 + $0x938] sm:$0xff]
  %v362 = vld [vmem:[%s1 + $0x940] sm:$0xff]
  %v363 = vld [vmem:[%s1 + $0x948] sm:$0xff]
  %v364 = vld [vmem:[%s1 + $0x950] sm:$0xff]
  %v365 = vld [vmem:[%s1 + $0x958] sm:$0xff]
  %v366 = vld [vmem:[%s1 + $0x960] sm:$0xff]
  %v367 = vld [vmem:[%s1 + $0x968] sm:$0xff]
  %v368 = vld [vmem:[%s1 + $0x970] sm:$0xff]
  %v369 = vld [vmem:[%s1 + $0x978] sm:$0xff]
  %v370 = vld [vmem:[%s1 + $0x980] sm:$0xff]
  %v371 = vld [vmem:[%s1 + $0x988] sm:$0xff]
  %v372 = vld [vmem:[%s1 + $0x990] sm:$0xff]
  %v373 = vld [vmem:[%s1 + $0x998] sm:$0xff]
  %v374 = vld [vmem:[%s1 + $0x9a0] sm:$0xff]
  %v375 = vld [vmem:[%s1 + $0x9a8] sm:$0xff]
  %v376 = vld [vmem:[%s1 + $0x9b0] sm:$0xff]
  %v377 = vld [vmem:[%s1 + $0x9b8] sm:$0xff]
  %v378 = vld [vmem:[%s1 + $0x9c0] sm:$0xff]
  %v379 = vld [vmem:[%s1 + $0x9c8] sm:$0xff]
  %v380 = vld [vmem:[%s1 + $0x9d0] sm:$0xff]
  %v381 = vld [vmem:[%s1 + $0x9d8] sm:$0xff]
  %v382 = vld [vmem:[%s1 + $0x9e0] sm:$0xff]
  %v383 = vld [vmem:[%s1 + $0x9e8] sm:$0xff]
  %v384 = vld [vmem:[%s1 + $0x9f0] sm:$0xff]
  %v385 = vld [vmem:[%s1 + $0x9f8] sm:$0xff]
  %v386 = vld [vmem:[%s1 + $0xa00] sm:$0xff]
  %v387 = vld [vmem:[%s1 + $0xa08] sm:$0xff]
  %v388 = vld [vmem:[%s1 + $0xa10] sm:$0xff]
  %v389 = vld [vmem:[%s1 + $0xa18] sm:$0xff]
  %v390 = vld [vmem:[%s1 + $0xa20] sm:$0xff]
  %v391 = vld [vmem:[%s1 + $0xa28] sm:$0xff]
  %v392 = vld [vmem:[%s1 + $0xa30] sm:$0xff]
  %v393 = vld [vmem:[%s1 + $0xa38] sm:$0xff]
  %v394 = vld [vmem:[%s1 + $0xa40] sm:$0xff]
  %v395 = vld [vmem:[%s1 + $0xa48] sm:$0xff]
  %v396 = vld [vmem:[%s1 + $0xa50] sm:$0xff]
  %v397 = vld [vmem:[%s1 + $0xa58] sm:$0xff]
  %v398 = vld [vmem:[%s1 + $0xa60] sm:$0xff]
  %v399 = vld [vmem:[%s1 + $0xa68] sm:$0xff]
  %v400 = vld [vmem:[%s1 + $0xa70] sm:$0xff]
  %v401 = vld [vmem:[%s1 + $0xa78] sm:$0xff]
  %v402 = vld [vmem:[%s1 + $0xa80] sm:$0xff]
  %v403 = vld [vmem:[%s1 + $0xa88] sm:$0xff]
  %v404 = vld [vmem:[%s1 + $0xa90] sm:$0xff]
  %v405 = vld [vmem:[%s1 + $0xa98] sm:$0xff]
  %v406 = vld [vmem:[%s1 + $0xaa0] sm:$0xff]
  %v407 = vld [vmem:[%s1 + $0xaa8] sm:$0xff]
  %v408 = vld [vmem:[%s1 + $0xab0] sm:$0xff]
  %v409 = vld [vmem:[%s1 + $0xab8] sm:$0xff]
  %v410 = vld [vmem:[%s1 + $0xac0] sm:$0xff]
  %v411 = vld [vmem:[%s1 + $0xac8] sm:$0xff]
  %v412 = vld [vmem:[%s1 + $0xad0] sm:$0xff]
  %v413 = vld [vmem:[%s1 + $0xad8] sm:$0xff]
  %v414 = vld [vmem:[%s1 + $0xae0] sm:$0xff]
  %v415 = vld [vmem:[%s1 + $0xae8] sm:$0xff]
  %v416 = vld [vmem:[%s1 + $0xaf0] sm:$0xff]
  %v417 = vld [vmem:[%s1 + $0xaf8] sm:$0xff]
  %v418 = vld [vmem:[%s1 + $0xb00] sm:$0xff]
  %v419 = vld [vmem:[%s1 + $0xb08] sm:$0xff]
  %v420 = vld [vmem:[%s1 + $0xb10] sm:$0xff]
  %v421 = vld [vmem:[%s1 + $0xb18] sm:$0xff]
  %v422 = vld [vmem:[%s1 + $0xb20] sm:$0xff]
  %v423 = vld [vmem:[%s1 + $0xb28] sm:$0xff]
  %v424 = vld [vmem:[%s1 + $0xb30] sm:$0xff]
  %v425 = vld [vmem:[%s1 + $0xb38] sm:$0xff]
  %v426 = vld [vmem:[%s1 + $0xb40] sm:$0xff]
  %v427 = vld [vmem:[%s1 + $0xb48] sm:$0xff]
  %v428 = vld [vmem:[%s1 + $0xb50] sm:$0xff]
  %v429 = vld [vmem:[%s1 + $0xb58] sm:$0xff]
  %v430 = vld [vmem:[%s1 + $0xb60] sm:$0xff]
  %v431 = vld [vmem:[%s1 + $0xb68] sm:$0xff]
  %v432 = vld [vmem:[%s1 + $0xb70] sm:$0xff]
  %v433 = vld [vmem:[%s1 + $0xb78] sm:$0xff]
  %v434 = vld [vmem:[%s1 + $0xb80] sm:$0xff]
  %v435 = vld [vmem:[%s1 + $0xb88] sm:$0xff]
  %v436 = vld [vmem:[%s1 + $0xb90] sm:$0xff]
  %v437 = vld [vmem:[%s1 + $0xb98] sm:$0xff]
  %v438 = vld [vmem:[%s1 + $0xba0] sm:$0xff]
  %v439 = vld [vmem:[%s1 + $0xba8] sm:$0xff]
  %v440 = vld [vmem:[%s1 + $0xbb0] sm:$0xff]
  %v441 = vld [vmem:[%s1 + $0xbb8] sm:$0xff]
  %v442 = vld [vmem:[%s1 + $0xbc0] sm:$0xff]
  %v443 = vld [vmem:[%s1 + $0xbc8] sm:$0xff]
  %v444 = vld [vmem:[%s1 + $0xbd0] sm:$0xff]
  %v445 = vld [vmem:[%s1 + $0xbd8] sm:$0xff]
  %v446 = vld [vmem:[%s1 + $0xbe0] sm:$0xff]
  %v447 = vld [vmem:[%s1 + $0xbe8] sm:$0xff]
  %v448 = vld [vmem:[%s1 + $0xbf0] sm:$0xff]
  %v449 = vld [vmem:[%s1 + $0xbf8] sm:$0xff]
  %v450 = vld [vmem:[%s1 + $0xc00] sm:$0xff]
  %v451 = vld [vmem:[%s1 + $0xc08] sm:$0xff]
  %v452 = vld [vmem:[%s1 + $0xc10] sm:$0xff]
  %v453 = vld [vmem:[%s1 + $0xc18] sm:$0xff]
  %v454 = vld [vmem:[%s1 + $0xc20] sm:$0xff]
  %v455 = vld [vmem:[%s1 + $0xc28] sm:$0xff]
  %v456 = vld [vmem:[%s1 + $0xc30] sm:$0xff]
  %v457 = vld [vmem:[%s1 + $0xc38] sm:$0xff]
  %v458 = vld [vmem:[%s1 + $0xc40] sm:$0xff]
  %v459 = vld [vmem:[%s1 + $0xc48] sm:$0xff]
  %v460 = vld [vmem:[%s1 + $0xc50] sm:$0xff]
  %v461 = vld [vmem:[%s1 + $0xc58] sm:$0xff]
  %v462 = vld [vmem:[%s1 + $0xc60] sm:$0xff]
  %v463 = vld [vmem:[%s1 + $0xc68] sm:$0xff]
  %v464 = vld [vmem:[%s1 + $0xc70] sm:$0xff]
  %v465 = vld [vmem:[%s1 + $0xc78] sm:$0xff]
  %v466 = vld [vmem:[%s1 + $0xc80] sm:$0xff]
  %v467 = vld [vmem:[%s1 + $0xc88] sm:$0xff]
  %v468 = vld [vmem:[%s1 + $0xc90] sm:$0xff]
  %v469 = vld [vmem:[%s1 + $0xc98] sm:$0xff]
  %v470 = vld [vmem:[%s1 + $0xca0] sm:$0xff]
  %v471 = vld [vmem:[%s1 + $0xca8] sm:$0xff]
  %v472 = vld [vmem:[%s1 + $0xcb0] sm:$0xff]
  %v473 = vld [vmem:[%s1 + $0xcb8] sm:$0xff]
  %v474 = vld [vmem:[%s1 + $0xcc0] sm:$0xff]
  %v475 = vld [vmem:[%s1 + $0xcc8] sm:$0xff]
  %v476 = vld [vmem:[%s1 + $0xcd0] sm:$0xff]
  %v477 = vld [vmem:[%s1 + $0xcd8] sm:$0xff]
  %v478 = vld [vmem:[%s1 + $0xce0] sm:$0xff]
  %v479 = vld [vmem:[%s1 + $0xce8] sm:$0xff]
  %v480 = vld [vmem:[%s1 + $0xcf0] sm:$0xff]
  %v481 = vld [vmem:[%s1 + $0xcf8] sm:$0xff]
  %v482 = vld [vmem:[%s1 + $0xd00] sm:$0xff]
  %v483 = vld [vmem:[%s1 + $0xd08] sm:$0xff]
  %v484 = vld [vmem:[%s1 + $0xd10] sm:$0xff]
  %v485 = vld [vmem:[%s1 + $0xd18] sm:$0xff]
  %v486 = vld [vmem:[%s1 + $0xd20] sm:$0xff]
  %v487 = vld [vmem:[%s1 + $0xd28] sm:$0xff]
  %v488 = vld [vmem:[%s1 + $0xd30] sm:$0xff]
  %v489 = vld [vmem:[%s1 + $0xd38] sm:$0xff]
  %v490 = vld [vmem:[%s1 + $0xd40] sm:$0xff]
  %v491 = vld [vmem:[%s1 + $0xd48] sm:$0xff]
  %v492 = vld [vmem:[%s1 + $0xd50] sm:$0xff]
  %v493 = vld [vmem:[%s1 + $0xd58] sm:$0xff]
  %v494 = vld [vmem:[%s1 + $0xd60] sm:$0xff]
  %v495 = vld [vmem:[%s1 + $0xd68] sm:$0xff]
  %v496 = vld [vmem:[%s1 + $0xd70] sm:$0xff]
  %v497 = vld [vmem:[%s1 + $0xd78] sm:$0xff]
  %v498 = vld [vmem:[%s1 + $0xd80] sm:$0xff]
  %v499 = vld [vmem:[%s1 + $0xd88] sm:$0xff]
  %v500 = vld [vmem:[%s1 + $0xd90] sm:$0xff]
  %v501 = vld [vmem:[%s1 + $0xd98] sm:$0xff]
  %v502 = vld [vmem:[%s1 + $0xda0] sm:$0xff]
  %v503 = vld [vmem:[%s1 + $0xda8] sm:$0xff]
  %v504 = vld [vmem:[%s1 + $0xdb0] sm:$0xff]
  %v505 = vld [vmem:[%s1 + $0xdb8] sm:$0xff]
  %v506 = vld [vmem:[%s1 + $0xdc0] sm:$0xff]
  %v507 = vld [vmem:[%s1 + $0xdc8] sm:$0xff]
  %v508 = vld [vmem:[%s1 + $0xdd0] sm:$0xff]
  %v509 = vld [vmem:[%s1 + $0xdd8] sm:$0xff]
  %v510 = vld [vmem:[%s1 + $0xde0] sm:$0xff]
  %v511 = vld [vmem:[%s1 + $0xde8] sm:$0xff]
  %v512 = vld [vmem:[%s1 + $0xdf0] sm:$0xff]
  %v513 = vld [vmem:[%s1 + $0xdf8] sm:$0xff]
  %v514 = vld [vmem:[%s1 + $0xe00] sm:$0xff]
  %v515 = vld [vmem:[%s1 + $0xe08] sm:$0xff]
  %v516 = vld [vmem:[%s1 + $0xe10] sm:$0xff]
  %v517 = vld [vmem:[%s1 + $0xe18] sm:$0xff]
  %v518 = vld [vmem:[%s1 + $0xe20] sm:$0xff]
  %v519 = vld [vmem:[%s1 + $0xe28] sm:$0xff]
  %v520 = vld [vmem:[%s1 + $0xe30] sm:$0xff]
  %v521 = vld [vmem:[%s1 + $0xe38] sm:$0xff]
  %v522 = vld [vmem:[%s1 + $0xe40] sm:$0xff]
  %v523 = vld [vmem:[%s1 + $0xe48] sm:$0xff]
  %v524 = vld [vmem:[%s1 + $0xe50] sm:$0xff]
  %v525 = vld [vmem:[%s1 + $0xe58] sm:$0xff]
  %v526 = vld [vmem:[%s1 + $0xe60] sm:$0xff]
  %v527 = vld [vmem:[%s1 + $0xe68] sm:$0xff]
  %v528 = vld [vmem:[%s1 + $0xe70] sm:$0xff]
  %v529 = vld [vmem:[%s1 + $0xe78] sm:$0xff]
  %v530 = vld [vmem:[%s1 + $0xe80] sm:$0xff]
  %v531 = vld [vmem:[%s1 + $0xe88] sm:$0xff]
  %v532 = vld [vmem:[%s1 + $0xe90] sm:$0xff]
  %v533 = vld [vmem:[%s1 + $0xe98] sm:$0xff]
  %v534 = vld [vmem:[%s1 + $0xea0] sm:$0xff]
  %v535 = vld [vmem:[%s1 + $0xea8] sm:$0xff]
  %v536 = vld [vmem:[%s1 + $0xeb0] sm:$0xff]
  %v537 = vld [vmem:[%s1 + $0xeb8] sm:$0xff]
  %v538 = vld [vmem:[%s1 + $0xec0] sm:$0xff]
  %v539 = vld [vmem:[%s1 + $0xec8] sm:$0xff]
  %v540 = vld [vmem:[%s1 + $0xed0] sm:$0xff]
  %v541 = vld [vmem:[%s1 + $0xed8] sm:$0xff]
  %v542 = vld [vmem:[%s1 + $0xee0] sm:$0xff]
  %v543 = vld [vmem:[%s1 + $0xee8] sm:$0xff]
  %v544 = vld [vmem:[%s1 + $0xef0] sm:$0xff]
  %v545 = vld [vmem:[%s1 + $0xef8] sm:$0xff]
  %v546 = vld [vmem:[%s1 + $0xf00] sm:$0xff]
  %v547 = vld [vmem:[%s1 + $0xf08] sm:$0xff]
  %v548 = vld [vmem:[%s1 + $0xf10] sm:$0xff]
  %v549 = vld [vmem:[%s1 + $0xf18] sm:$0xff]
  %v550 = vld [vmem:[%s1 + $0xf20] sm:$0xff]
  %v551 = vld [vmem:[%s1 + $0xf28] sm:$0xff]
  %v552 = vld [vmem:[%s1 + $0xf30] sm:$0xff]
  %v553 = vld [vmem:[%s1 + $0xf38] sm:$0xff]
  %v554 = vld [vmem:[%s1 + $0xf40] sm:$0xff]
  %v555 = vld [vmem:[%s1 + $0xf48] sm:$0xff]
  %v556 = vld [vmem:[%s1 + $0xf50] sm:$0xff]
  %v557 = vld [vmem:[%s1 + $0xf58] sm:$0xff]
  %v558 = vld [vmem:[%s1 + $0xf60] sm:$0xff]
  %v559 = vld [vmem:[%s1 + $0xf68] sm:$0xff]
  %v560 = vld [vmem:[%s1 + $0xf70] sm:$0xff]
  %v561 = vld [vmem:[%s1 + $0xf78] sm:$0xff]
  %v562 = vld [vmem:[%s1 + $0xf80] sm:$0xff]
  %v563 = vld [vmem:[%s1 + $0xf88] sm:$0xff]
  %v564 = vld [vmem:[%s1 + $0xf90] sm:$0xff]
  %v565 = vld [vmem:[%s1 + $0xf98] sm:$0xff]
  %v566 = vld [vmem:[%s1 + $0xfa0] sm:$0xff]
  %v567 = vld [vmem:[%s1 + $0xfa8] sm:$0xff]
  %v568 = vld [vmem:[%s1 + $0xfb0] sm:$0xff]
  %v569 = vld [vmem:[%s1 + $0xfb8] sm:$0xff]
  %v570 = vld [vmem:[%s1 + $0xfc0] sm:$0xff]
  %v571 = vld [vmem:[%s1 + $0xfc8] sm:$0xff]
  %v572 = vld [vmem:[%s1 + $0xfd0] sm:$0xff]
  %v573 = vld [vmem:[%s1 + $0xfd8] sm:$0xff]
  %v574 = vld [vmem:[%s1 + $0xfe0] sm:$0xff]
  %v575 = vld [vmem:[%s1 + $0xfe8] sm:$0xff]
  %v576 = vld [vmem:[%s1 + $0xff0] sm:$0xff]
  %v577 = vld [vmem:[%s1 + $0xff8] sm:$0xff]
  %v578 = vld [vmem:[%s1 + $0x1000] sm:$0xff]
  %v579 = vld [vmem:[%s1 + $0x1008] sm:$0xff]
  %v580 = vld [vmem:[%s1 + $0x1010] sm:$0xff]
  %v581 = vld [vmem:[%s1 + $0x1018] sm:$0xff]
  %v582 = vld [vmem:[%s1 + $0x1020] sm:$0xff]
  %v583 = vld [vmem:[%s1 + $0x1028] sm:$0xff]
  %v584 = vld [vmem:[%s1 + $0x1030] sm:$0xff]
  %v585 = vld [vmem:[%s1 + $0x1038] sm:$0xff]
  %v586 = vld [vmem:[%s1 + $0x1040] sm:$0xff]
  %v587 = vld [vmem:[%s1 + $0x1048] sm:$0xff]
  %v588 = vld [vmem:[%s1 + $0x1050] sm:$0xff]
  %v589 = vld [vmem:[%s1 + $0x1058] sm:$0xff]
  %v590 = vld [vmem:[%s1 + $0x1060] sm:$0xff]
  %v591 = vld [vmem:[%s1 + $0x1068] sm:$0xff]
  %v592 = vld [vmem:[%s1 + $0x1070] sm:$0xff]
  %v593 = vld [vmem:[%s1 + $0x1078] sm:$0xff]
  %v594 = vld [vmem:[%s1 + $0x1080] sm:$0xff]
  %v595 = vld [vmem:[%s1 + $0x1088] sm:$0xff]
  %v596 = vld [vmem:[%s1 + $0x1090] sm:$0xff]
  %v597 = vld [vmem:[%s1 + $0x1098] sm:$0xff]
  %v598 = vld [vmem:[%s1 + $0x10a0] sm:$0xff]
  %v599 = vld [vmem:[%s1 + $0x10a8] sm:$0xff]
  %v600 = vld [vmem:[%s1 + $0x10b0] sm:$0xff]
  %v601 = vld [vmem:[%s1 + $0x10b8] sm:$0xff]
  %v602 = vld [vmem:[%s1 + $0x10c0] sm:$0xff]
  %v603 = vld [vmem:[%s1 + $0x10c8] sm:$0xff]
  %v604 = vld [vmem:[%s1 + $0x10d0] sm:$0xff]
  %v605 = vld [vmem:[%s1 + $0x10d8] sm:$0xff]
  %v606 = vld [vmem:[%s1 + $0x10e0] sm:$0xff]
  %v607 = vld [vmem:[%s1 + $0x10e8] sm:$0xff]
  %v608 = vld [vmem:[%s1 + $0x10f0] sm:$0xff]
  %v609 = vld [vmem:[%s1 + $0x10f8] sm:$0xff]
  %v610 = vld [vmem:[%s1 + $0x1100] sm:$0xff]
  %v611 = vld [vmem:[%s1 + $0x1108] sm:$0xff]
  %v612 = vld [vmem:[%s1 + $0x1110] sm:$0xff]
  %v613 = vld [vmem:[%s1 + $0x1118] sm:$0xff]
  %v614 = vld [vmem:[%s1 + $0x1120] sm:$0xff]
  %v615 = vld [vmem:[%s1 + $0x1128] sm:$0xff]
  %v616 = vld [vmem:[%s1 + $0x1130] sm:$0xff]
  %v617 = vld [vmem:[%s1 + $0x1138] sm:$0xff]
  %v618 = vld [vmem:[%s1 + $0x1140] sm:$0xff]
  %v619 = vld [vmem:[%s1 + $0x1148] sm:$0xff]
  %v620 = vld [vmem:[%s1 + $0x1150] sm:$0xff]
  %v621 = vld [vmem:[%s1 + $0x1158] sm:$0xff]
  %v622 = vld [vmem:[%s1 + $0x1160] sm:$0xff]
  %v623 = vld [vmem:[%s1 + $0x1168] sm:$0xff]
  %v624 = vld [vmem:[%s1 + $0x1170] sm:$0xff]
  %v625 = vld [vmem:[%s1 + $0x1178] sm:$0xff]
  %v626 = vld [vmem:[%s1 + $0x1180] sm:$0xff]
  %v627 = vld [vmem:[%s1 + $0x1188] sm:$0xff]
  %v628 = vld [vmem:[%s1 + $0x1190] sm:$0xff]
  %v629 = vld [vmem:[%s1 + $0x1198] sm:$0xff]
  %v630 = vld [vmem:[%s1 + $0x11a0] sm:$0xff]
  %v631 = vld [vmem:[%s1 + $0x11a8] sm:$0xff]
  %v632 = vld [vmem:[%s1 + $0x11b0] sm:$0xff]
  %v633 = vld [vmem:[%s1 + $0x11b8] sm:$0xff]
  %v634 = vld [vmem:[%s1 + $0x11c0] sm:$0xff]
  %v635 = vld [vmem:[%s1 + $0x11c8] sm:$0xff]
  %v636 = vld [vmem:[%s1 + $0x11d0] sm:$0xff]
  %v637 = vld [vmem:[%s1 + $0x11d8] sm:$0xff]
  %v638 = vld [vmem:[%s1 + $0x11e0] sm:$0xff]
  %v639 = vld [vmem:[%s1 + $0x11e8] sm:$0xff]
  %v640 = vld [vmem:[%s1 + $0x11f0] sm:$0xff]
  %v641 = vld [vmem:[%s1 + $0x11f8] sm:$0xff]
  %v642 = vld [vmem:[%s1 + $0x1200] sm:$0xff]
  %v643 = vld [vmem:[%s1 + $0x1208] sm:$0xff]
  %v644 = vld [vmem:[%s1 + $0x1210] sm:$0xff]
  %v645 = vld [vmem:[%s1 + $0x1218] sm:$0xff]
  %v646 = vld [vmem:[%s1 + $0x1220] sm:$0xff]
  %v647 = vld [vmem:[%s1 + $0x1228] sm:$0xff]
  %v648 = vld [vmem:[%s1 + $0x1230] sm:$0xff]
  %v649 = vld [vmem:[%s1 + $0x1238] sm:$0xff]
  %v650 = vld [vmem:[%s1 + $0x1240] sm:$0xff]
  %v651 = vld [vmem:[%s1 + $0x1248] sm:$0xff]
  %v652 = vld [vmem:[%s1 + $0x1250] sm:$0xff]
  %v653 = vld [vmem:[%s1 + $0x1258] sm:$0xff]
  %v654 = vld [vmem:[%s1 + $0x1260] sm:$0xff]
  %v655 = vld [vmem:[%s1 + $0x1268] sm:$0xff]
  %v656 = vld [vmem:[%s1 + $0x1270] sm:$0xff]
  %v657 = vld [vmem:[%s1 + $0x1278] sm:$0xff]
  %v658 = vld [vmem:[%s1 + $0x1280] sm:$0xff]
  %v659 = vld [vmem:[%s1 + $0x1288] sm:$0xff]
  %v660 = vld [vmem:[%s1 + $0x1290] sm:$0xff]
  %v661 = vld [vmem:[%s1 + $0x1298] sm:$0xff]
  %v662 = vld [vmem:[%s1 + $0x12a0] sm:$0xff]
  %v663 = vld [vmem:[%s1 + $0x12a8] sm:$0xff]
  %v664 = vld [vmem:[%s1 + $0x12b0] sm:$0xff]
  %v665 = vld [vmem:[%s1 + $0x12b8] sm:$0xff]
  %v666 = vld [vmem:[%s1 + $0x12c0] sm:$0xff]
  %v667 = vld [vmem:[%s1 + $0x12c8] sm:$0xff]
  %v668 = vld [vmem:[%s1 + $0x12d0] sm:$0xff]
  %v669 = vld [vmem:[%s1 + $0x12d8] sm:$0xff]
  %v670 = vld [vmem:[%s1 + $0x12e0] sm:$0xff]
  %v671 = vld [vmem:[%s1 + $0x12e8] sm:$0xff]
  %v672 = vld [vmem:[%s1 + $0x12f0] sm:$0xff]
  %v673 = vld [vmem:[%s1 + $0x12f8] sm:$0xff]
  %v674 = vld [vmem:[%s1 + $0x1300] sm:$0xff]
  %v675 = vld [vmem:[%s1 + $0x1308] sm:$0xff]
  %v676 = vld [vmem:[%s1 + $0x1310] sm:$0xff]
  %v677 = vld [vmem:[%s1 + $0x1318] sm:$0xff]
  %v678 = vld [vmem:[%s1 + $0x1320] sm:$0xff]
  %v679 = vld [vmem:[%s1 + $0x1328] sm:$0xff]
  %v680 = vld [vmem:[%s1 + $0x1330] sm:$0xff]
  %v681 = vld [vmem:[%s1 + $0x1338] sm:$0xff]
  %v682 = vld [vmem:[%s1 + $0x1340] sm:$0xff]
  %v683 = vld [vmem:[%s1 + $0x1348] sm:$0xff]
  %v684 = vld [vmem:[%s1 + $0x1350] sm:$0xff]
  %v685 = vld [vmem:[%s1 + $0x1358] sm:$0xff]
  %v686 = vld [vmem:[%s1 + $0x1360] sm:$0xff]
  %v687 = vld [vmem:[%s1 + $0x1368] sm:$0xff]
  %v688 = vld [vmem:[%s1 + $0x1370] sm:$0xff]
  %v689 = vld [vmem:[%s1 + $0x1378] sm:$0xff]
  %v690 = vld [vmem:[%s1 + $0x1380] sm:$0xff]
  %v691 = vld [vmem:[%s1 + $0x1388] sm:$0xff]
  %v692 = vld [vmem:[%s1 + $0x1390] sm:$0xff]
  %v693 = vld [vmem:[%s1 + $0x1398] sm:$0xff]
  %v694 = vld [vmem:[%s1 + $0x13a0] sm:$0xff]
  %v695 = vld [vmem:[%s1 + $0x13a8] sm:$0xff]
  %v696 = vld [vmem:[%s1 + $0x13b0] sm:$0xff]
  %v697 = vld [vmem:[%s1 + $0x13b8] sm:$0xff]
  %v698 = vld [vmem:[%s1 + $0x13c0] sm:$0xff]
  %v699 = vld [vmem:[%s1 + $0x13c8] sm:$0xff]
  %v700 = vld [vmem:[%s1 + $0x13d0] sm:$0xff]
  %v701 = vld [vmem:[%s1 + $0x13d8] sm:$0xff]
  %v702 = vld [vmem:[%s1 + $0x13e0] sm:$0xff]
  %v703 = vld [vmem:[%s1 + $0x13e8] sm:$0xff]
  %v704 = vld [vmem:[%s1 + $0x13f0] sm:$0xff]
  %v705 = vld [vmem:[%s1 + $0x13f8] sm:$0xff]
  %v706 = vld [vmem:[%s2] sm:$0x1]
  %v708 = vperm.slane %v706, 0
  %710 = vmatpush.msra.mxu0 %v81
  %711 = vmatpush.msra.mxu0 %v80
  %712 = vmatpush.msra.mxu0 %v79
  %713 = vmatpush.msra.mxu0 %v78
  %714 = vmatpush.msra.mxu0 %v77
  %715 = vmatpush.msra.mxu0 %v76
  %716 = vmatpush.msra.mxu0 %v75
  %717 = vmatpush.msra.mxu0 %v74
  %718 = vmatpush.msra.mxu0 %v73
  %719 = vmatpush.msra.mxu0 %v72
  %720 = vmatpush.msra.mxu0 %v71
  %721 = vmatpush.msra.mxu0 %v70
  %722 = vmatpush.msra.mxu0 %v69
  %723 = vmatpush.msra.mxu0 %v68
  %724 = vmatpush.msra.mxu0 %v67
  %725 = vmatpush.msra.mxu0 %v66
  %726 = vmatmul.f32.gmra.mxu0 %v26
  %v727 = vpop.f32.mrf.mxu0
  %v728 = vadd.f32 %v708, %v727
  %729 = vdwg.mxu0
  %730 = vmatpush.msra.mxu0 %v97
  %731 = vmatpush.msra.mxu0 %v96
  %732 = vmatpush.msra.mxu0 %v95
  %733 = vmatpush.msra.mxu0 %v94
  %734 = vmatpush.msra.mxu0 %v93
  %735 = vmatpush.msra.mxu0 %v92
  %736 = vmatpush.msra.mxu0 %v91
  %737 = vmatpush.msra.mxu0 %v90
  %738 = vmatpush.msra.mxu0 %v89
  %739 = vmatpush.msra.mxu0 %v88
  %740 = vmatpush.msra.mxu0 %v87
  %741 = vmatpush.msra.mxu0 %v86
  %742 = vmatpush.msra.mxu0 %v85
  %743 = vmatpush.msra.mxu0 %v84
  %744 = vmatpush.msra.mxu0 %v83
  %745 = vmatpush.msra.mxu0 %v82
  %746 = vmatmul.f32.gmra.mxu0 %v27
  %v747 = vpop.f32.mrf.mxu0
  %v748 = vadd.f32 %v728, %v747
  %749 = vdwg.mxu0
  %750 = vmatpush.msra.mxu0 %v113
  %751 = vmatpush.msra.mxu0 %v112
  %752 = vmatpush.msra.mxu0 %v111
  %753 = vmatpush.msra.mxu0 %v110
  %754 = vmatpush.msra.mxu0 %v109
  %755 = vmatpush.msra.mxu0 %v108
  %756 = vmatpush.msra.mxu0 %v107
  %757 = vmatpush.msra.mxu0 %v106
  %758 = vmatpush.msra.mxu0 %v105
  %759 = vmatpush.msra.mxu0 %v104
  %760 = vmatpush.msra.mxu0 %v103
  %761 = vmatpush.msra.mxu0 %v102
  %762 = vmatpush.msra.mxu0 %v101
  %763 = vmatpush.msra.mxu0 %v100
  %764 = vmatpush.msra.mxu0 %v99
  %765 = vmatpush.msra.mxu0 %v98
  %766 = vmatmul.f32.gmra.mxu0 %v28
  %v767 = vpop.f32.mrf.mxu0
  %v768 = vadd.f32 %v748, %v767
  %769 = vdwg.mxu0
  %770 = vmatpush.msra.mxu0 %v129
  %771 = vmatpush.msra.mxu0 %v128
  %772 = vmatpush.msra.mxu0 %v127
  %773 = vmatpush.msra.mxu0 %v126
  %774 = vmatpush.msra.mxu0 %v125
  %775 = vmatpush.msra.mxu0 %v124
  %776 = vmatpush.msra.mxu0 %v123
  %777 = vmatpush.msra.mxu0 %v122
  %778 = vmatpush.msra.mxu0 %v121
  %779 = vmatpush.msra.mxu0 %v120
  %780 = vmatpush.msra.mxu0 %v119
  %781 = vmatpush.msra.mxu0 %v118
  %782 = vmatpush.msra.mxu0 %v117
  %783 = vmatpush.msra.mxu0 %v116
  %784 = vmatpush.msra.mxu0 %v115
  %785 = vmatpush.msra.mxu0 %v114
  %786 = vmatmul.f32.gmra.mxu0 %v29
  %v787 = vpop.f32.mrf.mxu0
  %v788 = vadd.f32 %v768, %v787
  %789 = vdwg.mxu0
  %790 = vmatpush.msra.mxu0 %v145
  %791 = vmatpush.msra.mxu0 %v144
  %792 = vmatpush.msra.mxu0 %v143
  %793 = vmatpush.msra.mxu0 %v142
  %794 = vmatpush.msra.mxu0 %v141
  %795 = vmatpush.msra.mxu0 %v140
  %796 = vmatpush.msra.mxu0 %v139
  %797 = vmatpush.msra.mxu0 %v138
  %798 = vmatpush.msra.mxu0 %v137
  %799 = vmatpush.msra.mxu0 %v136
  %800 = vmatpush.msra.mxu0 %v135
  %801 = vmatpush.msra.mxu0 %v134
  %802 = vmatpush.msra.mxu0 %v133
  %803 = vmatpush.msra.mxu0 %v132
  %804 = vmatpush.msra.mxu0 %v131
  %805 = vmatpush.msra.mxu0 %v130
  %806 = vmatmul.f32.gmra.mxu0 %v30
  %v807 = vpop.f32.mrf.mxu0
  %v808 = vadd.f32 %v788, %v807
  %809 = vdwg.mxu0
  %810 = vmatpush.msra.mxu0 %v161
  %811 = vmatpush.msra.mxu0 %v160
  %812 = vmatpush.msra.mxu0 %v159
  %813 = vmatpush.msra.mxu0 %v158
  %814 = vmatpush.msra.mxu0 %v157
  %815 = vmatpush.msra.mxu0 %v156
  %816 = vmatpush.msra.mxu0 %v155
  %817 = vmatpush.msra.mxu0 %v154
  %818 = vmatpush.msra.mxu0 %v153
  %819 = vmatpush.msra.mxu0 %v152
  %820 = vmatpush.msra.mxu0 %v151
  %821 = vmatpush.msra.mxu0 %v150
  %822 = vmatpush.msra.mxu0 %v149
  %823 = vmatpush.msra.mxu0 %v148
  %824 = vmatpush.msra.mxu0 %v147
  %825 = vmatpush.msra.mxu0 %v146
  %826 = vmatmul.f32.gmra.mxu0 %v31
  %v827 = vpop.f32.mrf.mxu0
  %v828 = vadd.f32 %v808, %v827
  %829 = vdwg.mxu0
  %830 = vmatpush.msra.mxu0 %v177
  %831 = vmatpush.msra.mxu0 %v176
  %832 = vmatpush.msra.mxu0 %v175
  %833 = vmatpush.msra.mxu0 %v174
  %834 = vmatpush.msra.mxu0 %v173
  %835 = vmatpush.msra.mxu0 %v172
  %836 = vmatpush.msra.mxu0 %v171
  %837 = vmatpush.msra.mxu0 %v170
  %838 = vmatpush.msra.mxu0 %v169
  %839 = vmatpush.msra.mxu0 %v168
  %840 = vmatpush.msra.mxu0 %v167
  %841 = vmatpush.msra.mxu0 %v166
  %842 = vmatpush.msra.mxu0 %v165
  %843 = vmatpush.msra.mxu0 %v164
  %844 = vmatpush.msra.mxu0 %v163
  %845 = vmatpush.msra.mxu0 %v162
  %846 = vmatmul.f32.gmra.mxu0 %v32
  %v847 = vpop.f32.mrf.mxu0
  %v848 = vadd.f32 %v828, %v847
  %849 = vdwg.mxu0
  %850 = vmatpush.msra.mxu0 %v193
  %851 = vmatpush.msra.mxu0 %v192
  %852 = vmatpush.msra.mxu0 %v191
  %853 = vmatpush.msra.mxu0 %v190
  %854 = vmatpush.msra.mxu0 %v189
  %855 = vmatpush.msra.mxu0 %v188
  %856 = vmatpush.msra.mxu0 %v187
  %857 = vmatpush.msra.mxu0 %v186
  %858 = vmatpush.msra.mxu0 %v185
  %859 = vmatpush.msra.mxu0 %v184
  %860 = vmatpush.msra.mxu0 %v183
  %861 = vmatpush.msra.mxu0 %v182
  %862 = vmatpush.msra.mxu0 %v181
  %863 = vmatpush.msra.mxu0 %v180
  %864 = vmatpush.msra.mxu0 %v179
  %865 = vmatpush.msra.mxu0 %v178
  %866 = vmatmul.f32.gmra.mxu0 %v33
  %v867 = vpop.f32.mrf.mxu0
  %v868 = vadd.f32 %v848, %v867
  %869 = vdwg.mxu0
  %870 = vmatpush.msra.mxu0 %v209
  %871 = vmatpush.msra.mxu0 %v208
  %872 = vmatpush.msra.mxu0 %v207
  %873 = vmatpush.msra.mxu0 %v206
  %874 = vmatpush.msra.mxu0 %v205
  %875 = vmatpush.msra.mxu0 %v204
  %876 = vmatpush.msra.mxu0 %v203
  %877 = vmatpush.msra.mxu0 %v202
  %878 = vmatpush.msra.mxu0 %v201
  %879 = vmatpush.msra.mxu0 %v200
  %880 = vmatpush.msra.mxu0 %v199
  %881 = vmatpush.msra.mxu0 %v198
  %882 = vmatpush.msra.mxu0 %v197
  %883 = vmatpush.msra.mxu0 %v196
  %884 = vmatpush.msra.mxu0 %v195
  %885 = vmatpush.msra.mxu0 %v194
  %886 = vmatmul.f32.gmra.mxu0 %v34
  %v887 = vpop.f32.mrf.mxu0
  %v888 = vadd.f32 %v868, %v887
  %889 = vdwg.mxu0
  %890 = vmatpush.msra.mxu0 %v225
  %891 = vmatpush.msra.mxu0 %v224
  %892 = vmatpush.msra.mxu0 %v223
  %893 = vmatpush.msra.mxu0 %v222
  %894 = vmatpush.msra.mxu0 %v221
  %895 = vmatpush.msra.mxu0 %v220
  %896 = vmatpush.msra.mxu0 %v219
  %897 = vmatpush.msra.mxu0 %v218
  %898 = vmatpush.msra.mxu0 %v217
  %899 = vmatpush.msra.mxu0 %v216
  %900 = vmatpush.msra.mxu0 %v215
  %901 = vmatpush.msra.mxu0 %v214
  %902 = vmatpush.msra.mxu0 %v213
  %903 = vmatpush.msra.mxu0 %v212
  %904 = vmatpush.msra.mxu0 %v211
  %905 = vmatpush.msra.mxu0 %v210
  %906 = vmatmul.f32.gmra.mxu0 %v35
  %v907 = vpop.f32.mrf.mxu0
  %v908 = vadd.f32 %v888, %v907
  %909 = vdwg.mxu0
  %910 = vmatpush.msra.mxu0 %v241
  %911 = vmatpush.msra.mxu0 %v240
  %912 = vmatpush.msra.mxu0 %v239
  %913 = vmatpush.msra.mxu0 %v238
  %914 = vmatpush.msra.mxu0 %v237
  %915 = vmatpush.msra.mxu0 %v236
  %916 = vmatpush.msra.mxu0 %v235
  %917 = vmatpush.msra.mxu0 %v234
  %918 = vmatpush.msra.mxu0 %v233
  %919 = vmatpush.msra.mxu0 %v232
  %920 = vmatpush.msra.mxu0 %v231
  %921 = vmatpush.msra.mxu0 %v230
  %922 = vmatpush.msra.mxu0 %v229
  %923 = vmatpush.msra.mxu0 %v228
  %924 = vmatpush.msra.mxu0 %v227
  %925 = vmatpush.msra.mxu0 %v226
  %926 = vmatmul.f32.gmra.mxu0 %v36
  %v927 = vpop.f32.mrf.mxu0
  %v928 = vadd.f32 %v908, %v927
  %929 = vdwg.mxu0
  %930 = vmatpush.msra.mxu0 %v257
  %931 = vmatpush.msra.mxu0 %v256
  %932 = vmatpush.msra.mxu0 %v255
  %933 = vmatpush.msra.mxu0 %v254
  %934 = vmatpush.msra.mxu0 %v253
  %935 = vmatpush.msra.mxu0 %v252
  %936 = vmatpush.msra.mxu0 %v251
  %937 = vmatpush.msra.mxu0 %v250
  %938 = vmatpush.msra.mxu0 %v249
  %939 = vmatpush.msra.mxu0 %v248
  %940 = vmatpush.msra.mxu0 %v247
  %941 = vmatpush.msra.mxu0 %v246
  %942 = vmatpush.msra.mxu0 %v245
  %943 = vmatpush.msra.mxu0 %v244
  %944 = vmatpush.msra.mxu0 %v243
  %945 = vmatpush.msra.mxu0 %v242
  %946 = vmatmul.f32.gmra.mxu0 %v37
  %v947 = vpop.f32.mrf.mxu0
  %v948 = vadd.f32 %v928, %v947
  %949 = vdwg.mxu0
  %950 = vmatpush.msra.mxu0 %v273
  %951 = vmatpush.msra.mxu0 %v272
  %952 = vmatpush.msra.mxu0 %v271
  %953 = vmatpush.msra.mxu0 %v270
  %954 = vmatpush.msra.mxu0 %v269
  %955 = vmatpush.msra.mxu0 %v268
  %956 = vmatpush.msra.mxu0 %v267
  %957 = vmatpush.msra.mxu0 %v266
  %958 = vmatpush.msra.mxu0 %v265
  %959 = vmatpush.msra.mxu0 %v264
  %960 = vmatpush.msra.mxu0 %v263
  %961 = vmatpush.msra.mxu0 %v262
  %962 = vmatpush.msra.mxu0 %v261
  %963 = vmatpush.msra.mxu0 %v260
  %964 = vmatpush.msra.mxu0 %v259
  %965 = vmatpush.msra.mxu0 %v258
  %966 = vmatmul.f32.gmra.mxu0 %v38
  %v967 = vpop.f32.mrf.mxu0
  %v968 = vadd.f32 %v948, %v967
  %969 = vdwg.mxu0
  %970 = vmatpush.msra.mxu0 %v289
  %971 = vmatpush.msra.mxu0 %v288
  %972 = vmatpush.msra.mxu0 %v287
  %973 = vmatpush.msra.mxu0 %v286
  %974 = vmatpush.msra.mxu0 %v285
  %975 = vmatpush.msra.mxu0 %v284
  %976 = vmatpush.msra.mxu0 %v283
  %977 = vmatpush.msra.mxu0 %v282
  %978 = vmatpush.msra.mxu0 %v281
  %979 = vmatpush.msra.mxu0 %v280
  %980 = vmatpush.msra.mxu0 %v279
  %981 = vmatpush.msra.mxu0 %v278
  %982 = vmatpush.msra.mxu0 %v277
  %983 = vmatpush.msra.mxu0 %v276
  %984 = vmatpush.msra.mxu0 %v275
  %985 = vmatpush.msra.mxu0 %v274
  %986 = vmatmul.f32.gmra.mxu0 %v39
  %v987 = vpop.f32.mrf.mxu0
  %v988 = vadd.f32 %v968, %v987
  %989 = vdwg.mxu0
  %990 = vmatpush.msra.mxu0 %v305
  %991 = vmatpush.msra.mxu0 %v304
  %992 = vmatpush.msra.mxu0 %v303
  %993 = vmatpush.msra.mxu0 %v302
  %994 = vmatpush.msra.mxu0 %v301
  %995 = vmatpush.msra.mxu0 %v300
  %996 = vmatpush.msra.mxu0 %v299
  %997 = vmatpush.msra.mxu0 %v298
  %998 = vmatpush.msra.mxu0 %v297
  %999 = vmatpush.msra.mxu0 %v296
  %1000 = vmatpush.msra.mxu0 %v295
  %1001 = vmatpush.msra.mxu0 %v294
  %1002 = vmatpush.msra.mxu0 %v293
  %1003 = vmatpush.msra.mxu0 %v292
  %1004 = vmatpush.msra.mxu0 %v291
  %1005 = vmatpush.msra.mxu0 %v290
  %1006 = vmatmul.f32.gmra.mxu0 %v40
  %v1007 = vpop.f32.mrf.mxu0
  %v1008 = vadd.f32 %v988, %v1007
  %1009 = vdwg.mxu0
  %1010 = vmatpush.msra.mxu0 %v321
  %1011 = vmatpush.msra.mxu0 %v320
  %1012 = vmatpush.msra.mxu0 %v319
  %1013 = vmatpush.msra.mxu0 %v318
  %1014 = vmatpush.msra.mxu0 %v317
  %1015 = vmatpush.msra.mxu0 %v316
  %1016 = vmatpush.msra.mxu0 %v315
  %1017 = vmatpush.msra.mxu0 %v314
  %1018 = vmatpush.msra.mxu0 %v313
  %1019 = vmatpush.msra.mxu0 %v312
  %1020 = vmatpush.msra.mxu0 %v311
  %1021 = vmatpush.msra.mxu0 %v310
  %1022 = vmatpush.msra.mxu0 %v309
  %1023 = vmatpush.msra.mxu0 %v308
  %1024 = vmatpush.msra.mxu0 %v307
  %1025 = vmatpush.msra.mxu0 %v306
  %1026 = vmatmul.f32.gmra.mxu0 %v41
  %v1027 = vpop.f32.mrf.mxu0
  %v1028 = vadd.f32 %v1008, %v1027
  %1029 = vdwg.mxu0
  %1030 = vmatpush.msra.mxu0 %v337
  %1031 = vmatpush.msra.mxu0 %v336
  %1032 = vmatpush.msra.mxu0 %v335
  %1033 = vmatpush.msra.mxu0 %v334
  %1034 = vmatpush.msra.mxu0 %v333
  %1035 = vmatpush.msra.mxu0 %v332
  %1036 = vmatpush.msra.mxu0 %v331
  %1037 = vmatpush.msra.mxu0 %v330
  %1038 = vmatpush.msra.mxu0 %v329
  %1039 = vmatpush.msra.mxu0 %v328
  %1040 = vmatpush.msra.mxu0 %v327
  %1041 = vmatpush.msra.mxu0 %v326
  %1042 = vmatpush.msra.mxu0 %v325
  %1043 = vmatpush.msra.mxu0 %v324
  %1044 = vmatpush.msra.mxu0 %v323
  %1045 = vmatpush.msra.mxu0 %v322
  %1046 = vmatmul.f32.gmra.mxu0 %v42
  %v1047 = vpop.f32.mrf.mxu0
  %v1048 = vadd.f32 %v1028, %v1047
  %1049 = vdwg.mxu0
  %1050 = vmatpush.msra.mxu0 %v353
  %1051 = vmatpush.msra.mxu0 %v352
  %1052 = vmatpush.msra.mxu0 %v351
  %1053 = vmatpush.msra.mxu0 %v350
  %1054 = vmatpush.msra.mxu0 %v349
  %1055 = vmatpush.msra.mxu0 %v348
  %1056 = vmatpush.msra.mxu0 %v347
  %1057 = vmatpush.msra.mxu0 %v346
  %1058 = vmatpush.msra.mxu0 %v345
  %1059 = vmatpush.msra.mxu0 %v344
  %1060 = vmatpush.msra.mxu0 %v343
  %1061 = vmatpush.msra.mxu0 %v342
  %1062 = vmatpush.msra.mxu0 %v341
  %1063 = vmatpush.msra.mxu0 %v340
  %1064 = vmatpush.msra.mxu0 %v339
  %1065 = vmatpush.msra.mxu0 %v338
  %1066 = vmatmul.f32.gmra.mxu0 %v43
  %v1067 = vpop.f32.mrf.mxu0
  %v1068 = vadd.f32 %v1048, %v1067
  %1069 = vdwg.mxu0
  %1070 = vmatpush.msra.mxu0 %v369
  %1071 = vmatpush.msra.mxu0 %v368
  %1072 = vmatpush.msra.mxu0 %v367
  %1073 = vmatpush.msra.mxu0 %v366
  %1074 = vmatpush.msra.mxu0 %v365
  %1075 = vmatpush.msra.mxu0 %v364
  %1076 = vmatpush.msra.mxu0 %v363
  %1077 = vmatpush.msra.mxu0 %v362
  %1078 = vmatpush.msra.mxu0 %v361
  %1079 = vmatpush.msra.mxu0 %v360
  %1080 = vmatpush.msra.mxu0 %v359
  %1081 = vmatpush.msra.mxu0 %v358
  %1082 = vmatpush.msra.mxu0 %v357
  %1083 = vmatpush.msra.mxu0 %v356
  %1084 = vmatpush.msra.mxu0 %v355
  %1085 = vmatpush.msra.mxu0 %v354
  %1086 = vmatmul.f32.gmra.mxu0 %v44
  %v1087 = vpop.f32.mrf.mxu0
  %v1088 = vadd.f32 %v1068, %v1087
  %1089 = vdwg.mxu0
  %1090 = vmatpush.msra.mxu0 %v385
  %1091 = vmatpush.msra.mxu0 %v384
  %1092 = vmatpush.msra.mxu0 %v383
  %1093 = vmatpush.msra.mxu0 %v382
  %1094 = vmatpush.msra.mxu0 %v381
  %1095 = vmatpush.msra.mxu0 %v380
  %1096 = vmatpush.msra.mxu0 %v379
  %1097 = vmatpush.msra.mxu0 %v378
  %1098 = vmatpush.msra.mxu0 %v377
  %1099 = vmatpush.msra.mxu0 %v376
  %1100 = vmatpush.msra.mxu0 %v375
  %1101 = vmatpush.msra.mxu0 %v374
  %1102 = vmatpush.msra.mxu0 %v373
  %1103 = vmatpush.msra.mxu0 %v372
  %1104 = vmatpush.msra.mxu0 %v371
  %1105 = vmatpush.msra.mxu0 %v370
  %1106 = vmatmul.f32.gmra.mxu0 %v45
  %v1107 = vpop.f32.mrf.mxu0
  %v1108 = vadd.f32 %v1088, %v1107
  %1109 = vdwg.mxu0
  %1110 = vmatpush.msra.mxu0 %v401
  %1111 = vmatpush.msra.mxu0 %v400
  %1112 = vmatpush.msra.mxu0 %v399
  %1113 = vmatpush.msra.mxu0 %v398
  %1114 = vmatpush.msra.mxu0 %v397
  %1115 = vmatpush.msra.mxu0 %v396
  %1116 = vmatpush.msra.mxu0 %v395
  %1117 = vmatpush.msra.mxu0 %v394
  %1118 = vmatpush.msra.mxu0 %v393
  %1119 = vmatpush.msra.mxu0 %v392
  %1120 = vmatpush.msra.mxu0 %v391
  %1121 = vmatpush.msra.mxu0 %v390
  %1122 = vmatpush.msra.mxu0 %v389
  %1123 = vmatpush.msra.mxu0 %v388
  %1124 = vmatpush.msra.mxu0 %v387
  %1125 = vmatpush.msra.mxu0 %v386
  %1126 = vmatmul.f32.gmra.mxu0 %v46
  %v1127 = vpop.f32.mrf.mxu0
  %v1128 = vadd.f32 %v1108, %v1127
  %1129 = vdwg.mxu0
  %1130 = vmatpush.msra.mxu0 %v417
  %1131 = vmatpush.msra.mxu0 %v416
  %1132 = vmatpush.msra.mxu0 %v415
  %1133 = vmatpush.msra.mxu0 %v414
  %1134 = vmatpush.msra.mxu0 %v413
  %1135 = vmatpush.msra.mxu0 %v412
  %1136 = vmatpush.msra.mxu0 %v411
  %1137 = vmatpush.msra.mxu0 %v410
  %1138 = vmatpush.msra.mxu0 %v409
  %1139 = vmatpush.msra.mxu0 %v408
  %1140 = vmatpush.msra.mxu0 %v407
  %1141 = vmatpush.msra.mxu0 %v406
  %1142 = vmatpush.msra.mxu0 %v405
  %1143 = vmatpush.msra.mxu0 %v404
  %1144 = vmatpush.msra.mxu0 %v403
  %1145 = vmatpush.msra.mxu0 %v402
  %1146 = vmatmul.f32.gmra.mxu0 %v47
  %v1147 = vpop.f32.mrf.mxu0
  %v1148 = vadd.f32 %v1128, %v1147
  %1149 = vdwg.mxu0
  %1150 = vmatpush.msra.mxu0 %v433
  %1151 = vmatpush.msra.mxu0 %v432
  %1152 = vmatpush.msra.mxu0 %v431
  %1153 = vmatpush.msra.mxu0 %v430
  %1154 = vmatpush.msra.mxu0 %v429
  %1155 = vmatpush.msra.mxu0 %v428
  %1156 = vmatpush.msra.mxu0 %v427
  %1157 = vmatpush.msra.mxu0 %v426
  %1158 = vmatpush.msra.mxu0 %v425
  %1159 = vmatpush.msra.mxu0 %v424
  %1160 = vmatpush.msra.mxu0 %v423
  %1161 = vmatpush.msra.mxu0 %v422
  %1162 = vmatpush.msra.mxu0 %v421
  %1163 = vmatpush.msra.mxu0 %v420
  %1164 = vmatpush.msra.mxu0 %v419
  %1165 = vmatpush.msra.mxu0 %v418
  %1166 = vmatmul.f32.gmra.mxu0 %v48
  %v1167 = vpop.f32.mrf.mxu0
  %v1168 = vadd.f32 %v1148, %v1167
  %1169 = vdwg.mxu0
  %1170 = vmatpush.msra.mxu0 %v449
  %1171 = vmatpush.msra.mxu0 %v448
  %1172 = vmatpush.msra.mxu0 %v447
  %1173 = vmatpush.msra.mxu0 %v446
  %1174 = vmatpush.msra.mxu0 %v445
  %1175 = vmatpush.msra.mxu0 %v444
  %1176 = vmatpush.msra.mxu0 %v443
  %1177 = vmatpush.msra.mxu0 %v442
  %1178 = vmatpush.msra.mxu0 %v441
  %1179 = vmatpush.msra.mxu0 %v440
  %1180 = vmatpush.msra.mxu0 %v439
  %1181 = vmatpush.msra.mxu0 %v438
  %1182 = vmatpush.msra.mxu0 %v437
  %1183 = vmatpush.msra.mxu0 %v436
  %1184 = vmatpush.msra.mxu0 %v435
  %1185 = vmatpush.msra.mxu0 %v434
  %1186 = vmatmul.f32.gmra.mxu0 %v49
  %v1187 = vpop.f32.mrf.mxu0
  %v1188 = vadd.f32 %v1168, %v1187
  %1189 = vdwg.mxu0
  %1190 = vmatpush.msra.mxu0 %v465
  %1191 = vmatpush.msra.mxu0 %v464
  %1192 = vmatpush.msra.mxu0 %v463
  %1193 = vmatpush.msra.mxu0 %v462
  %1194 = vmatpush.msra.mxu0 %v461
  %1195 = vmatpush.msra.mxu0 %v460
  %1196 = vmatpush.msra.mxu0 %v459
  %1197 = vmatpush.msra.mxu0 %v458
  %1198 = vmatpush.msra.mxu0 %v457
  %1199 = vmatpush.msra.mxu0 %v456
  %1200 = vmatpush.msra.mxu0 %v455
  %1201 = vmatpush.msra.mxu0 %v454
  %1202 = vmatpush.msra.mxu0 %v453
  %1203 = vmatpush.msra.mxu0 %v452
  %1204 = vmatpush.msra.mxu0 %v451
  %1205 = vmatpush.msra.mxu0 %v450
  %1206 = vmatmul.f32.gmra.mxu0 %v50
  %v1207 = vpop.f32.mrf.mxu0
  %v1208 = vadd.f32 %v1188, %v1207
  %1209 = vdwg.mxu0
  %1210 = vmatpush.msra.mxu0 %v481
  %1211 = vmatpush.msra.mxu0 %v480
  %1212 = vmatpush.msra.mxu0 %v479
  %1213 = vmatpush.msra.mxu0 %v478
  %1214 = vmatpush.msra.mxu0 %v477
  %1215 = vmatpush.msra.mxu0 %v476
  %1216 = vmatpush.msra.mxu0 %v475
  %1217 = vmatpush.msra.mxu0 %v474
  %1218 = vmatpush.msra.mxu0 %v473
  %1219 = vmatpush.msra.mxu0 %v472
  %1220 = vmatpush.msra.mxu0 %v471
  %1221 = vmatpush.msra.mxu0 %v470
  %1222 = vmatpush.msra.mxu0 %v469
  %1223 = vmatpush.msra.mxu0 %v468
  %1224 = vmatpush.msra.mxu0 %v467
  %1225 = vmatpush.msra.mxu0 %v466
  %1226 = vmatmul.f32.gmra.mxu0 %v51
  %v1227 = vpop.f32.mrf.mxu0
  %v1228 = vadd.f32 %v1208, %v1227
  %1229 = vdwg.mxu0
  %1230 = vmatpush.msra.mxu0 %v497
  %1231 = vmatpush.msra.mxu0 %v496
  %1232 = vmatpush.msra.mxu0 %v495
  %1233 = vmatpush.msra.mxu0 %v494
  %1234 = vmatpush.msra.mxu0 %v493
  %1235 = vmatpush.msra.mxu0 %v492
  %1236 = vmatpush.msra.mxu0 %v491
  %1237 = vmatpush.msra.mxu0 %v490
  %1238 = vmatpush.msra.mxu0 %v489
  %1239 = vmatpush.msra.mxu0 %v488
  %1240 = vmatpush.msra.mxu0 %v487
  %1241 = vmatpush.msra.mxu0 %v486
  %1242 = vmatpush.msra.mxu0 %v485
  %1243 = vmatpush.msra.mxu0 %v484
  %1244 = vmatpush.msra.mxu0 %v483
  %1245 = vmatpush.msra.mxu0 %v482
  %1246 = vmatmul.f32.gmra.mxu0 %v52
  %v1247 = vpop.f32.mrf.mxu0
  %v1248 = vadd.f32 %v1228, %v1247
  %1249 = vdwg.mxu0
  %1250 = vmatpush.msra.mxu0 %v513
  %1251 = vmatpush.msra.mxu0 %v512
  %1252 = vmatpush.msra.mxu0 %v511
  %1253 = vmatpush.msra.mxu0 %v510
  %1254 = vmatpush.msra.mxu0 %v509
  %1255 = vmatpush.msra.mxu0 %v508
  %1256 = vmatpush.msra.mxu0 %v507
  %1257 = vmatpush.msra.mxu0 %v506
  %1258 = vmatpush.msra.mxu0 %v505
  %1259 = vmatpush.msra.mxu0 %v504
  %1260 = vmatpush.msra.mxu0 %v503
  %1261 = vmatpush.msra.mxu0 %v502
  %1262 = vmatpush.msra.mxu0 %v501
  %1263 = vmatpush.msra.mxu0 %v500
  %1264 = vmatpush.msra.mxu0 %v499
  %1265 = vmatpush.msra.mxu0 %v498
  %1266 = vmatmul.f32.gmra.mxu0 %v53
  %v1267 = vpop.f32.mrf.mxu0
  %v1268 = vadd.f32 %v1248, %v1267
  %1269 = vdwg.mxu0
  %1270 = vmatpush.msra.mxu0 %v529
  %1271 = vmatpush.msra.mxu0 %v528
  %1272 = vmatpush.msra.mxu0 %v527
  %1273 = vmatpush.msra.mxu0 %v526
  %1274 = vmatpush.msra.mxu0 %v525
  %1275 = vmatpush.msra.mxu0 %v524
  %1276 = vmatpush.msra.mxu0 %v523
  %1277 = vmatpush.msra.mxu0 %v522
  %1278 = vmatpush.msra.mxu0 %v521
  %1279 = vmatpush.msra.mxu0 %v520
  %1280 = vmatpush.msra.mxu0 %v519
  %1281 = vmatpush.msra.mxu0 %v518
  %1282 = vmatpush.msra.mxu0 %v517
  %1283 = vmatpush.msra.mxu0 %v516
  %1284 = vmatpush.msra.mxu0 %v515
  %1285 = vmatpush.msra.mxu0 %v514
  %1286 = vmatmul.f32.gmra.mxu0 %v54
  %v1287 = vpop.f32.mrf.mxu0
  %v1288 = vadd.f32 %v1268, %v1287
  %1289 = vdwg.mxu0
  %1290 = vmatpush.msra.mxu0 %v545
  %1291 = vmatpush.msra.mxu0 %v544
  %1292 = vmatpush.msra.mxu0 %v543
  %1293 = vmatpush.msra.mxu0 %v542
  %1294 = vmatpush.msra.mxu0 %v541
  %1295 = vmatpush.msra.mxu0 %v540
  %1296 = vmatpush.msra.mxu0 %v539
  %1297 = vmatpush.msra.mxu0 %v538
  %1298 = vmatpush.msra.mxu0 %v537
  %1299 = vmatpush.msra.mxu0 %v536
  %1300 = vmatpush.msra.mxu0 %v535
  %1301 = vmatpush.msra.mxu0 %v534
  %1302 = vmatpush.msra.mxu0 %v533
  %1303 = vmatpush.msra.mxu0 %v532
  %1304 = vmatpush.msra.mxu0 %v531
  %1305 = vmatpush.msra.mxu0 %v530
  %1306 = vmatmul.f32.gmra.mxu0 %v55
  %v1307 = vpop.f32.mrf.mxu0
  %v1308 = vadd.f32 %v1288, %v1307
  %1309 = vdwg.mxu0
  %1310 = vmatpush.msra.mxu0 %v561
  %1311 = vmatpush.msra.mxu0 %v560
  %1312 = vmatpush.msra.mxu0 %v559
  %1313 = vmatpush.msra.mxu0 %v558
  %1314 = vmatpush.msra.mxu0 %v557
  %1315 = vmatpush.msra.mxu0 %v556
  %1316 = vmatpush.msra.mxu0 %v555
  %1317 = vmatpush.msra.mxu0 %v554
  %1318 = vmatpush.msra.mxu0 %v553
  %1319 = vmatpush.msra.mxu0 %v552
  %1320 = vmatpush.msra.mxu0 %v551
  %1321 = vmatpush.msra.mxu0 %v550
  %1322 = vmatpush.msra.mxu0 %v549
  %1323 = vmatpush.msra.mxu0 %v548
  %1324 = vmatpush.msra.mxu0 %v547
  %1325 = vmatpush.msra.mxu0 %v546
  %1326 = vmatmul.f32.gmra.mxu0 %v56
  %v1327 = vpop.f32.mrf.mxu0
  %v1328 = vadd.f32 %v1308, %v1327
  %1329 = vdwg.mxu0
  %1330 = vmatpush.msra.mxu0 %v577
  %1331 = vmatpush.msra.mxu0 %v576
  %1332 = vmatpush.msra.mxu0 %v575
  %1333 = vmatpush.msra.mxu0 %v574
  %1334 = vmatpush.msra.mxu0 %v573
  %1335 = vmatpush.msra.mxu0 %v572
  %1336 = vmatpush.msra.mxu0 %v571
  %1337 = vmatpush.msra.mxu0 %v570
  %1338 = vmatpush.msra.mxu0 %v569
  %1339 = vmatpush.msra.mxu0 %v568
  %1340 = vmatpush.msra.mxu0 %v567
  %1341 = vmatpush.msra.mxu0 %v566
  %1342 = vmatpush.msra.mxu0 %v565
  %1343 = vmatpush.msra.mxu0 %v564
  %1344 = vmatpush.msra.mxu0 %v563
  %1345 = vmatpush.msra.mxu0 %v562
  %1346 = vmatmul.f32.gmra.mxu0 %v57
  %v1347 = vpop.f32.mrf.mxu0
  %v1348 = vadd.f32 %v1328, %v1347
  %1349 = vdwg.mxu0
  %1350 = vmatpush.msra.mxu0 %v593
  %1351 = vmatpush.msra.mxu0 %v592
  %1352 = vmatpush.msra.mxu0 %v591
  %1353 = vmatpush.msra.mxu0 %v590
  %1354 = vmatpush.msra.mxu0 %v589
  %1355 = vmatpush.msra.mxu0 %v588
  %1356 = vmatpush.msra.mxu0 %v587
  %1357 = vmatpush.msra.mxu0 %v586
  %1358 = vmatpush.msra.mxu0 %v585
  %1359 = vmatpush.msra.mxu0 %v584
  %1360 = vmatpush.msra.mxu0 %v583
  %1361 = vmatpush.msra.mxu0 %v582
  %1362 = vmatpush.msra.mxu0 %v581
  %1363 = vmatpush.msra.mxu0 %v580
  %1364 = vmatpush.msra.mxu0 %v579
  %1365 = vmatpush.msra.mxu0 %v578
  %1366 = vmatmul.f32.gmra.mxu0 %v58
  %v1367 = vpop.f32.mrf.mxu0
  %v1368 = vadd.f32 %v1348, %v1367
  %1369 = vdwg.mxu0
  %1370 = vmatpush.msra.mxu0 %v609
  %1371 = vmatpush.msra.mxu0 %v608
  %1372 = vmatpush.msra.mxu0 %v607
  %1373 = vmatpush.msra.mxu0 %v606
  %1374 = vmatpush.msra.mxu0 %v605
  %1375 = vmatpush.msra.mxu0 %v604
  %1376 = vmatpush.msra.mxu0 %v603
  %1377 = vmatpush.msra.mxu0 %v602
  %1378 = vmatpush.msra.mxu0 %v601
  %1379 = vmatpush.msra.mxu0 %v600
  %1380 = vmatpush.msra.mxu0 %v599
  %1381 = vmatpush.msra.mxu0 %v598
  %1382 = vmatpush.msra.mxu0 %v597
  %1383 = vmatpush.msra.mxu0 %v596
  %1384 = vmatpush.msra.mxu0 %v595
  %1385 = vmatpush.msra.mxu0 %v594
  %1386 = vmatmul.f32.gmra.mxu0 %v59
  %v1387 = vpop.f32.mrf.mxu0
  %v1388 = vadd.f32 %v1368, %v1387
  %1389 = vdwg.mxu0
  %1390 = vmatpush.msra.mxu0 %v625
  %1391 = vmatpush.msra.mxu0 %v624
  %1392 = vmatpush.msra.mxu0 %v623
  %1393 = vmatpush.msra.mxu0 %v622
  %1394 = vmatpush.msra.mxu0 %v621
  %1395 = vmatpush.msra.mxu0 %v620
  %1396 = vmatpush.msra.mxu0 %v619
  %1397 = vmatpush.msra.mxu0 %v618
  %1398 = vmatpush.msra.mxu0 %v617
  %1399 = vmatpush.msra.mxu0 %v616
  %1400 = vmatpush.msra.mxu0 %v615
  %1401 = vmatpush.msra.mxu0 %v614
  %1402 = vmatpush.msra.mxu0 %v613
  %1403 = vmatpush.msra.mxu0 %v612
  %1404 = vmatpush.msra.mxu0 %v611
  %1405 = vmatpush.msra.mxu0 %v610
  %1406 = vmatmul.f32.gmra.mxu0 %v60
  %v1407 = vpop.f32.mrf.mxu0
  %v1408 = vadd.f32 %v1388, %v1407
  %1409 = vdwg.mxu0
  %1410 = vmatpush.msra.mxu0 %v641
  %1411 = vmatpush.msra.mxu0 %v640
  %1412 = vmatpush.msra.mxu0 %v639
  %1413 = vmatpush.msra.mxu0 %v638
  %1414 = vmatpush.msra.mxu0 %v637
  %1415 = vmatpush.msra.mxu0 %v636
  %1416 = vmatpush.msra.mxu0 %v635
  %1417 = vmatpush.msra.mxu0 %v634
  %1418 = vmatpush.msra.mxu0 %v633
  %1419 = vmatpush.msra.mxu0 %v632
  %1420 = vmatpush.msra.mxu0 %v631
  %1421 = vmatpush.msra.mxu0 %v630
  %1422 = vmatpush.msra.mxu0 %v629
  %1423 = vmatpush.msra.mxu0 %v628
  %1424 = vmatpush.msra.mxu0 %v627
  %1425 = vmatpush.msra.mxu0 %v626
  %1426 = vmatmul.f32.gmra.mxu0 %v61
  %v1427 = vpop.f32.mrf.mxu0
  %v1428 = vadd.f32 %v1408, %v1427
  %1429 = vdwg.mxu0
  %1430 = vmatpush.msra.mxu0 %v657
  %1431 = vmatpush.msra.mxu0 %v656
  %1432 = vmatpush.msra.mxu0 %v655
  %1433 = vmatpush.msra.mxu0 %v654
  %1434 = vmatpush.msra.mxu0 %v653
  %1435 = vmatpush.msra.mxu0 %v652
  %1436 = vmatpush.msra.mxu0 %v651
  %1437 = vmatpush.msra.mxu0 %v650
  %1438 = vmatpush.msra.mxu0 %v649
  %1439 = vmatpush.msra.mxu0 %v648
  %1440 = vmatpush.msra.mxu0 %v647
  %1441 = vmatpush.msra.mxu0 %v646
  %1442 = vmatpush.msra.mxu0 %v645
  %1443 = vmatpush.msra.mxu0 %v644
  %1444 = vmatpush.msra.mxu0 %v643
  %1445 = vmatpush.msra.mxu0 %v642
  %1446 = vmatmul.f32.gmra.mxu0 %v62
  %v1447 = vpop.f32.mrf.mxu0
  %v1448 = vadd.f32 %v1428, %v1447
  %1449 = vdwg.mxu0
  %1450 = vmatpush.msra.mxu0 %v673
  %1451 = vmatpush.msra.mxu0 %v672
  %1452 = vmatpush.msra.mxu0 %v671
  %1453 = vmatpush.msra.mxu0 %v670
  %1454 = vmatpush.msra.mxu0 %v669
  %1455 = vmatpush.msra.mxu0 %v668
  %1456 = vmatpush.msra.mxu0 %v667
  %1457 = vmatpush.msra.mxu0 %v666
  %1458 = vmatpush.msra.mxu0 %v665
  %1459 = vmatpush.msra.mxu0 %v664
  %1460 = vmatpush.msra.mxu0 %v663
  %1461 = vmatpush.msra.mxu0 %v662
  %1462 = vmatpush.msra.mxu0 %v661
  %1463 = vmatpush.msra.mxu0 %v660
  %1464 = vmatpush.msra.mxu0 %v659
  %1465 = vmatpush.msra.mxu0 %v658
  %1466 = vmatmul.f32.gmra.mxu0 %v63
  %v1467 = vpop.f32.mrf.mxu0
  %v1468 = vadd.f32 %v1448, %v1467
  %1469 = vdwg.mxu0
  %1470 = vmatpush.msra.mxu0 %v689
  %1471 = vmatpush.msra.mxu0 %v688
  %1472 = vmatpush.msra.mxu0 %v687
  %1473 = vmatpush.msra.mxu0 %v686
  %1474 = vmatpush.msra.mxu0 %v685
  %1475 = vmatpush.msra.mxu0 %v684
  %1476 = vmatpush.msra.mxu0 %v683
  %1477 = vmatpush.msra.mxu0 %v682
  %1478 = vmatpush.msra.mxu0 %v681
  %1479 = vmatpush.msra.mxu0 %v680
  %1480 = vmatpush.msra.mxu0 %v679
  %1481 = vmatpush.msra.mxu0 %v678
  %1482 = vmatpush.msra.mxu0 %v677
  %1483 = vmatpush.msra.mxu0 %v676
  %1484 = vmatpush.msra.mxu0 %v675
  %1485 = vmatpush.msra.mxu0 %v674
  %1486 = vmatmul.f32.gmra.mxu0 %v64
  %v1487 = vpop.f32.mrf.mxu0
  %v1488 = vadd.f32 %v1468, %v1487
  %1489 = vdwg.mxu0
  %1490 = vmatpush.msra.mxu0 %v705
  %1491 = vmatpush.msra.mxu0 %v704
  %1492 = vmatpush.msra.mxu0 %v703
  %1493 = vmatpush.msra.mxu0 %v702
  %1494 = vmatpush.msra.mxu0 %v701
  %1495 = vmatpush.msra.mxu0 %v700
  %1496 = vmatpush.msra.mxu0 %v699
  %1497 = vmatpush.msra.mxu0 %v698
  %1498 = vmatpush.msra.mxu0 %v697
  %1499 = vmatpush.msra.mxu0 %v696
  %1500 = vmatpush.msra.mxu0 %v695
  %1501 = vmatpush.msra.mxu0 %v694
  %1502 = vmatpush.msra.mxu0 %v693
  %1503 = vmatpush.msra.mxu0 %v692
  %1504 = vmatpush.msra.mxu0 %v691
  %1505 = vmatpush.msra.mxu0 %v690
  %1506 = vmatmul.f32.gmra.mxu0 %v65
  %v1507 = vpop.f32.mrf.mxu0
  %v1508 = vadd.f32 %v1488, %v1507
  %1509 = vdwg.mxu0
  %v1510 = vmax.f32 %v1508, 0.0
  %v1511 = vld [vmem:[%s3] sm:$0xff]
  %v1512 = vld [vmem:[%s3 + $0x8] sm:$0xff]
  %v1513 = vld [vmem:[%s3 + $0x10] sm:$0xff]
  %v1514 = vld [vmem:[%s3 + $0x18] sm:$0xff]
  %v1515 = vld [vmem:[%s3 + $0x20] sm:$0xff]
  %v1516 = vld [vmem:[%s3 + $0x28] sm:$0xff]
  %v1517 = vld [vmem:[%s3 + $0x30] sm:$0xff]
  %v1518 = vld [vmem:[%s3 + $0x38] sm:$0xff]
  %v1519 = vld [vmem:[%s3 + $0x40] sm:$0xff]
  %v1520 = vld [vmem:[%s3 + $0x48] sm:$0xff]
  %v1521 = vld [vmem:[%s3 + $0x50] sm:$0xff]
  %v1522 = vld [vmem:[%s3 + $0x58] sm:$0xff]
  %v1523 = vld [vmem:[%s3 + $0x60] sm:$0xff]
  %v1524 = vld [vmem:[%s3 + $0x68] sm:$0xff]
  %v1525 = vld [vmem:[%s3 + $0x70] sm:$0xff]
  %v1526 = vld [vmem:[%s3 + $0x78] sm:$0xff]
  %v1527 = vld [vmem:[%s4] sm:$0x1]
  %v1529 = vperm.slane %v1527, 0
  %1531 = vmatpush.msra.mxu0 %v1526
  %1532 = vmatpush.msra.mxu0 %v1525
  %1533 = vmatpush.msra.mxu0 %v1524
  %1534 = vmatpush.msra.mxu0 %v1523
  %1535 = vmatpush.msra.mxu0 %v1522
  %1536 = vmatpush.msra.mxu0 %v1521
  %1537 = vmatpush.msra.mxu0 %v1520
  %1538 = vmatpush.msra.mxu0 %v1519
  %1539 = vmatpush.msra.mxu0 %v1518
  %1540 = vmatpush.msra.mxu0 %v1517
  %1541 = vmatpush.msra.mxu0 %v1516
  %1542 = vmatpush.msra.mxu0 %v1515
  %1543 = vmatpush.msra.mxu0 %v1514
  %1544 = vmatpush.msra.mxu0 %v1513
  %1545 = vmatpush.msra.mxu0 %v1512
  %1546 = vmatpush.msra.mxu0 %v1511
  %1547 = vmatmul.f32.gmra.mxu0 %v1510
  %v1548 = vpop.f32.mrf.mxu0
  %v1549 = vadd.f32 %v1529, %v1548
  %1550 = vdwg.mxu0
  %v1551 = vmax.f32 %v1549, 0.0
  %v1552 = vld [vmem:[%s5] sm:$0xff]
  %v1553 = vld [vmem:[%s5 + $0x8] sm:$0xff]
  %v1554 = vld [vmem:[%s5 + $0x10] sm:$0xff]
  %v1555 = vld [vmem:[%s5 + $0x18] sm:$0xff]
  %v1556 = vld [vmem:[%s5 + $0x20] sm:$0xff]
  %v1557 = vld [vmem:[%s5 + $0x28] sm:$0xff]
  %v1558 = vld [vmem:[%s5 + $0x30] sm:$0xff]
  %v1559 = vld [vmem:[%s5 + $0x38] sm:$0xff]
  %v1560 = vld [vmem:[%s5 + $0x40] sm:$0xff]
  %v1561 = vld [vmem:[%s5 + $0x48] sm:$0xff]
  %v1562 = vld [vmem:[%s5 + $0x50] sm:$0xff]
  %v1563 = vld [vmem:[%s5 + $0x58] sm:$0xff]
  %v1564 = vld [vmem:[%s5 + $0x60] sm:$0xff]
  %v1565 = vld [vmem:[%s5 + $0x68] sm:$0xff]
  %v1566 = vld [vmem:[%s5 + $0x70] sm:$0xff]
  %v1567 = vld [vmem:[%s5 + $0x78] sm:$0xff]
  %v1568 = vld [vmem:[%s6] sm:$0x1]
  %v1570 = vperm.slane %v1568, 0
  %1572 = vmatpush.msra.mxu0 %v1567
  %1573 = vmatpush.msra.mxu0 %v1566
  %1574 = vmatpush.msra.mxu0 %v1565
  %1575 = vmatpush.msra.mxu0 %v1564
  %1576 = vmatpush.msra.mxu0 %v1563
  %1577 = vmatpush.msra.mxu0 %v1562
  %1578 = vmatpush.msra.mxu0 %v1561
  %1579 = vmatpush.msra.mxu0 %v1560
  %1580 = vmatpush.msra.mxu0 %v1559
  %1581 = vmatpush.msra.mxu0 %v1558
  %1582 = vmatpush.msra.mxu0 %v1557
  %1583 = vmatpush.msra.mxu0 %v1556
  %1584 = vmatpush.msra.mxu0 %v1555
  %1585 = vmatpush.msra.mxu0 %v1554
  %1586 = vmatpush.msra.mxu0 %v1553
  %1587 = vmatpush.msra.mxu0 %v1552
  %1588 = vmatmul.f32.gmra.mxu0 %v1551
  %v1589 = vpop.f32.mrf.mxu0
  %v1590 = vadd.f32 %v1570, %v1589
  %1591 = vdwg.mxu0
  %1592 = vst [vmem:[%s7] sm:$0xff] %v1590
  // Predicated region
  $region30: #{net_base_forward.5} parent=0 // pred_check
    _
  $region31: #{net_base_forward.5} parent=0 // pred_check_branch
    %1594 = sbr.rel (0) target = $region33
  $region32: #{net_base_forward.5} parent=0 // pred_region
    _
  $region33: #{net_base_forward.5} parent=0 // pred_fallthru
    _
  // Predicated region
  $region34: #{net_base_forward.5} parent=0 // pred_check
    _
  $region35: #{net_base_forward.5} parent=0 // pred_check_branch
    %1596 = sbr.rel (0) target = $region37
  $region36: #{net_base_forward.5} parent=0 // pred_region
    _
  $region37: #{net_base_forward.5} parent=0 // pred_fallthru
    _

// kernel: net_base_forward.4
$region0: #{net_base_forward.4}
  #allocation0 [shape = 'u32[]', space=smem, size = 0x4, offset = 0x4, fixed_abs, tag = 'smem constant byte address 0x4 - core index']
  #allocation1 [shape = 'u32[72,128]{1,0:T(1,128)}', space=vmem, size = 0x9000, scoped, tag = 'internal scratch']
  %s0 = inlined_call_operand.vmem [shape: f32[2,144,8], index: 0, kind: input, shape index: {}]
  %s1 = inlined_call_operand.vmem [shape: f32[2,144,8], index: 1, kind: input, shape index: {}]
  %s2 = inlined_call_operand.vmem [shape: f32[25,8,128], index: 2, kind: input, shape index: {}]
  %s3 = inlined_call_operand.vmem [shape: f32[1,128], index: 3, kind: input, shape index: {}]
  %s4 = inlined_call_operand.vmem [shape: f32[2,5,8,128], index: 4, kind: output, shape index: {}]
  %s5 = sld [smem:[#allocation0]]
  $region49: #{net_base_forward.4} parent=0
    _
  %s7 = ssub.s32 1, %s5
  %s8 = scalar_select 0, %s7, %s5
  loop: start=0, step=1, limit=4
  $region2: #{net_base_forward.4} parent=0 // loop_pre_header
    _
  $region3: #{net_base_forward.4} parent=0 // loop_header
    %s10 = sphi 0, %s14
    %p11 = scmp.ge.s32.totalorder %s10, 4
    %s20 = sphi 0, %s22
    %s23 = sphi 0, %s20
    %s24 = sphi 0, %s23
    %s40 = sphi 0, %s24
    %s46 = sphi 0, %s48
    %s49 = sphi 0, %s46
    %s50 = sphi 0, %s49
    %s66 = sphi 0, %s50
    %s70 = sphi 0, %s70
    %s72 = sphi 0, %s70
    %s73 = sphi 0, %s72
    %s87 = sphi 0, %s73
    %s91 = sphi 0, %s91
    %s93 = sphi 0, %s91
    %s94 = sphi 0, %s93
    %s108 = sphi 0, %s94
    %s114 = sphi 0, %s116
    %s117 = sphi 0, %s114
    %s118 = sphi 0, %s117
    %s134 = sphi 0, %s118
  $region4: #{net_base_forward.4} parent=0 // loop_header_branch
    %13 = sbr.rel (%p11) target = $region8
  $region5: #{net_base_forward.4} parent=0 // loop_body
    %s15 = ssub.s32 %s10, 1
    %s16 = ssub.s32 %s10, 2
    %s17 = sadd.s32 %s10, 1
    %s18 = ssub.s32 %s10, %s17
    %p19 = scmp.eq.s32.totalorder %s18, 0
    %s21 = sadd.s32 %s20, 1
    %s22 = scalar_select %p19, %s20, %s21
    %p25 = pneg %p19
    %p26 = scmp.eq.s32.totalorder %s10, 1
    %p27 = por %p25, %p26
    %p28 = scmp.ne.s32.totalorder %s20, %s23
    %p29 = scmp.eq.s32.totalorder %s10, 0
    %p30 = por %p28, %p29
    %p31 = scmp.ne.s32.totalorder %s20, %s23
    %p32 = scmp.eq.s32.totalorder %s15, 1
    %p33 = por %p31, %p32
    %p34 = scmp.ne.s32.totalorder %s23, %s24
    %p35 = scmp.eq.s32.totalorder %s15, 0
    %p36 = por %p34, %p35
    %p37 = scmp.ne.s32.totalorder %s23, %s24
    %p38 = scmp.eq.s32.totalorder %s16, 1
    %p39 = por %p37, %p38
    %p41 = scmp.ne.s32.totalorder %s24, %s40
    %p42 = scmp.eq.s32.totalorder %s16, 0
    %p43 = por %p41, %p42
    %s44 = ssub.s32 %s10, %s17
    %p45 = scmp.eq.s32.totalorder %s44, 0
    %s47 = sadd.s32 %s46, 1
    %s48 = scalar_select %p45, %s46, %s47
    %p51 = pneg %p45
    %p52 = scmp.eq.s32.totalorder %s10, 1
    %p53 = por %p51, %p52
    %p54 = scmp.ne.s32.totalorder %s46, %s49
    %p55 = scmp.eq.s32.totalorder %s10, 0
    %p56 = por %p54, %p55
    %p57 = scmp.ne.s32.totalorder %s46, %s49
    %p58 = scmp.eq.s32.totalorder %s15, 1
    %p59 = por %p57, %p58
    %p60 = scmp.ne.s32.totalorder %s49, %s50
    %p61 = scmp.eq.s32.totalorder %s15, 0
    %p62 = por %p60, %p61
    %p63 = scmp.ne.s32.totalorder %s49, %s50
    %p64 = scmp.eq.s32.totalorder %s16, 1
    %p65 = por %p63, %p64
    %p67 = scmp.ne.s32.totalorder %s50, %s66
    %p68 = scmp.eq.s32.totalorder %s16, 0
    %p69 = por %p67, %p68
    %s71 = sadd.s32 %s70, 1
    %p74 = scmp.eq.s32.totalorder %s10, 1
    %p75 = scmp.ne.s32.totalorder %s70, %s72
    %p76 = scmp.eq.s32.totalorder %s10, 0
    %p77 = por %p75, %p76
    %p78 = scmp.ne.s32.totalorder %s70, %s72
    %p79 = scmp.eq.s32.totalorder %s15, 1
    %p80 = por %p78, %p79
    %p81 = scmp.ne.s32.totalorder %s72, %s73
    %p82 = scmp.eq.s32.totalorder %s15, 0
    %p83 = por %p81, %p82
    %p84 = scmp.ne.s32.totalorder %s72, %s73
    %p85 = scmp.eq.s32.totalorder %s16, 1
    %p86 = por %p84, %p85
    %p88 = scmp.ne.s32.totalorder %s73, %s87
    %p89 = scmp.eq.s32.totalorder %s16, 0
    %p90 = por %p88, %p89
    %s92 = sadd.s32 %s91, 1
    %p95 = scmp.eq.s32.totalorder %s10, 1
    %p96 = scmp.ne.s32.totalorder %s91, %s93
    %p97 = scmp.eq.s32.totalorder %s10, 0
    %p98 = por %p96, %p97
    %p99 = scmp.ne.s32.totalorder %s91, %s93
    %p100 = scmp.eq.s32.totalorder %s15, 1
    %p101 = por %p99, %p100
    %p102 = scmp.ne.s32.totalorder %s93, %s94
    %p103 = scmp.eq.s32.totalorder %s15, 0
    %p104 = por %p102, %p103
    %p105 = scmp.ne.s32.totalorder %s93, %s94
    %p106 = scmp.eq.s32.totalorder %s16, 1
    %p107 = por %p105, %p106
    %p109 = scmp.ne.s32.totalorder %s94, %s108
    %p110 = scmp.eq.s32.totalorder %s16, 0
    %p111 = por %p109, %p110
    %s112 = ssub.s32 %s10, %s17
    %p113 = scmp.eq.s32.totalorder %s112, 0
    %s115 = sadd.s32 %s114, 1
    %s116 = scalar_select %p113, %s114, %s115
    %p119 = pneg %p113
    %p120 = scmp.eq.s32.totalorder %s10, 1
    %p121 = por %p119, %p120
    %p122 = scmp.ne.s32.totalorder %s114, %s117
    %p123 = scmp.eq.s32.totalorder %s10, 0
    %p124 = por %p122, %p123
    %p125 = scmp.ne.s32.totalorder %s114, %s117
    %p126 = scmp.eq.s32.totalorder %s15, 1
    %p127 = por %p125, %p126
    %p128 = scmp.ne.s32.totalorder %s117, %s118
    %p129 = scmp.eq.s32.totalorder %s15, 0
    %p130 = por %p128, %p129
    %p131 = scmp.ne.s32.totalorder %s117, %s118
    %p132 = scmp.eq.s32.totalorder %s16, 1
    %p133 = por %p131, %p132
    %p135 = scmp.ne.s32.totalorder %s118, %s134
    %p136 = scmp.eq.s32.totalorder %s16, 0
    %p137 = por %p135, %p136
    %p138 = scmp.le.s32.totalorder 1, %s10
    %p139 = scmp.lt.s32.totalorder %s10, 3
    %p140 = pnand %p138, %p139
    %p141 = pneg %p140
    // Predicated region
    $region9: #{net_base_forward.4} parent=5 // pred_check
      _
    $region10: #{net_base_forward.4} parent=5 // pred_check_branch
      %143 = sbr.rel (%p140) target = $region12
    $region11: #{net_base_forward.4} parent=5 // pred_region
      %s144 = ssub.s32 %s10, 1
      // Predicated region
      $region13: #{net_base_forward.4} parent=11 // pred_check
        %p145 = pneg %p83
      $region14: #{net_base_forward.4} parent=11 // pred_check_branch
        %147 = sbr.rel (%p145) target = $region16
      $region15: #{net_base_forward.4} parent=11 // pred_region
        _
      $region16: #{net_base_forward.4} parent=11 // pred_fallthru
        _
      // Predicated region
      $region17: #{net_base_forward.4} parent=11 // pred_check
        %p148 = pneg %p104
      $region18: #{net_base_forward.4} parent=11 // pred_check_branch
        %150 = sbr.rel (%p148) target = $region20
      $region19: #{net_base_forward.4} parent=11 // pred_region
        _
      $region20: #{net_base_forward.4} parent=11 // pred_fallthru
        _
    $region12: #{net_base_forward.4} parent=5 // pred_fallthru
      _
    %p151 = scmp.lt.s32.totalorder %s10, 2
    // Predicated region
    $region21: #{net_base_forward.4} parent=5 // pred_check
      %p152 = pneg %p151
    $region22: #{net_base_forward.4} parent=5 // pred_check_branch
      %154 = sbr.rel (%p152) target = $region24
    $region23: #{net_base_forward.4} parent=5 // pred_region
      // Predicated region
      $region25: #{net_base_forward.4} parent=23 // pred_check
        %p155 = pneg %p30
      $region26: #{net_base_forward.4} parent=23 // pred_check_branch
        %157 = sbr.rel (%p155) target = $region28
      $region27: #{net_base_forward.4} parent=23 // pred_region
        %p158 = scmp.lt.s32.totalorder %s10, 1
        %s159 = scalar_select %p158, %s10, 1
        %s160 = smul.addr %s159, 18
        %s161 = smul.addr %s160, 8
        %s162 = scalar_lea.vmem %s0, %s161
      $region28: #{net_base_forward.4} parent=23 // pred_fallthru
        _
      // Predicated region
      $region29: #{net_base_forward.4} parent=23 // pred_check
        %p163 = pneg %p56
      $region30: #{net_base_forward.4} parent=23 // pred_check_branch
        %165 = sbr.rel (%p163) target = $region32
      $region31: #{net_base_forward.4} parent=23 // pred_region
        %p166 = scmp.lt.s32.totalorder %s10, 1
        %s167 = scalar_select %p166, %s10, 1
        %s168 = smul.addr %s167, 18
        %s169 = smul.addr %s168, 8
        %s170 = scalar_lea.vmem %s1, %s169
      $region32: #{net_base_forward.4} parent=23 // pred_fallthru
        _
    $region24: #{net_base_forward.4} parent=5 // pred_fallthru
      _
    %p171 = scmp.le.s32.totalorder 1, %s10
    %p172 = scmp.lt.s32.totalorder %s10, 3
    %p173 = pnand %p171, %p172
    %p174 = pneg %p173
    // Predicated region
    $region33: #{net_base_forward.4} parent=5 // pred_check
      _
    $region34: #{net_base_forward.4} parent=5 // pred_check_branch
      %176 = sbr.rel (%p173) target = $region36
    $region35: #{net_base_forward.4} parent=5 // pred_region
      %s177 = ssub.s32 %s10, 1
      %p178 = scmp.lt.s32.totalorder %s15, 1
      %s179 = scalar_select %p178, %s15, 1
      %s180 = smul.addr %s179, 18
      %s181 = smul.addr %s180, 8
      %s182 = scalar_lea.vmem %s0, %s181
      %p183 = pneg %p36
      %p184 = pneg %p33
      %p185 = scmp.lt.s32.totalorder %s15, 1
      %s186 = scalar_select %p185, %s15, 1
      %s187 = smul.addr %s186, 18
      %s188 = smul.addr %s187, 8
      %s189 = scalar_lea.vmem %s1, %s188
      %p190 = pneg %p62
      %p191 = pneg %p59
      %p192 = pneg %p83
      %p193 = pneg %p80
      %p194 = pneg %p104
      %p195 = pneg %p101
      %p196 = pneg %p130
      %p197 = pneg %p127
      %p198 = scmp.lt.s32.totalorder %s15, 1
      %s199 = scalar_select %p198, %s15, 1
      %s200 = smul.addr %s199, 5
      %s201 = smul.addr %s200, 8
      %s202 = scalar_lea.vmem %s4, %s201
      %p203 = scmp.lt.s32.totalorder %s15, 1
      %s204 = scalar_select %p203, %s15, 1
      %s205 = smul.addr %s204, 18
      %s206 = smul.addr %s205, 8
      %s207 = scalar_lea.vmem %s0, %s206
      %p208 = scmp.lt.s32.totalorder %s15, 1
      %s209 = scalar_select %p208, %s15, 1
      %s210 = smul.addr %s209, 18
      %s211 = smul.addr %s210, 8
      %s212 = scalar_lea.vmem %s1, %s211
      %p213 = scmp.lt.s32.totalorder %s15, 1
      %s214 = scalar_select %p213, %s15, 1
      %s215 = smul.addr %s214, 5
      %s216 = smul.addr %s215, 8
      %s217 = scalar_lea.vmem %s4, %s216
      %v218 = vld [vmem:[%s3] sm:$0x1]
      %v219 = vld [vmem:[%s2] sm:$0xff]
      %v220 = vld [vmem:[%s207] sm:$0xff]
      %v221 = vld [vmem:[%s207 + $0x8] sm:$0xff]
      %v222 = vld [vmem:[%s207 + $0x10] sm:$0xff]
      %v223 = vld [vmem:[%s207 + $0x18] sm:$0xff]
      %v224 = vld [vmem:[%s207 + $0x20] sm:$0xff]
      %v225 = vld [vmem:[%s207 + $0x28] sm:$0xff]
      %v226 = vld [vmem:[%s207 + $0x30] sm:$0xff]
      %v227 = vld [vmem:[%s207 + $0x38] sm:$0xff]
      %v228 = vld [vmem:[%s207 + $0x40] sm:$0xff]
      %v229 = vld [vmem:[%s207 + $0x48] sm:$0xff]
      %v230 = vld [vmem:[%s212] sm:$0xff]
      %v231 = vld [vmem:[%s212 + $0x8] sm:$0xff]
      %v232 = vld [vmem:[%s212 + $0x10] sm:$0xff]
      %v233 = vld [vmem:[%s212 + $0x18] sm:$0xff]
      %v234 = vld [vmem:[%s212 + $0x20] sm:$0xff]
      %v235 = vld [vmem:[%s212 + $0x28] sm:$0xff]
      %v236 = vld [vmem:[%s212 + $0x30] sm:$0xff]
      %v237 = vld [vmem:[%s212 + $0x38] sm:$0xff]
      %v238 = vld [vmem:[%s212 + $0x40] sm:$0xff]
      %v239 = vld [vmem:[%s212 + $0x48] sm:$0xff]
      %s240 = scalar_lea.vmem %s2, 8
      %v241 = vld [vmem:[%s240] sm:$0xff]
      %v242 = vld [vmem:[%s207 + $0x1] sm:$0xff]
      %v243 = vld [vmem:[%s207 + $0x9] sm:$0xff]
      %v244 = vld [vmem:[%s207 + $0x11] sm:$0xff]
      %v245 = vld [vmem:[%s207 + $0x19] sm:$0xff]
      %v246 = vld [vmem:[%s207 + $0x21] sm:$0xff]
      %v247 = vld [vmem:[%s207 + $0x29] sm:$0xff]
      %v248 = vld [vmem:[%s207 + $0x31] sm:$0xff]
      %v249 = vld [vmem:[%s207 + $0x39] sm:$0xff]
      %v250 = vld [vmem:[%s207 + $0x41] sm:$0xff]
      %v251 = vld [vmem:[%s207 + $0x49] sm:$0xff]
      %vm252 = vcmask 64512
      %v254 = vsel %vm252, %v230, 0
      %v257 = vsel %vm252, %v231, 0
      %v260 = vsel %vm252, %v232, 0
      %v263 = vsel %vm252, %v233, 0
      %v266 = vsel %vm252, %v234, 0
      %v269 = vsel %vm252, %v235, 0
      %v272 = vsel %vm252, %v236, 0
      %v275 = vsel %vm252, %v237, 0
      %v278 = vsel %vm252, %v238, 0
      %v281 = vsel %vm252, %v239, 0
      %283 = vmatpush.msra.mxu0 0.0
      %284 = vmatpush.msra.mxu0 0.0
      %285 = vmatpush.msra.mxu0 0.0
      %286 = vmatpush.msra.mxu0 0.0
      %287 = vmatpush.msra.mxu0 0.0
      %288 = vmatpush.msra.mxu0 0.0
      %289 = vmatpush.msra.mxu0 0.0
      %290 = vmatpush.msra.mxu0 0.0
      %291 = vmatpush.msra.mxu0 0.0
      %292 = vmatpush.msra.mxu0 0.0
      %293 = vmatpush.msra.mxu0 0.0
      %294 = vmatpush.msra.mxu0 0.0
      %295 = vmatpush.msra.mxu0 0.0
      %296 = vmatpush.msra.mxu0 0.0
      %297 = vmatpush.msra.mxu0 0.0
      %298 = vmatpush.msra.mxu0 %v241
      %299 = vmatmul.f32.gmra.mxu0 %v254
      %v300 = vpop.f32.mrf.mxu0
      %v301 = vadd.f32 0.0, %v300
      %302 = vmatmul.f32.gmra.mxu0 %v257
      %v303 = vpop.f32.mrf.mxu0
      %v304 = vadd.f32 0.0, %v303
      %305 = vmatmul.f32.gmra.mxu0 %v260
      %v306 = vpop.f32.mrf.mxu0
      %v307 = vadd.f32 0.0, %v306
      %308 = vmatmul.f32.gmra.mxu0 %v263
      %v309 = vpop.f32.mrf.mxu0
      %v310 = vadd.f32 0.0, %v309
      %311 = vmatmul.f32.gmra.mxu0 %v266
      %v312 = vpop.f32.mrf.mxu0
      %v313 = vadd.f32 0.0, %v312
      %314 = vmatmul.f32.gmra.mxu0 %v269
      %v315 = vpop.f32.mrf.mxu0
      %v316 = vadd.f32 0.0, %v315
      %317 = vmatmul.f32.gmra.mxu0 %v272
      %v318 = vpop.f32.mrf.mxu0
      %v319 = vadd.f32 0.0, %v318
      %320 = vmatmul.f32.gmra.mxu0 %v275
      %v321 = vpop.f32.mrf.mxu0
      %v322 = vadd.f32 0.0, %v321
      %323 = vmatmul.f32.gmra.mxu0 %v278
      %v324 = vpop.f32.mrf.mxu0
      %v325 = vadd.f32 0.0, %v324
      %326 = vmatmul.f32.gmra.mxu0 %v281
      %v327 = vpop.f32.mrf.mxu0
      %v328 = vadd.f32 0.0, %v327
      %329 = vdwg.mxu0
      %v331 = vsel %vm252, %v220, 0
      %v334 = vsel %vm252, %v221, 0
      %v337 = vsel %vm252, %v222, 0
      %v340 = vsel %vm252, %v223, 0
      %v343 = vsel %vm252, %v224, 0
      %v346 = vsel %vm252, %v225, 0
      %v349 = vsel %vm252, %v226, 0
      %v352 = vsel %vm252, %v227, 0
      %v355 = vsel %vm252, %v228, 0
      %v358 = vsel %vm252, %v229, 0
      %360 = vmatpush.msra.mxu0 0.0
      %361 = vmatpush.msra.mxu0 0.0
      %362 = vmatpush.msra.mxu0 0.0
      %363 = vmatpush.msra.mxu0 0.0
      %364 = vmatpush.msra.mxu0 0.0
      %365 = vmatpush.msra.mxu0 0.0
      %366 = vmatpush.msra.mxu0 0.0
      %367 = vmatpush.msra.mxu0 0.0
      %368 = vmatpush.msra.mxu0 0.0
      %369 = vmatpush.msra.mxu0 0.0
      %370 = vmatpush.msra.mxu0 0.0
      %371 = vmatpush.msra.mxu0 0.0
      %372 = vmatpush.msra.mxu0 0.0
      %373 = vmatpush.msra.mxu0 0.0
      %374 = vmatpush.msra.mxu0 0.0
      %375 = vmatpush.msra.mxu0 %v219
      %376 = vmatmul.f32.gmra.mxu0 %v331
      %v377 = vpop.f32.mrf.mxu0
      %v378 = vadd.f32 %v301, %v377
      %379 = vmatmul.f32.gmra.mxu0 %v334
      %v380 = vpop.f32.mrf.mxu0
      %v381 = vadd.f32 %v304, %v380
      %382 = vmatmul.f32.gmra.mxu0 %v337
      %v383 = vpop.f32.mrf.mxu0
      %v384 = vadd.f32 %v307, %v383
      %385 = vmatmul.f32.gmra.mxu0 %v340
      %v386 = vpop.f32.mrf.mxu0
      %v387 = vadd.f32 %v310, %v386
      %388 = vmatmul.f32.gmra.mxu0 %v343
      %v389 = vpop.f32.mrf.mxu0
      %v390 = vadd.f32 %v313, %v389
      %391 = vmatmul.f32.gmra.mxu0 %v346
      %v392 = vpop.f32.mrf.mxu0
      %v393 = vadd.f32 %v316, %v392
      %394 = vmatmul.f32.gmra.mxu0 %v349
      %v395 = vpop.f32.mrf.mxu0
      %v396 = vadd.f32 %v319, %v395
      %397 = vmatmul.f32.gmra.mxu0 %v352
      %v398 = vpop.f32.mrf.mxu0
      %v399 = vadd.f32 %v322, %v398
      %400 = vmatmul.f32.gmra.mxu0 %v355
      %v401 = vpop.f32.mrf.mxu0
      %v402 = vadd.f32 %v325, %v401
      %403 = vmatmul.f32.gmra.mxu0 %v358
      %v404 = vpop.f32.mrf.mxu0
      %v405 = vadd.f32 %v328, %v404
      %406 = vdwg.mxu0
      %v408 = vsel %vm252, %v242, 0
      %v411 = vsel %vm252, %v243, 0
      %v414 = vsel %vm252, %v244, 0
      %v417 = vsel %vm252, %v245, 0
      %v420 = vsel %vm252, %v246, 0
      %v423 = vsel %vm252, %v247, 0
      %v426 = vsel %vm252, %v248, 0
      %v429 = vsel %vm252, %v249, 0
      %v432 = vsel %vm252, %v250, 0
      %v435 = vsel %vm252, %v251, 0
      %437 = vmatpush.msra.mxu0 0.0
      %438 = vmatpush.msra.mxu0 0.0
      %439 = vmatpush.msra.mxu0 0.0
      %440 = vmatpush.msra.mxu0 0.0
      %441 = vmatpush.msra.mxu0 0.0
      %442 = vmatpush.msra.mxu0 0.0
      %443 = vmatpush.msra.mxu0 0.0
      %444 = vmatpush.msra.mxu0 0.0
      %445 = vmatpush.msra.mxu0 0.0
      %446 = vmatpush.msra.mxu0 0.0
      %447 = vmatpush.msra.mxu0 0.0
      %448 = vmatpush.msra.mxu0 0.0
      %449 = vmatpush.msra.mxu0 0.0
      %450 = vmatpush.msra.mxu0 0.0
      %451 = vmatpush.msra.mxu0 0.0
      %452 = vmatpush.msra.mxu0 %v241
      %453 = vmatmul.f32.gmra.mxu0 %v408
      %v454 = vpop.f32.mrf.mxu0
      %v455 = vadd.f32 0.0, %v454
      %456 = vmatmul.f32.gmra.mxu0 %v411
      %v457 = vpop.f32.mrf.mxu0
      %v458 = vadd.f32 0.0, %v457
      %459 = vmatmul.f32.gmra.mxu0 %v414
      %v460 = vpop.f32.mrf.mxu0
      %v461 = vadd.f32 0.0, %v460
      %462 = vmatmul.f32.gmra.mxu0 %v417
      %v463 = vpop.f32.mrf.mxu0
      %v464 = vadd.f32 0.0, %v463
      %465 = vmatmul.f32.gmra.mxu0 %v420
      %v466 = vpop.f32.mrf.mxu0
      %v467 = vadd.f32 0.0, %v466
      %468 = vmatmul.f32.gmra.mxu0 %v423
      %v469 = vpop.f32.mrf.mxu0
      %v470 = vadd.f32 0.0, %v469
      %471 = vmatmul.f32.gmra.mxu0 %v426
      %v472 = vpop.f32.mrf.mxu0
      %v473 = vadd.f32 0.0, %v472
      %474 = vmatmul.f32.gmra.mxu0 %v429
      %v475 = vpop.f32.mrf.mxu0
      %v476 = vadd.f32 0.0, %v475
      %477 = vmatmul.f32.gmra.mxu0 %v432
      %v478 = vpop.f32.mrf.mxu0
      %v479 = vadd.f32 0.0, %v478
      %480 = vmatmul.f32.gmra.mxu0 %v435
      %v481 = vpop.f32.mrf.mxu0
      %v482 = vadd.f32 0.0, %v481
      %483 = vdwg.mxu0
      %484 = vmatpush.msra.mxu0 0.0
      %485 = vmatpush.msra.mxu0 0.0
      %486 = vmatpush.msra.mxu0 0.0
      %487 = vmatpush.msra.mxu0 0.0
      %488 = vmatpush.msra.mxu0 0.0
      %489 = vmatpush.msra.mxu0 0.0
      %490 = vmatpush.msra.mxu0 0.0
      %491 = vmatpush.msra.mxu0 0.0
      %492 = vmatpush.msra.mxu0 0.0
      %493 = vmatpush.msra.mxu0 0.0
      %494 = vmatpush.msra.mxu0 0.0
      %495 = vmatpush.msra.mxu0 0.0
      %496 = vmatpush.msra.mxu0 0.0
      %497 = vmatpush.msra.mxu0 0.0
      %498 = vmatpush.msra.mxu0 0.0
      %499 = vmatpush.msra.mxu0 %v219
      %500 = vmatmul.f32.gmra.mxu0 %v254
      %v501 = vpop.f32.mrf.mxu0
      %v502 = vadd.f32 %v455, %v501
      %503 = vmatmul.f32.gmra.mxu0 %v257
      %v504 = vpop.f32.mrf.mxu0
      %v505 = vadd.f32 %v458, %v504
      %506 = vmatmul.f32.gmra.mxu0 %v260
      %v507 = vpop.f32.mrf.mxu0
      %v508 = vadd.f32 %v461, %v507
      %509 = vmatmul.f32.gmra.mxu0 %v263
      %v510 = vpop.f32.mrf.mxu0
      %v511 = vadd.f32 %v464, %v510
      %512 = vmatmul.f32.gmra.mxu0 %v266
      %v513 = vpop.f32.mrf.mxu0
      %v514 = vadd.f32 %v467, %v513
      %515 = vmatmul.f32.gmra.mxu0 %v269
      %v516 = vpop.f32.mrf.mxu0
      %v517 = vadd.f32 %v470, %v516
      %518 = vmatmul.f32.gmra.mxu0 %v272
      %v519 = vpop.f32.mrf.mxu0
      %v520 = vadd.f32 %v473, %v519
      %521 = vmatmul.f32.gmra.mxu0 %v275
      %v522 = vpop.f32.mrf.mxu0
      %v523 = vadd.f32 %v476, %v522
      %524 = vmatmul.f32.gmra.mxu0 %v278
      %v525 = vpop.f32.mrf.mxu0
      %v526 = vadd.f32 %v479, %v525
      %527 = vmatmul.f32.gmra.mxu0 %v281
      %v528 = vpop.f32.mrf.mxu0
      %v529 = vadd.f32 %v482, %v528
      %530 = vdwg.mxu0
      %s531 = scalar_lea.vmem %s2, 16
      %v532 = vld [vmem:[%s531] sm:$0xff]
      %v533 = vld [vmem:[%s212 + $0x1] sm:$0xff]
      %v534 = vld [vmem:[%s212 + $0x9] sm:$0xff]
      %v535 = vld [vmem:[%s212 + $0x11] sm:$0xff]
      %v536 = vld [vmem:[%s212 + $0x19] sm:$0xff]
      %v537 = vld [vmem:[%s212 + $0x21] sm:$0xff]
      %v538 = vld [vmem:[%s212 + $0x29] sm:$0xff]
      %v539 = vld [vmem:[%s212 + $0x31] sm:$0xff]
      %v540 = vld [vmem:[%s212 + $0x39] sm:$0xff]
      %v541 = vld [vmem:[%s212 + $0x41] sm:$0xff]
      %v542 = vld [vmem:[%s212 + $0x49] sm:$0xff]
      %543 = vmatpush.msra.mxu0 0.0
      %544 = vmatpush.msra.mxu0 0.0
      %545 = vmatpush.msra.mxu0 0.0
      %546 = vmatpush.msra.mxu0 0.0
      %547 = vmatpush.msra.mxu0 0.0
      %548 = vmatpush.msra.mxu0 0.0
      %549 = vmatpush.msra.mxu0 0.0
      %550 = vmatpush.msra.mxu0 0.0
      %551 = vmatpush.msra.mxu0 0.0
      %552 = vmatpush.msra.mxu0 0.0
      %553 = vmatpush.msra.mxu0 0.0
      %554 = vmatpush.msra.mxu0 0.0
      %555 = vmatpush.msra.mxu0 0.0
      %556 = vmatpush.msra.mxu0 0.0
      %557 = vmatpush.msra.mxu0 0.0
      %558 = vmatpush.msra.mxu0 %v532
      %559 = vmatmul.f32.gmra.mxu0 %v408
      %v560 = vpop.f32.mrf.mxu0
      %v561 = vadd.f32 0.0, %v560
      %562 = vmatmul.f32.gmra.mxu0 %v411
      %v563 = vpop.f32.mrf.mxu0
      %v564 = vadd.f32 0.0, %v563
      %565 = vmatmul.f32.gmra.mxu0 %v414
      %v566 = vpop.f32.mrf.mxu0
      %v567 = vadd.f32 0.0, %v566
      %568 = vmatmul.f32.gmra.mxu0 %v417
      %v569 = vpop.f32.mrf.mxu0
      %v570 = vadd.f32 0.0, %v569
      %571 = vmatmul.f32.gmra.mxu0 %v420
      %v572 = vpop.f32.mrf.mxu0
      %v573 = vadd.f32 0.0, %v572
      %574 = vmatmul.f32.gmra.mxu0 %v423
      %v575 = vpop.f32.mrf.mxu0
      %v576 = vadd.f32 0.0, %v575
      %577 = vmatmul.f32.gmra.mxu0 %v426
      %v578 = vpop.f32.mrf.mxu0
      %v579 = vadd.f32 0.0, %v578
      %580 = vmatmul.f32.gmra.mxu0 %v429
      %v581 = vpop.f32.mrf.mxu0
      %v582 = vadd.f32 0.0, %v581
      %583 = vmatmul.f32.gmra.mxu0 %v432
      %v584 = vpop.f32.mrf.mxu0
      %v585 = vadd.f32 0.0, %v584
      %586 = vmatmul.f32.gmra.mxu0 %v435
      %v587 = vpop.f32.mrf.mxu0
      %v588 = vadd.f32 0.0, %v587
      %589 = vdwg.mxu0
      %v590 = vadd.f32 %v378, %v561
      %v591 = vadd.f32 %v381, %v564
      %v592 = vadd.f32 %v384, %v567
      %v593 = vadd.f32 %v387, %v570
      %v594 = vadd.f32 %v390, %v573
      %v595 = vadd.f32 %v393, %v576
      %v596 = vadd.f32 %v396, %v579
      %v597 = vadd.f32 %v399, %v582
      %v598 = vadd.f32 %v402, %v585
      %v599 = vadd.f32 %v405, %v588
      %v601 = vsel %vm252, %v533, 0
      %v604 = vsel %vm252, %v534, 0
      %v607 = vsel %vm252, %v535, 0
      %v610 = vsel %vm252, %v536, 0
      %v613 = vsel %vm252, %v537, 0
      %v616 = vsel %vm252, %v538, 0
      %v619 = vsel %vm252, %v539, 0
      %v622 = vsel %vm252, %v540, 0
      %v625 = vsel %vm252, %v541, 0
      %v628 = vsel %vm252, %v542, 0
      %630 = vmatpush.msra.mxu0 0.0
      %631 = vmatpush.msra.mxu0 0.0
      %632 = vmatpush.msra.mxu0 0.0
      %633 = vmatpush.msra.mxu0 0.0
      %634 = vmatpush.msra.mxu0 0.0
      %635 = vmatpush.msra.mxu0 0.0
      %636 = vmatpush.msra.mxu0 0.0
      %637 = vmatpush.msra.mxu0 0.0
      %638 = vmatpush.msra.mxu0 0.0
      %639 = vmatpush.msra.mxu0 0.0
      %640 = vmatpush.msra.mxu0 0.0
      %641 = vmatpush.msra.mxu0 0.0
      %642 = vmatpush.msra.mxu0 0.0
      %643 = vmatpush.msra.mxu0 0.0
      %644 = vmatpush.msra.mxu0 0.0
      %645 = vmatpush.msra.mxu0 %v532
      %646 = vmatmul.f32.gmra.mxu0 %v601
      %v647 = vpop.f32.mrf.mxu0
      %v648 = vadd.f32 0.0, %v647
      %649 = vmatmul.f32.gmra.mxu0 %v604
      %v650 = vpop.f32.mrf.mxu0
      %v651 = vadd.f32 0.0, %v650
      %652 = vmatmul.f32.gmra.mxu0 %v607
      %v653 = vpop.f32.mrf.mxu0
      %v654 = vadd.f32 0.0, %v653
      %655 = vmatmul.f32.gmra.mxu0 %v610
      %v656 = vpop.f32.mrf.mxu0
      %v657 = vadd.f32 0.0, %v656
      %658 = vmatmul.f32.gmra.mxu0 %v613
      %v659 = vpop.f32.mrf.mxu0
      %v660 = vadd.f32 0.0, %v659
      %661 = vmatmul.f32.gmra.mxu0 %v616
      %v662 = vpop.f32.mrf.mxu0
      %v663 = vadd.f32 0.0, %v662
      %664 = vmatmul.f32.gmra.mxu0 %v619
      %v665 = vpop.f32.mrf.mxu0
      %v666 = vadd.f32 0.0, %v665
      %667 = vmatmul.f32.gmra.mxu0 %v622
      %v668 = vpop.f32.mrf.mxu0
      %v669 = vadd.f32 0.0, %v668
      %670 = vmatmul.f32.gmra.mxu0 %v625
      %v671 = vpop.f32.mrf.mxu0
      %v672 = vadd.f32 0.0, %v671
      %673 = vmatmul.f32.gmra.mxu0 %v628
      %v674 = vpop.f32.mrf.mxu0
      %v675 = vadd.f32 0.0, %v674
      %676 = vdwg.mxu0
      %v677 = vadd.f32 %v502, %v648
      %v678 = vadd.f32 %v505, %v651
      %v679 = vadd.f32 %v508, %v654
      %v680 = vadd.f32 %v511, %v657
      %v681 = vadd.f32 %v514, %v660
      %v682 = vadd.f32 %v517, %v663
      %v683 = vadd.f32 %v520, %v666
      %v684 = vadd.f32 %v523, %v669
      %v685 = vadd.f32 %v526, %v672
      %v686 = vadd.f32 %v529, %v675
      %s687 = scalar_lea.vmem %s2, 24
      %v688 = vld [vmem:[%s687] sm:$0xff]
      %v689 = vld [vmem:[%s207 + $0x2] sm:$0xff]
      %v690 = vld [vmem:[%s207 + $0xa] sm:$0xff]
      %v691 = vld [vmem:[%s207 + $0x12] sm:$0xff]
      %v692 = vld [vmem:[%s207 + $0x1a] sm:$0xff]
      %v693 = vld [vmem:[%s207 + $0x22] sm:$0xff]
      %v694 = vld [vmem:[%s207 + $0x2a] sm:$0xff]
      %v695 = vld [vmem:[%s207 + $0x32] sm:$0xff]
      %v696 = vld [vmem:[%s207 + $0x3a] sm:$0xff]
      %v697 = vld [vmem:[%s207 + $0x42] sm:$0xff]
      %v698 = vld [vmem:[%s207 + $0x4a] sm:$0xff]
      %699 = vmatpush.msra.mxu0 0.0
      %700 = vmatpush.msra.mxu0 0.0
      %701 = vmatpush.msra.mxu0 0.0
      %702 = vmatpush.msra.mxu0 0.0
      %703 = vmatpush.msra.mxu0 0.0
      %704 = vmatpush.msra.mxu0 0.0
      %705 = vmatpush.msra.mxu0 0.0
      %706 = vmatpush.msra.mxu0 0.0
      %707 = vmatpush.msra.mxu0 0.0
      %708 = vmatpush.msra.mxu0 0.0
      %709 = vmatpush.msra.mxu0 0.0
      %710 = vmatpush.msra.mxu0 0.0
      %711 = vmatpush.msra.mxu0 0.0
      %712 = vmatpush.msra.mxu0 0.0
      %713 = vmatpush.msra.mxu0 0.0
      %714 = vmatpush.msra.mxu0 %v688
      %715 = vmatmul.f32.gmra.mxu0 %v601
      %v716 = vpop.f32.mrf.mxu0
      %v717 = vadd.f32 0.0, %v716
      %718 = vmatmul.f32.gmra.mxu0 %v604
      %v719 = vpop.f32.mrf.mxu0
      %v720 = vadd.f32 0.0, %v719
      %721 = vmatmul.f32.gmra.mxu0 %v607
      %v722 = vpop.f32.mrf.mxu0
      %v723 = vadd.f32 0.0, %v722
      %724 = vmatmul.f32.gmra.mxu0 %v610
      %v725 = vpop.f32.mrf.mxu0
      %v726 = vadd.f32 0.0, %v725
      %727 = vmatmul.f32.gmra.mxu0 %v613
      %v728 = vpop.f32.mrf.mxu0
      %v729 = vadd.f32 0.0, %v728
      %730 = vmatmul.f32.gmra.mxu0 %v616
      %v731 = vpop.f32.mrf.mxu0
      %v732 = vadd.f32 0.0, %v731
      %733 = vmatmul.f32.gmra.mxu0 %v619
      %v734 = vpop.f32.mrf.mxu0
      %v735 = vadd.f32 0.0, %v734
      %736 = vmatmul.f32.gmra.mxu0 %v622
      %v737 = vpop.f32.mrf.mxu0
      %v738 = vadd.f32 0.0, %v737
      %739 = vmatmul.f32.gmra.mxu0 %v625
      %v740 = vpop.f32.mrf.mxu0
      %v741 = vadd.f32 0.0, %v740
      %742 = vmatmul.f32.gmra.mxu0 %v628
      %v743 = vpop.f32.mrf.mxu0
      %v744 = vadd.f32 0.0, %v743
      %745 = vdwg.mxu0
      %v746 = vadd.f32 %v590, %v717
      %v747 = vadd.f32 %v591, %v720
      %v748 = vadd.f32 %v592, %v723
      %v749 = vadd.f32 %v593, %v726
      %v750 = vadd.f32 %v594, %v729
      %v751 = vadd.f32 %v595, %v732
      %v752 = vadd.f32 %v596, %v735
      %v753 = vadd.f32 %v597, %v738
      %v754 = vadd.f32 %v598, %v741
      %v755 = vadd.f32 %v599, %v744
      %v757 = vsel %vm252, %v689, 0
      %v760 = vsel %vm252, %v690, 0
      %v763 = vsel %vm252, %v691, 0
      %v766 = vsel %vm252, %v692, 0
      %v769 = vsel %vm252, %v693, 0
      %v772 = vsel %vm252, %v694, 0
      %v775 = vsel %vm252, %v695, 0
      %v778 = vsel %vm252, %v696, 0
      %v781 = vsel %vm252, %v697, 0
      %v784 = vsel %vm252, %v698, 0
      %786 = vmatpush.msra.mxu0 0.0
      %787 = vmatpush.msra.mxu0 0.0
      %788 = vmatpush.msra.mxu0 0.0
      %789 = vmatpush.msra.mxu0 0.0
      %790 = vmatpush.msra.mxu0 0.0
      %791 = vmatpush.msra.mxu0 0.0
      %792 = vmatpush.msra.mxu0 0.0
      %793 = vmatpush.msra.mxu0 0.0
      %794 = vmatpush.msra.mxu0 0.0
      %795 = vmatpush.msra.mxu0 0.0
      %796 = vmatpush.msra.mxu0 0.0
      %797 = vmatpush.msra.mxu0 0.0
      %798 = vmatpush.msra.mxu0 0.0
      %799 = vmatpush.msra.mxu0 0.0
      %800 = vmatpush.msra.mxu0 0.0
      %801 = vmatpush.msra.mxu0 %v688
      %802 = vmatmul.f32.gmra.mxu0 %v757
      %v803 = vpop.f32.mrf.mxu0
      %v804 = vadd.f32 0.0, %v803
      %805 = vmatmul.f32.gmra.mxu0 %v760
      %v806 = vpop.f32.mrf.mxu0
      %v807 = vadd.f32 0.0, %v806
      %808 = vmatmul.f32.gmra.mxu0 %v763
      %v809 = vpop.f32.mrf.mxu0
      %v810 = vadd.f32 0.0, %v809
      %811 = vmatmul.f32.gmra.mxu0 %v766
      %v812 = vpop.f32.mrf.mxu0
      %v813 = vadd.f32 0.0, %v812
      %814 = vmatmul.f32.gmra.mxu0 %v769
      %v815 = vpop.f32.mrf.mxu0
      %v816 = vadd.f32 0.0, %v815
      %817 = vmatmul.f32.gmra.mxu0 %v772
      %v818 = vpop.f32.mrf.mxu0
      %v819 = vadd.f32 0.0, %v818
      %820 = vmatmul.f32.gmra.mxu0 %v775
      %v821 = vpop.f32.mrf.mxu0
      %v822 = vadd.f32 0.0, %v821
      %823 = vmatmul.f32.gmra.mxu0 %v778
      %v824 = vpop.f32.mrf.mxu0
      %v825 = vadd.f32 0.0, %v824
      %826 = vmatmul.f32.gmra.mxu0 %v781
      %v827 = vpop.f32.mrf.mxu0
      %v828 = vadd.f32 0.0, %v827
      %829 = vmatmul.f32.gmra.mxu0 %v784
      %v830 = vpop.f32.mrf.mxu0
      %v831 = vadd.f32 0.0, %v830
      %832 = vdwg.mxu0
      %v833 = vadd.f32 %v677, %v804
      %v834 = vadd.f32 %v678, %v807
      %v835 = vadd.f32 %v679, %v810
      %v836 = vadd.f32 %v680, %v813
      %v837 = vadd.f32 %v681, %v816
      %v838 = vadd.f32 %v682, %v819
      %v839 = vadd.f32 %v683, %v822
      %v840 = vadd.f32 %v684, %v825
      %v841 = vadd.f32 %v685, %v828
      %v842 = vadd.f32 %v686, %v831
      %s843 = scalar_lea.vmem %s2, 32
      %v844 = vld [vmem:[%s843] sm:$0xff]
      %v845 = vld [vmem:[%s212 + $0x2] sm:$0xff]
      %v846 = vld [vmem:[%s212 + $0xa] sm:$0xff]
      %v847 = vld [vmem:[%s212 + $0x12] sm:$0xff]
      %v848 = vld [vmem:[%s212 + $0x1a] sm:$0xff]
      %v849 = vld [vmem:[%s212 + $0x22] sm:$0xff]
      %v850 = vld [vmem:[%s212 + $0x2a] sm:$0xff]
      %v851 = vld [vmem:[%s212 + $0x32] sm:$0xff]
      %v852 = vld [vmem:[%s212 + $0x3a] sm:$0xff]
      %v853 = vld [vmem:[%s212 + $0x42] sm:$0xff]
      %v854 = vld [vmem:[%s212 + $0x4a] sm:$0xff]
      %855 = vmatpush.msra.mxu0 0.0
      %856 = vmatpush.msra.mxu0 0.0
      %857 = vmatpush.msra.mxu0 0.0
      %858 = vmatpush.msra.mxu0 0.0
      %859 = vmatpush.msra.mxu0 0.0
      %860 = vmatpush.msra.mxu0 0.0
      %861 = vmatpush.msra.mxu0 0.0
      %862 = vmatpush.msra.mxu0 0.0
      %863 = vmatpush.msra.mxu0 0.0
      %864 = vmatpush.msra.mxu0 0.0
      %865 = vmatpush.msra.mxu0 0.0
      %866 = vmatpush.msra.mxu0 0.0
      %867 = vmatpush.msra.mxu0 0.0
      %868 = vmatpush.msra.mxu0 0.0
      %869 = vmatpush.msra.mxu0 0.0
      %870 = vmatpush.msra.mxu0 %v844
      %871 = vmatmul.f32.gmra.mxu0 %v757
      %v872 = vpop.f32.mrf.mxu0
      %v873 = vadd.f32 0.0, %v872
      %874 = vmatmul.f32.gmra.mxu0 %v760
      %v875 = vpop.f32.mrf.mxu0
      %v876 = vadd.f32 0.0, %v875
      %877 = vmatmul.f32.gmra.mxu0 %v763
      %v878 = vpop.f32.mrf.mxu0
      %v879 = vadd.f32 0.0, %v878
      %880 = vmatmul.f32.gmra.mxu0 %v766
      %v881 = vpop.f32.mrf.mxu0
      %v882 = vadd.f32 0.0, %v881
      %883 = vmatmul.f32.gmra.mxu0 %v769
      %v884 = vpop.f32.mrf.mxu0
      %v885 = vadd.f32 0.0, %v884
      %886 = vmatmul.f32.gmra.mxu0 %v772
      %v887 = vpop.f32.mrf.mxu0
      %v888 = vadd.f32 0.0, %v887
      %889 = vmatmul.f32.gmra.mxu0 %v775
      %v890 = vpop.f32.mrf.mxu0
      %v891 = vadd.f32 0.0, %v890
      %892 = vmatmul.f32.gmra.mxu0 %v778
      %v893 = vpop.f32.mrf.mxu0
      %v894 = vadd.f32 0.0, %v893
      %895 = vmatmul.f32.gmra.mxu0 %v781
      %v896 = vpop.f32.mrf.mxu0
      %v897 = vadd.f32 0.0, %v896
      %898 = vmatmul.f32.gmra.mxu0 %v784
      %v899 = vpop.f32.mrf.mxu0
      %v900 = vadd.f32 0.0, %v899
      %901 = vdwg.mxu0
      %v902 = vadd.f32 %v746, %v873
      %v903 = vadd.f32 %v747, %v876
      %v904 = vadd.f32 %v748, %v879
      %v905 = vadd.f32 %v749, %v882
      %v906 = vadd.f32 %v750, %v885
      %v907 = vadd.f32 %v751, %v888
      %v908 = vadd.f32 %v752, %v891
      %v909 = vadd.f32 %v753, %v894
      %v910 = vadd.f32 %v754, %v897
      %v911 = vadd.f32 %v755, %v900
      %v913 = vsel %vm252, %v845, 0
      %v916 = vsel %vm252, %v846, 0
      %v919 = vsel %vm252, %v847, 0
      %v922 = vsel %vm252, %v848, 0
      %v925 = vsel %vm252, %v849, 0
      %v928 = vsel %vm252, %v850, 0
      %v931 = vsel %vm252, %v851, 0
      %v934 = vsel %vm252, %v852, 0
      %v937 = vsel %vm252, %v853, 0
      %v940 = vsel %vm252, %v854, 0
      %942 = vmatpush.msra.mxu0 0.0
      %943 = vmatpush.msra.mxu0 0.0
      %944 = vmatpush.msra.mxu0 0.0
      %945 = vmatpush.msra.mxu0 0.0
      %946 = vmatpush.msra.mxu0 0.0
      %947 = vmatpush.msra.mxu0 0.0
      %948 = vmatpush.msra.mxu0 0.0
      %949 = vmatpush.msra.mxu0 0.0
      %950 = vmatpush.msra.mxu0 0.0
      %951 = vmatpush.msra.mxu0 0.0
      %952 = vmatpush.msra.mxu0 0.0
      %953 = vmatpush.msra.mxu0 0.0
      %954 = vmatpush.msra.mxu0 0.0
      %955 = vmatpush.msra.mxu0 0.0
      %956 = vmatpush.msra.mxu0 0.0
      %957 = vmatpush.msra.mxu0 %v844
      %958 = vmatmul.f32.gmra.mxu0 %v913
      %v959 = vpop.f32.mrf.mxu0
      %v960 = vadd.f32 0.0, %v959
      %961 = vmatmul.f32.gmra.mxu0 %v916
      %v962 = vpop.f32.mrf.mxu0
      %v963 = vadd.f32 0.0, %v962
      %964 = vmatmul.f32.gmra.mxu0 %v919
      %v965 = vpop.f32.mrf.mxu0
      %v966 = vadd.f32 0.0, %v965
      %967 = vmatmul.f32.gmra.mxu0 %v922
      %v968 = vpop.f32.mrf.mxu0
      %v969 = vadd.f32 0.0, %v968
      %970 = vmatmul.f32.gmra.mxu0 %v925
      %v971 = vpop.f32.mrf.mxu0
      %v972 = vadd.f32 0.0, %v971
      %973 = vmatmul.f32.gmra.mxu0 %v928
      %v974 = vpop.f32.mrf.mxu0
      %v975 = vadd.f32 0.0, %v974
      %976 = vmatmul.f32.gmra.mxu0 %v931
      %v977 = vpop.f32.mrf.mxu0
      %v978 = vadd.f32 0.0, %v977
      %979 = vmatmul.f32.gmra.mxu0 %v934
      %v980 = vpop.f32.mrf.mxu0
      %v981 = vadd.f32 0.0, %v980
      %982 = vmatmul.f32.gmra.mxu0 %v937
      %v983 = vpop.f32.mrf.mxu0
      %v984 = vadd.f32 0.0, %v983
      %985 = vmatmul.f32.gmra.mxu0 %v940
      %v986 = vpop.f32.mrf.mxu0
      %v987 = vadd.f32 0.0, %v986
      %988 = vdwg.mxu0
      %v989 = vadd.f32 %v833, %v960
      %v990 = vadd.f32 %v834, %v963
      %v991 = vadd.f32 %v835, %v966
      %v992 = vadd.f32 %v836, %v969
      %v993 = vadd.f32 %v837, %v972
      %v994 = vadd.f32 %v838, %v975
      %v995 = vadd.f32 %v839, %v978
      %v996 = vadd.f32 %v840, %v981
      %v997 = vadd.f32 %v841, %v984
      %v998 = vadd.f32 %v842, %v987
      %s999 = scalar_lea.vmem %s2, 40
      %v1000 = vld [vmem:[%s999] sm:$0xff]
      %v1001 = vld [vmem:[%s207 + $0x8] sm:$0xff]
      %v1002 = vld [vmem:[%s207 + $0x10] sm:$0xff]
      %v1003 = vld [vmem:[%s207 + $0x18] sm:$0xff]
      %v1004 = vld [vmem:[%s207 + $0x20] sm:$0xff]
      %v1005 = vld [vmem:[%s207 + $0x28] sm:$0xff]
      %v1006 = vld [vmem:[%s207 + $0x30] sm:$0xff]
      %v1007 = vld [vmem:[%s207 + $0x38] sm:$0xff]
      %v1008 = vld [vmem:[%s207 + $0x40] sm:$0xff]
      %v1009 = vld [vmem:[%s207 + $0x48] sm:$0xff]
      %v1010 = vld [vmem:[%s207 + $0x50] sm:$0xff]
      %v1011 = vld [vmem:[%s212 + $0x8] sm:$0xff]
      %v1012 = vld [vmem:[%s212 + $0x10] sm:$0xff]
      %v1013 = vld [vmem:[%s212 + $0x18] sm:$0xff]
      %v1014 = vld [vmem:[%s212 + $0x20] sm:$0xff]
      %v1015 = vld [vmem:[%s212 + $0x28] sm:$0xff]
      %v1016 = vld [vmem:[%s212 + $0x30] sm:$0xff]
      %v1017 = vld [vmem:[%s212 + $0x38] sm:$0xff]
      %v1018 = vld [vmem:[%s212 + $0x40] sm:$0xff]
      %v1019 = vld [vmem:[%s212 + $0x48] sm:$0xff]
      %v1020 = vld [vmem:[%s212 + $0x50] sm:$0xff]
      %v1022 = vsel %vm252, %v1001, 0
      %v1025 = vsel %vm252, %v1002, 0
      %v1028 = vsel %vm252, %v1003, 0
      %v1031 = vsel %vm252, %v1004, 0
      %v1034 = vsel %vm252, %v1005, 0
      %v1037 = vsel %vm252, %v1006, 0
      %v1040 = vsel %vm252, %v1007, 0
      %v1043 = vsel %vm252, %v1008, 0
      %v1046 = vsel %vm252, %v1009, 0
      %v1049 = vsel %vm252, %v1010, 0
      %1051 = vmatpush.msra.mxu0 0.0
      %1052 = vmatpush.msra.mxu0 0.0
      %1053 = vmatpush.msra.mxu0 0.0
      %1054 = vmatpush.msra.mxu0 0.0
      %1055 = vmatpush.msra.mxu0 0.0
      %1056 = vmatpush.msra.mxu0 0.0
      %1057 = vmatpush.msra.mxu0 0.0
      %1058 = vmatpush.msra.mxu0 0.0
      %1059 = vmatpush.msra.mxu0 0.0
      %1060 = vmatpush.msra.mxu0 0.0
      %1061 = vmatpush.msra.mxu0 0.0
      %1062 = vmatpush.msra.mxu0 0.0
      %1063 = vmatpush.msra.mxu0 0.0
      %1064 = vmatpush.msra.mxu0 0.0
      %1065 = vmatpush.msra.mxu0 0.0
      %1066 = vmatpush.msra.mxu0 %v1000
      %1067 = vmatmul.f32.gmra.mxu0 %v1022
      %v1068 = vpop.f32.mrf.mxu0
      %v1069 = vadd.f32 0.0, %v1068
      %1070 = vmatmul.f32.gmra.mxu0 %v1025
      %v1071 = vpop.f32.mrf.mxu0
      %v1072 = vadd.f32 0.0, %v1071
      %1073 = vmatmul.f32.gmra.mxu0 %v1028
      %v1074 = vpop.f32.mrf.mxu0
      %v1075 = vadd.f32 0.0, %v1074
      %1076 = vmatmul.f32.gmra.mxu0 %v1031
      %v1077 = vpop.f32.mrf.mxu0
      %v1078 = vadd.f32 0.0, %v1077
      %1079 = vmatmul.f32.gmra.mxu0 %v1034
      %v1080 = vpop.f32.mrf.mxu0
      %v1081 = vadd.f32 0.0, %v1080
      %1082 = vmatmul.f32.gmra.mxu0 %v1037
      %v1083 = vpop.f32.mrf.mxu0
      %v1084 = vadd.f32 0.0, %v1083
      %1085 = vmatmul.f32.gmra.mxu0 %v1040
      %v1086 = vpop.f32.mrf.mxu0
      %v1087 = vadd.f32 0.0, %v1086
      %1088 = vmatmul.f32.gmra.mxu0 %v1043
      %v1089 = vpop.f32.mrf.mxu0
      %v1090 = vadd.f32 0.0, %v1089
      %1091 = vmatmul.f32.gmra.mxu0 %v1046
      %v1092 = vpop.f32.mrf.mxu0
      %v1093 = vadd.f32 0.0, %v1092
      %1094 = vmatmul.f32.gmra.mxu0 %v1049
      %v1095 = vpop.f32.mrf.mxu0
      %v1096 = vadd.f32 0.0, %v1095
      %1097 = vdwg.mxu0
      %v1098 = vadd.f32 %v902, %v1069
      %v1099 = vadd.f32 %v903, %v1072
      %v1100 = vadd.f32 %v904, %v1075
      %v1101 = vadd.f32 %v905, %v1078
      %v1102 = vadd.f32 %v906, %v1081
      %v1103 = vadd.f32 %v907, %v1084
      %v1104 = vadd.f32 %v908, %v1087
      %v1105 = vadd.f32 %v909, %v1090
      %v1106 = vadd.f32 %v910, %v1093
      %v1107 = vadd.f32 %v911, %v1096
      %v1109 = vsel %vm252, %v1011, 0
      %v1112 = vsel %vm252, %v1012, 0
      %v1115 = vsel %vm252, %v1013, 0
      %v1118 = vsel %vm252, %v1014, 0
      %v1121 = vsel %vm252, %v1015, 0
      %v1124 = vsel %vm252, %v1016, 0
      %v1127 = vsel %vm252, %v1017, 0
      %v1130 = vsel %vm252, %v1018, 0
      %v1133 = vsel %vm252, %v1019, 0
      %v1136 = vsel %vm252, %v1020, 0
      %1138 = vmatpush.msra.mxu0 0.0
      %1139 = vmatpush.msra.mxu0 0.0
      %1140 = vmatpush.msra.mxu0 0.0
      %1141 = vmatpush.msra.mxu0 0.0
      %1142 = vmatpush.msra.mxu0 0.0
      %1143 = vmatpush.msra.mxu0 0.0
      %1144 = vmatpush.msra.mxu0 0.0
      %1145 = vmatpush.msra.mxu0 0.0
      %1146 = vmatpush.msra.mxu0 0.0
      %1147 = vmatpush.msra.mxu0 0.0
      %1148 = vmatpush.msra.mxu0 0.0
      %1149 = vmatpush.msra.mxu0 0.0
      %1150 = vmatpush.msra.mxu0 0.0
      %1151 = vmatpush.msra.mxu0 0.0
      %1152 = vmatpush.msra.mxu0 0.0
      %1153 = vmatpush.msra.mxu0 %v1000
      %1154 = vmatmul.f32.gmra.mxu0 %v1109
      %v1155 = vpop.f32.mrf.mxu0
      %v1156 = vadd.f32 0.0, %v1155
      %1157 = vmatmul.f32.gmra.mxu0 %v1112
      %v1158 = vpop.f32.mrf.mxu0
      %v1159 = vadd.f32 0.0, %v1158
      %1160 = vmatmul.f32.gmra.mxu0 %v1115
      %v1161 = vpop.f32.mrf.mxu0
      %v1162 = vadd.f32 0.0, %v1161
      %1163 = vmatmul.f32.gmra.mxu0 %v1118
      %v1164 = vpop.f32.mrf.mxu0
      %v1165 = vadd.f32 0.0, %v1164
      %1166 = vmatmul.f32.gmra.mxu0 %v1121
      %v1167 = vpop.f32.mrf.mxu0
      %v1168 = vadd.f32 0.0, %v1167
      %1169 = vmatmul.f32.gmra.mxu0 %v1124
      %v1170 = vpop.f32.mrf.mxu0
      %v1171 = vadd.f32 0.0, %v1170
      %1172 = vmatmul.f32.gmra.mxu0 %v1127
      %v1173 = vpop.f32.mrf.mxu0
      %v1174 = vadd.f32 0.0, %v1173
      %1175 = vmatmul.f32.gmra.mxu0 %v1130
      %v1176 = vpop.f32.mrf.mxu0
      %v1177 = vadd.f32 0.0, %v1176
      %1178 = vmatmul.f32.gmra.mxu0 %v1133
      %v1179 = vpop.f32.mrf.mxu0
      %v1180 = vadd.f32 0.0, %v1179
      %1181 = vmatmul.f32.gmra.mxu0 %v1136
      %v1182 = vpop.f32.mrf.mxu0
      %v1183 = vadd.f32 0.0, %v1182
      %1184 = vdwg.mxu0
      %v1185 = vadd.f32 %v989, %v1156
      %v1186 = vadd.f32 %v990, %v1159
      %v1187 = vadd.f32 %v991, %v1162
      %v1188 = vadd.f32 %v992, %v1165
      %v1189 = vadd.f32 %v993, %v1168
      %v1190 = vadd.f32 %v994, %v1171
      %v1191 = vadd.f32 %v995, %v1174
      %v1192 = vadd.f32 %v996, %v1177
      %v1193 = vadd.f32 %v997, %v1180
      %v1194 = vadd.f32 %v998, %v1183
      %s1195 = scalar_lea.vmem %s2, 48
      %v1196 = vld [vmem:[%s1195] sm:$0xff]
      %v1197 = vld [vmem:[%s207 + $0x9] sm:$0xff]
      %v1198 = vld [vmem:[%s207 + $0x11] sm:$0xff]
      %v1199 = vld [vmem:[%s207 + $0x19] sm:$0xff]
      %v1200 = vld [vmem:[%s207 + $0x21] sm:$0xff]
      %v1201 = vld [vmem:[%s207 + $0x29] sm:$0xff]
      %v1202 = vld [vmem:[%s207 + $0x31] sm:$0xff]
      %v1203 = vld [vmem:[%s207 + $0x39] sm:$0xff]
      %v1204 = vld [vmem:[%s207 + $0x41] sm:$0xff]
      %v1205 = vld [vmem:[%s207 + $0x49] sm:$0xff]
      %v1206 = vld [vmem:[%s207 + $0x51] sm:$0xff]
      %1207 = vmatpush.msra.mxu0 0.0
      %1208 = vmatpush.msra.mxu0 0.0
      %1209 = vmatpush.msra.mxu0 0.0
      %1210 = vmatpush.msra.mxu0 0.0
      %1211 = vmatpush.msra.mxu0 0.0
      %1212 = vmatpush.msra.mxu0 0.0
      %1213 = vmatpush.msra.mxu0 0.0
      %1214 = vmatpush.msra.mxu0 0.0
      %1215 = vmatpush.msra.mxu0 0.0
      %1216 = vmatpush.msra.mxu0 0.0
      %1217 = vmatpush.msra.mxu0 0.0
      %1218 = vmatpush.msra.mxu0 0.0
      %1219 = vmatpush.msra.mxu0 0.0
      %1220 = vmatpush.msra.mxu0 0.0
      %1221 = vmatpush.msra.mxu0 0.0
      %1222 = vmatpush.msra.mxu0 %v1196
      %1223 = vmatmul.f32.gmra.mxu0 %v1109
      %v1224 = vpop.f32.mrf.mxu0
      %v1225 = vadd.f32 0.0, %v1224
      %1226 = vmatmul.f32.gmra.mxu0 %v1112
      %v1227 = vpop.f32.mrf.mxu0
      %v1228 = vadd.f32 0.0, %v1227
      %1229 = vmatmul.f32.gmra.mxu0 %v1115
      %v1230 = vpop.f32.mrf.mxu0
      %v1231 = vadd.f32 0.0, %v1230
      %1232 = vmatmul.f32.gmra.mxu0 %v1118
      %v1233 = vpop.f32.mrf.mxu0
      %v1234 = vadd.f32 0.0, %v1233
      %1235 = vmatmul.f32.gmra.mxu0 %v1121
      %v1236 = vpop.f32.mrf.mxu0
      %v1237 = vadd.f32 0.0, %v1236
      %1238 = vmatmul.f32.gmra.mxu0 %v1124
      %v1239 = vpop.f32.mrf.mxu0
      %v1240 = vadd.f32 0.0, %v1239
      %1241 = vmatmul.f32.gmra.mxu0 %v1127
      %v1242 = vpop.f32.mrf.mxu0
      %v1243 = vadd.f32 0.0, %v1242
      %1244 = vmatmul.f32.gmra.mxu0 %v1130
      %v1245 = vpop.f32.mrf.mxu0
      %v1246 = vadd.f32 0.0, %v1245
      %1247 = vmatmul.f32.gmra.mxu0 %v1133
      %v1248 = vpop.f32.mrf.mxu0
      %v1249 = vadd.f32 0.0, %v1248
      %1250 = vmatmul.f32.gmra.mxu0 %v1136
      %v1251 = vpop.f32.mrf.mxu0
      %v1252 = vadd.f32 0.0, %v1251
      %1253 = vdwg.mxu0
      %v1254 = vadd.f32 %v1098, %v1225
      %v1255 = vadd.f32 %v1099, %v1228
      %v1256 = vadd.f32 %v1100, %v1231
      %v1257 = vadd.f32 %v1101, %v1234
      %v1258 = vadd.f32 %v1102, %v1237
      %v1259 = vadd.f32 %v1103, %v1240
      %v1260 = vadd.f32 %v1104, %v1243
      %v1261 = vadd.f32 %v1105, %v1246
      %v1262 = vadd.f32 %v1106, %v1249
      %v1263 = vadd.f32 %v1107, %v1252
      %v1265 = vsel %vm252, %v1197, 0
      %v1268 = vsel %vm252, %v1198, 0
      %v1271 = vsel %vm252, %v1199, 0
      %v1274 = vsel %vm252, %v1200, 0
      %v1277 = vsel %vm252, %v1201, 0
      %v1280 = vsel %vm252, %v1202, 0
      %v1283 = vsel %vm252, %v1203, 0
      %v1286 = vsel %vm252, %v1204, 0
      %v1289 = vsel %vm252, %v1205, 0
      %v1292 = vsel %vm252, %v1206, 0
      %1294 = vmatpush.msra.mxu0 0.0
      %1295 = vmatpush.msra.mxu0 0.0
      %1296 = vmatpush.msra.mxu0 0.0
      %1297 = vmatpush.msra.mxu0 0.0
      %1298 = vmatpush.msra.mxu0 0.0
      %1299 = vmatpush.msra.mxu0 0.0
      %1300 = vmatpush.msra.mxu0 0.0
      %1301 = vmatpush.msra.mxu0 0.0
      %1302 = vmatpush.msra.mxu0 0.0
      %1303 = vmatpush.msra.mxu0 0.0
      %1304 = vmatpush.msra.mxu0 0.0
      %1305 = vmatpush.msra.mxu0 0.0
      %1306 = vmatpush.msra.mxu0 0.0
      %1307 = vmatpush.msra.mxu0 0.0
      %1308 = vmatpush.msra.mxu0 0.0
      %1309 = vmatpush.msra.mxu0 %v1196
      %1310 = vmatmul.f32.gmra.mxu0 %v1265
      %v1311 = vpop.f32.mrf.mxu0
      %v1312 = vadd.f32 0.0, %v1311
      %1313 = vmatmul.f32.gmra.mxu0 %v1268
      %v1314 = vpop.f32.mrf.mxu0
      %v1315 = vadd.f32 0.0, %v1314
      %1316 = vmatmul.f32.gmra.mxu0 %v1271
      %v1317 = vpop.f32.mrf.mxu0
      %v1318 = vadd.f32 0.0, %v1317
      %1319 = vmatmul.f32.gmra.mxu0 %v1274
      %v1320 = vpop.f32.mrf.mxu0
      %v1321 = vadd.f32 0.0, %v1320
      %1322 = vmatmul.f32.gmra.mxu0 %v1277
      %v1323 = vpop.f32.mrf.mxu0
      %v1324 = vadd.f32 0.0, %v1323
      %1325 = vmatmul.f32.gmra.mxu0 %v1280
      %v1326 = vpop.f32.mrf.mxu0
      %v1327 = vadd.f32 0.0, %v1326
      %1328 = vmatmul.f32.gmra.mxu0 %v1283
      %v1329 = vpop.f32.mrf.mxu0
      %v1330 = vadd.f32 0.0, %v1329
      %1331 = vmatmul.f32.gmra.mxu0 %v1286
      %v1332 = vpop.f32.mrf.mxu0
      %v1333 = vadd.f32 0.0, %v1332
      %1334 = vmatmul.f32.gmra.mxu0 %v1289
      %v1335 = vpop.f32.mrf.mxu0
      %v1336 = vadd.f32 0.0, %v1335
      %1337 = vmatmul.f32.gmra.mxu0 %v1292
      %v1338 = vpop.f32.mrf.mxu0
      %v1339 = vadd.f32 0.0, %v1338
      %1340 = vdwg.mxu0
      %v1341 = vadd.f32 %v1185, %v1312
      %v1342 = vadd.f32 %v1186, %v1315
      %v1343 = vadd.f32 %v1187, %v1318
      %v1344 = vadd.f32 %v1188, %v1321
      %v1345 = vadd.f32 %v1189, %v1324
      %v1346 = vadd.f32 %v1190, %v1327
      %v1347 = vadd.f32 %v1191, %v1330
      %v1348 = vadd.f32 %v1192, %v1333
      %v1349 = vadd.f32 %v1193, %v1336
      %v1350 = vadd.f32 %v1194, %v1339
      %s1351 = scalar_lea.vmem %s2, 56
      %v1352 = vld [vmem:[%s1351] sm:$0xff]
      %v1353 = vld [vmem:[%s212 + $0x9] sm:$0xff]
      %v1354 = vld [vmem:[%s212 + $0x11] sm:$0xff]
      %v1355 = vld [vmem:[%s212 + $0x19] sm:$0xff]
      %v1356 = vld [vmem:[%s212 + $0x21] sm:$0xff]
      %v1357 = vld [vmem:[%s212 + $0x29] sm:$0xff]
      %v1358 = vld [vmem:[%s212 + $0x31] sm:$0xff]
      %v1359 = vld [vmem:[%s212 + $0x39] sm:$0xff]
      %v1360 = vld [vmem:[%s212 + $0x41] sm:$0xff]
      %v1361 = vld [vmem:[%s212 + $0x49] sm:$0xff]
      %v1362 = vld [vmem:[%s212 + $0x51] sm:$0xff]
      %1363 = vmatpush.msra.mxu0 0.0
      %1364 = vmatpush.msra.mxu0 0.0
      %1365 = vmatpush.msra.mxu0 0.0
      %1366 = vmatpush.msra.mxu0 0.0
      %1367 = vmatpush.msra.mxu0 0.0
      %1368 = vmatpush.msra.mxu0 0.0
      %1369 = vmatpush.msra.mxu0 0.0
      %1370 = vmatpush.msra.mxu0 0.0
      %1371 = vmatpush.msra.mxu0 0.0
      %1372 = vmatpush.msra.mxu0 0.0
      %1373 = vmatpush.msra.mxu0 0.0
      %1374 = vmatpush.msra.mxu0 0.0
      %1375 = vmatpush.msra.mxu0 0.0
      %1376 = vmatpush.msra.mxu0 0.0
      %1377 = vmatpush.msra.mxu0 0.0
      %1378 = vmatpush.msra.mxu0 %v1352
      %1379 = vmatmul.f32.gmra.mxu0 %v1265
      %v1380 = vpop.f32.mrf.mxu0
      %v1381 = vadd.f32 0.0, %v1380
      %1382 = vmatmul.f32.gmra.mxu0 %v1268
      %v1383 = vpop.f32.mrf.mxu0
      %v1384 = vadd.f32 0.0, %v1383
      %1385 = vmatmul.f32.gmra.mxu0 %v1271
      %v1386 = vpop.f32.mrf.mxu0
      %v1387 = vadd.f32 0.0, %v1386
      %1388 = vmatmul.f32.gmra.mxu0 %v1274
      %v1389 = vpop.f32.mrf.mxu0
      %v1390 = vadd.f32 0.0, %v1389
      %1391 = vmatmul.f32.gmra.mxu0 %v1277
      %v1392 = vpop.f32.mrf.mxu0
      %v1393 = vadd.f32 0.0, %v1392
      %1394 = vmatmul.f32.gmra.mxu0 %v1280
      %v1395 = vpop.f32.mrf.mxu0
      %v1396 = vadd.f32 0.0, %v1395
      %1397 = vmatmul.f32.gmra.mxu0 %v1283
      %v1398 = vpop.f32.mrf.mxu0
      %v1399 = vadd.f32 0.0, %v1398
      %1400 = vmatmul.f32.gmra.mxu0 %v1286
      %v1401 = vpop.f32.mrf.mxu0
      %v1402 = vadd.f32 0.0, %v1401
      %1403 = vmatmul.f32.gmra.mxu0 %v1289
      %v1404 = vpop.f32.mrf.mxu0
      %v1405 = vadd.f32 0.0, %v1404
      %1406 = vmatmul.f32.gmra.mxu0 %v1292
      %v1407 = vpop.f32.mrf.mxu0
      %v1408 = vadd.f32 0.0, %v1407
      %1409 = vdwg.mxu0
      %v1410 = vadd.f32 %v1254, %v1381
      %v1411 = vadd.f32 %v1255, %v1384
      %v1412 = vadd.f32 %v1256, %v1387
      %v1413 = vadd.f32 %v1257, %v1390
      %v1414 = vadd.f32 %v1258, %v1393
      %v1415 = vadd.f32 %v1259, %v1396
      %v1416 = vadd.f32 %v1260, %v1399
      %v1417 = vadd.f32 %v1261, %v1402
      %v1418 = vadd.f32 %v1262, %v1405
      %v1419 = vadd.f32 %v1263, %v1408
      %v1421 = vsel %vm252, %v1353, 0
      %v1424 = vsel %vm252, %v1354, 0
      %v1427 = vsel %vm252, %v1355, 0
      %v1430 = vsel %vm252, %v1356, 0
      %v1433 = vsel %vm252, %v1357, 0
      %v1436 = vsel %vm252, %v1358, 0
      %v1439 = vsel %vm252, %v1359, 0
      %v1442 = vsel %vm252, %v1360, 0
      %v1445 = vsel %vm252, %v1361, 0
      %v1448 = vsel %vm252, %v1362, 0
      %1450 = vmatpush.msra.mxu0 0.0
      %1451 = vmatpush.msra.mxu0 0.0
      %1452 = vmatpush.msra.mxu0 0.0
      %1453 = vmatpush.msra.mxu0 0.0
      %1454 = vmatpush.msra.mxu0 0.0
      %1455 = vmatpush.msra.mxu0 0.0
      %1456 = vmatpush.msra.mxu0 0.0
      %1457 = vmatpush.msra.mxu0 0.0
      %1458 = vmatpush.msra.mxu0 0.0
      %1459 = vmatpush.msra.mxu0 0.0
      %1460 = vmatpush.msra.mxu0 0.0
      %1461 = vmatpush.msra.mxu0 0.0
      %1462 = vmatpush.msra.mxu0 0.0
      %1463 = vmatpush.msra.mxu0 0.0
      %1464 = vmatpush.msra.mxu0 0.0
      %1465 = vmatpush.msra.mxu0 %v1352
      %1466 = vmatmul.f32.gmra.mxu0 %v1421
      %v1467 = vpop.f32.mrf.mxu0
      %v1468 = vadd.f32 0.0, %v1467
      %1469 = vmatmul.f32.gmra.mxu0 %v1424
      %v1470 = vpop.f32.mrf.mxu0
      %v1471 = vadd.f32 0.0, %v1470
      %1472 = vmatmul.f32.gmra.mxu0 %v1427
      %v1473 = vpop.f32.mrf.mxu0
      %v1474 = vadd.f32 0.0, %v1473
      %1475 = vmatmul.f32.gmra.mxu0 %v1430
      %v1476 = vpop.f32.mrf.mxu0
      %v1477 = vadd.f32 0.0, %v1476
      %1478 = vmatmul.f32.gmra.mxu0 %v1433
      %v1479 = vpop.f32.mrf.mxu0
      %v1480 = vadd.f32 0.0, %v1479
      %1481 = vmatmul.f32.gmra.mxu0 %v1436
      %v1482 = vpop.f32.mrf.mxu0
      %v1483 = vadd.f32 0.0, %v1482
      %1484 = vmatmul.f32.gmra.mxu0 %v1439
      %v1485 = vpop.f32.mrf.mxu0
      %v1486 = vadd.f32 0.0, %v1485
      %1487 = vmatmul.f32.gmra.mxu0 %v1442
      %v1488 = vpop.f32.mrf.mxu0
      %v1489 = vadd.f32 0.0, %v1488
      %1490 = vmatmul.f32.gmra.mxu0 %v1445
      %v1491 = vpop.f32.mrf.mxu0
      %v1492 = vadd.f32 0.0, %v1491
      %1493 = vmatmul.f32.gmra.mxu0 %v1448
      %v1494 = vpop.f32.mrf.mxu0
      %v1495 = vadd.f32 0.0, %v1494
      %1496 = vdwg.mxu0
      %v1497 = vadd.f32 %v1341, %v1468
      %v1498 = vadd.f32 %v1342, %v1471
      %v1499 = vadd.f32 %v1343, %v1474
      %v1500 = vadd.f32 %v1344, %v1477
      %v1501 = vadd.f32 %v1345, %v1480
      %v1502 = vadd.f32 %v1346, %v1483
      %v1503 = vadd.f32 %v1347, %v1486
      %v1504 = vadd.f32 %v1348, %v1489
      %v1505 = vadd.f32 %v1349, %v1492
      %v1506 = vadd.f32 %v1350, %v1495
      %s1507 = scalar_lea.vmem %s2, 64
      %v1508 = vld [vmem:[%s1507] sm:$0xff]
      %v1509 = vld [vmem:[%s207 + $0xa] sm:$0xff]
      %v1510 = vld [vmem:[%s207 + $0x12] sm:$0xff]
      %v1511 = vld [vmem:[%s207 + $0x1a] sm:$0xff]
      %v1512 = vld [vmem:[%s207 + $0x22] sm:$0xff]
      %v1513 = vld [vmem:[%s207 + $0x2a] sm:$0xff]
      %v1514 = vld [vmem:[%s207 + $0x32] sm:$0xff]
      %v1515 = vld [vmem:[%s207 + $0x3a] sm:$0xff]
      %v1516 = vld [vmem:[%s207 + $0x42] sm:$0xff]
      %v1517 = vld [vmem:[%s207 + $0x4a] sm:$0xff]
      %v1518 = vld [vmem:[%s207 + $0x52] sm:$0xff]
      %1519 = vmatpush.msra.mxu0 0.0
      %1520 = vmatpush.msra.mxu0 0.0
      %1521 = vmatpush.msra.mxu0 0.0
      %1522 = vmatpush.msra.mxu0 0.0
      %1523 = vmatpush.msra.mxu0 0.0
      %1524 = vmatpush.msra.mxu0 0.0
      %1525 = vmatpush.msra.mxu0 0.0
      %1526 = vmatpush.msra.mxu0 0.0
      %1527 = vmatpush.msra.mxu0 0.0
      %1528 = vmatpush.msra.mxu0 0.0
      %1529 = vmatpush.msra.mxu0 0.0
      %1530 = vmatpush.msra.mxu0 0.0
      %1531 = vmatpush.msra.mxu0 0.0
      %1532 = vmatpush.msra.mxu0 0.0
      %1533 = vmatpush.msra.mxu0 0.0
      %1534 = vmatpush.msra.mxu0 %v1508
      %1535 = vmatmul.f32.gmra.mxu0 %v1421
      %v1536 = vpop.f32.mrf.mxu0
      %v1537 = vadd.f32 0.0, %v1536
      %1538 = vmatmul.f32.gmra.mxu0 %v1424
      %v1539 = vpop.f32.mrf.mxu0
      %v1540 = vadd.f32 0.0, %v1539
      %1541 = vmatmul.f32.gmra.mxu0 %v1427
      %v1542 = vpop.f32.mrf.mxu0
      %v1543 = vadd.f32 0.0, %v1542
      %1544 = vmatmul.f32.gmra.mxu0 %v1430
      %v1545 = vpop.f32.mrf.mxu0
      %v1546 = vadd.f32 0.0, %v1545
      %1547 = vmatmul.f32.gmra.mxu0 %v1433
      %v1548 = vpop.f32.mrf.mxu0
      %v1549 = vadd.f32 0.0, %v1548
      %1550 = vmatmul.f32.gmra.mxu0 %v1436
      %v1551 = vpop.f32.mrf.mxu0
      %v1552 = vadd.f32 0.0, %v1551
      %1553 = vmatmul.f32.gmra.mxu0 %v1439
      %v1554 = vpop.f32.mrf.mxu0
      %v1555 = vadd.f32 0.0, %v1554
      %1556 = vmatmul.f32.gmra.mxu0 %v1442
      %v1557 = vpop.f32.mrf.mxu0
      %v1558 = vadd.f32 0.0, %v1557
      %1559 = vmatmul.f32.gmra.mxu0 %v1445
      %v1560 = vpop.f32.mrf.mxu0
      %v1561 = vadd.f32 0.0, %v1560
      %1562 = vmatmul.f32.gmra.mxu0 %v1448
      %v1563 = vpop.f32.mrf.mxu0
      %v1564 = vadd.f32 0.0, %v1563
      %1565 = vdwg.mxu0
      %v1566 = vadd.f32 %v1410, %v1537
      %v1567 = vadd.f32 %v1411, %v1540
      %v1568 = vadd.f32 %v1412, %v1543
      %v1569 = vadd.f32 %v1413, %v1546
      %v1570 = vadd.f32 %v1414, %v1549
      %v1571 = vadd.f32 %v1415, %v1552
      %v1572 = vadd.f32 %v1416, %v1555
      %v1573 = vadd.f32 %v1417, %v1558
      %v1574 = vadd.f32 %v1418, %v1561
      %v1575 = vadd.f32 %v1419, %v1564
      %v1577 = vsel %vm252, %v1509, 0
      %v1580 = vsel %vm252, %v1510, 0
      %v1583 = vsel %vm252, %v1511, 0
      %v1586 = vsel %vm252, %v1512, 0
      %v1589 = vsel %vm252, %v1513, 0
      %v1592 = vsel %vm252, %v1514, 0
      %v1595 = vsel %vm252, %v1515, 0
      %v1598 = vsel %vm252, %v1516, 0
      %v1601 = vsel %vm252, %v1517, 0
      %v1604 = vsel %vm252, %v1518, 0
      %1606 = vmatpush.msra.mxu0 0.0
      %1607 = vmatpush.msra.mxu0 0.0
      %1608 = vmatpush.msra.mxu0 0.0
      %1609 = vmatpush.msra.mxu0 0.0
      %1610 = vmatpush.msra.mxu0 0.0
      %1611 = vmatpush.msra.mxu0 0.0
      %1612 = vmatpush.msra.mxu0 0.0
      %1613 = vmatpush.msra.mxu0 0.0
      %1614 = vmatpush.msra.mxu0 0.0
      %1615 = vmatpush.msra.mxu0 0.0
      %1616 = vmatpush.msra.mxu0 0.0
      %1617 = vmatpush.msra.mxu0 0.0
      %1618 = vmatpush.msra.mxu0 0.0
      %1619 = vmatpush.msra.mxu0 0.0
      %1620 = vmatpush.msra.mxu0 0.0
      %1621 = vmatpush.msra.mxu0 %v1508
      %1622 = vmatmul.f32.gmra.mxu0 %v1577
      %v1623 = vpop.f32.mrf.mxu0
      %v1624 = vadd.f32 0.0, %v1623
      %1625 = vmatmul.f32.gmra.mxu0 %v1580
      %v1626 = vpop.f32.mrf.mxu0
      %v1627 = vadd.f32 0.0, %v1626
      %1628 = vmatmul.f32.gmra.mxu0 %v1583
      %v1629 = vpop.f32.mrf.mxu0
      %v1630 = vadd.f32 0.0, %v1629
      %1631 = vmatmul.f32.gmra.mxu0 %v1586
      %v1632 = vpop.f32.mrf.mxu0
      %v1633 = vadd.f32 0.0, %v1632
      %1634 = vmatmul.f32.gmra.mxu0 %v1589
      %v1635 = vpop.f32.mrf.mxu0
      %v1636 = vadd.f32 0.0, %v1635
      %1637 = vmatmul.f32.gmra.mxu0 %v1592
      %v1638 = vpop.f32.mrf.mxu0
      %v1639 = vadd.f32 0.0, %v1638
      %1640 = vmatmul.f32.gmra.mxu0 %v1595
      %v1641 = vpop.f32.mrf.mxu0
      %v1642 = vadd.f32 0.0, %v1641
      %1643 = vmatmul.f32.gmra.mxu0 %v1598
      %v1644 = vpop.f32.mrf.mxu0
      %v1645 = vadd.f32 0.0, %v1644
      %1646 = vmatmul.f32.gmra.mxu0 %v1601
      %v1647 = vpop.f32.mrf.mxu0
      %v1648 = vadd.f32 0.0, %v1647
      %1649 = vmatmul.f32.gmra.mxu0 %v1604
      %v1650 = vpop.f32.mrf.mxu0
      %v1651 = vadd.f32 0.0, %v1650
      %1652 = vdwg.mxu0
      %v1653 = vadd.f32 %v1497, %v1624
      %v1654 = vadd.f32 %v1498, %v1627
      %v1655 = vadd.f32 %v1499, %v1630
      %v1656 = vadd.f32 %v1500, %v1633
      %v1657 = vadd.f32 %v1501, %v1636
      %v1658 = vadd.f32 %v1502, %v1639
      %v1659 = vadd.f32 %v1503, %v1642
      %v1660 = vadd.f32 %v1504, %v1645
      %v1661 = vadd.f32 %v1505, %v1648
      %v1662 = vadd.f32 %v1506, %v1651
      %s1663 = scalar_lea.vmem %s2, 72
      %v1664 = vld [vmem:[%s1663] sm:$0xff]
      %v1665 = vld [vmem:[%s212 + $0xa] sm:$0xff]
      %v1666 = vld [vmem:[%s212 + $0x12] sm:$0xff]
      %v1667 = vld [vmem:[%s212 + $0x1a] sm:$0xff]
      %v1668 = vld [vmem:[%s212 + $0x22] sm:$0xff]
      %v1669 = vld [vmem:[%s212 + $0x2a] sm:$0xff]
      %v1670 = vld [vmem:[%s212 + $0x32] sm:$0xff]
      %v1671 = vld [vmem:[%s212 + $0x3a] sm:$0xff]
      %v1672 = vld [vmem:[%s212 + $0x42] sm:$0xff]
      %v1673 = vld [vmem:[%s212 + $0x4a] sm:$0xff]
      %v1674 = vld [vmem:[%s212 + $0x52] sm:$0xff]
      %1675 = vmatpush.msra.mxu0 0.0
      %1676 = vmatpush.msra.mxu0 0.0
      %1677 = vmatpush.msra.mxu0 0.0
      %1678 = vmatpush.msra.mxu0 0.0
      %1679 = vmatpush.msra.mxu0 0.0
      %1680 = vmatpush.msra.mxu0 0.0
      %1681 = vmatpush.msra.mxu0 0.0
      %1682 = vmatpush.msra.mxu0 0.0
      %1683 = vmatpush.msra.mxu0 0.0
      %1684 = vmatpush.msra.mxu0 0.0
      %1685 = vmatpush.msra.mxu0 0.0
      %1686 = vmatpush.msra.mxu0 0.0
      %1687 = vmatpush.msra.mxu0 0.0
      %1688 = vmatpush.msra.mxu0 0.0
      %1689 = vmatpush.msra.mxu0 0.0
      %1690 = vmatpush.msra.mxu0 %v1664
      %1691 = vmatmul.f32.gmra.mxu0 %v1577
      %v1692 = vpop.f32.mrf.mxu0
      %v1693 = vadd.f32 0.0, %v1692
      %1694 = vmatmul.f32.gmra.mxu0 %v1580
      %v1695 = vpop.f32.mrf.mxu0
      %v1696 = vadd.f32 0.0, %v1695
      %1697 = vmatmul.f32.gmra.mxu0 %v1583
      %v1698 = vpop.f32.mrf.mxu0
      %v1699 = vadd.f32 0.0, %v1698
      %1700 = vmatmul.f32.gmra.mxu0 %v1586
      %v1701 = vpop.f32.mrf.mxu0
      %v1702 = vadd.f32 0.0, %v1701
      %1703 = vmatmul.f32.gmra.mxu0 %v1589
      %v1704 = vpop.f32.mrf.mxu0
      %v1705 = vadd.f32 0.0, %v1704
      %1706 = vmatmul.f32.gmra.mxu0 %v1592
      %v1707 = vpop.f32.mrf.mxu0
      %v1708 = vadd.f32 0.0, %v1707
      %1709 = vmatmul.f32.gmra.mxu0 %v1595
      %v1710 = vpop.f32.mrf.mxu0
      %v1711 = vadd.f32 0.0, %v1710
      %1712 = vmatmul.f32.gmra.mxu0 %v1598
      %v1713 = vpop.f32.mrf.mxu0
      %v1714 = vadd.f32 0.0, %v1713
      %1715 = vmatmul.f32.gmra.mxu0 %v1601
      %v1716 = vpop.f32.mrf.mxu0
      %v1717 = vadd.f32 0.0, %v1716
      %1718 = vmatmul.f32.gmra.mxu0 %v1604
      %v1719 = vpop.f32.mrf.mxu0
      %v1720 = vadd.f32 0.0, %v1719
      %1721 = vdwg.mxu0
      %v1722 = vadd.f32 %v1566, %v1693
      %v1723 = vadd.f32 %v1567, %v1696
      %v1724 = vadd.f32 %v1568, %v1699
      %v1725 = vadd.f32 %v1569, %v1702
      %v1726 = vadd.f32 %v1570, %v1705
      %v1727 = vadd.f32 %v1571, %v1708
      %v1728 = vadd.f32 %v1572, %v1711
      %v1729 = vadd.f32 %v1573, %v1714
      %v1730 = vadd.f32 %v1574, %v1717
      %v1731 = vadd.f32 %v1575, %v1720
      %v1733 = vsel %vm252, %v1665, 0
      %v1736 = vsel %vm252, %v1666, 0
      %v1739 = vsel %vm252, %v1667, 0
      %v1742 = vsel %vm252, %v1668, 0
      %v1745 = vsel %vm252, %v1669, 0
      %v1748 = vsel %vm252, %v1670, 0
      %v1751 = vsel %vm252, %v1671, 0
      %v1754 = vsel %vm252, %v1672, 0
      %v1757 = vsel %vm252, %v1673, 0
      %v1760 = vsel %vm252, %v1674, 0
      %1762 = vmatpush.msra.mxu0 0.0
      %1763 = vmatpush.msra.mxu0 0.0
      %1764 = vmatpush.msra.mxu0 0.0
      %1765 = vmatpush.msra.mxu0 0.0
      %1766 = vmatpush.msra.mxu0 0.0
      %1767 = vmatpush.msra.mxu0 0.0
      %1768 = vmatpush.msra.mxu0 0.0
      %1769 = vmatpush.msra.mxu0 0.0
      %1770 = vmatpush.msra.mxu0 0.0
      %1771 = vmatpush.msra.mxu0 0.0
      %1772 = vmatpush.msra.mxu0 0.0
      %1773 = vmatpush.msra.mxu0 0.0
      %1774 = vmatpush.msra.mxu0 0.0
      %1775 = vmatpush.msra.mxu0 0.0
      %1776 = vmatpush.msra.mxu0 0.0
      %1777 = vmatpush.msra.mxu0 %v1664
      %1778 = vmatmul.f32.gmra.mxu0 %v1733
      %v1779 = vpop.f32.mrf.mxu0
      %v1780 = vadd.f32 0.0, %v1779
      %1781 = vmatmul.f32.gmra.mxu0 %v1736
      %v1782 = vpop.f32.mrf.mxu0
      %v1783 = vadd.f32 0.0, %v1782
      %1784 = vmatmul.f32.gmra.mxu0 %v1739
      %v1785 = vpop.f32.mrf.mxu0
      %v1786 = vadd.f32 0.0, %v1785
      %1787 = vmatmul.f32.gmra.mxu0 %v1742
      %v1788 = vpop.f32.mrf.mxu0
      %v1789 = vadd.f32 0.0, %v1788
      %1790 = vmatmul.f32.gmra.mxu0 %v1745
      %v1791 = vpop.f32.mrf.mxu0
      %v1792 = vadd.f32 0.0, %v1791
      %1793 = vmatmul.f32.gmra.mxu0 %v1748
      %v1794 = vpop.f32.mrf.mxu0
      %v1795 = vadd.f32 0.0, %v1794
      %1796 = vmatmul.f32.gmra.mxu0 %v1751
      %v1797 = vpop.f32.mrf.mxu0
      %v1798 = vadd.f32 0.0, %v1797
      %1799 = vmatmul.f32.gmra.mxu0 %v1754
      %v1800 = vpop.f32.mrf.mxu0
      %v1801 = vadd.f32 0.0, %v1800
      %1802 = vmatmul.f32.gmra.mxu0 %v1757
      %v1803 = vpop.f32.mrf.mxu0
      %v1804 = vadd.f32 0.0, %v1803
      %1805 = vmatmul.f32.gmra.mxu0 %v1760
      %v1806 = vpop.f32.mrf.mxu0
      %v1807 = vadd.f32 0.0, %v1806
      %1808 = vdwg.mxu0
      %v1809 = vadd.f32 %v1653, %v1780
      %v1810 = vadd.f32 %v1654, %v1783
      %v1811 = vadd.f32 %v1655, %v1786
      %v1812 = vadd.f32 %v1656, %v1789
      %v1813 = vadd.f32 %v1657, %v1792
      %v1814 = vadd.f32 %v1658, %v1795
      %v1815 = vadd.f32 %v1659, %v1798
      %v1816 = vadd.f32 %v1660, %v1801
      %v1817 = vadd.f32 %v1661, %v1804
      %v1818 = vadd.f32 %v1662, %v1807
      %s1819 = scalar_lea.vmem %s2, 80
      %v1820 = vld [vmem:[%s1819] sm:$0xff]
      %v1821 = vld [vmem:[%s207 + $0x10] sm:$0xff]
      %v1822 = vld [vmem:[%s207 + $0x18] sm:$0xff]
      %v1823 = vld [vmem:[%s207 + $0x20] sm:$0xff]
      %v1824 = vld [vmem:[%s207 + $0x28] sm:$0xff]
      %v1825 = vld [vmem:[%s207 + $0x30] sm:$0xff]
      %v1826 = vld [vmem:[%s207 + $0x38] sm:$0xff]
      %v1827 = vld [vmem:[%s207 + $0x40] sm:$0xff]
      %v1828 = vld [vmem:[%s207 + $0x48] sm:$0xff]
      %v1829 = vld [vmem:[%s207 + $0x50] sm:$0xff]
      %v1830 = vld [vmem:[%s207 + $0x58] sm:$0xff]
      %v1831 = vld [vmem:[%s212 + $0x10] sm:$0xff]
      %v1832 = vld [vmem:[%s212 + $0x18] sm:$0xff]
      %v1833 = vld [vmem:[%s212 + $0x20] sm:$0xff]
      %v1834 = vld [vmem:[%s212 + $0x28] sm:$0xff]
      %v1835 = vld [vmem:[%s212 + $0x30] sm:$0xff]
      %v1836 = vld [vmem:[%s212 + $0x38] sm:$0xff]
      %v1837 = vld [vmem:[%s212 + $0x40] sm:$0xff]
      %v1838 = vld [vmem:[%s212 + $0x48] sm:$0xff]
      %v1839 = vld [vmem:[%s212 + $0x50] sm:$0xff]
      %v1840 = vld [vmem:[%s212 + $0x58] sm:$0xff]
      %v1842 = vsel %vm252, %v1821, 0
      %v1845 = vsel %vm252, %v1822, 0
      %v1848 = vsel %vm252, %v1823, 0
      %v1851 = vsel %vm252, %v1824, 0
      %v1854 = vsel %vm252, %v1825, 0
      %v1857 = vsel %vm252, %v1826, 0
      %v1860 = vsel %vm252, %v1827, 0
      %v1863 = vsel %vm252, %v1828, 0
      %v1866 = vsel %vm252, %v1829, 0
      %v1869 = vsel %vm252, %v1830, 0
      %1871 = vmatpush.msra.mxu0 0.0
      %1872 = vmatpush.msra.mxu0 0.0
      %1873 = vmatpush.msra.mxu0 0.0
      %1874 = vmatpush.msra.mxu0 0.0
      %1875 = vmatpush.msra.mxu0 0.0
      %1876 = vmatpush.msra.mxu0 0.0
      %1877 = vmatpush.msra.mxu0 0.0
      %1878 = vmatpush.msra.mxu0 0.0
      %1879 = vmatpush.msra.mxu0 0.0
      %1880 = vmatpush.msra.mxu0 0.0
      %1881 = vmatpush.msra.mxu0 0.0
      %1882 = vmatpush.msra.mxu0 0.0
      %1883 = vmatpush.msra.mxu0 0.0
      %1884 = vmatpush.msra.mxu0 0.0
      %1885 = vmatpush.msra.mxu0 0.0
      %1886 = vmatpush.msra.mxu0 %v1820
      %1887 = vmatmul.f32.gmra.mxu0 %v1842
      %v1888 = vpop.f32.mrf.mxu0
      %v1889 = vadd.f32 0.0, %v1888
      %1890 = vmatmul.f32.gmra.mxu0 %v1845
      %v1891 = vpop.f32.mrf.mxu0
      %v1892 = vadd.f32 0.0, %v1891
      %1893 = vmatmul.f32.gmra.mxu0 %v1848
      %v1894 = vpop.f32.mrf.mxu0
      %v1895 = vadd.f32 0.0, %v1894
      %1896 = vmatmul.f32.gmra.mxu0 %v1851
      %v1897 = vpop.f32.mrf.mxu0
      %v1898 = vadd.f32 0.0, %v1897
      %1899 = vmatmul.f32.gmra.mxu0 %v1854
      %v1900 = vpop.f32.mrf.mxu0
      %v1901 = vadd.f32 0.0, %v1900
      %1902 = vmatmul.f32.gmra.mxu0 %v1857
      %v1903 = vpop.f32.mrf.mxu0
      %v1904 = vadd.f32 0.0, %v1903
      %1905 = vmatmul.f32.gmra.mxu0 %v1860
      %v1906 = vpop.f32.mrf.mxu0
      %v1907 = vadd.f32 0.0, %v1906
      %1908 = vmatmul.f32.gmra.mxu0 %v1863
      %v1909 = vpop.f32.mrf.mxu0
      %v1910 = vadd.f32 0.0, %v1909
      %1911 = vmatmul.f32.gmra.mxu0 %v1866
      %v1912 = vpop.f32.mrf.mxu0
      %v1913 = vadd.f32 0.0, %v1912
      %1914 = vmatmul.f32.gmra.mxu0 %v1869
      %v1915 = vpop.f32.mrf.mxu0
      %v1916 = vadd.f32 0.0, %v1915
      %1917 = vdwg.mxu0
      %v1918 = vadd.f32 %v1722, %v1889
      %v1919 = vadd.f32 %v1723, %v1892
      %v1920 = vadd.f32 %v1724, %v1895
      %v1921 = vadd.f32 %v1725, %v1898
      %v1922 = vadd.f32 %v1726, %v1901
      %v1923 = vadd.f32 %v1727, %v1904
      %v1924 = vadd.f32 %v1728, %v1907
      %v1925 = vadd.f32 %v1729, %v1910
      %v1926 = vadd.f32 %v1730, %v1913
      %v1927 = vadd.f32 %v1731, %v1916
      %v1929 = vsel %vm252, %v1831, 0
      %v1932 = vsel %vm252, %v1832, 0
      %v1935 = vsel %vm252, %v1833, 0
      %v1938 = vsel %vm252, %v1834, 0
      %v1941 = vsel %vm252, %v1835, 0
      %v1944 = vsel %vm252, %v1836, 0
      %v1947 = vsel %vm252, %v1837, 0
      %v1950 = vsel %vm252, %v1838, 0
      %v1953 = vsel %vm252, %v1839, 0
      %v1956 = vsel %vm252, %v1840, 0
      %1958 = vmatpush.msra.mxu0 0.0
      %1959 = vmatpush.msra.mxu0 0.0
      %1960 = vmatpush.msra.mxu0 0.0
      %1961 = vmatpush.msra.mxu0 0.0
      %1962 = vmatpush.msra.mxu0 0.0
      %1963 = vmatpush.msra.mxu0 0.0
      %1964 = vmatpush.msra.mxu0 0.0
      %1965 = vmatpush.msra.mxu0 0.0
      %1966 = vmatpush.msra.mxu0 0.0
      %1967 = vmatpush.msra.mxu0 0.0
      %1968 = vmatpush.msra.mxu0 0.0
      %1969 = vmatpush.msra.mxu0 0.0
      %1970 = vmatpush.msra.mxu0 0.0
      %1971 = vmatpush.msra.mxu0 0.0
      %1972 = vmatpush.msra.mxu0 0.0
      %1973 = vmatpush.msra.mxu0 %v1820
      %1974 = vmatmul.f32.gmra.mxu0 %v1929
      %v1975 = vpop.f32.mrf.mxu0
      %v1976 = vadd.f32 0.0, %v1975
      %1977 = vmatmul.f32.gmra.mxu0 %v1932
      %v1978 = vpop.f32.mrf.mxu0
      %v1979 = vadd.f32 0.0, %v1978
      %1980 = vmatmul.f32.gmra.mxu0 %v1935
      %v1981 = vpop.f32.mrf.mxu0
      %v1982 = vadd.f32 0.0, %v1981
      %1983 = vmatmul.f32.gmra.mxu0 %v1938
      %v1984 = vpop.f32.mrf.mxu0
      %v1985 = vadd.f32 0.0, %v1984
      %1986 = vmatmul.f32.gmra.mxu0 %v1941
      %v1987 = vpop.f32.mrf.mxu0
      %v1988 = vadd.f32 0.0, %v1987
      %1989 = vmatmul.f32.gmra.mxu0 %v1944
      %v1990 = vpop.f32.mrf.mxu0
      %v1991 = vadd.f32 0.0, %v1990
      %1992 = vmatmul.f32.gmra.mxu0 %v1947
      %v1993 = vpop.f32.mrf.mxu0
      %v1994 = vadd.f32 0.0, %v1993
      %1995 = vmatmul.f32.gmra.mxu0 %v1950
      %v1996 = vpop.f32.mrf.mxu0
      %v1997 = vadd.f32 0.0, %v1996
      %1998 = vmatmul.f32.gmra.mxu0 %v1953
      %v1999 = vpop.f32.mrf.mxu0
      %v2000 = vadd.f32 0.0, %v1999
      %2001 = vmatmul.f32.gmra.mxu0 %v1956
      %v2002 = vpop.f32.mrf.mxu0
      %v2003 = vadd.f32 0.0, %v2002
      %2004 = vdwg.mxu0
      %v2005 = vadd.f32 %v1809, %v1976
      %v2006 = vadd.f32 %v1810, %v1979
      %v2007 = vadd.f32 %v1811, %v1982
      %v2008 = vadd.f32 %v1812, %v1985
      %v2009 = vadd.f32 %v1813, %v1988
      %v2010 = vadd.f32 %v1814, %v1991
      %v2011 = vadd.f32 %v1815, %v1994
      %v2012 = vadd.f32 %v1816, %v1997
      %v2013 = vadd.f32 %v1817, %v2000
      %v2014 = vadd.f32 %v1818, %v2003
      %s2015 = scalar_lea.vmem %s2, 88
      %v2016 = vld [vmem:[%s2015] sm:$0xff]
      %v2017 = vld [vmem:[%s207 + $0x11] sm:$0xff]
      %v2018 = vld [vmem:[%s207 + $0x19] sm:$0xff]
      %v2019 = vld [vmem:[%s207 + $0x21] sm:$0xff]
      %v2020 = vld [vmem:[%s207 + $0x29] sm:$0xff]
      %v2021 = vld [vmem:[%s207 + $0x31] sm:$0xff]
      %v2022 = vld [vmem:[%s207 + $0x39] sm:$0xff]
      %v2023 = vld [vmem:[%s207 + $0x41] sm:$0xff]
      %v2024 = vld [vmem:[%s207 + $0x49] sm:$0xff]
      %v2025 = vld [vmem:[%s207 + $0x51] sm:$0xff]
      %v2026 = vld [vmem:[%s207 + $0x59] sm:$0xff]
      %2027 = vmatpush.msra.mxu0 0.0
      %2028 = vmatpush.msra.mxu0 0.0
      %2029 = vmatpush.msra.mxu0 0.0
      %2030 = vmatpush.msra.mxu0 0.0
      %2031 = vmatpush.msra.mxu0 0.0
      %2032 = vmatpush.msra.mxu0 0.0
      %2033 = vmatpush.msra.mxu0 0.0
      %2034 = vmatpush.msra.mxu0 0.0
      %2035 = vmatpush.msra.mxu0 0.0
      %2036 = vmatpush.msra.mxu0 0.0
      %2037 = vmatpush.msra.mxu0 0.0
      %2038 = vmatpush.msra.mxu0 0.0
      %2039 = vmatpush.msra.mxu0 0.0
      %2040 = vmatpush.msra.mxu0 0.0
      %2041 = vmatpush.msra.mxu0 0.0
      %2042 = vmatpush.msra.mxu0 %v2016
      %2043 = vmatmul.f32.gmra.mxu0 %v1929
      %v2044 = vpop.f32.mrf.mxu0
      %v2045 = vadd.f32 0.0, %v2044
      %2046 = vmatmul.f32.gmra.mxu0 %v1932
      %v2047 = vpop.f32.mrf.mxu0
      %v2048 = vadd.f32 0.0, %v2047
      %2049 = vmatmul.f32.gmra.mxu0 %v1935
      %v2050 = vpop.f32.mrf.mxu0
      %v2051 = vadd.f32 0.0, %v2050
      %2052 = vmatmul.f32.gmra.mxu0 %v1938
      %v2053 = vpop.f32.mrf.mxu0
      %v2054 = vadd.f32 0.0, %v2053
      %2055 = vmatmul.f32.gmra.mxu0 %v1941
      %v2056 = vpop.f32.mrf.mxu0
      %v2057 = vadd.f32 0.0, %v2056
      %2058 = vmatmul.f32.gmra.mxu0 %v1944
      %v2059 = vpop.f32.mrf.mxu0
      %v2060 = vadd.f32 0.0, %v2059
      %2061 = vmatmul.f32.gmra.mxu0 %v1947
      %v2062 = vpop.f32.mrf.mxu0
      %v2063 = vadd.f32 0.0, %v2062
      %2064 = vmatmul.f32.gmra.mxu0 %v1950
      %v2065 = vpop.f32.mrf.mxu0
      %v2066 = vadd.f32 0.0, %v2065
      %2067 = vmatmul.f32.gmra.mxu0 %v1953
      %v2068 = vpop.f32.mrf.mxu0
      %v2069 = vadd.f32 0.0, %v2068
      %2070 = vmatmul.f32.gmra.mxu0 %v1956
      %v2071 = vpop.f32.mrf.mxu0
      %v2072 = vadd.f32 0.0, %v2071
      %2073 = vdwg.mxu0
      %v2074 = vadd.f32 %v1918, %v2045
      %v2075 = vadd.f32 %v1919, %v2048
      %v2076 = vadd.f32 %v1920, %v2051
      %v2077 = vadd.f32 %v1921, %v2054
      %v2078 = vadd.f32 %v1922, %v2057
      %v2079 = vadd.f32 %v1923, %v2060
      %v2080 = vadd.f32 %v1924, %v2063
      %v2081 = vadd.f32 %v1925, %v2066
      %v2082 = vadd.f32 %v1926, %v2069
      %v2083 = vadd.f32 %v1927, %v2072
      %v2085 = vsel %vm252, %v2017, 0
      %v2088 = vsel %vm252, %v2018, 0
      %v2091 = vsel %vm252, %v2019, 0
      %v2094 = vsel %vm252, %v2020, 0
      %v2097 = vsel %vm252, %v2021, 0
      %v2100 = vsel %vm252, %v2022, 0
      %v2103 = vsel %vm252, %v2023, 0
      %v2106 = vsel %vm252, %v2024, 0
      %v2109 = vsel %vm252, %v2025, 0
      %v2112 = vsel %vm252, %v2026, 0
      %2114 = vmatpush.msra.mxu0 0.0
      %2115 = vmatpush.msra.mxu0 0.0
      %2116 = vmatpush.msra.mxu0 0.0
      %2117 = vmatpush.msra.mxu0 0.0
      %2118 = vmatpush.msra.mxu0 0.0
      %2119 = vmatpush.msra.mxu0 0.0
      %2120 = vmatpush.msra.mxu0 0.0
      %2121 = vmatpush.msra.mxu0 0.0
      %2122 = vmatpush.msra.mxu0 0.0
      %2123 = vmatpush.msra.mxu0 0.0
      %2124 = vmatpush.msra.mxu0 0.0
      %2125 = vmatpush.msra.mxu0 0.0
      %2126 = vmatpush.msra.mxu0 0.0
      %2127 = vmatpush.msra.mxu0 0.0
      %2128 = vmatpush.msra.mxu0 0.0
      %2129 = vmatpush.msra.mxu0 %v2016
      %2130 = vmatmul.f32.gmra.mxu0 %v2085
      %v2131 = vpop.f32.mrf.mxu0
      %v2132 = vadd.f32 0.0, %v2131
      %2133 = vmatmul.f32.gmra.mxu0 %v2088
      %v2134 = vpop.f32.mrf.mxu0
      %v2135 = vadd.f32 0.0, %v2134
      %2136 = vmatmul.f32.gmra.mxu0 %v2091
      %v2137 = vpop.f32.mrf.mxu0
      %v2138 = vadd.f32 0.0, %v2137
      %2139 = vmatmul.f32.gmra.mxu0 %v2094
      %v2140 = vpop.f32.mrf.mxu0
      %v2141 = vadd.f32 0.0, %v2140
      %2142 = vmatmul.f32.gmra.mxu0 %v2097
      %v2143 = vpop.f32.mrf.mxu0
      %v2144 = vadd.f32 0.0, %v2143
      %2145 = vmatmul.f32.gmra.mxu0 %v2100
      %v2146 = vpop.f32.mrf.mxu0
      %v2147 = vadd.f32 0.0, %v2146
      %2148 = vmatmul.f32.gmra.mxu0 %v2103
      %v2149 = vpop.f32.mrf.mxu0
      %v2150 = vadd.f32 0.0, %v2149
      %2151 = vmatmul.f32.gmra.mxu0 %v2106
      %v2152 = vpop.f32.mrf.mxu0
      %v2153 = vadd.f32 0.0, %v2152
      %2154 = vmatmul.f32.gmra.mxu0 %v2109
      %v2155 = vpop.f32.mrf.mxu0
      %v2156 = vadd.f32 0.0, %v2155
      %2157 = vmatmul.f32.gmra.mxu0 %v2112
      %v2158 = vpop.f32.mrf.mxu0
      %v2159 = vadd.f32 0.0, %v2158
      %2160 = vdwg.mxu0
      %v2161 = vadd.f32 %v2005, %v2132
      %v2162 = vadd.f32 %v2006, %v2135
      %v2163 = vadd.f32 %v2007, %v2138
      %v2164 = vadd.f32 %v2008, %v2141
      %v2165 = vadd.f32 %v2009, %v2144
      %v2166 = vadd.f32 %v2010, %v2147
      %v2167 = vadd.f32 %v2011, %v2150
      %v2168 = vadd.f32 %v2012, %v2153
      %v2169 = vadd.f32 %v2013, %v2156
      %v2170 = vadd.f32 %v2014, %v2159
      %s2171 = scalar_lea.vmem %s2, 96
      %v2172 = vld [vmem:[%s2171] sm:$0xff]
      %v2173 = vld [vmem:[%s212 + $0x11] sm:$0xff]
      %v2174 = vld [vmem:[%s212 + $0x19] sm:$0xff]
      %v2175 = vld [vmem:[%s212 + $0x21] sm:$0xff]
      %v2176 = vld [vmem:[%s212 + $0x29] sm:$0xff]
      %v2177 = vld [vmem:[%s212 + $0x31] sm:$0xff]
      %v2178 = vld [vmem:[%s212 + $0x39] sm:$0xff]
      %v2179 = vld [vmem:[%s212 + $0x41] sm:$0xff]
      %v2180 = vld [vmem:[%s212 + $0x49] sm:$0xff]
      %v2181 = vld [vmem:[%s212 + $0x51] sm:$0xff]
      %v2182 = vld [vmem:[%s212 + $0x59] sm:$0xff]
      %2183 = vmatpush.msra.mxu0 0.0
      %2184 = vmatpush.msra.mxu0 0.0
      %2185 = vmatpush.msra.mxu0 0.0
      %2186 = vmatpush.msra.mxu0 0.0
      %2187 = vmatpush.msra.mxu0 0.0
      %2188 = vmatpush.msra.mxu0 0.0
      %2189 = vmatpush.msra.mxu0 0.0
      %2190 = vmatpush.msra.mxu0 0.0
      %2191 = vmatpush.msra.mxu0 0.0
      %2192 = vmatpush.msra.mxu0 0.0
      %2193 = vmatpush.msra.mxu0 0.0
      %2194 = vmatpush.msra.mxu0 0.0
      %2195 = vmatpush.msra.mxu0 0.0
      %2196 = vmatpush.msra.mxu0 0.0
      %2197 = vmatpush.msra.mxu0 0.0
      %2198 = vmatpush.msra.mxu0 %v2172
      %2199 = vmatmul.f32.gmra.mxu0 %v2085
      %v2200 = vpop.f32.mrf.mxu0
      %v2201 = vadd.f32 0.0, %v2200
      %2202 = vmatmul.f32.gmra.mxu0 %v2088
      %v2203 = vpop.f32.mrf.mxu0
      %v2204 = vadd.f32 0.0, %v2203
      %2205 = vmatmul.f32.gmra.mxu0 %v2091
      %v2206 = vpop.f32.mrf.mxu0
      %v2207 = vadd.f32 0.0, %v2206
      %2208 = vmatmul.f32.gmra.mxu0 %v2094
      %v2209 = vpop.f32.mrf.mxu0
      %v2210 = vadd.f32 0.0, %v2209
      %2211 = vmatmul.f32.gmra.mxu0 %v2097
      %v2212 = vpop.f32.mrf.mxu0
      %v2213 = vadd.f32 0.0, %v2212
      %2214 = vmatmul.f32.gmra.mxu0 %v2100
      %v2215 = vpop.f32.mrf.mxu0
      %v2216 = vadd.f32 0.0, %v2215
      %2217 = vmatmul.f32.gmra.mxu0 %v2103
      %v2218 = vpop.f32.mrf.mxu0
      %v2219 = vadd.f32 0.0, %v2218
      %2220 = vmatmul.f32.gmra.mxu0 %v2106
      %v2221 = vpop.f32.mrf.mxu0
      %v2222 = vadd.f32 0.0, %v2221
      %2223 = vmatmul.f32.gmra.mxu0 %v2109
      %v2224 = vpop.f32.mrf.mxu0
      %v2225 = vadd.f32 0.0, %v2224
      %2226 = vmatmul.f32.gmra.mxu0 %v2112
      %v2227 = vpop.f32.mrf.mxu0
      %v2228 = vadd.f32 0.0, %v2227
      %2229 = vdwg.mxu0
      %v2230 = vadd.f32 %v2074, %v2201
      %v2231 = vadd.f32 %v2075, %v2204
      %v2232 = vadd.f32 %v2076, %v2207
      %v2233 = vadd.f32 %v2077, %v2210
      %v2234 = vadd.f32 %v2078, %v2213
      %v2235 = vadd.f32 %v2079, %v2216
      %v2236 = vadd.f32 %v2080, %v2219
      %v2237 = vadd.f32 %v2081, %v2222
      %v2238 = vadd.f32 %v2082, %v2225
      %v2239 = vadd.f32 %v2083, %v2228
      %v2241 = vsel %vm252, %v2173, 0
      %v2244 = vsel %vm252, %v2174, 0
      %v2247 = vsel %vm252, %v2175, 0
      %v2250 = vsel %vm252, %v2176, 0
      %v2253 = vsel %vm252, %v2177, 0
      %v2256 = vsel %vm252, %v2178, 0
      %v2259 = vsel %vm252, %v2179, 0
      %v2262 = vsel %vm252, %v2180, 0
      %v2265 = vsel %vm252, %v2181, 0
      %v2268 = vsel %vm252, %v2182, 0
      %2270 = vmatpush.msra.mxu0 0.0
      %2271 = vmatpush.msra.mxu0 0.0
      %2272 = vmatpush.msra.mxu0 0.0
      %2273 = vmatpush.msra.mxu0 0.0
      %2274 = vmatpush.msra.mxu0 0.0
      %2275 = vmatpush.msra.mxu0 0.0
      %2276 = vmatpush.msra.mxu0 0.0
      %2277 = vmatpush.msra.mxu0 0.0
      %2278 = vmatpush.msra.mxu0 0.0
      %2279 = vmatpush.msra.mxu0 0.0
      %2280 = vmatpush.msra.mxu0 0.0
      %2281 = vmatpush.msra.mxu0 0.0
      %2282 = vmatpush.msra.mxu0 0.0
      %2283 = vmatpush.msra.mxu0 0.0
      %2284 = vmatpush.msra.mxu0 0.0
      %2285 = vmatpush.msra.mxu0 %v2172
      %2286 = vmatmul.f32.gmra.mxu0 %v2241
      %v2287 = vpop.f32.mrf.mxu0
      %v2288 = vadd.f32 0.0, %v2287
      %2289 = vmatmul.f32.gmra.mxu0 %v2244
      %v2290 = vpop.f32.mrf.mxu0
      %v2291 = vadd.f32 0.0, %v2290
      %2292 = vmatmul.f32.gmra.mxu0 %v2247
      %v2293 = vpop.f32.mrf.mxu0
      %v2294 = vadd.f32 0.0, %v2293
      %2295 = vmatmul.f32.gmra.mxu0 %v2250
      %v2296 = vpop.f32.mrf.mxu0
      %v2297 = vadd.f32 0.0, %v2296
      %2298 = vmatmul.f32.gmra.mxu0 %v2253
      %v2299 = vpop.f32.mrf.mxu0
      %v2300 = vadd.f32 0.0, %v2299
      %2301 = vmatmul.f32.gmra.mxu0 %v2256
      %v2302 = vpop.f32.mrf.mxu0
      %v2303 = vadd.f32 0.0, %v2302
      %2304 = vmatmul.f32.gmra.mxu0 %v2259
      %v2305 = vpop.f32.mrf.mxu0
      %v2306 = vadd.f32 0.0, %v2305
      %2307 = vmatmul.f32.gmra.mxu0 %v2262
      %v2308 = vpop.f32.mrf.mxu0
      %v2309 = vadd.f32 0.0, %v2308
      %2310 = vmatmul.f32.gmra.mxu0 %v2265
      %v2311 = vpop.f32.mrf.mxu0
      %v2312 = vadd.f32 0.0, %v2311
      %2313 = vmatmul.f32.gmra.mxu0 %v2268
      %v2314 = vpop.f32.mrf.mxu0
      %v2315 = vadd.f32 0.0, %v2314
      %2316 = vdwg.mxu0
      %v2317 = vadd.f32 %v2161, %v2288
      %v2318 = vadd.f32 %v2162, %v2291
      %v2319 = vadd.f32 %v2163, %v2294
      %v2320 = vadd.f32 %v2164, %v2297
      %v2321 = vadd.f32 %v2165, %v2300
      %v2322 = vadd.f32 %v2166, %v2303
      %v2323 = vadd.f32 %v2167, %v2306
      %v2324 = vadd.f32 %v2168, %v2309
      %v2325 = vadd.f32 %v2169, %v2312
      %v2326 = vadd.f32 %v2170, %v2315
      %s2327 = scalar_lea.vmem %s2, 104
      %v2328 = vld [vmem:[%s2327] sm:$0xff]
      %v2329 = vld [vmem:[%s207 + $0x12] sm:$0xff]
      %v2330 = vld [vmem:[%s207 + $0x1a] sm:$0xff]
      %v2331 = vld [vmem:[%s207 + $0x22] sm:$0xff]
      %v2332 = vld [vmem:[%s207 + $0x2a] sm:$0xff]
      %v2333 = vld [vmem:[%s207 + $0x32] sm:$0xff]
      %v2334 = vld [vmem:[%s207 + $0x3a] sm:$0xff]
      %v2335 = vld [vmem:[%s207 + $0x42] sm:$0xff]
      %v2336 = vld [vmem:[%s207 + $0x4a] sm:$0xff]
      %v2337 = vld [vmem:[%s207 + $0x52] sm:$0xff]
      %v2338 = vld [vmem:[%s207 + $0x5a] sm:$0xff]
      %2339 = vmatpush.msra.mxu0 0.0
      %2340 = vmatpush.msra.mxu0 0.0
      %2341 = vmatpush.msra.mxu0 0.0
      %2342 = vmatpush.msra.mxu0 0.0
      %2343 = vmatpush.msra.mxu0 0.0
      %2344 = vmatpush.msra.mxu0 0.0
      %2345 = vmatpush.msra.mxu0 0.0
      %2346 = vmatpush.msra.mxu0 0.0
      %2347 = vmatpush.msra.mxu0 0.0
      %2348 = vmatpush.msra.mxu0 0.0
      %2349 = vmatpush.msra.mxu0 0.0
      %2350 = vmatpush.msra.mxu0 0.0
      %2351 = vmatpush.msra.mxu0 0.0
      %2352 = vmatpush.msra.mxu0 0.0
      %2353 = vmatpush.msra.mxu0 0.0
      %2354 = vmatpush.msra.mxu0 %v2328
      %2355 = vmatmul.f32.gmra.mxu0 %v2241
      %v2356 = vpop.f32.mrf.mxu0
      %v2357 = vadd.f32 0.0, %v2356
      %2358 = vmatmul.f32.gmra.mxu0 %v2244
      %v2359 = vpop.f32.mrf.mxu0
      %v2360 = vadd.f32 0.0, %v2359
      %2361 = vmatmul.f32.gmra.mxu0 %v2247
      %v2362 = vpop.f32.mrf.mxu0
      %v2363 = vadd.f32 0.0, %v2362
      %2364 = vmatmul.f32.gmra.mxu0 %v2250
      %v2365 = vpop.f32.mrf.mxu0
      %v2366 = vadd.f32 0.0, %v2365
      %2367 = vmatmul.f32.gmra.mxu0 %v2253
      %v2368 = vpop.f32.mrf.mxu0
      %v2369 = vadd.f32 0.0, %v2368
      %2370 = vmatmul.f32.gmra.mxu0 %v2256
      %v2371 = vpop.f32.mrf.mxu0
      %v2372 = vadd.f32 0.0, %v2371
      %2373 = vmatmul.f32.gmra.mxu0 %v2259
      %v2374 = vpop.f32.mrf.mxu0
      %v2375 = vadd.f32 0.0, %v2374
      %2376 = vmatmul.f32.gmra.mxu0 %v2262
      %v2377 = vpop.f32.mrf.mxu0
      %v2378 = vadd.f32 0.0, %v2377
      %2379 = vmatmul.f32.gmra.mxu0 %v2265
      %v2380 = vpop.f32.mrf.mxu0
      %v2381 = vadd.f32 0.0, %v2380
      %2382 = vmatmul.f32.gmra.mxu0 %v2268
      %v2383 = vpop.f32.mrf.mxu0
      %v2384 = vadd.f32 0.0, %v2383
      %2385 = vdwg.mxu0
      %v2386 = vadd.f32 %v2230, %v2357
      %v2387 = vadd.f32 %v2231, %v2360
      %v2388 = vadd.f32 %v2232, %v2363
      %v2389 = vadd.f32 %v2233, %v2366
      %v2390 = vadd.f32 %v2234, %v2369
      %v2391 = vadd.f32 %v2235, %v2372
      %v2392 = vadd.f32 %v2236, %v2375
      %v2393 = vadd.f32 %v2237, %v2378
      %v2394 = vadd.f32 %v2238, %v2381
      %v2395 = vadd.f32 %v2239, %v2384
      %v2397 = vsel %vm252, %v2329, 0
      %v2400 = vsel %vm252, %v2330, 0
      %v2403 = vsel %vm252, %v2331, 0
      %v2406 = vsel %vm252, %v2332, 0
      %v2409 = vsel %vm252, %v2333, 0
      %v2412 = vsel %vm252, %v2334, 0
      %v2415 = vsel %vm252, %v2335, 0
      %v2418 = vsel %vm252, %v2336, 0
      %v2421 = vsel %vm252, %v2337, 0
      %v2424 = vsel %vm252, %v2338, 0
      %2426 = vmatpush.msra.mxu0 0.0
      %2427 = vmatpush.msra.mxu0 0.0
      %2428 = vmatpush.msra.mxu0 0.0
      %2429 = vmatpush.msra.mxu0 0.0
      %2430 = vmatpush.msra.mxu0 0.0
      %2431 = vmatpush.msra.mxu0 0.0
      %2432 = vmatpush.msra.mxu0 0.0
      %2433 = vmatpush.msra.mxu0 0.0
      %2434 = vmatpush.msra.mxu0 0.0
      %2435 = vmatpush.msra.mxu0 0.0
      %2436 = vmatpush.msra.mxu0 0.0
      %2437 = vmatpush.msra.mxu0 0.0
      %2438 = vmatpush.msra.mxu0 0.0
      %2439 = vmatpush.msra.mxu0 0.0
      %2440 = vmatpush.msra.mxu0 0.0
      %2441 = vmatpush.msra.mxu0 %v2328
      %2442 = vmatmul.f32.gmra.mxu0 %v2397
      %v2443 = vpop.f32.mrf.mxu0
      %v2444 = vadd.f32 0.0, %v2443
      %2445 = vmatmul.f32.gmra.mxu0 %v2400
      %v2446 = vpop.f32.mrf.mxu0
      %v2447 = vadd.f32 0.0, %v2446
      %2448 = vmatmul.f32.gmra.mxu0 %v2403
      %v2449 = vpop.f32.mrf.mxu0
      %v2450 = vadd.f32 0.0, %v2449
      %2451 = vmatmul.f32.gmra.mxu0 %v2406
      %v2452 = vpop.f32.mrf.mxu0
      %v2453 = vadd.f32 0.0, %v2452
      %2454 = vmatmul.f32.gmra.mxu0 %v2409
      %v2455 = vpop.f32.mrf.mxu0
      %v2456 = vadd.f32 0.0, %v2455
      %2457 = vmatmul.f32.gmra.mxu0 %v2412
      %v2458 = vpop.f32.mrf.mxu0
      %v2459 = vadd.f32 0.0, %v2458
      %2460 = vmatmul.f32.gmra.mxu0 %v2415
      %v2461 = vpop.f32.mrf.mxu0
      %v2462 = vadd.f32 0.0, %v2461
      %2463 = vmatmul.f32.gmra.mxu0 %v2418
      %v2464 = vpop.f32.mrf.mxu0
      %v2465 = vadd.f32 0.0, %v2464
      %2466 = vmatmul.f32.gmra.mxu0 %v2421
      %v2467 = vpop.f32.mrf.mxu0
      %v2468 = vadd.f32 0.0, %v2467
      %2469 = vmatmul.f32.gmra.mxu0 %v2424
      %v2470 = vpop.f32.mrf.mxu0
      %v2471 = vadd.f32 0.0, %v2470
      %2472 = vdwg.mxu0
      %v2473 = vadd.f32 %v2317, %v2444
      %v2474 = vadd.f32 %v2318, %v2447
      %v2475 = vadd.f32 %v2319, %v2450
      %v2476 = vadd.f32 %v2320, %v2453
      %v2477 = vadd.f32 %v2321, %v2456
      %v2478 = vadd.f32 %v2322, %v2459
      %v2479 = vadd.f32 %v2323, %v2462
      %v2480 = vadd.f32 %v2324, %v2465
      %v2481 = vadd.f32 %v2325, %v2468
      %v2482 = vadd.f32 %v2326, %v2471
      %s2483 = scalar_lea.vmem %s2, 112
      %v2484 = vld [vmem:[%s2483] sm:$0xff]
      %v2485 = vld [vmem:[%s212 + $0x12] sm:$0xff]
      %v2486 = vld [vmem:[%s212 + $0x1a] sm:$0xff]
      %v2487 = vld [vmem:[%s212 + $0x22] sm:$0xff]
      %v2488 = vld [vmem:[%s212 + $0x2a] sm:$0xff]
      %v2489 = vld [vmem:[%s212 + $0x32] sm:$0xff]
      %v2490 = vld [vmem:[%s212 + $0x3a] sm:$0xff]
      %v2491 = vld [vmem:[%s212 + $0x42] sm:$0xff]
      %v2492 = vld [vmem:[%s212 + $0x4a] sm:$0xff]
      %v2493 = vld [vmem:[%s212 + $0x52] sm:$0xff]
      %v2494 = vld [vmem:[%s212 + $0x5a] sm:$0xff]
      %2495 = vmatpush.msra.mxu0 0.0
      %2496 = vmatpush.msra.mxu0 0.0
      %2497 = vmatpush.msra.mxu0 0.0
      %2498 = vmatpush.msra.mxu0 0.0
      %2499 = vmatpush.msra.mxu0 0.0
      %2500 = vmatpush.msra.mxu0 0.0
      %2501 = vmatpush.msra.mxu0 0.0
      %2502 = vmatpush.msra.mxu0 0.0
      %2503 = vmatpush.msra.mxu0 0.0
      %2504 = vmatpush.msra.mxu0 0.0
      %2505 = vmatpush.msra.mxu0 0.0
      %2506 = vmatpush.msra.mxu0 0.0
      %2507 = vmatpush.msra.mxu0 0.0
      %2508 = vmatpush.msra.mxu0 0.0
      %2509 = vmatpush.msra.mxu0 0.0
      %2510 = vmatpush.msra.mxu0 %v2484
      %2511 = vmatmul.f32.gmra.mxu0 %v2397
      %v2512 = vpop.f32.mrf.mxu0
      %v2513 = vadd.f32 0.0, %v2512
      %2514 = vmatmul.f32.gmra.mxu0 %v2400
      %v2515 = vpop.f32.mrf.mxu0
      %v2516 = vadd.f32 0.0, %v2515
      %2517 = vmatmul.f32.gmra.mxu0 %v2403
      %v2518 = vpop.f32.mrf.mxu0
      %v2519 = vadd.f32 0.0, %v2518
      %2520 = vmatmul.f32.gmra.mxu0 %v2406
      %v2521 = vpop.f32.mrf.mxu0
      %v2522 = vadd.f32 0.0, %v2521
      %2523 = vmatmul.f32.gmra.mxu0 %v2409
      %v2524 = vpop.f32.mrf.mxu0
      %v2525 = vadd.f32 0.0, %v2524
      %2526 = vmatmul.f32.gmra.mxu0 %v2412
      %v2527 = vpop.f32.mrf.mxu0
      %v2528 = vadd.f32 0.0, %v2527
      %2529 = vmatmul.f32.gmra.mxu0 %v2415
      %v2530 = vpop.f32.mrf.mxu0
      %v2531 = vadd.f32 0.0, %v2530
      %2532 = vmatmul.f32.gmra.mxu0 %v2418
      %v2533 = vpop.f32.mrf.mxu0
      %v2534 = vadd.f32 0.0, %v2533
      %2535 = vmatmul.f32.gmra.mxu0 %v2421
      %v2536 = vpop.f32.mrf.mxu0
      %v2537 = vadd.f32 0.0, %v2536
      %2538 = vmatmul.f32.gmra.mxu0 %v2424
      %v2539 = vpop.f32.mrf.mxu0
      %v2540 = vadd.f32 0.0, %v2539
      %2541 = vdwg.mxu0
      %v2542 = vadd.f32 %v2386, %v2513
      %v2543 = vadd.f32 %v2387, %v2516
      %v2544 = vadd.f32 %v2388, %v2519
      %v2545 = vadd.f32 %v2389, %v2522
      %v2546 = vadd.f32 %v2390, %v2525
      %v2547 = vadd.f32 %v2391, %v2528
      %v2548 = vadd.f32 %v2392, %v2531
      %v2549 = vadd.f32 %v2393, %v2534
      %v2550 = vadd.f32 %v2394, %v2537
      %v2551 = vadd.f32 %v2395, %v2540
      %v2553 = vsel %vm252, %v2485, 0
      %v2556 = vsel %vm252, %v2486, 0
      %v2559 = vsel %vm252, %v2487, 0
      %v2562 = vsel %vm252, %v2488, 0
      %v2565 = vsel %vm252, %v2489, 0
      %v2568 = vsel %vm252, %v2490, 0
      %v2571 = vsel %vm252, %v2491, 0
      %v2574 = vsel %vm252, %v2492, 0
      %v2577 = vsel %vm252, %v2493, 0
      %v2580 = vsel %vm252, %v2494, 0
      %2582 = vmatpush.msra.mxu0 0.0
      %2583 = vmatpush.msra.mxu0 0.0
      %2584 = vmatpush.msra.mxu0 0.0
      %2585 = vmatpush.msra.mxu0 0.0
      %2586 = vmatpush.msra.mxu0 0.0
      %2587 = vmatpush.msra.mxu0 0.0
      %2588 = vmatpush.msra.mxu0 0.0
      %2589 = vmatpush.msra.mxu0 0.0
      %2590 = vmatpush.msra.mxu0 0.0
      %2591 = vmatpush.msra.mxu0 0.0
      %2592 = vmatpush.msra.mxu0 0.0
      %2593 = vmatpush.msra.mxu0 0.0
      %2594 = vmatpush.msra.mxu0 0.0
      %2595 = vmatpush.msra.mxu0 0.0
      %2596 = vmatpush.msra.mxu0 0.0
      %2597 = vmatpush.msra.mxu0 %v2484
      %2598 = vmatmul.f32.gmra.mxu0 %v2553
      %v2599 = vpop.f32.mrf.mxu0
      %v2600 = vadd.f32 0.0, %v2599
      %2601 = vmatmul.f32.gmra.mxu0 %v2556
      %v2602 = vpop.f32.mrf.mxu0
      %v2603 = vadd.f32 0.0, %v2602
      %2604 = vmatmul.f32.gmra.mxu0 %v2559
      %v2605 = vpop.f32.mrf.mxu0
      %v2606 = vadd.f32 0.0, %v2605
      %2607 = vmatmul.f32.gmra.mxu0 %v2562
      %v2608 = vpop.f32.mrf.mxu0
      %v2609 = vadd.f32 0.0, %v2608
      %2610 = vmatmul.f32.gmra.mxu0 %v2565
      %v2611 = vpop.f32.mrf.mxu0
      %v2612 = vadd.f32 0.0, %v2611
      %2613 = vmatmul.f32.gmra.mxu0 %v2568
      %v2614 = vpop.f32.mrf.mxu0
      %v2615 = vadd.f32 0.0, %v2614
      %2616 = vmatmul.f32.gmra.mxu0 %v2571
      %v2617 = vpop.f32.mrf.mxu0
      %v2618 = vadd.f32 0.0, %v2617
      %2619 = vmatmul.f32.gmra.mxu0 %v2574
      %v2620 = vpop.f32.mrf.mxu0
      %v2621 = vadd.f32 0.0, %v2620
      %2622 = vmatmul.f32.gmra.mxu0 %v2577
      %v2623 = vpop.f32.mrf.mxu0
      %v2624 = vadd.f32 0.0, %v2623
      %2625 = vmatmul.f32.gmra.mxu0 %v2580
      %v2626 = vpop.f32.mrf.mxu0
      %v2627 = vadd.f32 0.0, %v2626
      %2628 = vdwg.mxu0
      %v2629 = vadd.f32 %v2473, %v2600
      %v2630 = vadd.f32 %v2474, %v2603
      %v2631 = vadd.f32 %v2475, %v2606
      %v2632 = vadd.f32 %v2476, %v2609
      %v2633 = vadd.f32 %v2477, %v2612
      %v2634 = vadd.f32 %v2478, %v2615
      %v2635 = vadd.f32 %v2479, %v2618
      %v2636 = vadd.f32 %v2480, %v2621
      %v2637 = vadd.f32 %v2481, %v2624
      %v2638 = vadd.f32 %v2482, %v2627
      %s2639 = scalar_lea.vmem %s2, 120
      %v2640 = vld [vmem:[%s2639] sm:$0xff]
      %v2641 = vld [vmem:[%s207 + $0x18] sm:$0xff]
      %v2642 = vld [vmem:[%s207 + $0x20] sm:$0xff]
      %v2643 = vld [vmem:[%s207 + $0x28] sm:$0xff]
      %v2644 = vld [vmem:[%s207 + $0x30] sm:$0xff]
      %v2645 = vld [vmem:[%s207 + $0x38] sm:$0xff]
      %v2646 = vld [vmem:[%s207 + $0x40] sm:$0xff]
      %v2647 = vld [vmem:[%s207 + $0x48] sm:$0xff]
      %v2648 = vld [vmem:[%s207 + $0x50] sm:$0xff]
      %v2649 = vld [vmem:[%s207 + $0x58] sm:$0xff]
      %v2650 = vld [vmem:[%s207 + $0x60] sm:$0xff]
      %v2651 = vld [vmem:[%s212 + $0x18] sm:$0xff]
      %v2652 = vld [vmem:[%s212 + $0x20] sm:$0xff]
      %v2653 = vld [vmem:[%s212 + $0x28] sm:$0xff]
      %v2654 = vld [vmem:[%s212 + $0x30] sm:$0xff]
      %v2655 = vld [vmem:[%s212 + $0x38] sm:$0xff]
      %v2656 = vld [vmem:[%s212 + $0x40] sm:$0xff]
      %v2657 = vld [vmem:[%s212 + $0x48] sm:$0xff]
      %v2658 = vld [vmem:[%s212 + $0x50] sm:$0xff]
      %v2659 = vld [vmem:[%s212 + $0x58] sm:$0xff]
      %v2660 = vld [vmem:[%s212 + $0x60] sm:$0xff]
      %v2662 = vsel %vm252, %v2641, 0
      %v2665 = vsel %vm252, %v2642, 0
      %v2668 = vsel %vm252, %v2643, 0
      %v2671 = vsel %vm252, %v2644, 0
      %v2674 = vsel %vm252, %v2645, 0
      %v2677 = vsel %vm252, %v2646, 0
      %v2680 = vsel %vm252, %v2647, 0
      %v2683 = vsel %vm252, %v2648, 0
      %v2686 = vsel %vm252, %v2649, 0
      %v2689 = vsel %vm252, %v2650, 0
      %2691 = vmatpush.msra.mxu0 0.0
      %2692 = vmatpush.msra.mxu0 0.0
      %2693 = vmatpush.msra.mxu0 0.0
      %2694 = vmatpush.msra.mxu0 0.0
      %2695 = vmatpush.msra.mxu0 0.0
      %2696 = vmatpush.msra.mxu0 0.0
      %2697 = vmatpush.msra.mxu0 0.0
      %2698 = vmatpush.msra.mxu0 0.0
      %2699 = vmatpush.msra.mxu0 0.0
      %2700 = vmatpush.msra.mxu0 0.0
      %2701 = vmatpush.msra.mxu0 0.0
      %2702 = vmatpush.msra.mxu0 0.0
      %2703 = vmatpush.msra.mxu0 0.0
      %2704 = vmatpush.msra.mxu0 0.0
      %2705 = vmatpush.msra.mxu0 0.0
      %2706 = vmatpush.msra.mxu0 %v2640
      %2707 = vmatmul.f32.gmra.mxu0 %v2662
      %v2708 = vpop.f32.mrf.mxu0
      %v2709 = vadd.f32 0.0, %v2708
      %2710 = vmatmul.f32.gmra.mxu0 %v2665
      %v2711 = vpop.f32.mrf.mxu0
      %v2712 = vadd.f32 0.0, %v2711
      %2713 = vmatmul.f32.gmra.mxu0 %v2668
      %v2714 = vpop.f32.mrf.mxu0
      %v2715 = vadd.f32 0.0, %v2714
      %2716 = vmatmul.f32.gmra.mxu0 %v2671
      %v2717 = vpop.f32.mrf.mxu0
      %v2718 = vadd.f32 0.0, %v2717
      %2719 = vmatmul.f32.gmra.mxu0 %v2674
      %v2720 = vpop.f32.mrf.mxu0
      %v2721 = vadd.f32 0.0, %v2720
      %2722 = vmatmul.f32.gmra.mxu0 %v2677
      %v2723 = vpop.f32.mrf.mxu0
      %v2724 = vadd.f32 0.0, %v2723
      %2725 = vmatmul.f32.gmra.mxu0 %v2680
      %v2726 = vpop.f32.mrf.mxu0
      %v2727 = vadd.f32 0.0, %v2726
      %2728 = vmatmul.f32.gmra.mxu0 %v2683
      %v2729 = vpop.f32.mrf.mxu0
      %v2730 = vadd.f32 0.0, %v2729
      %2731 = vmatmul.f32.gmra.mxu0 %v2686
      %v2732 = vpop.f32.mrf.mxu0
      %v2733 = vadd.f32 0.0, %v2732
      %2734 = vmatmul.f32.gmra.mxu0 %v2689
      %v2735 = vpop.f32.mrf.mxu0
      %v2736 = vadd.f32 0.0, %v2735
      %2737 = vdwg.mxu0
      %v2738 = vadd.f32 %v2542, %v2709
      %v2739 = vadd.f32 %v2543, %v2712
      %v2740 = vadd.f32 %v2544, %v2715
      %v2741 = vadd.f32 %v2545, %v2718
      %v2742 = vadd.f32 %v2546, %v2721
      %v2743 = vadd.f32 %v2547, %v2724
      %v2744 = vadd.f32 %v2548, %v2727
      %v2745 = vadd.f32 %v2549, %v2730
      %v2746 = vadd.f32 %v2550, %v2733
      %v2747 = vadd.f32 %v2551, %v2736
      %v2749 = vsel %vm252, %v2651, 0
      %v2752 = vsel %vm252, %v2652, 0
      %v2755 = vsel %vm252, %v2653, 0
      %v2758 = vsel %vm252, %v2654, 0
      %v2761 = vsel %vm252, %v2655, 0
      %v2764 = vsel %vm252, %v2656, 0
      %v2767 = vsel %vm252, %v2657, 0
      %v2770 = vsel %vm252, %v2658, 0
      %v2773 = vsel %vm252, %v2659, 0
      %v2776 = vsel %vm252, %v2660, 0
      %2778 = vmatpush.msra.mxu0 0.0
      %2779 = vmatpush.msra.mxu0 0.0
      %2780 = vmatpush.msra.mxu0 0.0
      %2781 = vmatpush.msra.mxu0 0.0
      %2782 = vmatpush.msra.mxu0 0.0
      %2783 = vmatpush.msra.mxu0 0.0
      %2784 = vmatpush.msra.mxu0 0.0
      %2785 = vmatpush.msra.mxu0 0.0
      %2786 = vmatpush.msra.mxu0 0.0
      %2787 = vmatpush.msra.mxu0 0.0
      %2788 = vmatpush.msra.mxu0 0.0
      %2789 = vmatpush.msra.mxu0 0.0
      %2790 = vmatpush.msra.mxu0 0.0
      %2791 = vmatpush.msra.mxu0 0.0
      %2792 = vmatpush.msra.mxu0 0.0
      %2793 = vmatpush.msra.mxu0 %v2640
      %2794 = vmatmul.f32.gmra.mxu0 %v2749
      %v2795 = vpop.f32.mrf.mxu0
      %v2796 = vadd.f32 0.0, %v2795
      %2797 = vmatmul.f32.gmra.mxu0 %v2752
      %v2798 = vpop.f32.mrf.mxu0
      %v2799 = vadd.f32 0.0, %v2798
      %2800 = vmatmul.f32.gmra.mxu0 %v2755
      %v2801 = vpop.f32.mrf.mxu0
      %v2802 = vadd.f32 0.0, %v2801
      %2803 = vmatmul.f32.gmra.mxu0 %v2758
      %v2804 = vpop.f32.mrf.mxu0
      %v2805 = vadd.f32 0.0, %v2804
      %2806 = vmatmul.f32.gmra.mxu0 %v2761
      %v2807 = vpop.f32.mrf.mxu0
      %v2808 = vadd.f32 0.0, %v2807
      %2809 = vmatmul.f32.gmra.mxu0 %v2764
      %v2810 = vpop.f32.mrf.mxu0
      %v2811 = vadd.f32 0.0, %v2810
      %2812 = vmatmul.f32.gmra.mxu0 %v2767
      %v2813 = vpop.f32.mrf.mxu0
      %v2814 = vadd.f32 0.0, %v2813
      %2815 = vmatmul.f32.gmra.mxu0 %v2770
      %v2816 = vpop.f32.mrf.mxu0
      %v2817 = vadd.f32 0.0, %v2816
      %2818 = vmatmul.f32.gmra.mxu0 %v2773
      %v2819 = vpop.f32.mrf.mxu0
      %v2820 = vadd.f32 0.0, %v2819
      %2821 = vmatmul.f32.gmra.mxu0 %v2776
      %v2822 = vpop.f32.mrf.mxu0
      %v2823 = vadd.f32 0.0, %v2822
      %2824 = vdwg.mxu0
      %v2825 = vadd.f32 %v2629, %v2796
      %v2826 = vadd.f32 %v2630, %v2799
      %v2827 = vadd.f32 %v2631, %v2802
      %v2828 = vadd.f32 %v2632, %v2805
      %v2829 = vadd.f32 %v2633, %v2808
      %v2830 = vadd.f32 %v2634, %v2811
      %v2831 = vadd.f32 %v2635, %v2814
      %v2832 = vadd.f32 %v2636, %v2817
      %v2833 = vadd.f32 %v2637, %v2820
      %v2834 = vadd.f32 %v2638, %v2823
      %s2835 = scalar_lea.vmem %s2, 128
      %v2836 = vld [vmem:[%s2835] sm:$0xff]
      %v2837 = vld [vmem:[%s207 + $0x19] sm:$0xff]
      %v2838 = vld [vmem:[%s207 + $0x21] sm:$0xff]
      %v2839 = vld [vmem:[%s207 + $0x29] sm:$0xff]
      %v2840 = vld [vmem:[%s207 + $0x31] sm:$0xff]
      %v2841 = vld [vmem:[%s207 + $0x39] sm:$0xff]
      %v2842 = vld [vmem:[%s207 + $0x41] sm:$0xff]
      %v2843 = vld [vmem:[%s207 + $0x49] sm:$0xff]
      %v2844 = vld [vmem:[%s207 + $0x51] sm:$0xff]
      %v2845 = vld [vmem:[%s207 + $0x59] sm:$0xff]
      %v2846 = vld [vmem:[%s207 + $0x61] sm:$0xff]
      %2847 = vmatpush.msra.mxu0 0.0
      %2848 = vmatpush.msra.mxu0 0.0
      %2849 = vmatpush.msra.mxu0 0.0
      %2850 = vmatpush.msra.mxu0 0.0
      %2851 = vmatpush.msra.mxu0 0.0
      %2852 = vmatpush.msra.mxu0 0.0
      %2853 = vmatpush.msra.mxu0 0.0
      %2854 = vmatpush.msra.mxu0 0.0
      %2855 = vmatpush.msra.mxu0 0.0
      %2856 = vmatpush.msra.mxu0 0.0
      %2857 = vmatpush.msra.mxu0 0.0
      %2858 = vmatpush.msra.mxu0 0.0
      %2859 = vmatpush.msra.mxu0 0.0
      %2860 = vmatpush.msra.mxu0 0.0
      %2861 = vmatpush.msra.mxu0 0.0
      %2862 = vmatpush.msra.mxu0 %v2836
      %2863 = vmatmul.f32.gmra.mxu0 %v2749
      %v2864 = vpop.f32.mrf.mxu0
      %v2865 = vadd.f32 0.0, %v2864
      %2866 = vmatmul.f32.gmra.mxu0 %v2752
      %v2867 = vpop.f32.mrf.mxu0
      %v2868 = vadd.f32 0.0, %v2867
      %2869 = vmatmul.f32.gmra.mxu0 %v2755
      %v2870 = vpop.f32.mrf.mxu0
      %v2871 = vadd.f32 0.0, %v2870
      %2872 = vmatmul.f32.gmra.mxu0 %v2758
      %v2873 = vpop.f32.mrf.mxu0
      %v2874 = vadd.f32 0.0, %v2873
      %2875 = vmatmul.f32.gmra.mxu0 %v2761
      %v2876 = vpop.f32.mrf.mxu0
      %v2877 = vadd.f32 0.0, %v2876
      %2878 = vmatmul.f32.gmra.mxu0 %v2764
      %v2879 = vpop.f32.mrf.mxu0
      %v2880 = vadd.f32 0.0, %v2879
      %2881 = vmatmul.f32.gmra.mxu0 %v2767
      %v2882 = vpop.f32.mrf.mxu0
      %v2883 = vadd.f32 0.0, %v2882
      %2884 = vmatmul.f32.gmra.mxu0 %v2770
      %v2885 = vpop.f32.mrf.mxu0
      %v2886 = vadd.f32 0.0, %v2885
      %2887 = vmatmul.f32.gmra.mxu0 %v2773
      %v2888 = vpop.f32.mrf.mxu0
      %v2889 = vadd.f32 0.0, %v2888
      %2890 = vmatmul.f32.gmra.mxu0 %v2776
      %v2891 = vpop.f32.mrf.mxu0
      %v2892 = vadd.f32 0.0, %v2891
      %2893 = vdwg.mxu0
      %v2894 = vadd.f32 %v2738, %v2865
      %v2895 = vadd.f32 %v2739, %v2868
      %v2896 = vadd.f32 %v2740, %v2871
      %v2897 = vadd.f32 %v2741, %v2874
      %v2898 = vadd.f32 %v2742, %v2877
      %v2899 = vadd.f32 %v2743, %v2880
      %v2900 = vadd.f32 %v2744, %v2883
      %v2901 = vadd.f32 %v2745, %v2886
      %v2902 = vadd.f32 %v2746, %v2889
      %v2903 = vadd.f32 %v2747, %v2892
      %v2905 = vsel %vm252, %v2837, 0
      %v2908 = vsel %vm252, %v2838, 0
      %v2911 = vsel %vm252, %v2839, 0
      %v2914 = vsel %vm252, %v2840, 0
      %v2917 = vsel %vm252, %v2841, 0
      %v2920 = vsel %vm252, %v2842, 0
      %v2923 = vsel %vm252, %v2843, 0
      %v2926 = vsel %vm252, %v2844, 0
      %v2929 = vsel %vm252, %v2845, 0
      %v2932 = vsel %vm252, %v2846, 0
      %2934 = vmatpush.msra.mxu0 0.0
      %2935 = vmatpush.msra.mxu0 0.0
      %2936 = vmatpush.msra.mxu0 0.0
      %2937 = vmatpush.msra.mxu0 0.0
      %2938 = vmatpush.msra.mxu0 0.0
      %2939 = vmatpush.msra.mxu0 0.0
      %2940 = vmatpush.msra.mxu0 0.0
      %2941 = vmatpush.msra.mxu0 0.0
      %2942 = vmatpush.msra.mxu0 0.0
      %2943 = vmatpush.msra.mxu0 0.0
      %2944 = vmatpush.msra.mxu0 0.0
      %2945 = vmatpush.msra.mxu0 0.0
      %2946 = vmatpush.msra.mxu0 0.0
      %2947 = vmatpush.msra.mxu0 0.0
      %2948 = vmatpush.msra.mxu0 0.0
      %2949 = vmatpush.msra.mxu0 %v2836
      %2950 = vmatmul.f32.gmra.mxu0 %v2905
      %v2951 = vpop.f32.mrf.mxu0
      %v2952 = vadd.f32 0.0, %v2951
      %2953 = vmatmul.f32.gmra.mxu0 %v2908
      %v2954 = vpop.f32.mrf.mxu0
      %v2955 = vadd.f32 0.0, %v2954
      %2956 = vmatmul.f32.gmra.mxu0 %v2911
      %v2957 = vpop.f32.mrf.mxu0
      %v2958 = vadd.f32 0.0, %v2957
      %2959 = vmatmul.f32.gmra.mxu0 %v2914
      %v2960 = vpop.f32.mrf.mxu0
      %v2961 = vadd.f32 0.0, %v2960
      %2962 = vmatmul.f32.gmra.mxu0 %v2917
      %v2963 = vpop.f32.mrf.mxu0
      %v2964 = vadd.f32 0.0, %v2963
      %2965 = vmatmul.f32.gmra.mxu0 %v2920
      %v2966 = vpop.f32.mrf.mxu0
      %v2967 = vadd.f32 0.0, %v2966
      %2968 = vmatmul.f32.gmra.mxu0 %v2923
      %v2969 = vpop.f32.mrf.mxu0
      %v2970 = vadd.f32 0.0, %v2969
      %2971 = vmatmul.f32.gmra.mxu0 %v2926
      %v2972 = vpop.f32.mrf.mxu0
      %v2973 = vadd.f32 0.0, %v2972
      %2974 = vmatmul.f32.gmra.mxu0 %v2929
      %v2975 = vpop.f32.mrf.mxu0
      %v2976 = vadd.f32 0.0, %v2975
      %2977 = vmatmul.f32.gmra.mxu0 %v2932
      %v2978 = vpop.f32.mrf.mxu0
      %v2979 = vadd.f32 0.0, %v2978
      %2980 = vdwg.mxu0
      %v2981 = vadd.f32 %v2825, %v2952
      %v2982 = vadd.f32 %v2826, %v2955
      %v2983 = vadd.f32 %v2827, %v2958
      %v2984 = vadd.f32 %v2828, %v2961
      %v2985 = vadd.f32 %v2829, %v2964
      %v2986 = vadd.f32 %v2830, %v2967
      %v2987 = vadd.f32 %v2831, %v2970
      %v2988 = vadd.f32 %v2832, %v2973
      %v2989 = vadd.f32 %v2833, %v2976
      %v2990 = vadd.f32 %v2834, %v2979
      %s2991 = scalar_lea.vmem %s2, 136
      %v2992 = vld [vmem:[%s2991] sm:$0xff]
      %v2993 = vld [vmem:[%s212 + $0x19] sm:$0xff]
      %v2994 = vld [vmem:[%s212 + $0x21] sm:$0xff]
      %v2995 = vld [vmem:[%s212 + $0x29] sm:$0xff]
      %v2996 = vld [vmem:[%s212 + $0x31] sm:$0xff]
      %v2997 = vld [vmem:[%s212 + $0x39] sm:$0xff]
      %v2998 = vld [vmem:[%s212 + $0x41] sm:$0xff]
      %v2999 = vld [vmem:[%s212 + $0x49] sm:$0xff]
      %v3000 = vld [vmem:[%s212 + $0x51] sm:$0xff]
      %v3001 = vld [vmem:[%s212 + $0x59] sm:$0xff]
      %v3002 = vld [vmem:[%s212 + $0x61] sm:$0xff]
      %3003 = vmatpush.msra.mxu0 0.0
      %3004 = vmatpush.msra.mxu0 0.0
      %3005 = vmatpush.msra.mxu0 0.0
      %3006 = vmatpush.msra.mxu0 0.0
      %3007 = vmatpush.msra.mxu0 0.0
      %3008 = vmatpush.msra.mxu0 0.0
      %3009 = vmatpush.msra.mxu0 0.0
      %3010 = vmatpush.msra.mxu0 0.0
      %3011 = vmatpush.msra.mxu0 0.0
      %3012 = vmatpush.msra.mxu0 0.0
      %3013 = vmatpush.msra.mxu0 0.0
      %3014 = vmatpush.msra.mxu0 0.0
      %3015 = vmatpush.msra.mxu0 0.0
      %3016 = vmatpush.msra.mxu0 0.0
      %3017 = vmatpush.msra.mxu0 0.0
      %3018 = vmatpush.msra.mxu0 %v2992
      %3019 = vmatmul.f32.gmra.mxu0 %v2905
      %v3020 = vpop.f32.mrf.mxu0
      %v3021 = vadd.f32 0.0, %v3020
      %3022 = vmatmul.f32.gmra.mxu0 %v2908
      %v3023 = vpop.f32.mrf.mxu0
      %v3024 = vadd.f32 0.0, %v3023
      %3025 = vmatmul.f32.gmra.mxu0 %v2911
      %v3026 = vpop.f32.mrf.mxu0
      %v3027 = vadd.f32 0.0, %v3026
      %3028 = vmatmul.f32.gmra.mxu0 %v2914
      %v3029 = vpop.f32.mrf.mxu0
      %v3030 = vadd.f32 0.0, %v3029
      %3031 = vmatmul.f32.gmra.mxu0 %v2917
      %v3032 = vpop.f32.mrf.mxu0
      %v3033 = vadd.f32 0.0, %v3032
      %3034 = vmatmul.f32.gmra.mxu0 %v2920
      %v3035 = vpop.f32.mrf.mxu0
      %v3036 = vadd.f32 0.0, %v3035
      %3037 = vmatmul.f32.gmra.mxu0 %v2923
      %v3038 = vpop.f32.mrf.mxu0
      %v3039 = vadd.f32 0.0, %v3038
      %3040 = vmatmul.f32.gmra.mxu0 %v2926
      %v3041 = vpop.f32.mrf.mxu0
      %v3042 = vadd.f32 0.0, %v3041
      %3043 = vmatmul.f32.gmra.mxu0 %v2929
      %v3044 = vpop.f32.mrf.mxu0
      %v3045 = vadd.f32 0.0, %v3044
      %3046 = vmatmul.f32.gmra.mxu0 %v2932
      %v3047 = vpop.f32.mrf.mxu0
      %v3048 = vadd.f32 0.0, %v3047
      %3049 = vdwg.mxu0
      %v3050 = vadd.f32 %v2894, %v3021
      %v3051 = vadd.f32 %v2895, %v3024
      %v3052 = vadd.f32 %v2896, %v3027
      %v3053 = vadd.f32 %v2897, %v3030
      %v3054 = vadd.f32 %v2898, %v3033
      %v3055 = vadd.f32 %v2899, %v3036
      %v3056 = vadd.f32 %v2900, %v3039
      %v3057 = vadd.f32 %v2901, %v3042
      %v3058 = vadd.f32 %v2902, %v3045
      %v3059 = vadd.f32 %v2903, %v3048
      %v3061 = vsel %vm252, %v2993, 0
      %v3064 = vsel %vm252, %v2994, 0
      %v3067 = vsel %vm252, %v2995, 0
      %v3070 = vsel %vm252, %v2996, 0
      %v3073 = vsel %vm252, %v2997, 0
      %v3076 = vsel %vm252, %v2998, 0
      %v3079 = vsel %vm252, %v2999, 0
      %v3082 = vsel %vm252, %v3000, 0
      %v3085 = vsel %vm252, %v3001, 0
      %v3088 = vsel %vm252, %v3002, 0
      %3090 = vmatpush.msra.mxu0 0.0
      %3091 = vmatpush.msra.mxu0 0.0
      %3092 = vmatpush.msra.mxu0 0.0
      %3093 = vmatpush.msra.mxu0 0.0
      %3094 = vmatpush.msra.mxu0 0.0
      %3095 = vmatpush.msra.mxu0 0.0
      %3096 = vmatpush.msra.mxu0 0.0
      %3097 = vmatpush.msra.mxu0 0.0
      %3098 = vmatpush.msra.mxu0 0.0
      %3099 = vmatpush.msra.mxu0 0.0
      %3100 = vmatpush.msra.mxu0 0.0
      %3101 = vmatpush.msra.mxu0 0.0
      %3102 = vmatpush.msra.mxu0 0.0
      %3103 = vmatpush.msra.mxu0 0.0
      %3104 = vmatpush.msra.mxu0 0.0
      %3105 = vmatpush.msra.mxu0 %v2992
      %3106 = vmatmul.f32.gmra.mxu0 %v3061
      %v3107 = vpop.f32.mrf.mxu0
      %v3108 = vadd.f32 0.0, %v3107
      %3109 = vmatmul.f32.gmra.mxu0 %v3064
      %v3110 = vpop.f32.mrf.mxu0
      %v3111 = vadd.f32 0.0, %v3110
      %3112 = vmatmul.f32.gmra.mxu0 %v3067
      %v3113 = vpop.f32.mrf.mxu0
      %v3114 = vadd.f32 0.0, %v3113
      %3115 = vmatmul.f32.gmra.mxu0 %v3070
      %v3116 = vpop.f32.mrf.mxu0
      %v3117 = vadd.f32 0.0, %v3116
      %3118 = vmatmul.f32.gmra.mxu0 %v3073
      %v3119 = vpop.f32.mrf.mxu0
      %v3120 = vadd.f32 0.0, %v3119
      %3121 = vmatmul.f32.gmra.mxu0 %v3076
      %v3122 = vpop.f32.mrf.mxu0
      %v3123 = vadd.f32 0.0, %v3122
      %3124 = vmatmul.f32.gmra.mxu0 %v3079
      %v3125 = vpop.f32.mrf.mxu0
      %v3126 = vadd.f32 0.0, %v3125
      %3127 = vmatmul.f32.gmra.mxu0 %v3082
      %v3128 = vpop.f32.mrf.mxu0
      %v3129 = vadd.f32 0.0, %v3128
      %3130 = vmatmul.f32.gmra.mxu0 %v3085
      %v3131 = vpop.f32.mrf.mxu0
      %v3132 = vadd.f32 0.0, %v3131
      %3133 = vmatmul.f32.gmra.mxu0 %v3088
      %v3134 = vpop.f32.mrf.mxu0
      %v3135 = vadd.f32 0.0, %v3134
      %3136 = vdwg.mxu0
      %v3137 = vadd.f32 %v2981, %v3108
      %v3138 = vadd.f32 %v2982, %v3111
      %v3139 = vadd.f32 %v2983, %v3114
      %v3140 = vadd.f32 %v2984, %v3117
      %v3141 = vadd.f32 %v2985, %v3120
      %v3142 = vadd.f32 %v2986, %v3123
      %v3143 = vadd.f32 %v2987, %v3126
      %v3144 = vadd.f32 %v2988, %v3129
      %v3145 = vadd.f32 %v2989, %v3132
      %v3146 = vadd.f32 %v2990, %v3135
      %s3147 = scalar_lea.vmem %s2, 144
      %v3148 = vld [vmem:[%s3147] sm:$0xff]
      %v3149 = vld [vmem:[%s207 + $0x1a] sm:$0xff]
      %v3150 = vld [vmem:[%s207 + $0x22] sm:$0xff]
      %v3151 = vld [vmem:[%s207 + $0x2a] sm:$0xff]
      %v3152 = vld [vmem:[%s207 + $0x32] sm:$0xff]
      %v3153 = vld [vmem:[%s207 + $0x3a] sm:$0xff]
      %v3154 = vld [vmem:[%s207 + $0x42] sm:$0xff]
      %v3155 = vld [vmem:[%s207 + $0x4a] sm:$0xff]
      %v3156 = vld [vmem:[%s207 + $0x52] sm:$0xff]
      %v3157 = vld [vmem:[%s207 + $0x5a] sm:$0xff]
      %v3158 = vld [vmem:[%s207 + $0x62] sm:$0xff]
      %3159 = vmatpush.msra.mxu0 0.0
      %3160 = vmatpush.msra.mxu0 0.0
      %3161 = vmatpush.msra.mxu0 0.0
      %3162 = vmatpush.msra.mxu0 0.0
      %3163 = vmatpush.msra.mxu0 0.0
      %3164 = vmatpush.msra.mxu0 0.0
      %3165 = vmatpush.msra.mxu0 0.0
      %3166 = vmatpush.msra.mxu0 0.0
      %3167 = vmatpush.msra.mxu0 0.0
      %3168 = vmatpush.msra.mxu0 0.0
      %3169 = vmatpush.msra.mxu0 0.0
      %3170 = vmatpush.msra.mxu0 0.0
      %3171 = vmatpush.msra.mxu0 0.0
      %3172 = vmatpush.msra.mxu0 0.0
      %3173 = vmatpush.msra.mxu0 0.0
      %3174 = vmatpush.msra.mxu0 %v3148
      %3175 = vmatmul.f32.gmra.mxu0 %v3061
      %v3176 = vpop.f32.mrf.mxu0
      %v3177 = vadd.f32 0.0, %v3176
      %3178 = vmatmul.f32.gmra.mxu0 %v3064
      %v3179 = vpop.f32.mrf.mxu0
      %v3180 = vadd.f32 0.0, %v3179
      %3181 = vmatmul.f32.gmra.mxu0 %v3067
      %v3182 = vpop.f32.mrf.mxu0
      %v3183 = vadd.f32 0.0, %v3182
      %3184 = vmatmul.f32.gmra.mxu0 %v3070
      %v3185 = vpop.f32.mrf.mxu0
      %v3186 = vadd.f32 0.0, %v3185
      %3187 = vmatmul.f32.gmra.mxu0 %v3073
      %v3188 = vpop.f32.mrf.mxu0
      %v3189 = vadd.f32 0.0, %v3188
      %3190 = vmatmul.f32.gmra.mxu0 %v3076
      %v3191 = vpop.f32.mrf.mxu0
      %v3192 = vadd.f32 0.0, %v3191
      %3193 = vmatmul.f32.gmra.mxu0 %v3079
      %v3194 = vpop.f32.mrf.mxu0
      %v3195 = vadd.f32 0.0, %v3194
      %3196 = vmatmul.f32.gmra.mxu0 %v3082
      %v3197 = vpop.f32.mrf.mxu0
      %v3198 = vadd.f32 0.0, %v3197
      %3199 = vmatmul.f32.gmra.mxu0 %v3085
      %v3200 = vpop.f32.mrf.mxu0
      %v3201 = vadd.f32 0.0, %v3200
      %3202 = vmatmul.f32.gmra.mxu0 %v3088
      %v3203 = vpop.f32.mrf.mxu0
      %v3204 = vadd.f32 0.0, %v3203
      %3205 = vdwg.mxu0
      %v3206 = vadd.f32 %v3050, %v3177
      %v3207 = vadd.f32 %v3051, %v3180
      %v3208 = vadd.f32 %v3052, %v3183
      %v3209 = vadd.f32 %v3053, %v3186
      %v3210 = vadd.f32 %v3054, %v3189
      %v3211 = vadd.f32 %v3055, %v3192
      %v3212 = vadd.f32 %v3056, %v3195
      %v3213 = vadd.f32 %v3057, %v3198
      %v3214 = vadd.f32 %v3058, %v3201
      %v3215 = vadd.f32 %v3059, %v3204
      %v3217 = vsel %vm252, %v3149, 0
      %v3220 = vsel %vm252, %v3150, 0
      %v3223 = vsel %vm252, %v3151, 0
      %v3226 = vsel %vm252, %v3152, 0
      %v3229 = vsel %vm252, %v3153, 0
      %v3232 = vsel %vm252, %v3154, 0
      %v3235 = vsel %vm252, %v3155, 0
      %v3238 = vsel %vm252, %v3156, 0
      %v3241 = vsel %vm252, %v3157, 0
      %v3244 = vsel %vm252, %v3158, 0
      %3246 = vmatpush.msra.mxu0 0.0
      %3247 = vmatpush.msra.mxu0 0.0
      %3248 = vmatpush.msra.mxu0 0.0
      %3249 = vmatpush.msra.mxu0 0.0
      %3250 = vmatpush.msra.mxu0 0.0
      %3251 = vmatpush.msra.mxu0 0.0
      %3252 = vmatpush.msra.mxu0 0.0
      %3253 = vmatpush.msra.mxu0 0.0
      %3254 = vmatpush.msra.mxu0 0.0
      %3255 = vmatpush.msra.mxu0 0.0
      %3256 = vmatpush.msra.mxu0 0.0
      %3257 = vmatpush.msra.mxu0 0.0
      %3258 = vmatpush.msra.mxu0 0.0
      %3259 = vmatpush.msra.mxu0 0.0
      %3260 = vmatpush.msra.mxu0 0.0
      %3261 = vmatpush.msra.mxu0 %v3148
      %3262 = vmatmul.f32.gmra.mxu0 %v3217
      %v3263 = vpop.f32.mrf.mxu0
      %v3264 = vadd.f32 0.0, %v3263
      %3265 = vmatmul.f32.gmra.mxu0 %v3220
      %v3266 = vpop.f32.mrf.mxu0
      %v3267 = vadd.f32 0.0, %v3266
      %3268 = vmatmul.f32.gmra.mxu0 %v3223
      %v3269 = vpop.f32.mrf.mxu0
      %v3270 = vadd.f32 0.0, %v3269
      %3271 = vmatmul.f32.gmra.mxu0 %v3226
      %v3272 = vpop.f32.mrf.mxu0
      %v3273 = vadd.f32 0.0, %v3272
      %3274 = vmatmul.f32.gmra.mxu0 %v3229
      %v3275 = vpop.f32.mrf.mxu0
      %v3276 = vadd.f32 0.0, %v3275
      %3277 = vmatmul.f32.gmra.mxu0 %v3232
      %v3278 = vpop.f32.mrf.mxu0
      %v3279 = vadd.f32 0.0, %v3278
      %3280 = vmatmul.f32.gmra.mxu0 %v3235
      %v3281 = vpop.f32.mrf.mxu0
      %v3282 = vadd.f32 0.0, %v3281
      %3283 = vmatmul.f32.gmra.mxu0 %v3238
      %v3284 = vpop.f32.mrf.mxu0
      %v3285 = vadd.f32 0.0, %v3284
      %3286 = vmatmul.f32.gmra.mxu0 %v3241
      %v3287 = vpop.f32.mrf.mxu0
      %v3288 = vadd.f32 0.0, %v3287
      %3289 = vmatmul.f32.gmra.mxu0 %v3244
      %v3290 = vpop.f32.mrf.mxu0
      %v3291 = vadd.f32 0.0, %v3290
      %3292 = vdwg.mxu0
      %v3293 = vadd.f32 %v3137, %v3264
      %v3294 = vadd.f32 %v3138, %v3267
      %v3295 = vadd.f32 %v3139, %v3270
      %v3296 = vadd.f32 %v3140, %v3273
      %v3297 = vadd.f32 %v3141, %v3276
      %v3298 = vadd.f32 %v3142, %v3279
      %v3299 = vadd.f32 %v3143, %v3282
      %v3300 = vadd.f32 %v3144, %v3285
      %v3301 = vadd.f32 %v3145, %v3288
      %v3302 = vadd.f32 %v3146, %v3291
      %s3303 = scalar_lea.vmem %s2, 152
      %v3304 = vld [vmem:[%s3303] sm:$0xff]
      %v3305 = vld [vmem:[%s212 + $0x1a] sm:$0xff]
      %v3306 = vld [vmem:[%s212 + $0x22] sm:$0xff]
      %v3307 = vld [vmem:[%s212 + $0x2a] sm:$0xff]
      %v3308 = vld [vmem:[%s212 + $0x32] sm:$0xff]
      %v3309 = vld [vmem:[%s212 + $0x3a] sm:$0xff]
      %v3310 = vld [vmem:[%s212 + $0x42] sm:$0xff]
      %v3311 = vld [vmem:[%s212 + $0x4a] sm:$0xff]
      %v3312 = vld [vmem:[%s212 + $0x52] sm:$0xff]
      %v3313 = vld [vmem:[%s212 + $0x5a] sm:$0xff]
      %v3314 = vld [vmem:[%s212 + $0x62] sm:$0xff]
      %3315 = vmatpush.msra.mxu0 0.0
      %3316 = vmatpush.msra.mxu0 0.0
      %3317 = vmatpush.msra.mxu0 0.0
      %3318 = vmatpush.msra.mxu0 0.0
      %3319 = vmatpush.msra.mxu0 0.0
      %3320 = vmatpush.msra.mxu0 0.0
      %3321 = vmatpush.msra.mxu0 0.0
      %3322 = vmatpush.msra.mxu0 0.0
      %3323 = vmatpush.msra.mxu0 0.0
      %3324 = vmatpush.msra.mxu0 0.0
      %3325 = vmatpush.msra.mxu0 0.0
      %3326 = vmatpush.msra.mxu0 0.0
      %3327 = vmatpush.msra.mxu0 0.0
      %3328 = vmatpush.msra.mxu0 0.0
      %3329 = vmatpush.msra.mxu0 0.0
      %3330 = vmatpush.msra.mxu0 %v3304
      %3331 = vmatmul.f32.gmra.mxu0 %v3217
      %v3332 = vpop.f32.mrf.mxu0
      %v3333 = vadd.f32 0.0, %v3332
      %3334 = vmatmul.f32.gmra.mxu0 %v3220
      %v3335 = vpop.f32.mrf.mxu0
      %v3336 = vadd.f32 0.0, %v3335
      %3337 = vmatmul.f32.gmra.mxu0 %v3223
      %v3338 = vpop.f32.mrf.mxu0
      %v3339 = vadd.f32 0.0, %v3338
      %3340 = vmatmul.f32.gmra.mxu0 %v3226
      %v3341 = vpop.f32.mrf.mxu0
      %v3342 = vadd.f32 0.0, %v3341
      %3343 = vmatmul.f32.gmra.mxu0 %v3229
      %v3344 = vpop.f32.mrf.mxu0
      %v3345 = vadd.f32 0.0, %v3344
      %3346 = vmatmul.f32.gmra.mxu0 %v3232
      %v3347 = vpop.f32.mrf.mxu0
      %v3348 = vadd.f32 0.0, %v3347
      %3349 = vmatmul.f32.gmra.mxu0 %v3235
      %v3350 = vpop.f32.mrf.mxu0
      %v3351 = vadd.f32 0.0, %v3350
      %3352 = vmatmul.f32.gmra.mxu0 %v3238
      %v3353 = vpop.f32.mrf.mxu0
      %v3354 = vadd.f32 0.0, %v3353
      %3355 = vmatmul.f32.gmra.mxu0 %v3241
      %v3356 = vpop.f32.mrf.mxu0
      %v3357 = vadd.f32 0.0, %v3356
      %3358 = vmatmul.f32.gmra.mxu0 %v3244
      %v3359 = vpop.f32.mrf.mxu0
      %v3360 = vadd.f32 0.0, %v3359
      %3361 = vdwg.mxu0
      %v3362 = vadd.f32 %v3206, %v3333
      %v3363 = vadd.f32 %v3207, %v3336
      %v3364 = vadd.f32 %v3208, %v3339
      %v3365 = vadd.f32 %v3209, %v3342
      %v3366 = vadd.f32 %v3210, %v3345
      %v3367 = vadd.f32 %v3211, %v3348
      %v3368 = vadd.f32 %v3212, %v3351
      %v3369 = vadd.f32 %v3213, %v3354
      %v3370 = vadd.f32 %v3214, %v3357
      %v3371 = vadd.f32 %v3215, %v3360
      %v3373 = vsel %vm252, %v3305, 0
      %v3376 = vsel %vm252, %v3306, 0
      %v3379 = vsel %vm252, %v3307, 0
      %v3382 = vsel %vm252, %v3308, 0
      %v3385 = vsel %vm252, %v3309, 0
      %v3388 = vsel %vm252, %v3310, 0
      %v3391 = vsel %vm252, %v3311, 0
      %v3394 = vsel %vm252, %v3312, 0
      %v3397 = vsel %vm252, %v3313, 0
      %v3400 = vsel %vm252, %v3314, 0
      %3402 = vmatpush.msra.mxu0 0.0
      %3403 = vmatpush.msra.mxu0 0.0
      %3404 = vmatpush.msra.mxu0 0.0
      %3405 = vmatpush.msra.mxu0 0.0
      %3406 = vmatpush.msra.mxu0 0.0
      %3407 = vmatpush.msra.mxu0 0.0
      %3408 = vmatpush.msra.mxu0 0.0
      %3409 = vmatpush.msra.mxu0 0.0
      %3410 = vmatpush.msra.mxu0 0.0
      %3411 = vmatpush.msra.mxu0 0.0
      %3412 = vmatpush.msra.mxu0 0.0
      %3413 = vmatpush.msra.mxu0 0.0
      %3414 = vmatpush.msra.mxu0 0.0
      %3415 = vmatpush.msra.mxu0 0.0
      %3416 = vmatpush.msra.mxu0 0.0
      %3417 = vmatpush.msra.mxu0 %v3304
      %3418 = vmatmul.f32.gmra.mxu0 %v3373
      %v3419 = vpop.f32.mrf.mxu0
      %v3420 = vadd.f32 0.0, %v3419
      %3421 = vmatmul.f32.gmra.mxu0 %v3376
      %v3422 = vpop.f32.mrf.mxu0
      %v3423 = vadd.f32 0.0, %v3422
      %3424 = vmatmul.f32.gmra.mxu0 %v3379
      %v3425 = vpop.f32.mrf.mxu0
      %v3426 = vadd.f32 0.0, %v3425
      %3427 = vmatmul.f32.gmra.mxu0 %v3382
      %v3428 = vpop.f32.mrf.mxu0
      %v3429 = vadd.f32 0.0, %v3428
      %3430 = vmatmul.f32.gmra.mxu0 %v3385
      %v3431 = vpop.f32.mrf.mxu0
      %v3432 = vadd.f32 0.0, %v3431
      %3433 = vmatmul.f32.gmra.mxu0 %v3388
      %v3434 = vpop.f32.mrf.mxu0
      %v3435 = vadd.f32 0.0, %v3434
      %3436 = vmatmul.f32.gmra.mxu0 %v3391
      %v3437 = vpop.f32.mrf.mxu0
      %v3438 = vadd.f32 0.0, %v3437
      %3439 = vmatmul.f32.gmra.mxu0 %v3394
      %v3440 = vpop.f32.mrf.mxu0
      %v3441 = vadd.f32 0.0, %v3440
      %3442 = vmatmul.f32.gmra.mxu0 %v3397
      %v3443 = vpop.f32.mrf.mxu0
      %v3444 = vadd.f32 0.0, %v3443
      %3445 = vmatmul.f32.gmra.mxu0 %v3400
      %v3446 = vpop.f32.mrf.mxu0
      %v3447 = vadd.f32 0.0, %v3446
      %3448 = vdwg.mxu0
      %v3449 = vadd.f32 %v3293, %v3420
      %v3450 = vadd.f32 %v3294, %v3423
      %v3451 = vadd.f32 %v3295, %v3426
      %v3452 = vadd.f32 %v3296, %v3429
      %v3453 = vadd.f32 %v3297, %v3432
      %v3454 = vadd.f32 %v3298, %v3435
      %v3455 = vadd.f32 %v3299, %v3438
      %v3456 = vadd.f32 %v3300, %v3441
      %v3457 = vadd.f32 %v3301, %v3444
      %v3458 = vadd.f32 %v3302, %v3447
      %s3459 = scalar_lea.vmem %s2, 160
      %v3460 = vld [vmem:[%s3459] sm:$0xff]
      %v3461 = vld [vmem:[%s207 + $0x20] sm:$0xff]
      %v3462 = vld [vmem:[%s207 + $0x28] sm:$0xff]
      %v3463 = vld [vmem:[%s207 + $0x30] sm:$0xff]
      %v3464 = vld [vmem:[%s207 + $0x38] sm:$0xff]
      %v3465 = vld [vmem:[%s207 + $0x40] sm:$0xff]
      %v3466 = vld [vmem:[%s207 + $0x48] sm:$0xff]
      %v3467 = vld [vmem:[%s207 + $0x50] sm:$0xff]
      %v3468 = vld [vmem:[%s207 + $0x58] sm:$0xff]
      %v3469 = vld [vmem:[%s207 + $0x60] sm:$0xff]
      %v3470 = vld [vmem:[%s207 + $0x68] sm:$0xff]
      %v3471 = vld [vmem:[%s212 + $0x20] sm:$0xff]
      %v3472 = vld [vmem:[%s212 + $0x28] sm:$0xff]
      %v3473 = vld [vmem:[%s212 + $0x30] sm:$0xff]
      %v3474 = vld [vmem:[%s212 + $0x38] sm:$0xff]
      %v3475 = vld [vmem:[%s212 + $0x40] sm:$0xff]
      %v3476 = vld [vmem:[%s212 + $0x48] sm:$0xff]
      %v3477 = vld [vmem:[%s212 + $0x50] sm:$0xff]
      %v3478 = vld [vmem:[%s212 + $0x58] sm:$0xff]
      %v3479 = vld [vmem:[%s212 + $0x60] sm:$0xff]
      %v3480 = vld [vmem:[%s212 + $0x68] sm:$0xff]
      %v3482 = vsel %vm252, %v3461, 0
      %v3485 = vsel %vm252, %v3462, 0
      %v3488 = vsel %vm252, %v3463, 0
      %v3491 = vsel %vm252, %v3464, 0
      %v3494 = vsel %vm252, %v3465, 0
      %v3497 = vsel %vm252, %v3466, 0
      %v3500 = vsel %vm252, %v3467, 0
      %v3503 = vsel %vm252, %v3468, 0
      %v3506 = vsel %vm252, %v3469, 0
      %v3509 = vsel %vm252, %v3470, 0
      %3511 = vmatpush.msra.mxu0 0.0
      %3512 = vmatpush.msra.mxu0 0.0
      %3513 = vmatpush.msra.mxu0 0.0
      %3514 = vmatpush.msra.mxu0 0.0
      %3515 = vmatpush.msra.mxu0 0.0
      %3516 = vmatpush.msra.mxu0 0.0
      %3517 = vmatpush.msra.mxu0 0.0
      %3518 = vmatpush.msra.mxu0 0.0
      %3519 = vmatpush.msra.mxu0 0.0
      %3520 = vmatpush.msra.mxu0 0.0
      %3521 = vmatpush.msra.mxu0 0.0
      %3522 = vmatpush.msra.mxu0 0.0
      %3523 = vmatpush.msra.mxu0 0.0
      %3524 = vmatpush.msra.mxu0 0.0
      %3525 = vmatpush.msra.mxu0 0.0
      %3526 = vmatpush.msra.mxu0 %v3460
      %3527 = vmatmul.f32.gmra.mxu0 %v3482
      %v3528 = vpop.f32.mrf.mxu0
      %v3529 = vadd.f32 0.0, %v3528
      %3530 = vmatmul.f32.gmra.mxu0 %v3485
      %v3531 = vpop.f32.mrf.mxu0
      %v3532 = vadd.f32 0.0, %v3531
      %3533 = vmatmul.f32.gmra.mxu0 %v3488
      %v3534 = vpop.f32.mrf.mxu0
      %v3535 = vadd.f32 0.0, %v3534
      %3536 = vmatmul.f32.gmra.mxu0 %v3491
      %v3537 = vpop.f32.mrf.mxu0
      %v3538 = vadd.f32 0.0, %v3537
      %3539 = vmatmul.f32.gmra.mxu0 %v3494
      %v3540 = vpop.f32.mrf.mxu0
      %v3541 = vadd.f32 0.0, %v3540
      %3542 = vmatmul.f32.gmra.mxu0 %v3497
      %v3543 = vpop.f32.mrf.mxu0
      %v3544 = vadd.f32 0.0, %v3543
      %3545 = vmatmul.f32.gmra.mxu0 %v3500
      %v3546 = vpop.f32.mrf.mxu0
      %v3547 = vadd.f32 0.0, %v3546
      %3548 = vmatmul.f32.gmra.mxu0 %v3503
      %v3549 = vpop.f32.mrf.mxu0
      %v3550 = vadd.f32 0.0, %v3549
      %3551 = vmatmul.f32.gmra.mxu0 %v3506
      %v3552 = vpop.f32.mrf.mxu0
      %v3553 = vadd.f32 0.0, %v3552
      %3554 = vmatmul.f32.gmra.mxu0 %v3509
      %v3555 = vpop.f32.mrf.mxu0
      %v3556 = vadd.f32 0.0, %v3555
      %3557 = vdwg.mxu0
      %v3558 = vadd.f32 %v3362, %v3529
      %v3559 = vadd.f32 %v3363, %v3532
      %v3560 = vadd.f32 %v3364, %v3535
      %v3561 = vadd.f32 %v3365, %v3538
      %v3562 = vadd.f32 %v3366, %v3541
      %v3563 = vadd.f32 %v3367, %v3544
      %v3564 = vadd.f32 %v3368, %v3547
      %v3565 = vadd.f32 %v3369, %v3550
      %v3566 = vadd.f32 %v3370, %v3553
      %v3567 = vadd.f32 %v3371, %v3556
      %v3569 = vsel %vm252, %v3471, 0
      %v3572 = vsel %vm252, %v3472, 0
      %v3575 = vsel %vm252, %v3473, 0
      %v3578 = vsel %vm252, %v3474, 0
      %v3581 = vsel %vm252, %v3475, 0
      %v3584 = vsel %vm252, %v3476, 0
      %v3587 = vsel %vm252, %v3477, 0
      %v3590 = vsel %vm252, %v3478, 0
      %v3593 = vsel %vm252, %v3479, 0
      %v3596 = vsel %vm252, %v3480, 0
      %3598 = vmatpush.msra.mxu0 0.0
      %3599 = vmatpush.msra.mxu0 0.0
      %3600 = vmatpush.msra.mxu0 0.0
      %3601 = vmatpush.msra.mxu0 0.0
      %3602 = vmatpush.msra.mxu0 0.0
      %3603 = vmatpush.msra.mxu0 0.0
      %3604 = vmatpush.msra.mxu0 0.0
      %3605 = vmatpush.msra.mxu0 0.0
      %3606 = vmatpush.msra.mxu0 0.0
      %3607 = vmatpush.msra.mxu0 0.0
      %3608 = vmatpush.msra.mxu0 0.0
      %3609 = vmatpush.msra.mxu0 0.0
      %3610 = vmatpush.msra.mxu0 0.0
      %3611 = vmatpush.msra.mxu0 0.0
      %3612 = vmatpush.msra.mxu0 0.0
      %3613 = vmatpush.msra.mxu0 %v3460
      %3614 = vmatmul.f32.gmra.mxu0 %v3569
      %v3615 = vpop.f32.mrf.mxu0
      %v3616 = vadd.f32 0.0, %v3615
      %3617 = vmatmul.f32.gmra.mxu0 %v3572
      %v3618 = vpop.f32.mrf.mxu0
      %v3619 = vadd.f32 0.0, %v3618
      %3620 = vmatmul.f32.gmra.mxu0 %v3575
      %v3621 = vpop.f32.mrf.mxu0
      %v3622 = vadd.f32 0.0, %v3621
      %3623 = vmatmul.f32.gmra.mxu0 %v3578
      %v3624 = vpop.f32.mrf.mxu0
      %v3625 = vadd.f32 0.0, %v3624
      %3626 = vmatmul.f32.gmra.mxu0 %v3581
      %v3627 = vpop.f32.mrf.mxu0
      %v3628 = vadd.f32 0.0, %v3627
      %3629 = vmatmul.f32.gmra.mxu0 %v3584
      %v3630 = vpop.f32.mrf.mxu0
      %v3631 = vadd.f32 0.0, %v3630
      %3632 = vmatmul.f32.gmra.mxu0 %v3587
      %v3633 = vpop.f32.mrf.mxu0
      %v3634 = vadd.f32 0.0, %v3633
      %3635 = vmatmul.f32.gmra.mxu0 %v3590
      %v3636 = vpop.f32.mrf.mxu0
      %v3637 = vadd.f32 0.0, %v3636
      %3638 = vmatmul.f32.gmra.mxu0 %v3593
      %v3639 = vpop.f32.mrf.mxu0
      %v3640 = vadd.f32 0.0, %v3639
      %3641 = vmatmul.f32.gmra.mxu0 %v3596
      %v3642 = vpop.f32.mrf.mxu0
      %v3643 = vadd.f32 0.0, %v3642
      %3644 = vdwg.mxu0
      %v3645 = vadd.f32 %v3449, %v3616
      %v3646 = vadd.f32 %v3450, %v3619
      %v3647 = vadd.f32 %v3451, %v3622
      %v3648 = vadd.f32 %v3452, %v3625
      %v3649 = vadd.f32 %v3453, %v3628
      %v3650 = vadd.f32 %v3454, %v3631
      %v3651 = vadd.f32 %v3455, %v3634
      %v3652 = vadd.f32 %v3456, %v3637
      %v3653 = vadd.f32 %v3457, %v3640
      %v3654 = vadd.f32 %v3458, %v3643
      %s3655 = scalar_lea.vmem %s2, 168
      %v3656 = vld [vmem:[%s3655] sm:$0xff]
      %v3657 = vld [vmem:[%s207 + $0x21] sm:$0xff]
      %v3658 = vld [vmem:[%s207 + $0x29] sm:$0xff]
      %v3659 = vld [vmem:[%s207 + $0x31] sm:$0xff]
      %v3660 = vld [vmem:[%s207 + $0x39] sm:$0xff]
      %v3661 = vld [vmem:[%s207 + $0x41] sm:$0xff]
      %v3662 = vld [vmem:[%s207 + $0x49] sm:$0xff]
      %v3663 = vld [vmem:[%s207 + $0x51] sm:$0xff]
      %v3664 = vld [vmem:[%s207 + $0x59] sm:$0xff]
      %v3665 = vld [vmem:[%s207 + $0x61] sm:$0xff]
      %v3666 = vld [vmem:[%s207 + $0x69] sm:$0xff]
      %3667 = vmatpush.msra.mxu0 0.0
      %3668 = vmatpush.msra.mxu0 0.0
      %3669 = vmatpush.msra.mxu0 0.0
      %3670 = vmatpush.msra.mxu0 0.0
      %3671 = vmatpush.msra.mxu0 0.0
      %3672 = vmatpush.msra.mxu0 0.0
      %3673 = vmatpush.msra.mxu0 0.0
      %3674 = vmatpush.msra.mxu0 0.0
      %3675 = vmatpush.msra.mxu0 0.0
      %3676 = vmatpush.msra.mxu0 0.0
      %3677 = vmatpush.msra.mxu0 0.0
      %3678 = vmatpush.msra.mxu0 0.0
      %3679 = vmatpush.msra.mxu0 0.0
      %3680 = vmatpush.msra.mxu0 0.0
      %3681 = vmatpush.msra.mxu0 0.0
      %3682 = vmatpush.msra.mxu0 %v3656
      %3683 = vmatmul.f32.gmra.mxu0 %v3569
      %v3684 = vpop.f32.mrf.mxu0
      %v3685 = vadd.f32 0.0, %v3684
      %3686 = vmatmul.f32.gmra.mxu0 %v3572
      %v3687 = vpop.f32.mrf.mxu0
      %v3688 = vadd.f32 0.0, %v3687
      %3689 = vmatmul.f32.gmra.mxu0 %v3575
      %v3690 = vpop.f32.mrf.mxu0
      %v3691 = vadd.f32 0.0, %v3690
      %3692 = vmatmul.f32.gmra.mxu0 %v3578
      %v3693 = vpop.f32.mrf.mxu0
      %v3694 = vadd.f32 0.0, %v3693
      %3695 = vmatmul.f32.gmra.mxu0 %v3581
      %v3696 = vpop.f32.mrf.mxu0
      %v3697 = vadd.f32 0.0, %v3696
      %3698 = vmatmul.f32.gmra.mxu0 %v3584
      %v3699 = vpop.f32.mrf.mxu0
      %v3700 = vadd.f32 0.0, %v3699
      %3701 = vmatmul.f32.gmra.mxu0 %v3587
      %v3702 = vpop.f32.mrf.mxu0
      %v3703 = vadd.f32 0.0, %v3702
      %3704 = vmatmul.f32.gmra.mxu0 %v3590
      %v3705 = vpop.f32.mrf.mxu0
      %v3706 = vadd.f32 0.0, %v3705
      %3707 = vmatmul.f32.gmra.mxu0 %v3593
      %v3708 = vpop.f32.mrf.mxu0
      %v3709 = vadd.f32 0.0, %v3708
      %3710 = vmatmul.f32.gmra.mxu0 %v3596
      %v3711 = vpop.f32.mrf.mxu0
      %v3712 = vadd.f32 0.0, %v3711
      %3713 = vdwg.mxu0
      %v3714 = vadd.f32 %v3558, %v3685
      %v3715 = vadd.f32 %v3559, %v3688
      %v3716 = vadd.f32 %v3560, %v3691
      %v3717 = vadd.f32 %v3561, %v3694
      %v3718 = vadd.f32 %v3562, %v3697
      %v3719 = vadd.f32 %v3563, %v3700
      %v3720 = vadd.f32 %v3564, %v3703
      %v3721 = vadd.f32 %v3565, %v3706
      %v3722 = vadd.f32 %v3566, %v3709
      %v3723 = vadd.f32 %v3567, %v3712
      %v3725 = vsel %vm252, %v3657, 0
      %v3728 = vsel %vm252, %v3658, 0
      %v3731 = vsel %vm252, %v3659, 0
      %v3734 = vsel %vm252, %v3660, 0
      %v3737 = vsel %vm252, %v3661, 0
      %v3740 = vsel %vm252, %v3662, 0
      %v3743 = vsel %vm252, %v3663, 0
      %v3746 = vsel %vm252, %v3664, 0
      %v3749 = vsel %vm252, %v3665, 0
      %v3752 = vsel %vm252, %v3666, 0
      %3754 = vmatpush.msra.mxu0 0.0
      %3755 = vmatpush.msra.mxu0 0.0
      %3756 = vmatpush.msra.mxu0 0.0
      %3757 = vmatpush.msra.mxu0 0.0
      %3758 = vmatpush.msra.mxu0 0.0
      %3759 = vmatpush.msra.mxu0 0.0
      %3760 = vmatpush.msra.mxu0 0.0
      %3761 = vmatpush.msra.mxu0 0.0
      %3762 = vmatpush.msra.mxu0 0.0
      %3763 = vmatpush.msra.mxu0 0.0
      %3764 = vmatpush.msra.mxu0 0.0
      %3765 = vmatpush.msra.mxu0 0.0
      %3766 = vmatpush.msra.mxu0 0.0
      %3767 = vmatpush.msra.mxu0 0.0
      %3768 = vmatpush.msra.mxu0 0.0
      %3769 = vmatpush.msra.mxu0 %v3656
      %3770 = vmatmul.f32.gmra.mxu0 %v3725
      %v3771 = vpop.f32.mrf.mxu0
      %v3772 = vadd.f32 0.0, %v3771
      %3773 = vmatmul.f32.gmra.mxu0 %v3728
      %v3774 = vpop.f32.mrf.mxu0
      %v3775 = vadd.f32 0.0, %v3774
      %3776 = vmatmul.f32.gmra.mxu0 %v3731
      %v3777 = vpop.f32.mrf.mxu0
      %v3778 = vadd.f32 0.0, %v3777
      %3779 = vmatmul.f32.gmra.mxu0 %v3734
      %v3780 = vpop.f32.mrf.mxu0
      %v3781 = vadd.f32 0.0, %v3780
      %3782 = vmatmul.f32.gmra.mxu0 %v3737
      %v3783 = vpop.f32.mrf.mxu0
      %v3784 = vadd.f32 0.0, %v3783
      %3785 = vmatmul.f32.gmra.mxu0 %v3740
      %v3786 = vpop.f32.mrf.mxu0
      %v3787 = vadd.f32 0.0, %v3786
      %3788 = vmatmul.f32.gmra.mxu0 %v3743
      %v3789 = vpop.f32.mrf.mxu0
      %v3790 = vadd.f32 0.0, %v3789
      %3791 = vmatmul.f32.gmra.mxu0 %v3746
      %v3792 = vpop.f32.mrf.mxu0
      %v3793 = vadd.f32 0.0, %v3792
      %3794 = vmatmul.f32.gmra.mxu0 %v3749
      %v3795 = vpop.f32.mrf.mxu0
      %v3796 = vadd.f32 0.0, %v3795
      %3797 = vmatmul.f32.gmra.mxu0 %v3752
      %v3798 = vpop.f32.mrf.mxu0
      %v3799 = vadd.f32 0.0, %v3798
      %3800 = vdwg.mxu0
      %v3801 = vadd.f32 %v3645, %v3772
      %v3802 = vadd.f32 %v3646, %v3775
      %v3803 = vadd.f32 %v3647, %v3778
      %v3804 = vadd.f32 %v3648, %v3781
      %v3805 = vadd.f32 %v3649, %v3784
      %v3806 = vadd.f32 %v3650, %v3787
      %v3807 = vadd.f32 %v3651, %v3790
      %v3808 = vadd.f32 %v3652, %v3793
      %v3809 = vadd.f32 %v3653, %v3796
      %v3810 = vadd.f32 %v3654, %v3799
      %s3811 = scalar_lea.vmem %s2, 176
      %v3812 = vld [vmem:[%s3811] sm:$0xff]
      %v3813 = vld [vmem:[%s212 + $0x21] sm:$0xff]
      %v3814 = vld [vmem:[%s212 + $0x29] sm:$0xff]
      %v3815 = vld [vmem:[%s212 + $0x31] sm:$0xff]
      %v3816 = vld [vmem:[%s212 + $0x39] sm:$0xff]
      %v3817 = vld [vmem:[%s212 + $0x41] sm:$0xff]
      %v3818 = vld [vmem:[%s212 + $0x49] sm:$0xff]
      %v3819 = vld [vmem:[%s212 + $0x51] sm:$0xff]
      %v3820 = vld [vmem:[%s212 + $0x59] sm:$0xff]
      %v3821 = vld [vmem:[%s212 + $0x61] sm:$0xff]
      %v3822 = vld [vmem:[%s212 + $0x69] sm:$0xff]
      %3823 = vmatpush.msra.mxu0 0.0
      %3824 = vmatpush.msra.mxu0 0.0
      %3825 = vmatpush.msra.mxu0 0.0
      %3826 = vmatpush.msra.mxu0 0.0
      %3827 = vmatpush.msra.mxu0 0.0
      %3828 = vmatpush.msra.mxu0 0.0
      %3829 = vmatpush.msra.mxu0 0.0
      %3830 = vmatpush.msra.mxu0 0.0
      %3831 = vmatpush.msra.mxu0 0.0
      %3832 = vmatpush.msra.mxu0 0.0
      %3833 = vmatpush.msra.mxu0 0.0
      %3834 = vmatpush.msra.mxu0 0.0
      %3835 = vmatpush.msra.mxu0 0.0
      %3836 = vmatpush.msra.mxu0 0.0
      %3837 = vmatpush.msra.mxu0 0.0
      %3838 = vmatpush.msra.mxu0 %v3812
      %3839 = vmatmul.f32.gmra.mxu0 %v3725
      %v3840 = vpop.f32.mrf.mxu0
      %v3841 = vadd.f32 0.0, %v3840
      %3842 = vmatmul.f32.gmra.mxu0 %v3728
      %v3843 = vpop.f32.mrf.mxu0
      %v3844 = vadd.f32 0.0, %v3843
      %3845 = vmatmul.f32.gmra.mxu0 %v3731
      %v3846 = vpop.f32.mrf.mxu0
      %v3847 = vadd.f32 0.0, %v3846
      %3848 = vmatmul.f32.gmra.mxu0 %v3734
      %v3849 = vpop.f32.mrf.mxu0
      %v3850 = vadd.f32 0.0, %v3849
      %3851 = vmatmul.f32.gmra.mxu0 %v3737
      %v3852 = vpop.f32.mrf.mxu0
      %v3853 = vadd.f32 0.0, %v3852
      %3854 = vmatmul.f32.gmra.mxu0 %v3740
      %v3855 = vpop.f32.mrf.mxu0
      %v3856 = vadd.f32 0.0, %v3855
      %3857 = vmatmul.f32.gmra.mxu0 %v3743
      %v3858 = vpop.f32.mrf.mxu0
      %v3859 = vadd.f32 0.0, %v3858
      %3860 = vmatmul.f32.gmra.mxu0 %v3746
      %v3861 = vpop.f32.mrf.mxu0
      %v3862 = vadd.f32 0.0, %v3861
      %3863 = vmatmul.f32.gmra.mxu0 %v3749
      %v3864 = vpop.f32.mrf.mxu0
      %v3865 = vadd.f32 0.0, %v3864
      %3866 = vmatmul.f32.gmra.mxu0 %v3752
      %v3867 = vpop.f32.mrf.mxu0
      %v3868 = vadd.f32 0.0, %v3867
      %3869 = vdwg.mxu0
      %v3870 = vadd.f32 %v3714, %v3841
      %v3871 = vadd.f32 %v3715, %v3844
      %v3872 = vadd.f32 %v3716, %v3847
      %v3873 = vadd.f32 %v3717, %v3850
      %v3874 = vadd.f32 %v3718, %v3853
      %v3875 = vadd.f32 %v3719, %v3856
      %v3876 = vadd.f32 %v3720, %v3859
      %v3877 = vadd.f32 %v3721, %v3862
      %v3878 = vadd.f32 %v3722, %v3865
      %v3879 = vadd.f32 %v3723, %v3868
      %v3881 = vsel %vm252, %v3813, 0
      %v3884 = vsel %vm252, %v3814, 0
      %v3887 = vsel %vm252, %v3815, 0
      %v3890 = vsel %vm252, %v3816, 0
      %v3893 = vsel %vm252, %v3817, 0
      %v3896 = vsel %vm252, %v3818, 0
      %v3899 = vsel %vm252, %v3819, 0
      %v3902 = vsel %vm252, %v3820, 0
      %v3905 = vsel %vm252, %v3821, 0
      %v3908 = vsel %vm252, %v3822, 0
      %3910 = vmatpush.msra.mxu0 0.0
      %3911 = vmatpush.msra.mxu0 0.0
      %3912 = vmatpush.msra.mxu0 0.0
      %3913 = vmatpush.msra.mxu0 0.0
      %3914 = vmatpush.msra.mxu0 0.0
      %3915 = vmatpush.msra.mxu0 0.0
      %3916 = vmatpush.msra.mxu0 0.0
      %3917 = vmatpush.msra.mxu0 0.0
      %3918 = vmatpush.msra.mxu0 0.0
      %3919 = vmatpush.msra.mxu0 0.0
      %3920 = vmatpush.msra.mxu0 0.0
      %3921 = vmatpush.msra.mxu0 0.0
      %3922 = vmatpush.msra.mxu0 0.0
      %3923 = vmatpush.msra.mxu0 0.0
      %3924 = vmatpush.msra.mxu0 0.0
      %3925 = vmatpush.msra.mxu0 %v3812
      %3926 = vmatmul.f32.gmra.mxu0 %v3881
      %v3927 = vpop.f32.mrf.mxu0
      %v3928 = vadd.f32 0.0, %v3927
      %3929 = vmatmul.f32.gmra.mxu0 %v3884
      %v3930 = vpop.f32.mrf.mxu0
      %v3931 = vadd.f32 0.0, %v3930
      %3932 = vmatmul.f32.gmra.mxu0 %v3887
      %v3933 = vpop.f32.mrf.mxu0
      %v3934 = vadd.f32 0.0, %v3933
      %3935 = vmatmul.f32.gmra.mxu0 %v3890
      %v3936 = vpop.f32.mrf.mxu0
      %v3937 = vadd.f32 0.0, %v3936
      %3938 = vmatmul.f32.gmra.mxu0 %v3893
      %v3939 = vpop.f32.mrf.mxu0
      %v3940 = vadd.f32 0.0, %v3939
      %3941 = vmatmul.f32.gmra.mxu0 %v3896
      %v3942 = vpop.f32.mrf.mxu0
      %v3943 = vadd.f32 0.0, %v3942
      %3944 = vmatmul.f32.gmra.mxu0 %v3899
      %v3945 = vpop.f32.mrf.mxu0
      %v3946 = vadd.f32 0.0, %v3945
      %3947 = vmatmul.f32.gmra.mxu0 %v3902
      %v3948 = vpop.f32.mrf.mxu0
      %v3949 = vadd.f32 0.0, %v3948
      %3950 = vmatmul.f32.gmra.mxu0 %v3905
      %v3951 = vpop.f32.mrf.mxu0
      %v3952 = vadd.f32 0.0, %v3951
      %3953 = vmatmul.f32.gmra.mxu0 %v3908
      %v3954 = vpop.f32.mrf.mxu0
      %v3955 = vadd.f32 0.0, %v3954
      %3956 = vdwg.mxu0
      %v3957 = vadd.f32 %v3801, %v3928
      %v3958 = vadd.f32 %v3802, %v3931
      %v3959 = vadd.f32 %v3803, %v3934
      %v3960 = vadd.f32 %v3804, %v3937
      %v3961 = vadd.f32 %v3805, %v3940
      %v3962 = vadd.f32 %v3806, %v3943
      %v3963 = vadd.f32 %v3807, %v3946
      %v3964 = vadd.f32 %v3808, %v3949
      %v3965 = vadd.f32 %v3809, %v3952
      %v3966 = vadd.f32 %v3810, %v3955
      %s3967 = scalar_lea.vmem %s2, 184
      %v3968 = vld [vmem:[%s3967] sm:$0xff]
      %v3969 = vld [vmem:[%s207 + $0x22] sm:$0xff]
      %v3970 = vld [vmem:[%s207 + $0x2a] sm:$0xff]
      %v3971 = vld [vmem:[%s207 + $0x32] sm:$0xff]
      %v3972 = vld [vmem:[%s207 + $0x3a] sm:$0xff]
      %v3973 = vld [vmem:[%s207 + $0x42] sm:$0xff]
      %v3974 = vld [vmem:[%s207 + $0x4a] sm:$0xff]
      %v3975 = vld [vmem:[%s207 + $0x52] sm:$0xff]
      %v3976 = vld [vmem:[%s207 + $0x5a] sm:$0xff]
      %v3977 = vld [vmem:[%s207 + $0x62] sm:$0xff]
      %v3978 = vld [vmem:[%s207 + $0x6a] sm:$0xff]
      %3979 = vmatpush.msra.mxu0 0.0
      %3980 = vmatpush.msra.mxu0 0.0
      %3981 = vmatpush.msra.mxu0 0.0
      %3982 = vmatpush.msra.mxu0 0.0
      %3983 = vmatpush.msra.mxu0 0.0
      %3984 = vmatpush.msra.mxu0 0.0
      %3985 = vmatpush.msra.mxu0 0.0
      %3986 = vmatpush.msra.mxu0 0.0
      %3987 = vmatpush.msra.mxu0 0.0
      %3988 = vmatpush.msra.mxu0 0.0
      %3989 = vmatpush.msra.mxu0 0.0
      %3990 = vmatpush.msra.mxu0 0.0
      %3991 = vmatpush.msra.mxu0 0.0
      %3992 = vmatpush.msra.mxu0 0.0
      %3993 = vmatpush.msra.mxu0 0.0
      %3994 = vmatpush.msra.mxu0 %v3968
      %3995 = vmatmul.f32.gmra.mxu0 %v3881
      %v3996 = vpop.f32.mrf.mxu0
      %v3997 = vadd.f32 0.0, %v3996
      %3998 = vmatmul.f32.gmra.mxu0 %v3884
      %v3999 = vpop.f32.mrf.mxu0
      %v4000 = vadd.f32 0.0, %v3999
      %4001 = vmatmul.f32.gmra.mxu0 %v3887
      %v4002 = vpop.f32.mrf.mxu0
      %v4003 = vadd.f32 0.0, %v4002
      %4004 = vmatmul.f32.gmra.mxu0 %v3890
      %v4005 = vpop.f32.mrf.mxu0
      %v4006 = vadd.f32 0.0, %v4005
      %4007 = vmatmul.f32.gmra.mxu0 %v3893
      %v4008 = vpop.f32.mrf.mxu0
      %v4009 = vadd.f32 0.0, %v4008
      %4010 = vmatmul.f32.gmra.mxu0 %v3896
      %v4011 = vpop.f32.mrf.mxu0
      %v4012 = vadd.f32 0.0, %v4011
      %4013 = vmatmul.f32.gmra.mxu0 %v3899
      %v4014 = vpop.f32.mrf.mxu0
      %v4015 = vadd.f32 0.0, %v4014
      %4016 = vmatmul.f32.gmra.mxu0 %v3902
      %v4017 = vpop.f32.mrf.mxu0
      %v4018 = vadd.f32 0.0, %v4017
      %4019 = vmatmul.f32.gmra.mxu0 %v3905
      %v4020 = vpop.f32.mrf.mxu0
      %v4021 = vadd.f32 0.0, %v4020
      %4022 = vmatmul.f32.gmra.mxu0 %v3908
      %v4023 = vpop.f32.mrf.mxu0
      %v4024 = vadd.f32 0.0, %v4023
      %4025 = vdwg.mxu0
      %v4026 = vadd.f32 %v3870, %v3997
      %v4027 = vadd.f32 %v3871, %v4000
      %v4028 = vadd.f32 %v3872, %v4003
      %v4029 = vadd.f32 %v3873, %v4006
      %v4030 = vadd.f32 %v3874, %v4009
      %v4031 = vadd.f32 %v3875, %v4012
      %v4032 = vadd.f32 %v3876, %v4015
      %v4033 = vadd.f32 %v3877, %v4018
      %v4034 = vadd.f32 %v3878, %v4021
      %v4035 = vadd.f32 %v3879, %v4024
      %v4037 = vsel %vm252, %v3969, 0
      %v4040 = vsel %vm252, %v3970, 0
      %v4043 = vsel %vm252, %v3971, 0
      %v4046 = vsel %vm252, %v3972, 0
      %v4049 = vsel %vm252, %v3973, 0
      %v4052 = vsel %vm252, %v3974, 0
      %v4055 = vsel %vm252, %v3975, 0
      %v4058 = vsel %vm252, %v3976, 0
      %v4061 = vsel %vm252, %v3977, 0
      %v4064 = vsel %vm252, %v3978, 0
      %4066 = vmatpush.msra.mxu0 0.0
      %4067 = vmatpush.msra.mxu0 0.0
      %4068 = vmatpush.msra.mxu0 0.0
      %4069 = vmatpush.msra.mxu0 0.0
      %4070 = vmatpush.msra.mxu0 0.0
      %4071 = vmatpush.msra.mxu0 0.0
      %4072 = vmatpush.msra.mxu0 0.0
      %4073 = vmatpush.msra.mxu0 0.0
      %4074 = vmatpush.msra.mxu0 0.0
      %4075 = vmatpush.msra.mxu0 0.0
      %4076 = vmatpush.msra.mxu0 0.0
      %4077 = vmatpush.msra.mxu0 0.0
      %4078 = vmatpush.msra.mxu0 0.0
      %4079 = vmatpush.msra.mxu0 0.0
      %4080 = vmatpush.msra.mxu0 0.0
      %4081 = vmatpush.msra.mxu0 %v3968
      %4082 = vmatmul.f32.gmra.mxu0 %v4037
      %v4083 = vpop.f32.mrf.mxu0
      %v4084 = vadd.f32 0.0, %v4083
      %4085 = vmatmul.f32.gmra.mxu0 %v4040
      %v4086 = vpop.f32.mrf.mxu0
      %v4087 = vadd.f32 0.0, %v4086
      %4088 = vmatmul.f32.gmra.mxu0 %v4043
      %v4089 = vpop.f32.mrf.mxu0
      %v4090 = vadd.f32 0.0, %v4089
      %4091 = vmatmul.f32.gmra.mxu0 %v4046
      %v4092 = vpop.f32.mrf.mxu0
      %v4093 = vadd.f32 0.0, %v4092
      %4094 = vmatmul.f32.gmra.mxu0 %v4049
      %v4095 = vpop.f32.mrf.mxu0
      %v4096 = vadd.f32 0.0, %v4095
      %4097 = vmatmul.f32.gmra.mxu0 %v4052
      %v4098 = vpop.f32.mrf.mxu0
      %v4099 = vadd.f32 0.0, %v4098
      %4100 = vmatmul.f32.gmra.mxu0 %v4055
      %v4101 = vpop.f32.mrf.mxu0
      %v4102 = vadd.f32 0.0, %v4101
      %4103 = vmatmul.f32.gmra.mxu0 %v4058
      %v4104 = vpop.f32.mrf.mxu0
      %v4105 = vadd.f32 0.0, %v4104
      %4106 = vmatmul.f32.gmra.mxu0 %v4061
      %v4107 = vpop.f32.mrf.mxu0
      %v4108 = vadd.f32 0.0, %v4107
      %4109 = vmatmul.f32.gmra.mxu0 %v4064
      %v4110 = vpop.f32.mrf.mxu0
      %v4111 = vadd.f32 0.0, %v4110
      %4112 = vdwg.mxu0
      %v4113 = vadd.f32 %v3957, %v4084
      %v4114 = vadd.f32 %v3958, %v4087
      %v4115 = vadd.f32 %v3959, %v4090
      %v4116 = vadd.f32 %v3960, %v4093
      %v4117 = vadd.f32 %v3961, %v4096
      %v4118 = vadd.f32 %v3962, %v4099
      %v4119 = vadd.f32 %v3963, %v4102
      %v4120 = vadd.f32 %v3964, %v4105
      %v4121 = vadd.f32 %v3965, %v4108
      %v4122 = vadd.f32 %v3966, %v4111
      %s4123 = scalar_lea.vmem %s2, 192
      %v4124 = vld [vmem:[%s4123] sm:$0xff]
      %v4125 = vld [vmem:[%s212 + $0x22] sm:$0xff]
      %v4126 = vld [vmem:[%s212 + $0x2a] sm:$0xff]
      %v4127 = vld [vmem:[%s212 + $0x32] sm:$0xff]
      %v4128 = vld [vmem:[%s212 + $0x3a] sm:$0xff]
      %v4129 = vld [vmem:[%s212 + $0x42] sm:$0xff]
      %v4130 = vld [vmem:[%s212 + $0x4a] sm:$0xff]
      %v4131 = vld [vmem:[%s212 + $0x52] sm:$0xff]
      %v4132 = vld [vmem:[%s212 + $0x5a] sm:$0xff]
      %v4133 = vld [vmem:[%s212 + $0x62] sm:$0xff]
      %v4134 = vld [vmem:[%s212 + $0x6a] sm:$0xff]
      %4135 = vmatpush.msra.mxu0 0.0
      %4136 = vmatpush.msra.mxu0 0.0
      %4137 = vmatpush.msra.mxu0 0.0
      %4138 = vmatpush.msra.mxu0 0.0
      %4139 = vmatpush.msra.mxu0 0.0
      %4140 = vmatpush.msra.mxu0 0.0
      %4141 = vmatpush.msra.mxu0 0.0
      %4142 = vmatpush.msra.mxu0 0.0
      %4143 = vmatpush.msra.mxu0 0.0
      %4144 = vmatpush.msra.mxu0 0.0
      %4145 = vmatpush.msra.mxu0 0.0
      %4146 = vmatpush.msra.mxu0 0.0
      %4147 = vmatpush.msra.mxu0 0.0
      %4148 = vmatpush.msra.mxu0 0.0
      %4149 = vmatpush.msra.mxu0 0.0
      %4150 = vmatpush.msra.mxu0 %v4124
      %4151 = vmatmul.f32.gmra.mxu0 %v4037
      %v4152 = vpop.f32.mrf.mxu0
      %v4153 = vadd.f32 0.0, %v4152
      %4154 = vmatmul.f32.gmra.mxu0 %v4040
      %v4155 = vpop.f32.mrf.mxu0
      %v4156 = vadd.f32 0.0, %v4155
      %4157 = vmatmul.f32.gmra.mxu0 %v4043
      %v4158 = vpop.f32.mrf.mxu0
      %v4159 = vadd.f32 0.0, %v4158
      %4160 = vmatmul.f32.gmra.mxu0 %v4046
      %v4161 = vpop.f32.mrf.mxu0
      %v4162 = vadd.f32 0.0, %v4161
      %4163 = vmatmul.f32.gmra.mxu0 %v4049
      %v4164 = vpop.f32.mrf.mxu0
      %v4165 = vadd.f32 0.0, %v4164
      %4166 = vmatmul.f32.gmra.mxu0 %v4052
      %v4167 = vpop.f32.mrf.mxu0
      %v4168 = vadd.f32 0.0, %v4167
      %4169 = vmatmul.f32.gmra.mxu0 %v4055
      %v4170 = vpop.f32.mrf.mxu0
      %v4171 = vadd.f32 0.0, %v4170
      %4172 = vmatmul.f32.gmra.mxu0 %v4058
      %v4173 = vpop.f32.mrf.mxu0
      %v4174 = vadd.f32 0.0, %v4173
      %4175 = vmatmul.f32.gmra.mxu0 %v4061
      %v4176 = vpop.f32.mrf.mxu0
      %v4177 = vadd.f32 0.0, %v4176
      %4178 = vmatmul.f32.gmra.mxu0 %v4064
      %v4179 = vpop.f32.mrf.mxu0
      %v4180 = vadd.f32 0.0, %v4179
      %4181 = vdwg.mxu0
      %v4182 = vadd.f32 %v4026, %v4153
      %v4183 = vadd.f32 %v4027, %v4156
      %v4184 = vadd.f32 %v4028, %v4159
      %v4185 = vadd.f32 %v4029, %v4162
      %v4186 = vadd.f32 %v4030, %v4165
      %v4187 = vadd.f32 %v4031, %v4168
      %v4188 = vadd.f32 %v4032, %v4171
      %v4189 = vadd.f32 %v4033, %v4174
      %v4190 = vadd.f32 %v4034, %v4177
      %v4191 = vadd.f32 %v4035, %v4180
      %v4193 = vsel %vm252, %v4125, 0
      %v4196 = vsel %vm252, %v4126, 0
      %v4199 = vsel %vm252, %v4127, 0
      %v4202 = vsel %vm252, %v4128, 0
      %v4205 = vsel %vm252, %v4129, 0
      %v4208 = vsel %vm252, %v4130, 0
      %v4211 = vsel %vm252, %v4131, 0
      %v4214 = vsel %vm252, %v4132, 0
      %v4217 = vsel %vm252, %v4133, 0
      %v4220 = vsel %vm252, %v4134, 0
      %4222 = vmatpush.msra.mxu0 0.0
      %4223 = vmatpush.msra.mxu0 0.0
      %4224 = vmatpush.msra.mxu0 0.0
      %4225 = vmatpush.msra.mxu0 0.0
      %4226 = vmatpush.msra.mxu0 0.0
      %4227 = vmatpush.msra.mxu0 0.0
      %4228 = vmatpush.msra.mxu0 0.0
      %4229 = vmatpush.msra.mxu0 0.0
      %4230 = vmatpush.msra.mxu0 0.0
      %4231 = vmatpush.msra.mxu0 0.0
      %4232 = vmatpush.msra.mxu0 0.0
      %4233 = vmatpush.msra.mxu0 0.0
      %4234 = vmatpush.msra.mxu0 0.0
      %4235 = vmatpush.msra.mxu0 0.0
      %4236 = vmatpush.msra.mxu0 0.0
      %4237 = vmatpush.msra.mxu0 %v4124
      %4238 = vmatmul.f32.gmra.mxu0 %v4193
      %v4239 = vpop.f32.mrf.mxu0
      %v4240 = vadd.f32 0.0, %v4239
      %4241 = vmatmul.f32.gmra.mxu0 %v4196
      %v4242 = vpop.f32.mrf.mxu0
      %v4243 = vadd.f32 0.0, %v4242
      %4244 = vmatmul.f32.gmra.mxu0 %v4199
      %v4245 = vpop.f32.mrf.mxu0
      %v4246 = vadd.f32 0.0, %v4245
      %4247 = vmatmul.f32.gmra.mxu0 %v4202
      %v4248 = vpop.f32.mrf.mxu0
      %v4249 = vadd.f32 0.0, %v4248
      %4250 = vmatmul.f32.gmra.mxu0 %v4205
      %v4251 = vpop.f32.mrf.mxu0
      %v4252 = vadd.f32 0.0, %v4251
      %4253 = vmatmul.f32.gmra.mxu0 %v4208
      %v4254 = vpop.f32.mrf.mxu0
      %v4255 = vadd.f32 0.0, %v4254
      %4256 = vmatmul.f32.gmra.mxu0 %v4211
      %v4257 = vpop.f32.mrf.mxu0
      %v4258 = vadd.f32 0.0, %v4257
      %4259 = vmatmul.f32.gmra.mxu0 %v4214
      %v4260 = vpop.f32.mrf.mxu0
      %v4261 = vadd.f32 0.0, %v4260
      %4262 = vmatmul.f32.gmra.mxu0 %v4217
      %v4263 = vpop.f32.mrf.mxu0
      %v4264 = vadd.f32 0.0, %v4263
      %4265 = vmatmul.f32.gmra.mxu0 %v4220
      %v4266 = vpop.f32.mrf.mxu0
      %v4267 = vadd.f32 0.0, %v4266
      %4268 = vdwg.mxu0
      %v4269 = vadd.f32 %v4113, %v4240
      %v4270 = vadd.f32 %v4114, %v4243
      %v4271 = vadd.f32 %v4115, %v4246
      %v4272 = vadd.f32 %v4116, %v4249
      %v4273 = vadd.f32 %v4117, %v4252
      %v4274 = vadd.f32 %v4118, %v4255
      %v4275 = vadd.f32 %v4119, %v4258
      %v4276 = vadd.f32 %v4120, %v4261
      %v4277 = vadd.f32 %v4121, %v4264
      %v4278 = vadd.f32 %v4122, %v4267
      %v4279 = vmax.f32 %v4182, %v4269
      %v4280 = vmax.f32 %v4183, %v4270
      %v4281 = vmax.f32 %v4184, %v4271
      %v4282 = vmax.f32 %v4185, %v4272
      %v4283 = vmax.f32 %v4186, %v4273
      %v4284 = vmax.f32 %v4187, %v4274
      %v4285 = vmax.f32 %v4188, %v4275
      %v4286 = vmax.f32 %v4189, %v4276
      %v4287 = vmax.f32 %v4190, %v4277
      %v4288 = vmax.f32 %v4191, %v4278
      %v4290 = vperm.slane %v218, 0
      %v4292 = vadd.f32 %v4279, %v4290
      %v4293 = vadd.f32 %v4280, %v4290
      %v4294 = vadd.f32 %v4281, %v4290
      %v4295 = vadd.f32 %v4282, %v4290
      %v4296 = vadd.f32 %v4283, %v4290
      %v4297 = vadd.f32 %v4284, %v4290
      %v4298 = vadd.f32 %v4285, %v4290
      %v4299 = vadd.f32 %v4286, %v4290
      %v4300 = vadd.f32 %v4287, %v4290
      %v4301 = vadd.f32 %v4288, %v4290
      %v4302 = vmax.f32 %v4292, 0.0
      %v4303 = vmax.f32 %v4293, 0.0
      %v4304 = vmax.f32 %v4294, 0.0
      %v4305 = vmax.f32 %v4295, 0.0
      %v4306 = vmax.f32 %v4296, 0.0
      %v4307 = vmax.f32 %v4297, 0.0
      %v4308 = vmax.f32 %v4298, 0.0
      %v4309 = vmax.f32 %v4299, 0.0
      %v4310 = vmax.f32 %v4300, 0.0
      %v4311 = vmax.f32 %v4301, 0.0
      %v4312 = vmax.f32 %v4302, %v4303
      %v4313 = vmax.f32 %v4304, %v4305
      %v4314 = vmax.f32 %v4306, %v4307
      %v4315 = vmax.f32 %v4308, %v4309
      %v4316 = vmax.f32 %v4310, %v4311
      %4317 = vst [vmem:[%s217] sm:$0xff] %v4312
      %4318 = vst [vmem:[%s217 + $0x8] sm:$0xff] %v4313
      %4319 = vst [vmem:[%s217 + $0x10] sm:$0xff] %v4314
      %4320 = vst [vmem:[%s217 + $0x18] sm:$0xff] %v4315
      %4321 = vst [vmem:[%s217 + $0x20] sm:$0xff] %v4316
      %p4322 = scmp.lt.s32.totalorder %s15, 1
      %s4323 = scalar_select %p4322, %s15, 1
      %s4324 = smul.addr %s4323, 5
      %s4325 = smul.addr %s4324, 8
      %s4326 = scalar_lea.vmem %s4, %s4325
      // Predicated region
      $region37: #{net_base_forward.4} parent=35 // pred_check
        %p4327 = pneg %p127
      $region38: #{net_base_forward.4} parent=35 // pred_check_branch
        %4329 = sbr.rel (%p4327) target = $region40
      $region39: #{net_base_forward.4} parent=35 // pred_region
        _
      $region40: #{net_base_forward.4} parent=35 // pred_fallthru
        _
    $region36: #{net_base_forward.4} parent=5 // pred_fallthru
      _
    %p4330 = scmp.le.s32.totalorder 2, %s10
    // Predicated region
    $region41: #{net_base_forward.4} parent=5 // pred_check
      %p4331 = pneg %p4330
    $region42: #{net_base_forward.4} parent=5 // pred_check_branch
      %4333 = sbr.rel (%p4331) target = $region44
    $region43: #{net_base_forward.4} parent=5 // pred_region
      %s4334 = ssub.s32 %s10, 2
      // Predicated region
      $region45: #{net_base_forward.4} parent=43 // pred_check
        %p4335 = pneg %p133
      $region46: #{net_base_forward.4} parent=43 // pred_check_branch
        %4337 = sbr.rel (%p4335) target = $region48
      $region47: #{net_base_forward.4} parent=43 // pred_region
        %p4338 = scmp.lt.s32.totalorder %s16, 1
        %s4339 = scalar_select %p4338, %s16, 1
        %s4340 = smul.addr %s4339, 5
        %s4341 = smul.addr %s4340, 8
        %s4342 = scalar_lea.vmem %s4, %s4341
      $region48: #{net_base_forward.4} parent=43 // pred_fallthru
        _
    $region44: #{net_base_forward.4} parent=5 // pred_fallthru
      _
  $region6: #{net_base_forward.4} parent=0 // loop_footer
    %s14 = sadd.s32 1, %s10
  $region7: #{net_base_forward.4} parent=0 // loop_footer_branch
    %9 = sbr.rel target = $region3
  $region8: #{net_base_forward.4} parent=0 // loop_exit
    _

</llo_original>
